<compile_context>
chip_gen: v5e
topology: v5e:2x2
jax: 0.10.0
libtpu: 0.0.40
codegen_flags: <defaults>
</compile_context>

<pallas_src>
import numpy as np
import jax
import jax.numpy as jnp
from jax.experimental import pallas as pl
from jax.experimental.pallas import tpu as pltpu

# ----------------------------- configuration --------------------------------
IMG_SIZE = 64
IN_CHANNELS = 3
FPN_CHANNELS = 16                      # backbone / stem channels
STEM_CHANNELS = [FPN_CHANNELS, FPN_CHANNELS]
NUM_CLASSES = 4
ROI_SIZE = 7
BATCH_SIZE_PER_IMAGE = 16
FPN_STRIDES = {"p3": 8, "p4": 16, "p5": 32}
D_FLAT = FPN_CHANNELS * ROI_SIZE * ROI_SIZE       # 784 (real feature width)
D_PAD = 896                                       # 7*128, lane-aligned K dim
K1 = NUM_CLASSES + 1                              # 5 logits (real)
K_PAD = 128                                       # lane-dense output width
TILE_R = 128                                      # ROI row tile (MXU M dim)


# ============================ Pallas kernel 1: cls head =====================
def head_kernel(x_ref, m1_ref, b1_ref, m2_ref, b2_ref, wl_ref, bl_ref, o_ref):
    # conv1 (as dense matmul, bf16 operands, f32 accumulate) + bias + ReLU
    h = jnp.dot(x_ref[...], m1_ref[...], preferred_element_type=jnp.float32) + b1_ref[...]
    h = jnp.maximum(h, 0.0).astype(jnp.bfloat16)
    # conv2 (as dense matmul) + bias + ReLU
    h = jnp.dot(h, m2_ref[...], preferred_element_type=jnp.float32) + b2_ref[...]
    h = jnp.maximum(h, 0.0).astype(jnp.bfloat16)
    # final Linear (lane-dense padded output)
    o_ref[...] = jnp.dot(h, wl_ref[...], preferred_element_type=jnp.float32) + bl_ref[...]


def cls_head_forward(x_flat, M1, b1, M2, b2, Wl, bl):
    """x_flat: (R, C*49) float32  ->  logits (R, num_classes+1)."""
    R = x_flat.shape[0]
    Rp = max(TILE_R, ((R + TILE_R - 1) // TILE_R) * TILE_R)
    xp = jnp.zeros((Rp, D_PAD), jnp.bfloat16).at[:R, :D_FLAT].set(
        x_flat.astype(jnp.bfloat16))

    flops = 2 * Rp * D_PAD * D_PAD * 2 + 2 * Rp * D_PAD * K_PAD
    bytes_accessed = (2 * D_PAD * D_PAD * 2 + D_PAD * K_PAD * 2   # bf16 weights
                      + Rp * D_PAD * 2 + Rp * K_PAD * 4           # x in, logits out
                      + 2 * D_PAD * 4 + K_PAD * 4)                # biases

    out = pl.pallas_call(
        head_kernel,
        out_shape=jax.ShapeDtypeStruct((Rp, K_PAD), jnp.float32),
        grid=(Rp // TILE_R,),
        in_specs=[
            pl.BlockSpec((TILE_R, D_PAD), lambda i: (i, 0)),
            pl.BlockSpec((D_PAD, D_PAD), lambda i: (0, 0)),
            pl.BlockSpec((1, D_PAD), lambda i: (0, 0)),
            pl.BlockSpec((D_PAD, D_PAD), lambda i: (0, 0)),
            pl.BlockSpec((1, D_PAD), lambda i: (0, 0)),
            pl.BlockSpec((D_PAD, K_PAD), lambda i: (0, 0)),
            pl.BlockSpec((1, K_PAD), lambda i: (0, 0)),
        ],
        out_specs=pl.BlockSpec((TILE_R, K_PAD), lambda i: (i, 0)),
        compiler_params=pltpu.CompilerParams(
            dimension_semantics=("parallel",),
            vmem_limit_bytes=32 * 1024 * 1024),
        cost_estimate=pl.CostEstimate(
            flops=int(flops), transcendentals=0, bytes_accessed=int(bytes_accessed)),
    )(xp, M1, b1, M2, b2, Wl, bl)
    return out[:R, :K1]


# ============================ Pallas kernel 2: pairwise IoU ==================
def iou_kernel(gt_ref, propt_ref, o_ref):
    g = gt_ref[...]            # (Np, 4)   GT boxes xyxy        (small dim on sublanes)
    p = propt_ref[...]         # (4, Mp)   proposals xyxy, transposed (big dim on lanes)
    xx1 = jnp.maximum(g[:, 0:1], p[0:1, :])
    yy1 = jnp.maximum(g[:, 1:2], p[1:2, :])
    xx2 = jnp.minimum(g[:, 2:3], p[2:3, :])
    yy2 = jnp.minimum(g[:, 3:4], p[3:4, :])
    inter = jnp.maximum(xx2 - xx1, 0.0) * jnp.maximum(yy2 - yy1, 0.0)
    ag = (g[:, 2:3] - g[:, 0:1]) * (g[:, 3:4] - g[:, 1:2])
    ap = (p[2:3, :] - p[0:1, :]) * (p[3:4, :] - p[1:2, :])
    union = jnp.maximum(ag + ap - inter, 1e-8)   # eps-clamp: degenerate boxes -> IoU 0, no NaN
    o_ref[...] = inter / union


def pairwise_iou(boxes1, boxes2):
    """boxes1 (M,4) proposals, boxes2 (N,4) GT -> IoU matrix (M, N).  One call."""
    M, N = boxes1.shape[0], boxes2.shape[0]
    Mp = ((M + 127) // 128) * 128          # proposals on lanes -> lane-dense output
    Np = ((N + 7) // 8) * 8                # GT on sublanes
    prop_t = jnp.zeros((4, Mp), jnp.float32).at[:, :M].set(
        jnp.asarray(boxes1, jnp.float32).T)
    gt_p = jnp.zeros((Np, 4), jnp.float32).at[:N].set(jnp.asarray(boxes2, jnp.float32))
    out = pl.pallas_call(
        iou_kernel,
        out_shape=jax.ShapeDtypeStruct((Np, Mp), jnp.float32),
        grid=(1,),
        in_specs=[
            pl.BlockSpec((Np, 4), lambda i: (0, 0)),
            pl.BlockSpec((4, Mp), lambda i: (0, 0)),
        ],
        out_specs=pl.BlockSpec((Np, Mp), lambda i: (0, 0)),
    )(gt_p, prop_t)
    return out[:N, :M].T                    # back to (M, N) like torch iou()


# ======================= parameter setup (glue, plain numpy) =================
def conv3x3_to_dense(W, b, C, HW=ROI_SIZE):
    """Convert a 'same'-padded 3x3 conv (C->C) on a HWxHW map to a dense matrix.

    y_flat = x_flat @ M + b_vec, with flatten order (c, h, w) (== nn.Flatten)."""
    D = C * HW * HW
    M = np.zeros((D, D), np.float32)
    W = np.asarray(W, np.float32)
    for dy in range(3):
        for dx in range(3):
            Wt = W[:, :, dy, dx].T           # rows: c_in, cols: c_out
            for h in range(HW):
                h2 = h + dy - 1
                if h2 < 0 or h2 >= HW:
                    continue
                for w in range(HW):
                    w2 = w + dx - 1
                    if w2 < 0 or w2 >= HW:
                        continue
                    rows = np.arange(C) * HW * HW + h2 * HW + w2
                    cols = np.arange(C) * HW * HW + h * HW + w
                    M[np.ix_(rows, cols)] = Wt
    bvec = np.repeat(np.asarray(b, np.float32), HW * HW)[None, :]
    return M, bvec


def _pad_dense(M_np, rows, cols):
    out = np.zeros((rows, cols), np.float32)
    out[:M_np.shape[0], :M_np.shape[1]] = M_np
    return out


def build_params(key):
    ks = jax.random.split(key, 8)
    C = FPN_CHANNELS
    # cls_pred conv stack (normal std=0.01, zero bias -- matches init_weights)
    W1 = 0.01 * jax.random.normal(ks[0], (C, C, 3, 3), jnp.float32)
    W2 = 0.01 * jax.random.normal(ks[1], (C, C, 3, 3), jnp.float32)
    Wlin = 0.01 * jax.random.normal(ks[2], (K1, D_FLAT), jnp.float32)

    M1, b1 = conv3x3_to_dense(W1, np.zeros(C), C)
    M2, b2 = conv3x3_to_dense(W2, np.zeros(C), C)
    # pad K -> 896 and N -> 128 at setup time (zero padding; numerically inert),
    # store matmul operands in bf16, biases in f32.
    M1p = jnp.asarray(_pad_dense(M1, D_PAD, D_PAD), jnp.bfloat16)
    M2p = jnp.asarray(_pad_dense(M2, D_PAD, D_PAD), jnp.bfloat16)
    b1p = jnp.asarray(_pad_dense(b1, 1, D_PAD), jnp.float32)
    b2p = jnp.asarray(_pad_dense(b2, 1, D_PAD), jnp.float32)
    Wlp = jnp.asarray(_pad_dense(np.asarray(Wlin).T, D_PAD, K_PAD), jnp.bfloat16)
    blp = jnp.zeros((1, K_PAD), jnp.float32)
    head_dense = (M1p, b1p, M2p, b2p, Wlp, blp)

    # backbone stub params: 1x1 projection 3 -> C per FPN level
    backbone = {}
    for i, name in enumerate(FPN_STRIDES):
        backbone[name] = (0.1 * jax.random.normal(ks[3 + i], (C, IN_CHANNELS), jnp.float32),
                          jnp.zeros((C,), jnp.float32))
    return {"head_dense": head_dense, "backbone": backbone, "rpn_key": ks[6]}


# ================================ stubs (glue) ===============================
def backbone_forward(images, backbone_params):
    """Deterministic FPN stub: avg-pool to each stride then 1x1 conv + ReLU. NCHW."""
    feats = {}
    B, Cin, H, W = images.shape
    for name, stride in FPN_STRIDES.items():
        hs, ws = H // stride, W // stride
        pooled = images.reshape(B, Cin, hs, stride, ws, stride).mean(axis=(3, 5))
        Wp, bp = backbone_params[name]
        f = jnp.einsum("bchw,dc->bdhw", pooled, Wp) + bp[None, :, None, None]
        feats[name] = jnp.maximum(f, 0.0)
    return feats


def rpn_stub(key, num_images, num_props, img_size):
    """Deterministic RPN stub: random-but-fixed proposals, zero RPN losses."""
    keys = jax.random.split(key, num_images)
    props = []
    for i in range(num_images):
        k1, k2, k3, k4 = jax.random.split(keys[i], 4)
        cx = jax.random.uniform(k1, (num_props,), minval=8.0, maxval=img_size - 8.0)
        cy = jax.random.uniform(k2, (num_props,), minval=8.0, maxval=img_size - 8.0)
        w = jax.random.uniform(k3, (num_props,), minval=8.0, maxval=40.0)
        h = jax.random.uniform(k4, (num_props,), minval=8.0, maxval=40.0)
        x1 = jnp.clip(cx - w / 2, 0.0, img_size)
        x2 = jnp.clip(cx + w / 2, 0.0, img_size)
        y1 = jnp.clip(cy - h / 2, 0.0, img_size)
        y2 = jnp.clip(cy + h / 2, 0.0, img_size)
        props.append(jnp.stack([x1, y1, x2, y2], axis=1))
    return {"proposals": props,
            "loss_rpn_obj": jnp.float32(0.0),
            "loss_rpn_box": jnp.float32(0.0)}


# ========================== proposal bookkeeping (host) ======================
def reassign_proposals_to_fpn_levels_np(proposals_per_image, gt_boxes_np):
    levels = [3, 4, 5]
    out = {f"p{i}": [] for i in levels}
    for idx, props in enumerate(proposals_per_image):
        props = np.asarray(props, np.float32)
        if gt_boxes_np is not None:
            g = gt_boxes_np[idx]
            g = g[g[:, 4] != -1][:, :4]
            props = np.concatenate([props, g.astype(np.float32)], axis=0)
        areas = (props[:, 2] - props[:, 0]) * (props[:, 3] - props[:, 1])
        with np.errstate(divide="ignore"):
            lvl = np.floor(4 + np.log2(np.sqrt(np.maximum(areas, 1e-12)) / 224.0))
        lvl = np.clip(lvl, 3, 5).astype(np.int64)
        for i in levels:
            out[f"p{i}"].append(props[lvl == i])
    return out


# ============================ ROI align (glue, JAX) ==========================
def _bilinear_sample(feat, y, x):
    # feat: (C, H, W); torchvision-style border handling (zero outside [-1, H/W])
    C, H, W = feat.shape
    valid = (y > -1.0) & (y < H) & (x > -1.0) & (x < W)
    y = jnp.clip(y, 0.0, H - 1.0)
    x = jnp.clip(x, 0.0, W - 1.0)
    y0 = jnp.floor(y).astype(jnp.int32)
    x0 = jnp.floor(x).astype(jnp.int32)
    y1 = jnp.minimum(y0 + 1, H - 1)
    x1 = jnp.minimum(x0 + 1, W - 1)
    ly, lx = y - y0, x - x0
    hy, hx = 1.0 - ly, 1.0 - lx
    v = (hy * hx * feat[:, y0, x0] + hy * lx * feat[:, y0, x1]
         + ly * hx * feat[:, y1, x0] + ly * lx * feat[:, y1, x1])
    return v * valid


def roi_align_image(feat, boxes, spatial_scale, out_size=ROI_SIZE, sr=2):
    """feat (C,H,W), boxes (K,4) absolute xyxy -> (K, C, out, out). aligned=True.
    TODO(synk): torchvision default is adaptive sampling_ratio=-1; fixed sr=2 here."""
    def one(box):
        off = 0.5
        x1 = box[0] * spatial_scale - off
        y1 = box[1] * spatial_scale - off
        x2 = box[2] * spatial_scale - off
        y2 = box[3] * spatial_scale - off
        bw = (x2 - x1) / out_size
        bh = (y2 - y1) / out_size
        grid = (jnp.arange(out_size)[:, None] + (jnp.arange(sr)[None, :] + 0.5) / sr).reshape(-1)
        ys = y1 + grid * bh
        xs = x1 + grid * bw
        sampled = jax.vmap(lambda yy: jax.vmap(lambda xx: _bilinear_sample(feat, yy, xx))(xs))(ys)
        sampled = sampled.reshape(out_size, sr, out_size, sr, -1).mean(axis=(1, 3))
        return jnp.transpose(sampled, (2, 0, 1))
    return jax.vmap(one)(boxes)


# ======================= matching / sampling / loss (glue) ===================
def rcnn_match_all_images(props_per_image_np, gt_np, iou_thresholds=(0.5, 0.5)):
    """Per-image anchor<->GT matching; ONE batched Pallas IoU call for all images."""
    num_images = len(props_per_image_np)
    valid_gts, gt_offsets, prop_offsets = [], [], []
    goff = poff = 0
    for i in range(num_images):
        gv = gt_np[i][gt_np[i][:, 4] != -1]
        valid_gts.append(gv)
        gt_offsets.append((goff, goff + gv.shape[0]))
        goff += gv.shape[0]
        p = np.asarray(props_per_image_np[i], np.float32)
        prop_offsets.append((poff, poff + p.shape[0]))
        poff += p.shape[0]

    iou_all = None
    if poff > 0 and goff > 0:
        all_props = np.concatenate(
            [np.asarray(p, np.float32) for p in props_per_image_np], axis=0)
        all_gt = np.concatenate([g[:, :4] for g in valid_gts], axis=0).astype(np.float32)
        iou_all = np.asarray(pairwise_iou(jnp.asarray(all_props), jnp.asarray(all_gt)))

    matched_list = []
    for i in range(num_images):
        props = np.asarray(props_per_image_np[i], np.float32)
        gv = valid_gts[i]
        if gv.shape[0] == 0:
            matched_list.append(np.concatenate(
                [np.full((props.shape[0], 4), -1.0, np.float32),
                 np.full((props.shape[0], 1), -1.0, np.float32)], axis=1))
            continue
        ps, pe = prop_offsets[i]
        gs, ge = gt_offsets[i]
        iou_mat = iou_all[ps:pe, gs:ge]
        q = iou_mat.max(axis=1)
        mi = iou_mat.argmax(axis=1)
        matched = gv[mi].copy().astype(np.float32)
        matched[q <= iou_thresholds[0]] = -1.0
        neutral = (q > iou_thresholds[0]) & (q < iou_thresholds[1])
        matched[neutral] = -1e8
        matched_list.append(matched)
    return np.concatenate(matched_list, axis=0)


def sample_rpn_training_np(matched, num_samples, fg_fraction, rng):
    fg = np.nonzero(matched[:, 4] >= 0)[0]
    bg = np.nonzero(matched[:, 4] == -1)[0]
    num_fg = min(int(num_samples * fg_fraction), fg.size)
    num_bg = num_samples - num_fg
    p1 = rng.permutation(fg.size)[:num_fg]
    p2 = rng.permutation(bg.size)[:num_bg]
    return fg[p1], bg[p2]


def cross_entropy(logits, labels):
    logp = jax.nn.log_softmax(logits, axis=-1)
    return -jnp.mean(logp[jnp.arange(labels.shape[0]), labels])


# ============================== FasterRCNN forward ===========================
def faster_rcnn_forward_train(images, gt_boxes, params, num_proposals=20):
    feats = backbone_forward(images, params["backbone"])
    rpn_out = rpn_stub(params["rpn_key"], images.shape[0], num_proposals, IMG_SIZE)
    proposals_per_image = rpn_out["proposals"]

    gt_np = np.asarray(gt_boxes, np.float32)
    props_np = [np.asarray(p, np.float32) for p in proposals_per_image]
    proposals_per_fpn_level = reassign_proposals_to_fpn_levels_np(props_np, gt_np)
    num_images = feats["p3"].shape[0]

    # RoI-align per FPN level, concatenated across levels (dim 0)
    roi_chunks = []
    for level_name in ["p3", "p4", "p5"]:
        level_feats = feats[level_name]
        stride = FPN_STRIDES[level_name]
        per_img = []
        for i in range(num_images):
            boxes_i = jnp.asarray(proposals_per_fpn_level[level_name][i], jnp.float32)
            per_img.append(roi_align_image(level_feats[i], boxes_i, 1.0 / stride))
        roi_chunks.append(jnp.concatenate(per_img, axis=0))
    roi_feats = jnp.concatenate(roi_chunks, axis=0)            # (R, C, 7, 7)

    R = roi_feats.shape[0]
    x_flat = roi_feats.reshape(R, D_FLAT)                      # (c, h, w) flatten == nn.Flatten
    pred_cls_logits = cls_head_forward(x_flat, *params["head_dense"])   # Pallas hot path

    # matching: single batched Pallas IoU call, per-image slicing on host.
    per_image_props = [
        np.concatenate([np.asarray(proposals_per_fpn_level[l][i])
                        for l in ["p3", "p4", "p5"]], axis=0)
        for i in range(num_images)]
    matched = rcnn_match_all_images(per_image_props, gt_np, (0.5, 0.5))

    rng = np.random.default_rng(0)
    fg_idx, bg_idx = sample_rpn_training_np(
        matched, BATCH_SIZE_PER_IMAGE * num_images, 0.25, rng)
    sel = np.concatenate([fg_idx, bg_idx]).astype(np.int64)
    prediction = pred_cls_logits[jnp.asarray(sel)]
    labels = jnp.asarray(matched[sel, 4] + 1.0).astype(jnp.int32)
    loss_cls = cross_entropy(prediction, labels)

    return {
        "loss_rpn_obj": rpn_out["loss_rpn_obj"],
        "loss_rpn_box": rpn_out["loss_rpn_box"],
        "loss_cls": loss_cls,
    }, pred_cls_logits


# ==================================== main ===================================
if __name__ == "__main__":
    key = jax.random.PRNGKey(0)
    k_params, k_img = jax.random.split(key)
    params = build_params(k_params)

    images = jax.random.normal(k_img, (2, IN_CHANNELS, IMG_SIZE, IMG_SIZE), jnp.float32)
    gt_boxes = jnp.asarray(
        [[[5.0, 5.0, 25.0, 25.0, 1.0],
          [30.0, 30.0, 60.0, 60.0, 2.0],
          [-1.0, -1.0, -1.0, -1.0, -1.0],
          [-1.0, -1.0, -1.0, -1.0, -1.0]],
         [[10.0, 12.0, 40.0, 44.0, 0.0],
          [20.0, 8.0, 50.0, 28.0, 3.0],
          [-1.0, -1.0, -1.0, -1.0, -1.0],
          [-1.0, -1.0, -1.0, -1.0, -1.0]]], jnp.float32)

    losses, logits = faster_rcnn_forward_train(images, gt_boxes, params)
    jax.block_until_ready(logits)
    jax.block_until_ready(losses["loss_cls"])
    assert np.isfinite(np.asarray(losses["loss_cls"]))
    print("KERNEL_OK")
</pallas_src>

<mosaic_0001>
module attributes {stable_mosaic.version = 11 : i64} {
  func.func @head_kernel(%arg0: i32, %arg1: memref<128x896xbf16, #tpu.memory_space<vmem>>, %arg2: memref<896x896xbf16, #tpu.memory_space<vmem>>, %arg3: memref<1x896xf32, #tpu.memory_space<vmem>>, %arg4: memref<896x896xbf16, #tpu.memory_space<vmem>>, %arg5: memref<1x896xf32, #tpu.memory_space<vmem>>, %arg6: memref<896x128xbf16, #tpu.memory_space<vmem>>, %arg7: memref<1x128xf32, #tpu.memory_space<vmem>>, %arg8: memref<128x128xf32, #tpu.memory_space<vmem>>) attributes {dimension_semantics = [#tpu.dimension_semantics<parallel>], iteration_bounds = array<i64: 1>, scalar_prefetch = 0 : i64, scratch_operands = 0 : i64, tpu.core_type = #tpu.core_type<tc>, window_params = [{transform_indices = @transform_0, window_bounds = array<i64: 128, 896>}, {pipeline_mode = #tpu.pipeline_mode<synchronous>, transform_indices = @transform_1, window_bounds = array<i64: 896, 896>}, {pipeline_mode = #tpu.pipeline_mode<synchronous>, transform_indices = @transform_2, window_bounds = array<i64: 1, 896>}, {pipeline_mode = #tpu.pipeline_mode<synchronous>, transform_indices = @transform_3, window_bounds = array<i64: 896, 896>}, {pipeline_mode = #tpu.pipeline_mode<synchronous>, transform_indices = @transform_4, window_bounds = array<i64: 1, 896>}, {pipeline_mode = #tpu.pipeline_mode<synchronous>, transform_indices = @transform_5, window_bounds = array<i64: 896, 128>}, {pipeline_mode = #tpu.pipeline_mode<synchronous>, transform_indices = @transform_6, window_bounds = array<i64: 1, 128>}, {transform_indices = @transform_7, window_bounds = array<i64: 128, 128>}]} {
    %c0 = arith.constant 0 : index
    %c0_0 = arith.constant 0 : index
    %0 = vector.load %arg1[%c0, %c0_0] : memref<128x896xbf16, #tpu.memory_space<vmem>>, vector<128x896xbf16>
    %c0_1 = arith.constant 0 : index
    %c0_2 = arith.constant 0 : index
    %1 = vector.load %arg2[%c0_1, %c0_2] : memref<896x896xbf16, #tpu.memory_space<vmem>>, vector<896x896xbf16>
    %cst = arith.constant dense<0.000000e+00> : vector<128x896xf32>
    %2 = tpu.matmul %0, %1, %cst {dimension_numbers = #tpu.dot_dimension_numbers<[1], [0], [0], [1], [0, 0, 1, 1], [], []>} : vector<128x896xbf16>, vector<896x896xbf16>, vector<128x896xf32> -> vector<128x896xf32>
    %c0_3 = arith.constant 0 : index
    %c0_4 = arith.constant 0 : index
    %3 = vector.load %arg3[%c0_3, %c0_4] : memref<1x896xf32, #tpu.memory_space<vmem>>, vector<1x896xf32>
    %4 = vector.broadcast %3 : vector<1x896xf32> to vector<128x896xf32>
    %5 = arith.addf %2, %4 : vector<128x896xf32>
    %cst_5 = arith.constant 0.000000e+00 : f32
    %6 = vector.broadcast %cst_5 : f32 to vector<128x896xf32>
    %7 = arith.maximumf %5, %6 : vector<128x896xf32>
    %8 = arith.truncf %7 : vector<128x896xf32> to vector<128x896xbf16>
    %c0_6 = arith.constant 0 : index
    %c0_7 = arith.constant 0 : index
    %9 = vector.load %arg4[%c0_6, %c0_7] : memref<896x896xbf16, #tpu.memory_space<vmem>>, vector<896x896xbf16>
    %cst_8 = arith.constant dense<0.000000e+00> : vector<128x896xf32>
    %10 = tpu.matmul %8, %9, %cst_8 {dimension_numbers = #tpu.dot_dimension_numbers<[1], [0], [0], [1], [0, 0, 1, 1], [], []>} : vector<128x896xbf16>, vector<896x896xbf16>, vector<128x896xf32> -> vector<128x896xf32>
    %c0_9 = arith.constant 0 : index
    %c0_10 = arith.constant 0 : index
    %11 = vector.load %arg5[%c0_9, %c0_10] : memref<1x896xf32, #tpu.memory_space<vmem>>, vector<1x896xf32>
    %12 = vector.broadcast %11 : vector<1x896xf32> to vector<128x896xf32>
    %13 = arith.addf %10, %12 : vector<128x896xf32>
    %cst_11 = arith.constant 0.000000e+00 : f32
    %14 = vector.broadcast %cst_11 : f32 to vector<128x896xf32>
    %15 = arith.maximumf %13, %14 : vector<128x896xf32>
    %16 = arith.truncf %15 : vector<128x896xf32> to vector<128x896xbf16>
    %c0_12 = arith.constant 0 : index
    %c0_13 = arith.constant 0 : index
    %17 = vector.load %arg6[%c0_12, %c0_13] : memref<896x128xbf16, #tpu.memory_space<vmem>>, vector<896x128xbf16>
    %cst_14 = arith.constant dense<0.000000e+00> : vector<128x128xf32>
    %18 = tpu.matmul %16, %17, %cst_14 {dimension_numbers = #tpu.dot_dimension_numbers<[1], [0], [0], [1], [0, 0, 1, 1], [], []>} : vector<128x896xbf16>, vector<896x128xbf16>, vector<128x128xf32> -> vector<128x128xf32>
    %c0_15 = arith.constant 0 : index
    %c0_16 = arith.constant 0 : index
    %19 = vector.load %arg7[%c0_15, %c0_16] : memref<1x128xf32, #tpu.memory_space<vmem>>, vector<1x128xf32>
    %20 = vector.broadcast %19 : vector<1x128xf32> to vector<128x128xf32>
    %21 = arith.addf %18, %20 : vector<128x128xf32>
    %c0_17 = arith.constant 0 : index
    %c0_18 = arith.constant 0 : index
    %22 = vector.load %arg8[%c0_17, %c0_18] : memref<128x128xf32, #tpu.memory_space<vmem>>, vector<128x128xf32>
    tpu.vector_store %arg8[%c0_17, %c0_18], %21 {strides = array<i32>} : memref<128x128xf32, #tpu.memory_space<vmem>>, vector<128x128xf32>,
    return
  }
  func.func @transform_0(%arg0: i32) -> (i32, i32) {
    %c0_i32 = arith.constant 0 : i32
    %c0_i32_0 = arith.constant 0 : i32
    return %arg0, %c0_i32 : i32, i32
  }
  func.func @transform_1(%arg0: i32) -> (i32, i32) {
    %c0_i32 = arith.constant 0 : i32
    %c0_i32_0 = arith.constant 0 : i32
    %c0_i32_1 = arith.constant 0 : i32
    return %c0_i32, %c0_i32_0 : i32, i32
  }
  func.func @transform_2(%arg0: i32) -> (i32, i32) {
    %c0_i32 = arith.constant 0 : i32
    %c0_i32_0 = arith.constant 0 : i32
    %c0_i32_1 = arith.constant 0 : i32
    return %c0_i32, %c0_i32_0 : i32, i32
  }
  func.func @transform_3(%arg0: i32) -> (i32, i32) {
    %c0_i32 = arith.constant 0 : i32
    %c0_i32_0 = arith.constant 0 : i32
    %c0_i32_1 = arith.constant 0 : i32
    return %c0_i32, %c0_i32_0 : i32, i32
  }
  func.func @transform_4(%arg0: i32) -> (i32, i32) {
    %c0_i32 = arith.constant 0 : i32
    %c0_i32_0 = arith.constant 0 : i32
    %c0_i32_1 = arith.constant 0 : i32
    return %c0_i32, %c0_i32_0 : i32, i32
  }
  func.func @transform_5(%arg0: i32) -> (i32, i32) {
    %c0_i32 = arith.constant 0 : i32
    %c0_i32_0 = arith.constant 0 : i32
    %c0_i32_1 = arith.constant 0 : i32
    return %c0_i32, %c0_i32_0 : i32, i32
  }
  func.func @transform_6(%arg0: i32) -> (i32, i32) {
    %c0_i32 = arith.constant 0 : i32
    %c0_i32_0 = arith.constant 0 : i32
    %c0_i32_1 = arith.constant 0 : i32
    return %c0_i32, %c0_i32_0 : i32, i32
  }
  func.func @transform_7(%arg0: i32) -> (i32, i32) {
    %c0_i32 = arith.constant 0 : i32
    %c0_i32_0 = arith.constant 0 : i32
    return %arg0, %c0_i32 : i32, i32
  }
}

</mosaic_0001>

<llo_original>
// kernel: tpu_custom_call.1
$region0: #{tpu_custom_call.1}
  #allocation0 [shape = 'u32[]', space=smem, size = 0x4, offset = 0x4, fixed_abs, tag = 'smem constant byte address 0x4 - core index']
  #allocation1 [shape = 'u32[72,128]{1,0:T(1,128)}', space=vmem, size = 0x9000, scoped, tag = 'internal scratch']
  %s0 = inlined_call_operand.hbm [shape: bf16[128,896], index: 0, kind: input, shape index: {}]
  %s1 = inlined_call_operand.hbm [shape: bf16[896,896], index: 1, kind: input, shape index: {}]
  %s2 = inlined_call_operand.hbm [shape: f32[1,896], index: 2, kind: input, shape index: {}]
  %s3 = inlined_call_operand.hbm [shape: bf16[896,896], index: 3, kind: input, shape index: {}]
  %s4 = inlined_call_operand.hbm [shape: f32[1,896], index: 4, kind: input, shape index: {}]
  %s5 = inlined_call_operand.hbm [shape: bf16[896,128], index: 5, kind: input, shape index: {}]
  %s6 = inlined_call_operand.hbm [shape: f32[1,128], index: 6, kind: input, shape index: {}]
  %s7 = inlined_call_operand.hbm [shape: f32[128,128], index: 7, kind: output, shape index: {}]
  %s8 = sld [smem:[#allocation0]]
  $region66: #{tpu_custom_call.1} parent=0
    _
  %s10 = ssub.s32 1, %s8
  %s11 = scalar_select 0, %s10, %s8
  $region1: #{tpu_custom_call.1} parent=0
    #allocation2 [shape = 'u8[229376]{0}', space=vmem, size = 0x38000, scoped, tag = 'input window, operand 0, single buffered']
    #allocation3 [shape = 's32[1]{0}', space=sflag, size = 0x4, scoped, tag = 'scoped memory for tpu_custom_call.1']
    #allocation4 [shape = 's32[1]{0}', space=sflag, size = 0x4, scoped, tag = 'scoped memory for tpu_custom_call.1']
    #allocation5 [shape = 'u8[1605632]{0}', space=vmem, size = 0x188000, scoped, tag = 'input window, operand 1, single buffered']
    #allocation6 [shape = 's32[1]{0}', space=sflag, size = 0x4, scoped, tag = 'scoped memory for tpu_custom_call.1']
    #allocation7 [shape = 'u8[3584]{0}', space=vmem, size = 0x1000, scoped, tag = 'input window, operand 2, single buffered']
    #allocation8 [shape = 'u8[1605632]{0}', space=vmem, size = 0x188000, scoped, tag = 'input window, operand 3, single buffered']
    #allocation9 [shape = 's32[1]{0}', space=sflag, size = 0x4, scoped, tag = 'scoped memory for tpu_custom_call.1']
    #allocation10 [shape = 'u8[3584]{0}', space=vmem, size = 0x1000, scoped, tag = 'input window, operand 4, single buffered']
    #allocation11 [shape = 'u8[229376]{0}', space=vmem, size = 0x38000, scoped, tag = 'input window, operand 5, single buffered']
    #allocation12 [shape = 's32[1]{0}', space=sflag, size = 0x4, scoped, tag = 'scoped memory for tpu_custom_call.1']
    #allocation13 [shape = 'u8[512]{0}', space=vmem, size = 0x400, scoped, tag = 'input window, operand 6, single buffered']
    #allocation14 [shape = 'u8[65536]{0}', space=vmem, size = 0x10000, scoped, tag = 'output window, operand 0, single buffered']
    %12 = vsyncpa [#allocation3], 0
    %13 = vsyncpa [#allocation6], 0
    %14 = vsyncpa [#allocation9], 0
    %15 = vsyncpa [#allocation12], 0
    %16 = vsyncpa [#allocation4], 0
    // Predicated region
    $region2: #{tpu_custom_call.1} parent=1 // pred_check
      _
    $region3: #{tpu_custom_call.1} parent=1 // pred_check_branch
      %18 = sbr.rel (0) target = $region5
    $region4: #{tpu_custom_call.1} parent=1 // pred_region
      %20 = vsyncadd [#allocation3], 0
      %s21 = sshll.u32 %s0, 4
      %s22 = int_to_ptr.hbm [resolvable:$true] %s21
      %s23 = sshll.u32 [#allocation2], 4
      %s24 = int_to_ptr.vmem [resolvable:$true] %s23
      %29 = dma.hbm_to_vmem [thread:$0]  %s22, 7168, %s24, [#allocation3], 448, 448, 28
    $region5: #{tpu_custom_call.1} parent=1 // pred_fallthru
      _
    // Predicated region
    $region6: #{tpu_custom_call.1} parent=1 // pred_check
      _
    $region7: #{tpu_custom_call.1} parent=1 // pred_check_branch
      %31 = sbr.rel (0) target = $region9
    $region8: #{tpu_custom_call.1} parent=1 // pred_region
      %33 = vsyncadd [#allocation6], 0
      %s34 = sshll.u32 %s1, 4
      %s35 = int_to_ptr.hbm [resolvable:$true] %s34
      %s36 = sshll.u32 [#allocation5], 4
      %s37 = int_to_ptr.vmem [resolvable:$true] %s36
      %42 = dma.hbm_to_vmem [thread:$0]  %s35, 50176, %s37, [#allocation6], 448, 448, 28
    $region9: #{tpu_custom_call.1} parent=1 // pred_fallthru
      _
    // Predicated region
    $region10: #{tpu_custom_call.1} parent=1 // pred_check
      _
    $region11: #{tpu_custom_call.1} parent=1 // pred_check_branch
      %44 = sbr.rel (0) target = $region13
    $region12: #{tpu_custom_call.1} parent=1 // pred_region
      %46 = vsyncadd [#allocation6], 0
      %s48 = sshll.u32 %s2, 4
      %s49 = int_to_ptr.hbm [resolvable:$true] %s48
      %s50 = sshll.u32 [#allocation7], 4
      %s51 = int_to_ptr.vmem [resolvable:$true] %s50
      %53 = dma.hbm_to_vmem [thread:$0]  %s49, 112, %s51, [#allocation6]
    $region13: #{tpu_custom_call.1} parent=1 // pred_fallthru
      _
    // Predicated region
    $region14: #{tpu_custom_call.1} parent=1 // pred_check
      _
    $region15: #{tpu_custom_call.1} parent=1 // pred_check_branch
      %55 = sbr.rel (0) target = $region17
    $region16: #{tpu_custom_call.1} parent=1 // pred_region
      %57 = vsyncadd [#allocation9], 0
      %s58 = sshll.u32 %s3, 4
      %s59 = int_to_ptr.hbm [resolvable:$true] %s58
      %s60 = sshll.u32 [#allocation8], 4
      %s61 = int_to_ptr.vmem [resolvable:$true] %s60
      %66 = dma.hbm_to_vmem [thread:$0]  %s59, 50176, %s61, [#allocation9], 448, 448, 28
    $region17: #{tpu_custom_call.1} parent=1 // pred_fallthru
      _
    // Predicated region
    $region18: #{tpu_custom_call.1} parent=1 // pred_check
      _
    $region19: #{tpu_custom_call.1} parent=1 // pred_check_branch
      %68 = sbr.rel (0) target = $region21
    $region20: #{tpu_custom_call.1} parent=1 // pred_region
      %70 = vsyncadd [#allocation9], 0
      %s72 = sshll.u32 %s4, 4
      %s73 = int_to_ptr.hbm [resolvable:$true] %s72
      %s74 = sshll.u32 [#allocation10], 4
      %s75 = int_to_ptr.vmem [resolvable:$true] %s74
      %77 = dma.hbm_to_vmem [thread:$0]  %s73, 112, %s75, [#allocation9]
    $region21: #{tpu_custom_call.1} parent=1 // pred_fallthru
      _
    // Predicated region
    $region22: #{tpu_custom_call.1} parent=1 // pred_check
      _
    $region23: #{tpu_custom_call.1} parent=1 // pred_check_branch
      %79 = sbr.rel (0) target = $region25
    $region24: #{tpu_custom_call.1} parent=1 // pred_region
      %81 = vsyncadd [#allocation12], 0
      %s82 = sshll.u32 %s5, 4
      %s83 = int_to_ptr.hbm [resolvable:$true] %s82
      %s84 = sshll.u32 [#allocation11], 4
      %s85 = int_to_ptr.vmem [resolvable:$true] %s84
      %90 = dma.hbm_to_vmem [thread:$0]  %s83, 7168, %s85, [#allocation12], 64, 64, 4
    $region25: #{tpu_custom_call.1} parent=1 // pred_fallthru
      _
    // Predicated region
    $region26: #{tpu_custom_call.1} parent=1 // pred_check
      _
    $region27: #{tpu_custom_call.1} parent=1 // pred_check_branch
      %92 = sbr.rel (0) target = $region29
    $region28: #{tpu_custom_call.1} parent=1 // pred_region
      %94 = vsyncadd [#allocation12], 0
      %s96 = sshll.u32 %s6, 4
      %s97 = int_to_ptr.hbm [resolvable:$true] %s96
      %s98 = sshll.u32 [#allocation13], 4
      %s99 = int_to_ptr.vmem [resolvable:$true] %s98
      %101 = dma.hbm_to_vmem [thread:$0]  %s97, 16, %s99, [#allocation12]
    $region29: #{tpu_custom_call.1} parent=1 // pred_fallthru
      _
    // Predicated region
    $region30: #{tpu_custom_call.1} parent=1 // pred_check
      _
    $region31: #{tpu_custom_call.1} parent=1 // pred_check_branch
      %103 = sbr.rel (0) target = $region33
    $region32: #{tpu_custom_call.1} parent=1 // pred_region
      %105 = dma.done [#allocation3], 7168
    $region33: #{tpu_custom_call.1} parent=1 // pred_fallthru
      _
    // Predicated region
    $region34: #{tpu_custom_call.1} parent=1 // pred_check
      _
    $region35: #{tpu_custom_call.1} parent=1 // pred_check_branch
      %107 = sbr.rel (0) target = $region37
    $region36: #{tpu_custom_call.1} parent=1 // pred_region
      %109 = dma.done [#allocation6], 50176
    $region37: #{tpu_custom_call.1} parent=1 // pred_fallthru
      _
    // Predicated region
    $region38: #{tpu_custom_call.1} parent=1 // pred_check
      _
    $region39: #{tpu_custom_call.1} parent=1 // pred_check_branch
      %111 = sbr.rel (0) target = $region41
    $region40: #{tpu_custom_call.1} parent=1 // pred_region
      %113 = dma.done [#allocation6], 112
    $region41: #{tpu_custom_call.1} parent=1 // pred_fallthru
      _
    // Predicated region
    $region42: #{tpu_custom_call.1} parent=1 // pred_check
      _
    $region43: #{tpu_custom_call.1} parent=1 // pred_check_branch
      %115 = sbr.rel (0) target = $region45
    $region44: #{tpu_custom_call.1} parent=1 // pred_region
      %117 = dma.done [#allocation9], 50176
    $region45: #{tpu_custom_call.1} parent=1 // pred_fallthru
      _
    // Predicated region
    $region46: #{tpu_custom_call.1} parent=1 // pred_check
      _
    $region47: #{tpu_custom_call.1} parent=1 // pred_check_branch
      %119 = sbr.rel (0) target = $region49
    $region48: #{tpu_custom_call.1} parent=1 // pred_region
      %121 = dma.done [#allocation9], 112
    $region49: #{tpu_custom_call.1} parent=1 // pred_fallthru
      _
    // Predicated region
    $region50: #{tpu_custom_call.1} parent=1 // pred_check
      _
    $region51: #{tpu_custom_call.1} parent=1 // pred_check_branch
      %123 = sbr.rel (0) target = $region53
    $region52: #{tpu_custom_call.1} parent=1 // pred_region
      %125 = dma.done [#allocation12], 7168
    $region53: #{tpu_custom_call.1} parent=1 // pred_fallthru
      _
    // Predicated region
    $region54: #{tpu_custom_call.1} parent=1 // pred_check
      _
    $region55: #{tpu_custom_call.1} parent=1 // pred_check_branch
      %127 = sbr.rel (0) target = $region57
    $region56: #{tpu_custom_call.1} parent=1 // pred_region
      %129 = dma.done [#allocation12], 16
    $region57: #{tpu_custom_call.1} parent=1 // pred_fallthru
      _
    %v130 = vld [vmem:[#allocation2] sm:$0xff]
    %v131 = vld [vmem:[#allocation2 + $0x8] sm:$0xff]
    %v132 = vld [vmem:[#allocation2 + $0x10] sm:$0xff]
    %v133 = vld [vmem:[#allocation2 + $0x18] sm:$0xf]
    %v134 = vld [vmem:[#allocation2 + $0x1c] sm:$0xff]
    %v135 = vld [vmem:[#allocation2 + $0x24] sm:$0xff]
    %v136 = vld [vmem:[#allocation2 + $0x2c] sm:$0xff]
    %v137 = vld [vmem:[#allocation2 + $0x34] sm:$0xf]
    %v138 = vld [vmem:[#allocation2 + $0x38] sm:$0xff]
    %v139 = vld [vmem:[#allocation2 + $0x40] sm:$0xff]
    %v140 = vld [vmem:[#allocation2 + $0x48] sm:$0xff]
    %v141 = vld [vmem:[#allocation2 + $0x50] sm:$0xf]
    %v142 = vld [vmem:[#allocation2 + $0x54] sm:$0xff]
    %v143 = vld [vmem:[#allocation2 + $0x5c] sm:$0xff]
    %v144 = vld [vmem:[#allocation2 + $0x64] sm:$0xff]
    %v145 = vld [vmem:[#allocation2 + $0x6c] sm:$0xf]
    %v146 = vld [vmem:[#allocation2 + $0x70] sm:$0xff]
    %v147 = vld [vmem:[#allocation2 + $0x78] sm:$0xff]
    %v148 = vld [vmem:[#allocation2 + $0x80] sm:$0xff]
    %v149 = vld [vmem:[#allocation2 + $0x88] sm:$0xf]
    %v150 = vld [vmem:[#allocation2 + $0x8c] sm:$0xff]
    %v151 = vld [vmem:[#allocation2 + $0x94] sm:$0xff]
    %v152 = vld [vmem:[#allocation2 + $0x9c] sm:$0xff]
    %v153 = vld [vmem:[#allocation2 + $0xa4] sm:$0xf]
    %v154 = vld [vmem:[#allocation2 + $0xa8] sm:$0xff]
    %v155 = vld [vmem:[#allocation2 + $0xb0] sm:$0xff]
    %v156 = vld [vmem:[#allocation2 + $0xb8] sm:$0xff]
    %v157 = vld [vmem:[#allocation2 + $0xc0] sm:$0xf]
    %v158 = vld [vmem:[#allocation2 + $0xc4] sm:$0xff]
    %v159 = vld [vmem:[#allocation2 + $0xcc] sm:$0xff]
    %v160 = vld [vmem:[#allocation2 + $0xd4] sm:$0xff]
    %v161 = vld [vmem:[#allocation2 + $0xdc] sm:$0xf]
    %v162 = vld [vmem:[#allocation2 + $0xe0] sm:$0xff]
    %v163 = vld [vmem:[#allocation2 + $0xe8] sm:$0xff]
    %v164 = vld [vmem:[#allocation2 + $0xf0] sm:$0xff]
    %v165 = vld [vmem:[#allocation2 + $0xf8] sm:$0xf]
    %v166 = vld [vmem:[#allocation2 + $0xfc] sm:$0xff]
    %v167 = vld [vmem:[#allocation2 + $0x104] sm:$0xff]
    %v168 = vld [vmem:[#allocation2 + $0x10c] sm:$0xff]
    %v169 = vld [vmem:[#allocation2 + $0x114] sm:$0xf]
    %v170 = vld [vmem:[#allocation2 + $0x118] sm:$0xff]
    %v171 = vld [vmem:[#allocation2 + $0x120] sm:$0xff]
    %v172 = vld [vmem:[#allocation2 + $0x128] sm:$0xff]
    %v173 = vld [vmem:[#allocation2 + $0x130] sm:$0xf]
    %v174 = vld [vmem:[#allocation2 + $0x134] sm:$0xff]
    %v175 = vld [vmem:[#allocation2 + $0x13c] sm:$0xff]
    %v176 = vld [vmem:[#allocation2 + $0x144] sm:$0xff]
    %v177 = vld [vmem:[#allocation2 + $0x14c] sm:$0xf]
    %v178 = vld [vmem:[#allocation2 + $0x150] sm:$0xff]
    %v179 = vld [vmem:[#allocation2 + $0x158] sm:$0xff]
    %v180 = vld [vmem:[#allocation2 + $0x160] sm:$0xff]
    %v181 = vld [vmem:[#allocation2 + $0x168] sm:$0xf]
    %v182 = vld [vmem:[#allocation2 + $0x16c] sm:$0xff]
    %v183 = vld [vmem:[#allocation2 + $0x174] sm:$0xff]
    %v184 = vld [vmem:[#allocation2 + $0x17c] sm:$0xff]
    %v185 = vld [vmem:[#allocation2 + $0x184] sm:$0xf]
    %v186 = vld [vmem:[#allocation2 + $0x188] sm:$0xff]
    %v187 = vld [vmem:[#allocation2 + $0x190] sm:$0xff]
    %v188 = vld [vmem:[#allocation2 + $0x198] sm:$0xff]
    %v189 = vld [vmem:[#allocation2 + $0x1a0] sm:$0xf]
    %v190 = vld [vmem:[#allocation2 + $0x1a4] sm:$0xff]
    %v191 = vld [vmem:[#allocation2 + $0x1ac] sm:$0xff]
    %v192 = vld [vmem:[#allocation2 + $0x1b4] sm:$0xff]
    %v193 = vld [vmem:[#allocation2 + $0x1bc] sm:$0xf]
    %v194 = vld [vmem:[#allocation5] sm:$0xff]
    %v195 = vld [vmem:[#allocation5 + $0x8] sm:$0xff]
    %v196 = vld [vmem:[#allocation5 + $0x10] sm:$0xff]
    %v197 = vld [vmem:[#allocation5 + $0x18] sm:$0xf]
    %v198 = vld [vmem:[#allocation5 + $0x1c] sm:$0xff]
    %v199 = vld [vmem:[#allocation5 + $0x24] sm:$0xff]
    %v200 = vld [vmem:[#allocation5 + $0x2c] sm:$0xff]
    %v201 = vld [vmem:[#allocation5 + $0x34] sm:$0xf]
    %v202 = vld [vmem:[#allocation5 + $0x38] sm:$0xff]
    %v203 = vld [vmem:[#allocation5 + $0x40] sm:$0xff]
    %v204 = vld [vmem:[#allocation5 + $0x48] sm:$0xff]
    %v205 = vld [vmem:[#allocation5 + $0x50] sm:$0xf]
    %v206 = vld [vmem:[#allocation5 + $0x54] sm:$0xff]
    %v207 = vld [vmem:[#allocation5 + $0x5c] sm:$0xff]
    %v208 = vld [vmem:[#allocation5 + $0x64] sm:$0xff]
    %v209 = vld [vmem:[#allocation5 + $0x6c] sm:$0xf]
    %v210 = vld [vmem:[#allocation5 + $0x70] sm:$0xff]
    %v211 = vld [vmem:[#allocation5 + $0x78] sm:$0xff]
    %v212 = vld [vmem:[#allocation5 + $0x80] sm:$0xff]
    %v213 = vld [vmem:[#allocation5 + $0x88] sm:$0xf]
    %v214 = vld [vmem:[#allocation5 + $0x8c] sm:$0xff]
    %v215 = vld [vmem:[#allocation5 + $0x94] sm:$0xff]
    %v216 = vld [vmem:[#allocation5 + $0x9c] sm:$0xff]
    %v217 = vld [vmem:[#allocation5 + $0xa4] sm:$0xf]
    %v218 = vld [vmem:[#allocation5 + $0xa8] sm:$0xff]
    %v219 = vld [vmem:[#allocation5 + $0xb0] sm:$0xff]
    %v220 = vld [vmem:[#allocation5 + $0xb8] sm:$0xff]
    %v221 = vld [vmem:[#allocation5 + $0xc0] sm:$0xf]
    %v222 = vld [vmem:[#allocation5 + $0xc4] sm:$0xff]
    %v223 = vld [vmem:[#allocation5 + $0xcc] sm:$0xff]
    %v224 = vld [vmem:[#allocation5 + $0xd4] sm:$0xff]
    %v225 = vld [vmem:[#allocation5 + $0xdc] sm:$0xf]
    %v226 = vld [vmem:[#allocation5 + $0xe0] sm:$0xff]
    %v227 = vld [vmem:[#allocation5 + $0xe8] sm:$0xff]
    %v228 = vld [vmem:[#allocation5 + $0xf0] sm:$0xff]
    %v229 = vld [vmem:[#allocation5 + $0xf8] sm:$0xf]
    %v230 = vld [vmem:[#allocation5 + $0xfc] sm:$0xff]
    %v231 = vld [vmem:[#allocation5 + $0x104] sm:$0xff]
    %v232 = vld [vmem:[#allocation5 + $0x10c] sm:$0xff]
    %v233 = vld [vmem:[#allocation5 + $0x114] sm:$0xf]
    %v234 = vld [vmem:[#allocation5 + $0x118] sm:$0xff]
    %v235 = vld [vmem:[#allocation5 + $0x120] sm:$0xff]
    %v236 = vld [vmem:[#allocation5 + $0x128] sm:$0xff]
    %v237 = vld [vmem:[#allocation5 + $0x130] sm:$0xf]
    %v238 = vld [vmem:[#allocation5 + $0x134] sm:$0xff]
    %v239 = vld [vmem:[#allocation5 + $0x13c] sm:$0xff]
    %v240 = vld [vmem:[#allocation5 + $0x144] sm:$0xff]
    %v241 = vld [vmem:[#allocation5 + $0x14c] sm:$0xf]
    %v242 = vld [vmem:[#allocation5 + $0x150] sm:$0xff]
    %v243 = vld [vmem:[#allocation5 + $0x158] sm:$0xff]
    %v244 = vld [vmem:[#allocation5 + $0x160] sm:$0xff]
    %v245 = vld [vmem:[#allocation5 + $0x168] sm:$0xf]
    %v246 = vld [vmem:[#allocation5 + $0x16c] sm:$0xff]
    %v247 = vld [vmem:[#allocation5 + $0x174] sm:$0xff]
    %v248 = vld [vmem:[#allocation5 + $0x17c] sm:$0xff]
    %v249 = vld [vmem:[#allocation5 + $0x184] sm:$0xf]
    %v250 = vld [vmem:[#allocation5 + $0x188] sm:$0xff]
    %v251 = vld [vmem:[#allocation5 + $0x190] sm:$0xff]
    %v252 = vld [vmem:[#allocation5 + $0x198] sm:$0xff]
    %v253 = vld [vmem:[#allocation5 + $0x1a0] sm:$0xf]
    %v254 = vld [vmem:[#allocation5 + $0x1a4] sm:$0xff]
    %v255 = vld [vmem:[#allocation5 + $0x1ac] sm:$0xff]
    %v256 = vld [vmem:[#allocation5 + $0x1b4] sm:$0xff]
    %v257 = vld [vmem:[#allocation5 + $0x1bc] sm:$0xf]
    %v258 = vld [vmem:[#allocation5 + $0x1c0] sm:$0xff]
    %v259 = vld [vmem:[#allocation5 + $0x1c8] sm:$0xff]
    %v260 = vld [vmem:[#allocation5 + $0x1d0] sm:$0xff]
    %v261 = vld [vmem:[#allocation5 + $0x1d8] sm:$0xf]
    %v262 = vld [vmem:[#allocation5 + $0x1dc] sm:$0xff]
    %v263 = vld [vmem:[#allocation5 + $0x1e4] sm:$0xff]
    %v264 = vld [vmem:[#allocation5 + $0x1ec] sm:$0xff]
    %v265 = vld [vmem:[#allocation5 + $0x1f4] sm:$0xf]
    %v266 = vld [vmem:[#allocation5 + $0x1f8] sm:$0xff]
    %v267 = vld [vmem:[#allocation5 + $0x200] sm:$0xff]
    %v268 = vld [vmem:[#allocation5 + $0x208] sm:$0xff]
    %v269 = vld [vmem:[#allocation5 + $0x210] sm:$0xf]
    %v270 = vld [vmem:[#allocation5 + $0x214] sm:$0xff]
    %v271 = vld [vmem:[#allocation5 + $0x21c] sm:$0xff]
    %v272 = vld [vmem:[#allocation5 + $0x224] sm:$0xff]
    %v273 = vld [vmem:[#allocation5 + $0x22c] sm:$0xf]
    %v274 = vld [vmem:[#allocation5 + $0x230] sm:$0xff]
    %v275 = vld [vmem:[#allocation5 + $0x238] sm:$0xff]
    %v276 = vld [vmem:[#allocation5 + $0x240] sm:$0xff]
    %v277 = vld [vmem:[#allocation5 + $0x248] sm:$0xf]
    %v278 = vld [vmem:[#allocation5 + $0x24c] sm:$0xff]
    %v279 = vld [vmem:[#allocation5 + $0x254] sm:$0xff]
    %v280 = vld [vmem:[#allocation5 + $0x25c] sm:$0xff]
    %v281 = vld [vmem:[#allocation5 + $0x264] sm:$0xf]
    %v282 = vld [vmem:[#allocation5 + $0x268] sm:$0xff]
    %v283 = vld [vmem:[#allocation5 + $0x270] sm:$0xff]
    %v284 = vld [vmem:[#allocation5 + $0x278] sm:$0xff]
    %v285 = vld [vmem:[#allocation5 + $0x280] sm:$0xf]
    %v286 = vld [vmem:[#allocation5 + $0x284] sm:$0xff]
    %v287 = vld [vmem:[#allocation5 + $0x28c] sm:$0xff]
    %v288 = vld [vmem:[#allocation5 + $0x294] sm:$0xff]
    %v289 = vld [vmem:[#allocation5 + $0x29c] sm:$0xf]
    %v290 = vld [vmem:[#allocation5 + $0x2a0] sm:$0xff]
    %v291 = vld [vmem:[#allocation5 + $0x2a8] sm:$0xff]
    %v292 = vld [vmem:[#allocation5 + $0x2b0] sm:$0xff]
    %v293 = vld [vmem:[#allocation5 + $0x2b8] sm:$0xf]
    %v294 = vld [vmem:[#allocation5 + $0x2bc] sm:$0xff]
    %v295 = vld [vmem:[#allocation5 + $0x2c4] sm:$0xff]
    %v296 = vld [vmem:[#allocation5 + $0x2cc] sm:$0xff]
    %v297 = vld [vmem:[#allocation5 + $0x2d4] sm:$0xf]
    %v298 = vld [vmem:[#allocation5 + $0x2d8] sm:$0xff]
    %v299 = vld [vmem:[#allocation5 + $0x2e0] sm:$0xff]
    %v300 = vld [vmem:[#allocation5 + $0x2e8] sm:$0xff]
    %v301 = vld [vmem:[#allocation5 + $0x2f0] sm:$0xf]
    %v302 = vld [vmem:[#allocation5 + $0x2f4] sm:$0xff]
    %v303 = vld [vmem:[#allocation5 + $0x2fc] sm:$0xff]
    %v304 = vld [vmem:[#allocation5 + $0x304] sm:$0xff]
    %v305 = vld [vmem:[#allocation5 + $0x30c] sm:$0xf]
    %v306 = vld [vmem:[#allocation5 + $0x310] sm:$0xff]
    %v307 = vld [vmem:[#allocation5 + $0x318] sm:$0xff]
    %v308 = vld [vmem:[#allocation5 + $0x320] sm:$0xff]
    %v309 = vld [vmem:[#allocation5 + $0x328] sm:$0xf]
    %v310 = vld [vmem:[#allocation5 + $0x32c] sm:$0xff]
    %v311 = vld [vmem:[#allocation5 + $0x334] sm:$0xff]
    %v312 = vld [vmem:[#allocation5 + $0x33c] sm:$0xff]
    %v313 = vld [vmem:[#allocation5 + $0x344] sm:$0xf]
    %v314 = vld [vmem:[#allocation5 + $0x348] sm:$0xff]
    %v315 = vld [vmem:[#allocation5 + $0x350] sm:$0xff]
    %v316 = vld [vmem:[#allocation5 + $0x358] sm:$0xff]
    %v317 = vld [vmem:[#allocation5 + $0x360] sm:$0xf]
    %v318 = vld [vmem:[#allocation5 + $0x364] sm:$0xff]
    %v319 = vld [vmem:[#allocation5 + $0x36c] sm:$0xff]
    %v320 = vld [vmem:[#allocation5 + $0x374] sm:$0xff]
    %v321 = vld [vmem:[#allocation5 + $0x37c] sm:$0xf]
    %v322 = vld [vmem:[#allocation5 + $0x380] sm:$0xff]
    %v323 = vld [vmem:[#allocation5 + $0x388] sm:$0xff]
    %v324 = vld [vmem:[#allocation5 + $0x390] sm:$0xff]
    %v325 = vld [vmem:[#allocation5 + $0x398] sm:$0xf]
    %v326 = vld [vmem:[#allocation5 + $0x39c] sm:$0xff]
    %v327 = vld [vmem:[#allocation5 + $0x3a4] sm:$0xff]
    %v328 = vld [vmem:[#allocation5 + $0x3ac] sm:$0xff]
    %v329 = vld [vmem:[#allocation5 + $0x3b4] sm:$0xf]
    %v330 = vld [vmem:[#allocation5 + $0x3b8] sm:$0xff]
    %v331 = vld [vmem:[#allocation5 + $0x3c0] sm:$0xff]
    %v332 = vld [vmem:[#allocation5 + $0x3c8] sm:$0xff]
    %v333 = vld [vmem:[#allocation5 + $0x3d0] sm:$0xf]
    %v334 = vld [vmem:[#allocation5 + $0x3d4] sm:$0xff]
    %v335 = vld [vmem:[#allocation5 + $0x3dc] sm:$0xff]
    %v336 = vld [vmem:[#allocation5 + $0x3e4] sm:$0xff]
    %v337 = vld [vmem:[#allocation5 + $0x3ec] sm:$0xf]
    %v338 = vld [vmem:[#allocation5 + $0x3f0] sm:$0xff]
    %v339 = vld [vmem:[#allocation5 + $0x3f8] sm:$0xff]
    %v340 = vld [vmem:[#allocation5 + $0x400] sm:$0xff]
    %v341 = vld [vmem:[#allocation5 + $0x408] sm:$0xf]
    %v342 = vld [vmem:[#allocation5 + $0x40c] sm:$0xff]
    %v343 = vld [vmem:[#allocation5 + $0x414] sm:$0xff]
    %v344 = vld [vmem:[#allocation5 + $0x41c] sm:$0xff]
    %v345 = vld [vmem:[#allocation5 + $0x424] sm:$0xf]
    %v346 = vld [vmem:[#allocation5 + $0x428] sm:$0xff]
    %v347 = vld [vmem:[#allocation5 + $0x430] sm:$0xff]
    %v348 = vld [vmem:[#allocation5 + $0x438] sm:$0xff]
    %v349 = vld [vmem:[#allocation5 + $0x440] sm:$0xf]
    %v350 = vld [vmem:[#allocation5 + $0x444] sm:$0xff]
    %v351 = vld [vmem:[#allocation5 + $0x44c] sm:$0xff]
    %v352 = vld [vmem:[#allocation5 + $0x454] sm:$0xff]
    %v353 = vld [vmem:[#allocation5 + $0x45c] sm:$0xf]
    %v354 = vld [vmem:[#allocation5 + $0x460] sm:$0xff]
    %v355 = vld [vmem:[#allocation5 + $0x468] sm:$0xff]
    %v356 = vld [vmem:[#allocation5 + $0x470] sm:$0xff]
    %v357 = vld [vmem:[#allocation5 + $0x478] sm:$0xf]
    %v358 = vld [vmem:[#allocation5 + $0x47c] sm:$0xff]
    %v359 = vld [vmem:[#allocation5 + $0x484] sm:$0xff]
    %v360 = vld [vmem:[#allocation5 + $0x48c] sm:$0xff]
    %v361 = vld [vmem:[#allocation5 + $0x494] sm:$0xf]
    %v362 = vld [vmem:[#allocation5 + $0x498] sm:$0xff]
    %v363 = vld [vmem:[#allocation5 + $0x4a0] sm:$0xff]
    %v364 = vld [vmem:[#allocation5 + $0x4a8] sm:$0xff]
    %v365 = vld [vmem:[#allocation5 + $0x4b0] sm:$0xf]
    %v366 = vld [vmem:[#allocation5 + $0x4b4] sm:$0xff]
    %v367 = vld [vmem:[#allocation5 + $0x4bc] sm:$0xff]
    %v368 = vld [vmem:[#allocation5 + $0x4c4] sm:$0xff]
    %v369 = vld [vmem:[#allocation5 + $0x4cc] sm:$0xf]
    %v370 = vld [vmem:[#allocation5 + $0x4d0] sm:$0xff]
    %v371 = vld [vmem:[#allocation5 + $0x4d8] sm:$0xff]
    %v372 = vld [vmem:[#allocation5 + $0x4e0] sm:$0xff]
    %v373 = vld [vmem:[#allocation5 + $0x4e8] sm:$0xf]
    %v374 = vld [vmem:[#allocation5 + $0x4ec] sm:$0xff]
    %v375 = vld [vmem:[#allocation5 + $0x4f4] sm:$0xff]
    %v376 = vld [vmem:[#allocation5 + $0x4fc] sm:$0xff]
    %v377 = vld [vmem:[#allocation5 + $0x504] sm:$0xf]
    %v378 = vld [vmem:[#allocation5 + $0x508] sm:$0xff]
    %v379 = vld [vmem:[#allocation5 + $0x510] sm:$0xff]
    %v380 = vld [vmem:[#allocation5 + $0x518] sm:$0xff]
    %v381 = vld [vmem:[#allocation5 + $0x520] sm:$0xf]
    %v382 = vld [vmem:[#allocation5 + $0x524] sm:$0xff]
    %v383 = vld [vmem:[#allocation5 + $0x52c] sm:$0xff]
    %v384 = vld [vmem:[#allocation5 + $0x534] sm:$0xff]
    %v385 = vld [vmem:[#allocation5 + $0x53c] sm:$0xf]
    %v386 = vld [vmem:[#allocation5 + $0x540] sm:$0xff]
    %v387 = vld [vmem:[#allocation5 + $0x548] sm:$0xff]
    %v388 = vld [vmem:[#allocation5 + $0x550] sm:$0xff]
    %v389 = vld [vmem:[#allocation5 + $0x558] sm:$0xf]
    %v390 = vld [vmem:[#allocation5 + $0x55c] sm:$0xff]
    %v391 = vld [vmem:[#allocation5 + $0x564] sm:$0xff]
    %v392 = vld [vmem:[#allocation5 + $0x56c] sm:$0xff]
    %v393 = vld [vmem:[#allocation5 + $0x574] sm:$0xf]
    %v394 = vld [vmem:[#allocation5 + $0x578] sm:$0xff]
    %v395 = vld [vmem:[#allocation5 + $0x580] sm:$0xff]
    %v396 = vld [vmem:[#allocation5 + $0x588] sm:$0xff]
    %v397 = vld [vmem:[#allocation5 + $0x590] sm:$0xf]
    %v398 = vld [vmem:[#allocation5 + $0x594] sm:$0xff]
    %v399 = vld [vmem:[#allocation5 + $0x59c] sm:$0xff]
    %v400 = vld [vmem:[#allocation5 + $0x5a4] sm:$0xff]
    %v401 = vld [vmem:[#allocation5 + $0x5ac] sm:$0xf]
    %v402 = vld [vmem:[#allocation5 + $0x5b0] sm:$0xff]
    %v403 = vld [vmem:[#allocation5 + $0x5b8] sm:$0xff]
    %v404 = vld [vmem:[#allocation5 + $0x5c0] sm:$0xff]
    %v405 = vld [vmem:[#allocation5 + $0x5c8] sm:$0xf]
    %v406 = vld [vmem:[#allocation5 + $0x5cc] sm:$0xff]
    %v407 = vld [vmem:[#allocation5 + $0x5d4] sm:$0xff]
    %v408 = vld [vmem:[#allocation5 + $0x5dc] sm:$0xff]
    %v409 = vld [vmem:[#allocation5 + $0x5e4] sm:$0xf]
    %v410 = vld [vmem:[#allocation5 + $0x5e8] sm:$0xff]
    %v411 = vld [vmem:[#allocation5 + $0x5f0] sm:$0xff]
    %v412 = vld [vmem:[#allocation5 + $0x5f8] sm:$0xff]
    %v413 = vld [vmem:[#allocation5 + $0x600] sm:$0xf]
    %v414 = vld [vmem:[#allocation5 + $0x604] sm:$0xff]
    %v415 = vld [vmem:[#allocation5 + $0x60c] sm:$0xff]
    %v416 = vld [vmem:[#allocation5 + $0x614] sm:$0xff]
    %v417 = vld [vmem:[#allocation5 + $0x61c] sm:$0xf]
    %v418 = vld [vmem:[#allocation5 + $0x620] sm:$0xff]
    %v419 = vld [vmem:[#allocation5 + $0x628] sm:$0xff]
    %v420 = vld [vmem:[#allocation5 + $0x630] sm:$0xff]
    %v421 = vld [vmem:[#allocation5 + $0x638] sm:$0xf]
    %v422 = vld [vmem:[#allocation5 + $0x63c] sm:$0xff]
    %v423 = vld [vmem:[#allocation5 + $0x644] sm:$0xff]
    %v424 = vld [vmem:[#allocation5 + $0x64c] sm:$0xff]
    %v425 = vld [vmem:[#allocation5 + $0x654] sm:$0xf]
    %v426 = vld [vmem:[#allocation5 + $0x658] sm:$0xff]
    %v427 = vld [vmem:[#allocation5 + $0x660] sm:$0xff]
    %v428 = vld [vmem:[#allocation5 + $0x668] sm:$0xff]
    %v429 = vld [vmem:[#allocation5 + $0x670] sm:$0xf]
    %v430 = vld [vmem:[#allocation5 + $0x674] sm:$0xff]
    %v431 = vld [vmem:[#allocation5 + $0x67c] sm:$0xff]
    %v432 = vld [vmem:[#allocation5 + $0x684] sm:$0xff]
    %v433 = vld [vmem:[#allocation5 + $0x68c] sm:$0xf]
    %v434 = vld [vmem:[#allocation5 + $0x690] sm:$0xff]
    %v435 = vld [vmem:[#allocation5 + $0x698] sm:$0xff]
    %v436 = vld [vmem:[#allocation5 + $0x6a0] sm:$0xff]
    %v437 = vld [vmem:[#allocation5 + $0x6a8] sm:$0xf]
    %v438 = vld [vmem:[#allocation5 + $0x6ac] sm:$0xff]
    %v439 = vld [vmem:[#allocation5 + $0x6b4] sm:$0xff]
    %v440 = vld [vmem:[#allocation5 + $0x6bc] sm:$0xff]
    %v441 = vld [vmem:[#allocation5 + $0x6c4] sm:$0xf]
    %v442 = vld [vmem:[#allocation5 + $0x6c8] sm:$0xff]
    %v443 = vld [vmem:[#allocation5 + $0x6d0] sm:$0xff]
    %v444 = vld [vmem:[#allocation5 + $0x6d8] sm:$0xff]
    %v445 = vld [vmem:[#allocation5 + $0x6e0] sm:$0xf]
    %v446 = vld [vmem:[#allocation5 + $0x6e4] sm:$0xff]
    %v447 = vld [vmem:[#allocation5 + $0x6ec] sm:$0xff]
    %v448 = vld [vmem:[#allocation5 + $0x6f4] sm:$0xff]
    %v449 = vld [vmem:[#allocation5 + $0x6fc] sm:$0xf]
    %v450 = vld [vmem:[#allocation5 + $0x700] sm:$0xff]
    %v451 = vld [vmem:[#allocation5 + $0x708] sm:$0xff]
    %v452 = vld [vmem:[#allocation5 + $0x710] sm:$0xff]
    %v453 = vld [vmem:[#allocation5 + $0x718] sm:$0xf]
    %v454 = vld [vmem:[#allocation5 + $0x71c] sm:$0xff]
    %v455 = vld [vmem:[#allocation5 + $0x724] sm:$0xff]
    %v456 = vld [vmem:[#allocation5 + $0x72c] sm:$0xff]
    %v457 = vld [vmem:[#allocation5 + $0x734] sm:$0xf]
    %v458 = vld [vmem:[#allocation5 + $0x738] sm:$0xff]
    %v459 = vld [vmem:[#allocation5 + $0x740] sm:$0xff]
    %v460 = vld [vmem:[#allocation5 + $0x748] sm:$0xff]
    %v461 = vld [vmem:[#allocation5 + $0x750] sm:$0xf]
    %v462 = vld [vmem:[#allocation5 + $0x754] sm:$0xff]
    %v463 = vld [vmem:[#allocation5 + $0x75c] sm:$0xff]
    %v464 = vld [vmem:[#allocation5 + $0x764] sm:$0xff]
    %v465 = vld [vmem:[#allocation5 + $0x76c] sm:$0xf]
    %v466 = vld [vmem:[#allocation5 + $0x770] sm:$0xff]
    %v467 = vld [vmem:[#allocation5 + $0x778] sm:$0xff]
    %v468 = vld [vmem:[#allocation5 + $0x780] sm:$0xff]
    %v469 = vld [vmem:[#allocation5 + $0x788] sm:$0xf]
    %v470 = vld [vmem:[#allocation5 + $0x78c] sm:$0xff]
    %v471 = vld [vmem:[#allocation5 + $0x794] sm:$0xff]
    %v472 = vld [vmem:[#allocation5 + $0x79c] sm:$0xff]
    %v473 = vld [vmem:[#allocation5 + $0x7a4] sm:$0xf]
    %v474 = vld [vmem:[#allocation5 + $0x7a8] sm:$0xff]
    %v475 = vld [vmem:[#allocation5 + $0x7b0] sm:$0xff]
    %v476 = vld [vmem:[#allocation5 + $0x7b8] sm:$0xff]
    %v477 = vld [vmem:[#allocation5 + $0x7c0] sm:$0xf]
    %v478 = vld [vmem:[#allocation5 + $0x7c4] sm:$0xff]
    %v479 = vld [vmem:[#allocation5 + $0x7cc] sm:$0xff]
    %v480 = vld [vmem:[#allocation5 + $0x7d4] sm:$0xff]
    %v481 = vld [vmem:[#allocation5 + $0x7dc] sm:$0xf]
    %v482 = vld [vmem:[#allocation5 + $0x7e0] sm:$0xff]
    %v483 = vld [vmem:[#allocation5 + $0x7e8] sm:$0xff]
    %v484 = vld [vmem:[#allocation5 + $0x7f0] sm:$0xff]
    %v485 = vld [vmem:[#allocation5 + $0x7f8] sm:$0xf]
    %v486 = vld [vmem:[#allocation5 + $0x7fc] sm:$0xff]
    %v487 = vld [vmem:[#allocation5 + $0x804] sm:$0xff]
    %v488 = vld [vmem:[#allocation5 + $0x80c] sm:$0xff]
    %v489 = vld [vmem:[#allocation5 + $0x814] sm:$0xf]
    %v490 = vld [vmem:[#allocation5 + $0x818] sm:$0xff]
    %v491 = vld [vmem:[#allocation5 + $0x820] sm:$0xff]
    %v492 = vld [vmem:[#allocation5 + $0x828] sm:$0xff]
    %v493 = vld [vmem:[#allocation5 + $0x830] sm:$0xf]
    %v494 = vld [vmem:[#allocation5 + $0x834] sm:$0xff]
    %v495 = vld [vmem:[#allocation5 + $0x83c] sm:$0xff]
    %v496 = vld [vmem:[#allocation5 + $0x844] sm:$0xff]
    %v497 = vld [vmem:[#allocation5 + $0x84c] sm:$0xf]
    %v498 = vld [vmem:[#allocation5 + $0x850] sm:$0xff]
    %v499 = vld [vmem:[#allocation5 + $0x858] sm:$0xff]
    %v500 = vld [vmem:[#allocation5 + $0x860] sm:$0xff]
    %v501 = vld [vmem:[#allocation5 + $0x868] sm:$0xf]
    %v502 = vld [vmem:[#allocation5 + $0x86c] sm:$0xff]
    %v503 = vld [vmem:[#allocation5 + $0x874] sm:$0xff]
    %v504 = vld [vmem:[#allocation5 + $0x87c] sm:$0xff]
    %v505 = vld [vmem:[#allocation5 + $0x884] sm:$0xf]
    %v506 = vld [vmem:[#allocation5 + $0x888] sm:$0xff]
    %v507 = vld [vmem:[#allocation5 + $0x890] sm:$0xff]
    %v508 = vld [vmem:[#allocation5 + $0x898] sm:$0xff]
    %v509 = vld [vmem:[#allocation5 + $0x8a0] sm:$0xf]
    %v510 = vld [vmem:[#allocation5 + $0x8a4] sm:$0xff]
    %v511 = vld [vmem:[#allocation5 + $0x8ac] sm:$0xff]
    %v512 = vld [vmem:[#allocation5 + $0x8b4] sm:$0xff]
    %v513 = vld [vmem:[#allocation5 + $0x8bc] sm:$0xf]
    %v514 = vld [vmem:[#allocation5 + $0x8c0] sm:$0xff]
    %v515 = vld [vmem:[#allocation5 + $0x8c8] sm:$0xff]
    %v516 = vld [vmem:[#allocation5 + $0x8d0] sm:$0xff]
    %v517 = vld [vmem:[#allocation5 + $0x8d8] sm:$0xf]
    %v518 = vld [vmem:[#allocation5 + $0x8dc] sm:$0xff]
    %v519 = vld [vmem:[#allocation5 + $0x8e4] sm:$0xff]
    %v520 = vld [vmem:[#allocation5 + $0x8ec] sm:$0xff]
    %v521 = vld [vmem:[#allocation5 + $0x8f4] sm:$0xf]
    %v522 = vld [vmem:[#allocation5 + $0x8f8] sm:$0xff]
    %v523 = vld [vmem:[#allocation5 + $0x900] sm:$0xff]
    %v524 = vld [vmem:[#allocation5 + $0x908] sm:$0xff]
    %v525 = vld [vmem:[#allocation5 + $0x910] sm:$0xf]
    %v526 = vld [vmem:[#allocation5 + $0x914] sm:$0xff]
    %v527 = vld [vmem:[#allocation5 + $0x91c] sm:$0xff]
    %v528 = vld [vmem:[#allocation5 + $0x924] sm:$0xff]
    %v529 = vld [vmem:[#allocation5 + $0x92c] sm:$0xf]
    %v530 = vld [vmem:[#allocation5 + $0x930] sm:$0xff]
    %v531 = vld [vmem:[#allocation5 + $0x938] sm:$0xff]
    %v532 = vld [vmem:[#allocation5 + $0x940] sm:$0xff]
    %v533 = vld [vmem:[#allocation5 + $0x948] sm:$0xf]
    %v534 = vld [vmem:[#allocation5 + $0x94c] sm:$0xff]
    %v535 = vld [vmem:[#allocation5 + $0x954] sm:$0xff]
    %v536 = vld [vmem:[#allocation5 + $0x95c] sm:$0xff]
    %v537 = vld [vmem:[#allocation5 + $0x964] sm:$0xf]
    %v538 = vld [vmem:[#allocation5 + $0x968] sm:$0xff]
    %v539 = vld [vmem:[#allocation5 + $0x970] sm:$0xff]
    %v540 = vld [vmem:[#allocation5 + $0x978] sm:$0xff]
    %v541 = vld [vmem:[#allocation5 + $0x980] sm:$0xf]
    %v542 = vld [vmem:[#allocation5 + $0x984] sm:$0xff]
    %v543 = vld [vmem:[#allocation5 + $0x98c] sm:$0xff]
    %v544 = vld [vmem:[#allocation5 + $0x994] sm:$0xff]
    %v545 = vld [vmem:[#allocation5 + $0x99c] sm:$0xf]
    %v546 = vld [vmem:[#allocation5 + $0x9a0] sm:$0xff]
    %v547 = vld [vmem:[#allocation5 + $0x9a8] sm:$0xff]
    %v548 = vld [vmem:[#allocation5 + $0x9b0] sm:$0xff]
    %v549 = vld [vmem:[#allocation5 + $0x9b8] sm:$0xf]
    %v550 = vld [vmem:[#allocation5 + $0x9bc] sm:$0xff]
    %v551 = vld [vmem:[#allocation5 + $0x9c4] sm:$0xff]
    %v552 = vld [vmem:[#allocation5 + $0x9cc] sm:$0xff]
    %v553 = vld [vmem:[#allocation5 + $0x9d4] sm:$0xf]
    %v554 = vld [vmem:[#allocation5 + $0x9d8] sm:$0xff]
    %v555 = vld [vmem:[#allocation5 + $0x9e0] sm:$0xff]
    %v556 = vld [vmem:[#allocation5 + $0x9e8] sm:$0xff]
    %v557 = vld [vmem:[#allocation5 + $0x9f0] sm:$0xf]
    %v558 = vld [vmem:[#allocation5 + $0x9f4] sm:$0xff]
    %v559 = vld [vmem:[#allocation5 + $0x9fc] sm:$0xff]
    %v560 = vld [vmem:[#allocation5 + $0xa04] sm:$0xff]
    %v561 = vld [vmem:[#allocation5 + $0xa0c] sm:$0xf]
    %v562 = vld [vmem:[#allocation5 + $0xa10] sm:$0xff]
    %v563 = vld [vmem:[#allocation5 + $0xa18] sm:$0xff]
    %v564 = vld [vmem:[#allocation5 + $0xa20] sm:$0xff]
    %v565 = vld [vmem:[#allocation5 + $0xa28] sm:$0xf]
    %v566 = vld [vmem:[#allocation5 + $0xa2c] sm:$0xff]
    %v567 = vld [vmem:[#allocation5 + $0xa34] sm:$0xff]
    %v568 = vld [vmem:[#allocation5 + $0xa3c] sm:$0xff]
    %v569 = vld [vmem:[#allocation5 + $0xa44] sm:$0xf]
    %v570 = vld [vmem:[#allocation5 + $0xa48] sm:$0xff]
    %v571 = vld [vmem:[#allocation5 + $0xa50] sm:$0xff]
    %v572 = vld [vmem:[#allocation5 + $0xa58] sm:$0xff]
    %v573 = vld [vmem:[#allocation5 + $0xa60] sm:$0xf]
    %v574 = vld [vmem:[#allocation5 + $0xa64] sm:$0xff]
    %v575 = vld [vmem:[#allocation5 + $0xa6c] sm:$0xff]
    %v576 = vld [vmem:[#allocation5 + $0xa74] sm:$0xff]
    %v577 = vld [vmem:[#allocation5 + $0xa7c] sm:$0xf]
    %v578 = vld [vmem:[#allocation5 + $0xa80] sm:$0xff]
    %v579 = vld [vmem:[#allocation5 + $0xa88] sm:$0xff]
    %v580 = vld [vmem:[#allocation5 + $0xa90] sm:$0xff]
    %v581 = vld [vmem:[#allocation5 + $0xa98] sm:$0xf]
    %v582 = vld [vmem:[#allocation5 + $0xa9c] sm:$0xff]
    %v583 = vld [vmem:[#allocation5 + $0xaa4] sm:$0xff]
    %v584 = vld [vmem:[#allocation5 + $0xaac] sm:$0xff]
    %v585 = vld [vmem:[#allocation5 + $0xab4] sm:$0xf]
    %v586 = vld [vmem:[#allocation5 + $0xab8] sm:$0xff]
    %v587 = vld [vmem:[#allocation5 + $0xac0] sm:$0xff]
    %v588 = vld [vmem:[#allocation5 + $0xac8] sm:$0xff]
    %v589 = vld [vmem:[#allocation5 + $0xad0] sm:$0xf]
    %v590 = vld [vmem:[#allocation5 + $0xad4] sm:$0xff]
    %v591 = vld [vmem:[#allocation5 + $0xadc] sm:$0xff]
    %v592 = vld [vmem:[#allocation5 + $0xae4] sm:$0xff]
    %v593 = vld [vmem:[#allocation5 + $0xaec] sm:$0xf]
    %v594 = vld [vmem:[#allocation5 + $0xaf0] sm:$0xff]
    %v595 = vld [vmem:[#allocation5 + $0xaf8] sm:$0xff]
    %v596 = vld [vmem:[#allocation5 + $0xb00] sm:$0xff]
    %v597 = vld [vmem:[#allocation5 + $0xb08] sm:$0xf]
    %v598 = vld [vmem:[#allocation5 + $0xb0c] sm:$0xff]
    %v599 = vld [vmem:[#allocation5 + $0xb14] sm:$0xff]
    %v600 = vld [vmem:[#allocation5 + $0xb1c] sm:$0xff]
    %v601 = vld [vmem:[#allocation5 + $0xb24] sm:$0xf]
    %v602 = vld [vmem:[#allocation5 + $0xb28] sm:$0xff]
    %v603 = vld [vmem:[#allocation5 + $0xb30] sm:$0xff]
    %v604 = vld [vmem:[#allocation5 + $0xb38] sm:$0xff]
    %v605 = vld [vmem:[#allocation5 + $0xb40] sm:$0xf]
    %v606 = vld [vmem:[#allocation5 + $0xb44] sm:$0xff]
    %v607 = vld [vmem:[#allocation5 + $0xb4c] sm:$0xff]
    %v608 = vld [vmem:[#allocation5 + $0xb54] sm:$0xff]
    %v609 = vld [vmem:[#allocation5 + $0xb5c] sm:$0xf]
    %v610 = vld [vmem:[#allocation5 + $0xb60] sm:$0xff]
    %v611 = vld [vmem:[#allocation5 + $0xb68] sm:$0xff]
    %v612 = vld [vmem:[#allocation5 + $0xb70] sm:$0xff]
    %v613 = vld [vmem:[#allocation5 + $0xb78] sm:$0xf]
    %v614 = vld [vmem:[#allocation5 + $0xb7c] sm:$0xff]
    %v615 = vld [vmem:[#allocation5 + $0xb84] sm:$0xff]
    %v616 = vld [vmem:[#allocation5 + $0xb8c] sm:$0xff]
    %v617 = vld [vmem:[#allocation5 + $0xb94] sm:$0xf]
    %v618 = vld [vmem:[#allocation5 + $0xb98] sm:$0xff]
    %v619 = vld [vmem:[#allocation5 + $0xba0] sm:$0xff]
    %v620 = vld [vmem:[#allocation5 + $0xba8] sm:$0xff]
    %v621 = vld [vmem:[#allocation5 + $0xbb0] sm:$0xf]
    %v622 = vld [vmem:[#allocation5 + $0xbb4] sm:$0xff]
    %v623 = vld [vmem:[#allocation5 + $0xbbc] sm:$0xff]
    %v624 = vld [vmem:[#allocation5 + $0xbc4] sm:$0xff]
    %v625 = vld [vmem:[#allocation5 + $0xbcc] sm:$0xf]
    %v626 = vld [vmem:[#allocation5 + $0xbd0] sm:$0xff]
    %v627 = vld [vmem:[#allocation5 + $0xbd8] sm:$0xff]
    %v628 = vld [vmem:[#allocation5 + $0xbe0] sm:$0xff]
    %v629 = vld [vmem:[#allocation5 + $0xbe8] sm:$0xf]
    %v630 = vld [vmem:[#allocation5 + $0xbec] sm:$0xff]
    %v631 = vld [vmem:[#allocation5 + $0xbf4] sm:$0xff]
    %v632 = vld [vmem:[#allocation5 + $0xbfc] sm:$0xff]
    %v633 = vld [vmem:[#allocation5 + $0xc04] sm:$0xf]
    %v634 = vld [vmem:[#allocation5 + $0xc08] sm:$0xff]
    %v635 = vld [vmem:[#allocation5 + $0xc10] sm:$0xff]
    %v636 = vld [vmem:[#allocation5 + $0xc18] sm:$0xff]
    %v637 = vld [vmem:[#allocation5 + $0xc20] sm:$0xf]
    %v638 = vld [vmem:[#allocation5 + $0xc24] sm:$0xff]
    %v639 = vld [vmem:[#allocation5 + $0xc2c] sm:$0xff]
    %v640 = vld [vmem:[#allocation5 + $0xc34] sm:$0xff]
    %v641 = vld [vmem:[#allocation5 + $0xc3c] sm:$0xf]
    %v642 = vld [vmem:[#allocation7] sm:$0xff]
    %v644 = vperm.slane %v642, 0
    %v645 = vperm.slane %v642, 1
    %v646 = vperm.slane %v642, 2
    %v647 = vperm.slane %v642, 3
    %v648 = vperm.slane %v642, 4
    %v649 = vperm.slane %v642, 5
    %v650 = vperm.slane %v642, 6
    %v722 = vunpack.c.l.b16 %v130
    %v723 = vunpack.c.h.b16 %v130
    %v724 = vunpack.c.l.b16 %v131
    %v725 = vunpack.c.h.b16 %v131
    %v726 = vunpack.c.l.b16 %v132
    %v727 = vunpack.c.h.b16 %v132
    %v728 = vunpack.c.l.b16 %v133
    %v729 = vunpack.c.l.b16 %v134
    %v730 = vunpack.c.h.b16 %v134
    %v731 = vunpack.c.l.b16 %v135
    %v732 = vunpack.c.h.b16 %v135
    %v733 = vunpack.c.l.b16 %v136
    %v734 = vunpack.c.h.b16 %v136
    %v735 = vunpack.c.l.b16 %v137
    %v736 = vunpack.c.l.b16 %v138
    %v737 = vunpack.c.h.b16 %v138
    %v738 = vunpack.c.l.b16 %v139
    %v739 = vunpack.c.h.b16 %v139
    %v740 = vunpack.c.l.b16 %v140
    %v741 = vunpack.c.h.b16 %v140
    %v742 = vunpack.c.l.b16 %v141
    %v743 = vunpack.c.l.b16 %v142
    %v744 = vunpack.c.h.b16 %v142
    %v745 = vunpack.c.l.b16 %v143
    %v746 = vunpack.c.h.b16 %v143
    %v747 = vunpack.c.l.b16 %v144
    %v748 = vunpack.c.h.b16 %v144
    %v749 = vunpack.c.l.b16 %v145
    %v750 = vunpack.c.l.b16 %v146
    %v751 = vunpack.c.h.b16 %v146
    %v752 = vunpack.c.l.b16 %v147
    %v753 = vunpack.c.h.b16 %v147
    %v754 = vunpack.c.l.b16 %v148
    %v755 = vunpack.c.h.b16 %v148
    %v756 = vunpack.c.l.b16 %v149
    %v757 = vunpack.c.l.b16 %v150
    %v758 = vunpack.c.h.b16 %v150
    %v759 = vunpack.c.l.b16 %v151
    %v760 = vunpack.c.h.b16 %v151
    %v761 = vunpack.c.l.b16 %v152
    %v762 = vunpack.c.h.b16 %v152
    %v763 = vunpack.c.l.b16 %v153
    %v764 = vunpack.c.l.b16 %v154
    %v765 = vunpack.c.h.b16 %v154
    %v766 = vunpack.c.l.b16 %v155
    %v767 = vunpack.c.h.b16 %v155
    %v768 = vunpack.c.l.b16 %v156
    %v769 = vunpack.c.h.b16 %v156
    %v770 = vunpack.c.l.b16 %v157
    %v771 = vunpack.c.l.b16 %v158
    %v772 = vunpack.c.h.b16 %v158
    %v773 = vunpack.c.l.b16 %v159
    %v774 = vunpack.c.h.b16 %v159
    %v775 = vunpack.c.l.b16 %v160
    %v776 = vunpack.c.h.b16 %v160
    %v777 = vunpack.c.l.b16 %v161
    %v778 = vunpack.c.l.b16 %v162
    %v779 = vunpack.c.h.b16 %v162
    %v780 = vunpack.c.l.b16 %v163
    %v781 = vunpack.c.h.b16 %v163
    %v782 = vunpack.c.l.b16 %v164
    %v783 = vunpack.c.h.b16 %v164
    %v784 = vunpack.c.l.b16 %v165
    %v785 = vunpack.c.l.b16 %v166
    %v786 = vunpack.c.h.b16 %v166
    %v787 = vunpack.c.l.b16 %v167
    %v788 = vunpack.c.h.b16 %v167
    %v789 = vunpack.c.l.b16 %v168
    %v790 = vunpack.c.h.b16 %v168
    %v791 = vunpack.c.l.b16 %v169
    %v792 = vunpack.c.l.b16 %v170
    %v793 = vunpack.c.h.b16 %v170
    %v794 = vunpack.c.l.b16 %v171
    %v795 = vunpack.c.h.b16 %v171
    %v796 = vunpack.c.l.b16 %v172
    %v797 = vunpack.c.h.b16 %v172
    %v798 = vunpack.c.l.b16 %v173
    %v799 = vunpack.c.l.b16 %v174
    %v800 = vunpack.c.h.b16 %v174
    %v801 = vunpack.c.l.b16 %v175
    %v802 = vunpack.c.h.b16 %v175
    %v803 = vunpack.c.l.b16 %v176
    %v804 = vunpack.c.h.b16 %v176
    %v805 = vunpack.c.l.b16 %v177
    %v806 = vunpack.c.l.b16 %v178
    %v807 = vunpack.c.h.b16 %v178
    %v808 = vunpack.c.l.b16 %v179
    %v809 = vunpack.c.h.b16 %v179
    %v810 = vunpack.c.l.b16 %v180
    %v811 = vunpack.c.h.b16 %v180
    %v812 = vunpack.c.l.b16 %v181
    %v813 = vunpack.c.l.b16 %v182
    %v814 = vunpack.c.h.b16 %v182
    %v815 = vunpack.c.l.b16 %v183
    %v816 = vunpack.c.h.b16 %v183
    %v817 = vunpack.c.l.b16 %v184
    %v818 = vunpack.c.h.b16 %v184
    %v819 = vunpack.c.l.b16 %v185
    %v820 = vunpack.c.l.b16 %v186
    %v821 = vunpack.c.h.b16 %v186
    %v822 = vunpack.c.l.b16 %v187
    %v823 = vunpack.c.h.b16 %v187
    %v824 = vunpack.c.l.b16 %v188
    %v825 = vunpack.c.h.b16 %v188
    %v826 = vunpack.c.l.b16 %v189
    %v827 = vunpack.c.l.b16 %v190
    %v828 = vunpack.c.h.b16 %v190
    %v829 = vunpack.c.l.b16 %v191
    %v830 = vunpack.c.h.b16 %v191
    %v831 = vunpack.c.l.b16 %v192
    %v832 = vunpack.c.h.b16 %v192
    %v833 = vunpack.c.l.b16 %v193
    %v834 = vpack.c.b16 %v729, %v722
    %v835 = vpack.c.b16 %v730, %v723
    %v836 = vpack.c.b16 %v731, %v724
    %v837 = vpack.c.b16 %v732, %v725
    %v838 = vpack.c.b16 %v733, %v726
    %v839 = vpack.c.b16 %v734, %v727
    %v840 = vpack.c.b16 %v735, %v728
    %v841 = vpack.c.b16 %v743, %v736
    %v842 = vpack.c.b16 %v744, %v737
    %v843 = vpack.c.b16 %v745, %v738
    %v844 = vpack.c.b16 %v746, %v739
    %v845 = vpack.c.b16 %v747, %v740
    %v846 = vpack.c.b16 %v748, %v741
    %v847 = vpack.c.b16 %v749, %v742
    %v848 = vpack.c.b16 %v757, %v750
    %v849 = vpack.c.b16 %v758, %v751
    %v850 = vpack.c.b16 %v759, %v752
    %v851 = vpack.c.b16 %v760, %v753
    %v852 = vpack.c.b16 %v761, %v754
    %v853 = vpack.c.b16 %v762, %v755
    %v854 = vpack.c.b16 %v763, %v756
    %v855 = vpack.c.b16 %v771, %v764
    %v856 = vpack.c.b16 %v772, %v765
    %v857 = vpack.c.b16 %v773, %v766
    %v858 = vpack.c.b16 %v774, %v767
    %v859 = vpack.c.b16 %v775, %v768
    %v860 = vpack.c.b16 %v776, %v769
    %v861 = vpack.c.b16 %v777, %v770
    %v862 = vpack.c.b16 %v785, %v778
    %v863 = vpack.c.b16 %v786, %v779
    %v864 = vpack.c.b16 %v787, %v780
    %v865 = vpack.c.b16 %v788, %v781
    %v866 = vpack.c.b16 %v789, %v782
    %v867 = vpack.c.b16 %v790, %v783
    %v868 = vpack.c.b16 %v791, %v784
    %v869 = vpack.c.b16 %v799, %v792
    %v870 = vpack.c.b16 %v800, %v793
    %v871 = vpack.c.b16 %v801, %v794
    %v872 = vpack.c.b16 %v802, %v795
    %v873 = vpack.c.b16 %v803, %v796
    %v874 = vpack.c.b16 %v804, %v797
    %v875 = vpack.c.b16 %v805, %v798
    %v876 = vpack.c.b16 %v813, %v806
    %v877 = vpack.c.b16 %v814, %v807
    %v878 = vpack.c.b16 %v815, %v808
    %v879 = vpack.c.b16 %v816, %v809
    %v880 = vpack.c.b16 %v817, %v810
    %v881 = vpack.c.b16 %v818, %v811
    %v882 = vpack.c.b16 %v819, %v812
    %v883 = vpack.c.b16 %v827, %v820
    %v884 = vpack.c.b16 %v828, %v821
    %v885 = vpack.c.b16 %v829, %v822
    %v886 = vpack.c.b16 %v830, %v823
    %v887 = vpack.c.b16 %v831, %v824
    %v888 = vpack.c.b16 %v832, %v825
    %v889 = vpack.c.b16 %v833, %v826
    %v1394 = vunpack.c.l.b16 %v194
    %v1395 = vunpack.c.h.b16 %v194
    %v1396 = vunpack.c.l.b16 %v195
    %v1397 = vunpack.c.h.b16 %v195
    %v1398 = vunpack.c.l.b16 %v196
    %v1399 = vunpack.c.h.b16 %v196
    %v1400 = vunpack.c.l.b16 %v197
    %v1401 = vunpack.c.l.b16 %v198
    %v1402 = vunpack.c.h.b16 %v198
    %v1403 = vunpack.c.l.b16 %v199
    %v1404 = vunpack.c.h.b16 %v199
    %v1405 = vunpack.c.l.b16 %v200
    %v1406 = vunpack.c.h.b16 %v200
    %v1407 = vunpack.c.l.b16 %v201
    %v1408 = vunpack.c.l.b16 %v202
    %v1409 = vunpack.c.h.b16 %v202
    %v1410 = vunpack.c.l.b16 %v203
    %v1411 = vunpack.c.h.b16 %v203
    %v1412 = vunpack.c.l.b16 %v204
    %v1413 = vunpack.c.h.b16 %v204
    %v1414 = vunpack.c.l.b16 %v205
    %v1415 = vunpack.c.l.b16 %v206
    %v1416 = vunpack.c.h.b16 %v206
    %v1417 = vunpack.c.l.b16 %v207
    %v1418 = vunpack.c.h.b16 %v207
    %v1419 = vunpack.c.l.b16 %v208
    %v1420 = vunpack.c.h.b16 %v208
    %v1421 = vunpack.c.l.b16 %v209
    %v1422 = vunpack.c.l.b16 %v210
    %v1423 = vunpack.c.h.b16 %v210
    %v1424 = vunpack.c.l.b16 %v211
    %v1425 = vunpack.c.h.b16 %v211
    %v1426 = vunpack.c.l.b16 %v212
    %v1427 = vunpack.c.h.b16 %v212
    %v1428 = vunpack.c.l.b16 %v213
    %v1429 = vunpack.c.l.b16 %v214
    %v1430 = vunpack.c.h.b16 %v214
    %v1431 = vunpack.c.l.b16 %v215
    %v1432 = vunpack.c.h.b16 %v215
    %v1433 = vunpack.c.l.b16 %v216
    %v1434 = vunpack.c.h.b16 %v216
    %v1435 = vunpack.c.l.b16 %v217
    %v1436 = vunpack.c.l.b16 %v218
    %v1437 = vunpack.c.h.b16 %v218
    %v1438 = vunpack.c.l.b16 %v219
    %v1439 = vunpack.c.h.b16 %v219
    %v1440 = vunpack.c.l.b16 %v220
    %v1441 = vunpack.c.h.b16 %v220
    %v1442 = vunpack.c.l.b16 %v221
    %v1443 = vunpack.c.l.b16 %v222
    %v1444 = vunpack.c.h.b16 %v222
    %v1445 = vunpack.c.l.b16 %v223
    %v1446 = vunpack.c.h.b16 %v223
    %v1447 = vunpack.c.l.b16 %v224
    %v1448 = vunpack.c.h.b16 %v224
    %v1449 = vunpack.c.l.b16 %v225
    %v1450 = vunpack.c.l.b16 %v226
    %v1451 = vunpack.c.h.b16 %v226
    %v1452 = vunpack.c.l.b16 %v227
    %v1453 = vunpack.c.h.b16 %v227
    %v1454 = vunpack.c.l.b16 %v228
    %v1455 = vunpack.c.h.b16 %v228
    %v1456 = vunpack.c.l.b16 %v229
    %v1457 = vunpack.c.l.b16 %v230
    %v1458 = vunpack.c.h.b16 %v230
    %v1459 = vunpack.c.l.b16 %v231
    %v1460 = vunpack.c.h.b16 %v231
    %v1461 = vunpack.c.l.b16 %v232
    %v1462 = vunpack.c.h.b16 %v232
    %v1463 = vunpack.c.l.b16 %v233
    %v1464 = vunpack.c.l.b16 %v234
    %v1465 = vunpack.c.h.b16 %v234
    %v1466 = vunpack.c.l.b16 %v235
    %v1467 = vunpack.c.h.b16 %v235
    %v1468 = vunpack.c.l.b16 %v236
    %v1469 = vunpack.c.h.b16 %v236
    %v1470 = vunpack.c.l.b16 %v237
    %v1471 = vunpack.c.l.b16 %v238
    %v1472 = vunpack.c.h.b16 %v238
    %v1473 = vunpack.c.l.b16 %v239
    %v1474 = vunpack.c.h.b16 %v239
    %v1475 = vunpack.c.l.b16 %v240
    %v1476 = vunpack.c.h.b16 %v240
    %v1477 = vunpack.c.l.b16 %v241
    %v1478 = vunpack.c.l.b16 %v242
    %v1479 = vunpack.c.h.b16 %v242
    %v1480 = vunpack.c.l.b16 %v243
    %v1481 = vunpack.c.h.b16 %v243
    %v1482 = vunpack.c.l.b16 %v244
    %v1483 = vunpack.c.h.b16 %v244
    %v1484 = vunpack.c.l.b16 %v245
    %v1485 = vunpack.c.l.b16 %v246
    %v1486 = vunpack.c.h.b16 %v246
    %v1487 = vunpack.c.l.b16 %v247
    %v1488 = vunpack.c.h.b16 %v247
    %v1489 = vunpack.c.l.b16 %v248
    %v1490 = vunpack.c.h.b16 %v248
    %v1491 = vunpack.c.l.b16 %v249
    %v1492 = vunpack.c.l.b16 %v250
    %v1493 = vunpack.c.h.b16 %v250
    %v1494 = vunpack.c.l.b16 %v251
    %v1495 = vunpack.c.h.b16 %v251
    %v1496 = vunpack.c.l.b16 %v252
    %v1497 = vunpack.c.h.b16 %v252
    %v1498 = vunpack.c.l.b16 %v253
    %v1499 = vunpack.c.l.b16 %v254
    %v1500 = vunpack.c.h.b16 %v254
    %v1501 = vunpack.c.l.b16 %v255
    %v1502 = vunpack.c.h.b16 %v255
    %v1503 = vunpack.c.l.b16 %v256
    %v1504 = vunpack.c.h.b16 %v256
    %v1505 = vunpack.c.l.b16 %v257
    %v1506 = vunpack.c.l.b16 %v258
    %v1507 = vunpack.c.h.b16 %v258
    %v1508 = vunpack.c.l.b16 %v259
    %v1509 = vunpack.c.h.b16 %v259
    %v1510 = vunpack.c.l.b16 %v260
    %v1511 = vunpack.c.h.b16 %v260
    %v1512 = vunpack.c.l.b16 %v261
    %v1513 = vunpack.c.l.b16 %v262
    %v1514 = vunpack.c.h.b16 %v262
    %v1515 = vunpack.c.l.b16 %v263
    %v1516 = vunpack.c.h.b16 %v263
    %v1517 = vunpack.c.l.b16 %v264
    %v1518 = vunpack.c.h.b16 %v264
    %v1519 = vunpack.c.l.b16 %v265
    %v1520 = vunpack.c.l.b16 %v266
    %v1521 = vunpack.c.h.b16 %v266
    %v1522 = vunpack.c.l.b16 %v267
    %v1523 = vunpack.c.h.b16 %v267
    %v1524 = vunpack.c.l.b16 %v268
    %v1525 = vunpack.c.h.b16 %v268
    %v1526 = vunpack.c.l.b16 %v269
    %v1527 = vunpack.c.l.b16 %v270
    %v1528 = vunpack.c.h.b16 %v270
    %v1529 = vunpack.c.l.b16 %v271
    %v1530 = vunpack.c.h.b16 %v271
    %v1531 = vunpack.c.l.b16 %v272
    %v1532 = vunpack.c.h.b16 %v272
    %v1533 = vunpack.c.l.b16 %v273
    %v1534 = vunpack.c.l.b16 %v274
    %v1535 = vunpack.c.h.b16 %v274
    %v1536 = vunpack.c.l.b16 %v275
    %v1537 = vunpack.c.h.b16 %v275
    %v1538 = vunpack.c.l.b16 %v276
    %v1539 = vunpack.c.h.b16 %v276
    %v1540 = vunpack.c.l.b16 %v277
    %v1541 = vunpack.c.l.b16 %v278
    %v1542 = vunpack.c.h.b16 %v278
    %v1543 = vunpack.c.l.b16 %v279
    %v1544 = vunpack.c.h.b16 %v279
    %v1545 = vunpack.c.l.b16 %v280
    %v1546 = vunpack.c.h.b16 %v280
    %v1547 = vunpack.c.l.b16 %v281
    %v1548 = vunpack.c.l.b16 %v282
    %v1549 = vunpack.c.h.b16 %v282
    %v1550 = vunpack.c.l.b16 %v283
    %v1551 = vunpack.c.h.b16 %v283
    %v1552 = vunpack.c.l.b16 %v284
    %v1553 = vunpack.c.h.b16 %v284
    %v1554 = vunpack.c.l.b16 %v285
    %v1555 = vunpack.c.l.b16 %v286
    %v1556 = vunpack.c.h.b16 %v286
    %v1557 = vunpack.c.l.b16 %v287
    %v1558 = vunpack.c.h.b16 %v287
    %v1559 = vunpack.c.l.b16 %v288
    %v1560 = vunpack.c.h.b16 %v288
    %v1561 = vunpack.c.l.b16 %v289
    %v1562 = vunpack.c.l.b16 %v290
    %v1563 = vunpack.c.h.b16 %v290
    %v1564 = vunpack.c.l.b16 %v291
    %v1565 = vunpack.c.h.b16 %v291
    %v1566 = vunpack.c.l.b16 %v292
    %v1567 = vunpack.c.h.b16 %v292
    %v1568 = vunpack.c.l.b16 %v293
    %v1569 = vunpack.c.l.b16 %v294
    %v1570 = vunpack.c.h.b16 %v294
    %v1571 = vunpack.c.l.b16 %v295
    %v1572 = vunpack.c.h.b16 %v295
    %v1573 = vunpack.c.l.b16 %v296
    %v1574 = vunpack.c.h.b16 %v296
    %v1575 = vunpack.c.l.b16 %v297
    %v1576 = vunpack.c.l.b16 %v298
    %v1577 = vunpack.c.h.b16 %v298
    %v1578 = vunpack.c.l.b16 %v299
    %v1579 = vunpack.c.h.b16 %v299
    %v1580 = vunpack.c.l.b16 %v300
    %v1581 = vunpack.c.h.b16 %v300
    %v1582 = vunpack.c.l.b16 %v301
    %v1583 = vunpack.c.l.b16 %v302
    %v1584 = vunpack.c.h.b16 %v302
    %v1585 = vunpack.c.l.b16 %v303
    %v1586 = vunpack.c.h.b16 %v303
    %v1587 = vunpack.c.l.b16 %v304
    %v1588 = vunpack.c.h.b16 %v304
    %v1589 = vunpack.c.l.b16 %v305
    %v1590 = vunpack.c.l.b16 %v306
    %v1591 = vunpack.c.h.b16 %v306
    %v1592 = vunpack.c.l.b16 %v307
    %v1593 = vunpack.c.h.b16 %v307
    %v1594 = vunpack.c.l.b16 %v308
    %v1595 = vunpack.c.h.b16 %v308
    %v1596 = vunpack.c.l.b16 %v309
    %v1597 = vunpack.c.l.b16 %v310
    %v1598 = vunpack.c.h.b16 %v310
    %v1599 = vunpack.c.l.b16 %v311
    %v1600 = vunpack.c.h.b16 %v311
    %v1601 = vunpack.c.l.b16 %v312
    %v1602 = vunpack.c.h.b16 %v312
    %v1603 = vunpack.c.l.b16 %v313
    %v1604 = vunpack.c.l.b16 %v314
    %v1605 = vunpack.c.h.b16 %v314
    %v1606 = vunpack.c.l.b16 %v315
    %v1607 = vunpack.c.h.b16 %v315
    %v1608 = vunpack.c.l.b16 %v316
    %v1609 = vunpack.c.h.b16 %v316
    %v1610 = vunpack.c.l.b16 %v317
    %v1611 = vunpack.c.l.b16 %v318
    %v1612 = vunpack.c.h.b16 %v318
    %v1613 = vunpack.c.l.b16 %v319
    %v1614 = vunpack.c.h.b16 %v319
    %v1615 = vunpack.c.l.b16 %v320
    %v1616 = vunpack.c.h.b16 %v320
    %v1617 = vunpack.c.l.b16 %v321
    %v1618 = vunpack.c.l.b16 %v322
    %v1619 = vunpack.c.h.b16 %v322
    %v1620 = vunpack.c.l.b16 %v323
    %v1621 = vunpack.c.h.b16 %v323
    %v1622 = vunpack.c.l.b16 %v324
    %v1623 = vunpack.c.h.b16 %v324
    %v1624 = vunpack.c.l.b16 %v325
    %v1625 = vunpack.c.l.b16 %v326
    %v1626 = vunpack.c.h.b16 %v326
    %v1627 = vunpack.c.l.b16 %v327
    %v1628 = vunpack.c.h.b16 %v327
    %v1629 = vunpack.c.l.b16 %v328
    %v1630 = vunpack.c.h.b16 %v328
    %v1631 = vunpack.c.l.b16 %v329
    %v1632 = vunpack.c.l.b16 %v330
    %v1633 = vunpack.c.h.b16 %v330
    %v1634 = vunpack.c.l.b16 %v331
    %v1635 = vunpack.c.h.b16 %v331
    %v1636 = vunpack.c.l.b16 %v332
    %v1637 = vunpack.c.h.b16 %v332
    %v1638 = vunpack.c.l.b16 %v333
    %v1639 = vunpack.c.l.b16 %v334
    %v1640 = vunpack.c.h.b16 %v334
    %v1641 = vunpack.c.l.b16 %v335
    %v1642 = vunpack.c.h.b16 %v335
    %v1643 = vunpack.c.l.b16 %v336
    %v1644 = vunpack.c.h.b16 %v336
    %v1645 = vunpack.c.l.b16 %v337
    %v1646 = vunpack.c.l.b16 %v338
    %v1647 = vunpack.c.h.b16 %v338
    %v1648 = vunpack.c.l.b16 %v339
    %v1649 = vunpack.c.h.b16 %v339
    %v1650 = vunpack.c.l.b16 %v340
    %v1651 = vunpack.c.h.b16 %v340
    %v1652 = vunpack.c.l.b16 %v341
    %v1653 = vunpack.c.l.b16 %v342
    %v1654 = vunpack.c.h.b16 %v342
    %v1655 = vunpack.c.l.b16 %v343
    %v1656 = vunpack.c.h.b16 %v343
    %v1657 = vunpack.c.l.b16 %v344
    %v1658 = vunpack.c.h.b16 %v344
    %v1659 = vunpack.c.l.b16 %v345
    %v1660 = vunpack.c.l.b16 %v346
    %v1661 = vunpack.c.h.b16 %v346
    %v1662 = vunpack.c.l.b16 %v347
    %v1663 = vunpack.c.h.b16 %v347
    %v1664 = vunpack.c.l.b16 %v348
    %v1665 = vunpack.c.h.b16 %v348
    %v1666 = vunpack.c.l.b16 %v349
    %v1667 = vunpack.c.l.b16 %v350
    %v1668 = vunpack.c.h.b16 %v350
    %v1669 = vunpack.c.l.b16 %v351
    %v1670 = vunpack.c.h.b16 %v351
    %v1671 = vunpack.c.l.b16 %v352
    %v1672 = vunpack.c.h.b16 %v352
    %v1673 = vunpack.c.l.b16 %v353
    %v1674 = vunpack.c.l.b16 %v354
    %v1675 = vunpack.c.h.b16 %v354
    %v1676 = vunpack.c.l.b16 %v355
    %v1677 = vunpack.c.h.b16 %v355
    %v1678 = vunpack.c.l.b16 %v356
    %v1679 = vunpack.c.h.b16 %v356
    %v1680 = vunpack.c.l.b16 %v357
    %v1681 = vunpack.c.l.b16 %v358
    %v1682 = vunpack.c.h.b16 %v358
    %v1683 = vunpack.c.l.b16 %v359
    %v1684 = vunpack.c.h.b16 %v359
    %v1685 = vunpack.c.l.b16 %v360
    %v1686 = vunpack.c.h.b16 %v360
    %v1687 = vunpack.c.l.b16 %v361
    %v1688 = vunpack.c.l.b16 %v362
    %v1689 = vunpack.c.h.b16 %v362
    %v1690 = vunpack.c.l.b16 %v363
    %v1691 = vunpack.c.h.b16 %v363
    %v1692 = vunpack.c.l.b16 %v364
    %v1693 = vunpack.c.h.b16 %v364
    %v1694 = vunpack.c.l.b16 %v365
    %v1695 = vunpack.c.l.b16 %v366
    %v1696 = vunpack.c.h.b16 %v366
    %v1697 = vunpack.c.l.b16 %v367
    %v1698 = vunpack.c.h.b16 %v367
    %v1699 = vunpack.c.l.b16 %v368
    %v1700 = vunpack.c.h.b16 %v368
    %v1701 = vunpack.c.l.b16 %v369
    %v1702 = vunpack.c.l.b16 %v370
    %v1703 = vunpack.c.h.b16 %v370
    %v1704 = vunpack.c.l.b16 %v371
    %v1705 = vunpack.c.h.b16 %v371
    %v1706 = vunpack.c.l.b16 %v372
    %v1707 = vunpack.c.h.b16 %v372
    %v1708 = vunpack.c.l.b16 %v373
    %v1709 = vunpack.c.l.b16 %v374
    %v1710 = vunpack.c.h.b16 %v374
    %v1711 = vunpack.c.l.b16 %v375
    %v1712 = vunpack.c.h.b16 %v375
    %v1713 = vunpack.c.l.b16 %v376
    %v1714 = vunpack.c.h.b16 %v376
    %v1715 = vunpack.c.l.b16 %v377
    %v1716 = vunpack.c.l.b16 %v378
    %v1717 = vunpack.c.h.b16 %v378
    %v1718 = vunpack.c.l.b16 %v379
    %v1719 = vunpack.c.h.b16 %v379
    %v1720 = vunpack.c.l.b16 %v380
    %v1721 = vunpack.c.h.b16 %v380
    %v1722 = vunpack.c.l.b16 %v381
    %v1723 = vunpack.c.l.b16 %v382
    %v1724 = vunpack.c.h.b16 %v382
    %v1725 = vunpack.c.l.b16 %v383
    %v1726 = vunpack.c.h.b16 %v383
    %v1727 = vunpack.c.l.b16 %v384
    %v1728 = vunpack.c.h.b16 %v384
    %v1729 = vunpack.c.l.b16 %v385
    %v1730 = vunpack.c.l.b16 %v386
    %v1731 = vunpack.c.h.b16 %v386
    %v1732 = vunpack.c.l.b16 %v387
    %v1733 = vunpack.c.h.b16 %v387
    %v1734 = vunpack.c.l.b16 %v388
    %v1735 = vunpack.c.h.b16 %v388
    %v1736 = vunpack.c.l.b16 %v389
    %v1737 = vunpack.c.l.b16 %v390
    %v1738 = vunpack.c.h.b16 %v390
    %v1739 = vunpack.c.l.b16 %v391
    %v1740 = vunpack.c.h.b16 %v391
    %v1741 = vunpack.c.l.b16 %v392
    %v1742 = vunpack.c.h.b16 %v392
    %v1743 = vunpack.c.l.b16 %v393
    %v1744 = vunpack.c.l.b16 %v394
    %v1745 = vunpack.c.h.b16 %v394
    %v1746 = vunpack.c.l.b16 %v395
    %v1747 = vunpack.c.h.b16 %v395
    %v1748 = vunpack.c.l.b16 %v396
    %v1749 = vunpack.c.h.b16 %v396
    %v1750 = vunpack.c.l.b16 %v397
    %v1751 = vunpack.c.l.b16 %v398
    %v1752 = vunpack.c.h.b16 %v398
    %v1753 = vunpack.c.l.b16 %v399
    %v1754 = vunpack.c.h.b16 %v399
    %v1755 = vunpack.c.l.b16 %v400
    %v1756 = vunpack.c.h.b16 %v400
    %v1757 = vunpack.c.l.b16 %v401
    %v1758 = vunpack.c.l.b16 %v402
    %v1759 = vunpack.c.h.b16 %v402
    %v1760 = vunpack.c.l.b16 %v403
    %v1761 = vunpack.c.h.b16 %v403
    %v1762 = vunpack.c.l.b16 %v404
    %v1763 = vunpack.c.h.b16 %v404
    %v1764 = vunpack.c.l.b16 %v405
    %v1765 = vunpack.c.l.b16 %v406
    %v1766 = vunpack.c.h.b16 %v406
    %v1767 = vunpack.c.l.b16 %v407
    %v1768 = vunpack.c.h.b16 %v407
    %v1769 = vunpack.c.l.b16 %v408
    %v1770 = vunpack.c.h.b16 %v408
    %v1771 = vunpack.c.l.b16 %v409
    %v1772 = vunpack.c.l.b16 %v410
    %v1773 = vunpack.c.h.b16 %v410
    %v1774 = vunpack.c.l.b16 %v411
    %v1775 = vunpack.c.h.b16 %v411
    %v1776 = vunpack.c.l.b16 %v412
    %v1777 = vunpack.c.h.b16 %v412
    %v1778 = vunpack.c.l.b16 %v413
    %v1779 = vunpack.c.l.b16 %v414
    %v1780 = vunpack.c.h.b16 %v414
    %v1781 = vunpack.c.l.b16 %v415
    %v1782 = vunpack.c.h.b16 %v415
    %v1783 = vunpack.c.l.b16 %v416
    %v1784 = vunpack.c.h.b16 %v416
    %v1785 = vunpack.c.l.b16 %v417
    %v1786 = vunpack.c.l.b16 %v418
    %v1787 = vunpack.c.h.b16 %v418
    %v1788 = vunpack.c.l.b16 %v419
    %v1789 = vunpack.c.h.b16 %v419
    %v1790 = vunpack.c.l.b16 %v420
    %v1791 = vunpack.c.h.b16 %v420
    %v1792 = vunpack.c.l.b16 %v421
    %v1793 = vunpack.c.l.b16 %v422
    %v1794 = vunpack.c.h.b16 %v422
    %v1795 = vunpack.c.l.b16 %v423
    %v1796 = vunpack.c.h.b16 %v423
    %v1797 = vunpack.c.l.b16 %v424
    %v1798 = vunpack.c.h.b16 %v424
    %v1799 = vunpack.c.l.b16 %v425
    %v1800 = vunpack.c.l.b16 %v426
    %v1801 = vunpack.c.h.b16 %v426
    %v1802 = vunpack.c.l.b16 %v427
    %v1803 = vunpack.c.h.b16 %v427
    %v1804 = vunpack.c.l.b16 %v428
    %v1805 = vunpack.c.h.b16 %v428
    %v1806 = vunpack.c.l.b16 %v429
    %v1807 = vunpack.c.l.b16 %v430
    %v1808 = vunpack.c.h.b16 %v430
    %v1809 = vunpack.c.l.b16 %v431
    %v1810 = vunpack.c.h.b16 %v431
    %v1811 = vunpack.c.l.b16 %v432
    %v1812 = vunpack.c.h.b16 %v432
    %v1813 = vunpack.c.l.b16 %v433
    %v1814 = vunpack.c.l.b16 %v434
    %v1815 = vunpack.c.h.b16 %v434
    %v1816 = vunpack.c.l.b16 %v435
    %v1817 = vunpack.c.h.b16 %v435
    %v1818 = vunpack.c.l.b16 %v436
    %v1819 = vunpack.c.h.b16 %v436
    %v1820 = vunpack.c.l.b16 %v437
    %v1821 = vunpack.c.l.b16 %v438
    %v1822 = vunpack.c.h.b16 %v438
    %v1823 = vunpack.c.l.b16 %v439
    %v1824 = vunpack.c.h.b16 %v439
    %v1825 = vunpack.c.l.b16 %v440
    %v1826 = vunpack.c.h.b16 %v440
    %v1827 = vunpack.c.l.b16 %v441
    %v1828 = vunpack.c.l.b16 %v442
    %v1829 = vunpack.c.h.b16 %v442
    %v1830 = vunpack.c.l.b16 %v443
    %v1831 = vunpack.c.h.b16 %v443
    %v1832 = vunpack.c.l.b16 %v444
    %v1833 = vunpack.c.h.b16 %v444
    %v1834 = vunpack.c.l.b16 %v445
    %v1835 = vunpack.c.l.b16 %v446
    %v1836 = vunpack.c.h.b16 %v446
    %v1837 = vunpack.c.l.b16 %v447
    %v1838 = vunpack.c.h.b16 %v447
    %v1839 = vunpack.c.l.b16 %v448
    %v1840 = vunpack.c.h.b16 %v448
    %v1841 = vunpack.c.l.b16 %v449
    %v1842 = vunpack.c.l.b16 %v450
    %v1843 = vunpack.c.h.b16 %v450
    %v1844 = vunpack.c.l.b16 %v451
    %v1845 = vunpack.c.h.b16 %v451
    %v1846 = vunpack.c.l.b16 %v452
    %v1847 = vunpack.c.h.b16 %v452
    %v1848 = vunpack.c.l.b16 %v453
    %v1849 = vunpack.c.l.b16 %v454
    %v1850 = vunpack.c.h.b16 %v454
    %v1851 = vunpack.c.l.b16 %v455
    %v1852 = vunpack.c.h.b16 %v455
    %v1853 = vunpack.c.l.b16 %v456
    %v1854 = vunpack.c.h.b16 %v456
    %v1855 = vunpack.c.l.b16 %v457
    %v1856 = vunpack.c.l.b16 %v458
    %v1857 = vunpack.c.h.b16 %v458
    %v1858 = vunpack.c.l.b16 %v459
    %v1859 = vunpack.c.h.b16 %v459
    %v1860 = vunpack.c.l.b16 %v460
    %v1861 = vunpack.c.h.b16 %v460
    %v1862 = vunpack.c.l.b16 %v461
    %v1863 = vunpack.c.l.b16 %v462
    %v1864 = vunpack.c.h.b16 %v462
    %v1865 = vunpack.c.l.b16 %v463
    %v1866 = vunpack.c.h.b16 %v463
    %v1867 = vunpack.c.l.b16 %v464
    %v1868 = vunpack.c.h.b16 %v464
    %v1869 = vunpack.c.l.b16 %v465
    %v1870 = vunpack.c.l.b16 %v466
    %v1871 = vunpack.c.h.b16 %v466
    %v1872 = vunpack.c.l.b16 %v467
    %v1873 = vunpack.c.h.b16 %v467
    %v1874 = vunpack.c.l.b16 %v468
    %v1875 = vunpack.c.h.b16 %v468
    %v1876 = vunpack.c.l.b16 %v469
    %v1877 = vunpack.c.l.b16 %v470
    %v1878 = vunpack.c.h.b16 %v470
    %v1879 = vunpack.c.l.b16 %v471
    %v1880 = vunpack.c.h.b16 %v471
    %v1881 = vunpack.c.l.b16 %v472
    %v1882 = vunpack.c.h.b16 %v472
    %v1883 = vunpack.c.l.b16 %v473
    %v1884 = vunpack.c.l.b16 %v474
    %v1885 = vunpack.c.h.b16 %v474
    %v1886 = vunpack.c.l.b16 %v475
    %v1887 = vunpack.c.h.b16 %v475
    %v1888 = vunpack.c.l.b16 %v476
    %v1889 = vunpack.c.h.b16 %v476
    %v1890 = vunpack.c.l.b16 %v477
    %v1891 = vunpack.c.l.b16 %v478
    %v1892 = vunpack.c.h.b16 %v478
    %v1893 = vunpack.c.l.b16 %v479
    %v1894 = vunpack.c.h.b16 %v479
    %v1895 = vunpack.c.l.b16 %v480
    %v1896 = vunpack.c.h.b16 %v480
    %v1897 = vunpack.c.l.b16 %v481
    %v1898 = vunpack.c.l.b16 %v482
    %v1899 = vunpack.c.h.b16 %v482
    %v1900 = vunpack.c.l.b16 %v483
    %v1901 = vunpack.c.h.b16 %v483
    %v1902 = vunpack.c.l.b16 %v484
    %v1903 = vunpack.c.h.b16 %v484
    %v1904 = vunpack.c.l.b16 %v485
    %v1905 = vunpack.c.l.b16 %v486
    %v1906 = vunpack.c.h.b16 %v486
    %v1907 = vunpack.c.l.b16 %v487
    %v1908 = vunpack.c.h.b16 %v487
    %v1909 = vunpack.c.l.b16 %v488
    %v1910 = vunpack.c.h.b16 %v488
    %v1911 = vunpack.c.l.b16 %v489
    %v1912 = vunpack.c.l.b16 %v490
    %v1913 = vunpack.c.h.b16 %v490
    %v1914 = vunpack.c.l.b16 %v491
    %v1915 = vunpack.c.h.b16 %v491
    %v1916 = vunpack.c.l.b16 %v492
    %v1917 = vunpack.c.h.b16 %v492
    %v1918 = vunpack.c.l.b16 %v493
    %v1919 = vunpack.c.l.b16 %v494
    %v1920 = vunpack.c.h.b16 %v494
    %v1921 = vunpack.c.l.b16 %v495
    %v1922 = vunpack.c.h.b16 %v495
    %v1923 = vunpack.c.l.b16 %v496
    %v1924 = vunpack.c.h.b16 %v496
    %v1925 = vunpack.c.l.b16 %v497
    %v1926 = vunpack.c.l.b16 %v498
    %v1927 = vunpack.c.h.b16 %v498
    %v1928 = vunpack.c.l.b16 %v499
    %v1929 = vunpack.c.h.b16 %v499
    %v1930 = vunpack.c.l.b16 %v500
    %v1931 = vunpack.c.h.b16 %v500
    %v1932 = vunpack.c.l.b16 %v501
    %v1933 = vunpack.c.l.b16 %v502
    %v1934 = vunpack.c.h.b16 %v502
    %v1935 = vunpack.c.l.b16 %v503
    %v1936 = vunpack.c.h.b16 %v503
    %v1937 = vunpack.c.l.b16 %v504
    %v1938 = vunpack.c.h.b16 %v504
    %v1939 = vunpack.c.l.b16 %v505
    %v1940 = vunpack.c.l.b16 %v506
    %v1941 = vunpack.c.h.b16 %v506
    %v1942 = vunpack.c.l.b16 %v507
    %v1943 = vunpack.c.h.b16 %v507
    %v1944 = vunpack.c.l.b16 %v508
    %v1945 = vunpack.c.h.b16 %v508
    %v1946 = vunpack.c.l.b16 %v509
    %v1947 = vunpack.c.l.b16 %v510
    %v1948 = vunpack.c.h.b16 %v510
    %v1949 = vunpack.c.l.b16 %v511
    %v1950 = vunpack.c.h.b16 %v511
    %v1951 = vunpack.c.l.b16 %v512
    %v1952 = vunpack.c.h.b16 %v512
    %v1953 = vunpack.c.l.b16 %v513
    %v1954 = vunpack.c.l.b16 %v514
    %v1955 = vunpack.c.h.b16 %v514
    %v1956 = vunpack.c.l.b16 %v515
    %v1957 = vunpack.c.h.b16 %v515
    %v1958 = vunpack.c.l.b16 %v516
    %v1959 = vunpack.c.h.b16 %v516
    %v1960 = vunpack.c.l.b16 %v517
    %v1961 = vunpack.c.l.b16 %v518
    %v1962 = vunpack.c.h.b16 %v518
    %v1963 = vunpack.c.l.b16 %v519
    %v1964 = vunpack.c.h.b16 %v519
    %v1965 = vunpack.c.l.b16 %v520
    %v1966 = vunpack.c.h.b16 %v520
    %v1967 = vunpack.c.l.b16 %v521
    %v1968 = vunpack.c.l.b16 %v522
    %v1969 = vunpack.c.h.b16 %v522
    %v1970 = vunpack.c.l.b16 %v523
    %v1971 = vunpack.c.h.b16 %v523
    %v1972 = vunpack.c.l.b16 %v524
    %v1973 = vunpack.c.h.b16 %v524
    %v1974 = vunpack.c.l.b16 %v525
    %v1975 = vunpack.c.l.b16 %v526
    %v1976 = vunpack.c.h.b16 %v526
    %v1977 = vunpack.c.l.b16 %v527
    %v1978 = vunpack.c.h.b16 %v527
    %v1979 = vunpack.c.l.b16 %v528
    %v1980 = vunpack.c.h.b16 %v528
    %v1981 = vunpack.c.l.b16 %v529
    %v1982 = vunpack.c.l.b16 %v530
    %v1983 = vunpack.c.h.b16 %v530
    %v1984 = vunpack.c.l.b16 %v531
    %v1985 = vunpack.c.h.b16 %v531
    %v1986 = vunpack.c.l.b16 %v532
    %v1987 = vunpack.c.h.b16 %v532
    %v1988 = vunpack.c.l.b16 %v533
    %v1989 = vunpack.c.l.b16 %v534
    %v1990 = vunpack.c.h.b16 %v534
    %v1991 = vunpack.c.l.b16 %v535
    %v1992 = vunpack.c.h.b16 %v535
    %v1993 = vunpack.c.l.b16 %v536
    %v1994 = vunpack.c.h.b16 %v536
    %v1995 = vunpack.c.l.b16 %v537
    %v1996 = vunpack.c.l.b16 %v538
    %v1997 = vunpack.c.h.b16 %v538
    %v1998 = vunpack.c.l.b16 %v539
    %v1999 = vunpack.c.h.b16 %v539
    %v2000 = vunpack.c.l.b16 %v540
    %v2001 = vunpack.c.h.b16 %v540
    %v2002 = vunpack.c.l.b16 %v541
    %v2003 = vunpack.c.l.b16 %v542
    %v2004 = vunpack.c.h.b16 %v542
    %v2005 = vunpack.c.l.b16 %v543
    %v2006 = vunpack.c.h.b16 %v543
    %v2007 = vunpack.c.l.b16 %v544
    %v2008 = vunpack.c.h.b16 %v544
    %v2009 = vunpack.c.l.b16 %v545
    %v2010 = vunpack.c.l.b16 %v546
    %v2011 = vunpack.c.h.b16 %v546
    %v2012 = vunpack.c.l.b16 %v547
    %v2013 = vunpack.c.h.b16 %v547
    %v2014 = vunpack.c.l.b16 %v548
    %v2015 = vunpack.c.h.b16 %v548
    %v2016 = vunpack.c.l.b16 %v549
    %v2017 = vunpack.c.l.b16 %v550
    %v2018 = vunpack.c.h.b16 %v550
    %v2019 = vunpack.c.l.b16 %v551
    %v2020 = vunpack.c.h.b16 %v551
    %v2021 = vunpack.c.l.b16 %v552
    %v2022 = vunpack.c.h.b16 %v552
    %v2023 = vunpack.c.l.b16 %v553
    %v2024 = vunpack.c.l.b16 %v554
    %v2025 = vunpack.c.h.b16 %v554
    %v2026 = vunpack.c.l.b16 %v555
    %v2027 = vunpack.c.h.b16 %v555
    %v2028 = vunpack.c.l.b16 %v556
    %v2029 = vunpack.c.h.b16 %v556
    %v2030 = vunpack.c.l.b16 %v557
    %v2031 = vunpack.c.l.b16 %v558
    %v2032 = vunpack.c.h.b16 %v558
    %v2033 = vunpack.c.l.b16 %v559
    %v2034 = vunpack.c.h.b16 %v559
    %v2035 = vunpack.c.l.b16 %v560
    %v2036 = vunpack.c.h.b16 %v560
    %v2037 = vunpack.c.l.b16 %v561
    %v2038 = vunpack.c.l.b16 %v562
    %v2039 = vunpack.c.h.b16 %v562
    %v2040 = vunpack.c.l.b16 %v563
    %v2041 = vunpack.c.h.b16 %v563
    %v2042 = vunpack.c.l.b16 %v564
    %v2043 = vunpack.c.h.b16 %v564
    %v2044 = vunpack.c.l.b16 %v565
    %v2045 = vunpack.c.l.b16 %v566
    %v2046 = vunpack.c.h.b16 %v566
    %v2047 = vunpack.c.l.b16 %v567
    %v2048 = vunpack.c.h.b16 %v567
    %v2049 = vunpack.c.l.b16 %v568
    %v2050 = vunpack.c.h.b16 %v568
    %v2051 = vunpack.c.l.b16 %v569
    %v2052 = vunpack.c.l.b16 %v570
    %v2053 = vunpack.c.h.b16 %v570
    %v2054 = vunpack.c.l.b16 %v571
    %v2055 = vunpack.c.h.b16 %v571
    %v2056 = vunpack.c.l.b16 %v572
    %v2057 = vunpack.c.h.b16 %v572
    %v2058 = vunpack.c.l.b16 %v573
    %v2059 = vunpack.c.l.b16 %v574
    %v2060 = vunpack.c.h.b16 %v574
    %v2061 = vunpack.c.l.b16 %v575
    %v2062 = vunpack.c.h.b16 %v575
    %v2063 = vunpack.c.l.b16 %v576
    %v2064 = vunpack.c.h.b16 %v576
    %v2065 = vunpack.c.l.b16 %v577
    %v2066 = vunpack.c.l.b16 %v578
    %v2067 = vunpack.c.h.b16 %v578
    %v2068 = vunpack.c.l.b16 %v579
    %v2069 = vunpack.c.h.b16 %v579
    %v2070 = vunpack.c.l.b16 %v580
    %v2071 = vunpack.c.h.b16 %v580
    %v2072 = vunpack.c.l.b16 %v581
    %v2073 = vunpack.c.l.b16 %v582
    %v2074 = vunpack.c.h.b16 %v582
    %v2075 = vunpack.c.l.b16 %v583
    %v2076 = vunpack.c.h.b16 %v583
    %v2077 = vunpack.c.l.b16 %v584
    %v2078 = vunpack.c.h.b16 %v584
    %v2079 = vunpack.c.l.b16 %v585
    %v2080 = vunpack.c.l.b16 %v586
    %v2081 = vunpack.c.h.b16 %v586
    %v2082 = vunpack.c.l.b16 %v587
    %v2083 = vunpack.c.h.b16 %v587
    %v2084 = vunpack.c.l.b16 %v588
    %v2085 = vunpack.c.h.b16 %v588
    %v2086 = vunpack.c.l.b16 %v589
    %v2087 = vunpack.c.l.b16 %v590
    %v2088 = vunpack.c.h.b16 %v590
    %v2089 = vunpack.c.l.b16 %v591
    %v2090 = vunpack.c.h.b16 %v591
    %v2091 = vunpack.c.l.b16 %v592
    %v2092 = vunpack.c.h.b16 %v592
    %v2093 = vunpack.c.l.b16 %v593
    %v2094 = vunpack.c.l.b16 %v594
    %v2095 = vunpack.c.h.b16 %v594
    %v2096 = vunpack.c.l.b16 %v595
    %v2097 = vunpack.c.h.b16 %v595
    %v2098 = vunpack.c.l.b16 %v596
    %v2099 = vunpack.c.h.b16 %v596
    %v2100 = vunpack.c.l.b16 %v597
    %v2101 = vunpack.c.l.b16 %v598
    %v2102 = vunpack.c.h.b16 %v598
    %v2103 = vunpack.c.l.b16 %v599
    %v2104 = vunpack.c.h.b16 %v599
    %v2105 = vunpack.c.l.b16 %v600
    %v2106 = vunpack.c.h.b16 %v600
    %v2107 = vunpack.c.l.b16 %v601
    %v2108 = vunpack.c.l.b16 %v602
    %v2109 = vunpack.c.h.b16 %v602
    %v2110 = vunpack.c.l.b16 %v603
    %v2111 = vunpack.c.h.b16 %v603
    %v2112 = vunpack.c.l.b16 %v604
    %v2113 = vunpack.c.h.b16 %v604
    %v2114 = vunpack.c.l.b16 %v605
    %v2115 = vunpack.c.l.b16 %v606
    %v2116 = vunpack.c.h.b16 %v606
    %v2117 = vunpack.c.l.b16 %v607
    %v2118 = vunpack.c.h.b16 %v607
    %v2119 = vunpack.c.l.b16 %v608
    %v2120 = vunpack.c.h.b16 %v608
    %v2121 = vunpack.c.l.b16 %v609
    %v2122 = vunpack.c.l.b16 %v610
    %v2123 = vunpack.c.h.b16 %v610
    %v2124 = vunpack.c.l.b16 %v611
    %v2125 = vunpack.c.h.b16 %v611
    %v2126 = vunpack.c.l.b16 %v612
    %v2127 = vunpack.c.h.b16 %v612
    %v2128 = vunpack.c.l.b16 %v613
    %v2129 = vunpack.c.l.b16 %v614
    %v2130 = vunpack.c.h.b16 %v614
    %v2131 = vunpack.c.l.b16 %v615
    %v2132 = vunpack.c.h.b16 %v615
    %v2133 = vunpack.c.l.b16 %v616
    %v2134 = vunpack.c.h.b16 %v616
    %v2135 = vunpack.c.l.b16 %v617
    %v2136 = vunpack.c.l.b16 %v618
    %v2137 = vunpack.c.h.b16 %v618
    %v2138 = vunpack.c.l.b16 %v619
    %v2139 = vunpack.c.h.b16 %v619
    %v2140 = vunpack.c.l.b16 %v620
    %v2141 = vunpack.c.h.b16 %v620
    %v2142 = vunpack.c.l.b16 %v621
    %v2143 = vunpack.c.l.b16 %v622
    %v2144 = vunpack.c.h.b16 %v622
    %v2145 = vunpack.c.l.b16 %v623
    %v2146 = vunpack.c.h.b16 %v623
    %v2147 = vunpack.c.l.b16 %v624
    %v2148 = vunpack.c.h.b16 %v624
    %v2149 = vunpack.c.l.b16 %v625
    %v2150 = vunpack.c.l.b16 %v626
    %v2151 = vunpack.c.h.b16 %v626
    %v2152 = vunpack.c.l.b16 %v627
    %v2153 = vunpack.c.h.b16 %v627
    %v2154 = vunpack.c.l.b16 %v628
    %v2155 = vunpack.c.h.b16 %v628
    %v2156 = vunpack.c.l.b16 %v629
    %v2157 = vunpack.c.l.b16 %v630
    %v2158 = vunpack.c.h.b16 %v630
    %v2159 = vunpack.c.l.b16 %v631
    %v2160 = vunpack.c.h.b16 %v631
    %v2161 = vunpack.c.l.b16 %v632
    %v2162 = vunpack.c.h.b16 %v632
    %v2163 = vunpack.c.l.b16 %v633
    %v2164 = vunpack.c.l.b16 %v634
    %v2165 = vunpack.c.h.b16 %v634
    %v2166 = vunpack.c.l.b16 %v635
    %v2167 = vunpack.c.h.b16 %v635
    %v2168 = vunpack.c.l.b16 %v636
    %v2169 = vunpack.c.h.b16 %v636
    %v2170 = vunpack.c.l.b16 %v637
    %v2171 = vunpack.c.l.b16 %v638
    %v2172 = vunpack.c.h.b16 %v638
    %v2173 = vunpack.c.l.b16 %v639
    %v2174 = vunpack.c.h.b16 %v639
    %v2175 = vunpack.c.l.b16 %v640
    %v2176 = vunpack.c.h.b16 %v640
    %v2177 = vunpack.c.l.b16 %v641
    %v2178 = vpack.c.b16 %v1401, %v1394
    %v2179 = vpack.c.b16 %v1402, %v1395
    %v2180 = vpack.c.b16 %v1403, %v1396
    %v2181 = vpack.c.b16 %v1404, %v1397
    %v2182 = vpack.c.b16 %v1405, %v1398
    %v2183 = vpack.c.b16 %v1406, %v1399
    %v2184 = vpack.c.b16 %v1407, %v1400
    %v2185 = vpack.c.b16 %v1415, %v1408
    %v2186 = vpack.c.b16 %v1416, %v1409
    %v2187 = vpack.c.b16 %v1417, %v1410
    %v2188 = vpack.c.b16 %v1418, %v1411
    %v2189 = vpack.c.b16 %v1419, %v1412
    %v2190 = vpack.c.b16 %v1420, %v1413
    %v2191 = vpack.c.b16 %v1421, %v1414
    %v2192 = vpack.c.b16 %v1429, %v1422
    %v2193 = vpack.c.b16 %v1430, %v1423
    %v2194 = vpack.c.b16 %v1431, %v1424
    %v2195 = vpack.c.b16 %v1432, %v1425
    %v2196 = vpack.c.b16 %v1433, %v1426
    %v2197 = vpack.c.b16 %v1434, %v1427
    %v2198 = vpack.c.b16 %v1435, %v1428
    %v2199 = vpack.c.b16 %v1443, %v1436
    %v2200 = vpack.c.b16 %v1444, %v1437
    %v2201 = vpack.c.b16 %v1445, %v1438
    %v2202 = vpack.c.b16 %v1446, %v1439
    %v2203 = vpack.c.b16 %v1447, %v1440
    %v2204 = vpack.c.b16 %v1448, %v1441
    %v2205 = vpack.c.b16 %v1449, %v1442
    %v2206 = vpack.c.b16 %v1457, %v1450
    %v2207 = vpack.c.b16 %v1458, %v1451
    %v2208 = vpack.c.b16 %v1459, %v1452
    %v2209 = vpack.c.b16 %v1460, %v1453
    %v2210 = vpack.c.b16 %v1461, %v1454
    %v2211 = vpack.c.b16 %v1462, %v1455
    %v2212 = vpack.c.b16 %v1463, %v1456
    %v2213 = vpack.c.b16 %v1471, %v1464
    %v2214 = vpack.c.b16 %v1472, %v1465
    %v2215 = vpack.c.b16 %v1473, %v1466
    %v2216 = vpack.c.b16 %v1474, %v1467
    %v2217 = vpack.c.b16 %v1475, %v1468
    %v2218 = vpack.c.b16 %v1476, %v1469
    %v2219 = vpack.c.b16 %v1477, %v1470
    %v2220 = vpack.c.b16 %v1485, %v1478
    %v2221 = vpack.c.b16 %v1486, %v1479
    %v2222 = vpack.c.b16 %v1487, %v1480
    %v2223 = vpack.c.b16 %v1488, %v1481
    %v2224 = vpack.c.b16 %v1489, %v1482
    %v2225 = vpack.c.b16 %v1490, %v1483
    %v2226 = vpack.c.b16 %v1491, %v1484
    %v2227 = vpack.c.b16 %v1499, %v1492
    %v2228 = vpack.c.b16 %v1500, %v1493
    %v2229 = vpack.c.b16 %v1501, %v1494
    %v2230 = vpack.c.b16 %v1502, %v1495
    %v2231 = vpack.c.b16 %v1503, %v1496
    %v2232 = vpack.c.b16 %v1504, %v1497
    %v2233 = vpack.c.b16 %v1505, %v1498
    %v2234 = vpack.c.b16 %v1513, %v1506
    %v2235 = vpack.c.b16 %v1514, %v1507
    %v2236 = vpack.c.b16 %v1515, %v1508
    %v2237 = vpack.c.b16 %v1516, %v1509
    %v2238 = vpack.c.b16 %v1517, %v1510
    %v2239 = vpack.c.b16 %v1518, %v1511
    %v2240 = vpack.c.b16 %v1519, %v1512
    %v2241 = vpack.c.b16 %v1527, %v1520
    %v2242 = vpack.c.b16 %v1528, %v1521
    %v2243 = vpack.c.b16 %v1529, %v1522
    %v2244 = vpack.c.b16 %v1530, %v1523
    %v2245 = vpack.c.b16 %v1531, %v1524
    %v2246 = vpack.c.b16 %v1532, %v1525
    %v2247 = vpack.c.b16 %v1533, %v1526
    %v2248 = vpack.c.b16 %v1541, %v1534
    %v2249 = vpack.c.b16 %v1542, %v1535
    %v2250 = vpack.c.b16 %v1543, %v1536
    %v2251 = vpack.c.b16 %v1544, %v1537
    %v2252 = vpack.c.b16 %v1545, %v1538
    %v2253 = vpack.c.b16 %v1546, %v1539
    %v2254 = vpack.c.b16 %v1547, %v1540
    %v2255 = vpack.c.b16 %v1555, %v1548
    %v2256 = vpack.c.b16 %v1556, %v1549
    %v2257 = vpack.c.b16 %v1557, %v1550
    %v2258 = vpack.c.b16 %v1558, %v1551
    %v2259 = vpack.c.b16 %v1559, %v1552
    %v2260 = vpack.c.b16 %v1560, %v1553
    %v2261 = vpack.c.b16 %v1561, %v1554
    %v2262 = vpack.c.b16 %v1569, %v1562
    %v2263 = vpack.c.b16 %v1570, %v1563
    %v2264 = vpack.c.b16 %v1571, %v1564
    %v2265 = vpack.c.b16 %v1572, %v1565
    %v2266 = vpack.c.b16 %v1573, %v1566
    %v2267 = vpack.c.b16 %v1574, %v1567
    %v2268 = vpack.c.b16 %v1575, %v1568
    %v2269 = vpack.c.b16 %v1583, %v1576
    %v2270 = vpack.c.b16 %v1584, %v1577
    %v2271 = vpack.c.b16 %v1585, %v1578
    %v2272 = vpack.c.b16 %v1586, %v1579
    %v2273 = vpack.c.b16 %v1587, %v1580
    %v2274 = vpack.c.b16 %v1588, %v1581
    %v2275 = vpack.c.b16 %v1589, %v1582
    %v2276 = vpack.c.b16 %v1597, %v1590
    %v2277 = vpack.c.b16 %v1598, %v1591
    %v2278 = vpack.c.b16 %v1599, %v1592
    %v2279 = vpack.c.b16 %v1600, %v1593
    %v2280 = vpack.c.b16 %v1601, %v1594
    %v2281 = vpack.c.b16 %v1602, %v1595
    %v2282 = vpack.c.b16 %v1603, %v1596
    %v2283 = vpack.c.b16 %v1611, %v1604
    %v2284 = vpack.c.b16 %v1612, %v1605
    %v2285 = vpack.c.b16 %v1613, %v1606
    %v2286 = vpack.c.b16 %v1614, %v1607
    %v2287 = vpack.c.b16 %v1615, %v1608
    %v2288 = vpack.c.b16 %v1616, %v1609
    %v2289 = vpack.c.b16 %v1617, %v1610
    %v2290 = vpack.c.b16 %v1625, %v1618
    %v2291 = vpack.c.b16 %v1626, %v1619
    %v2292 = vpack.c.b16 %v1627, %v1620
    %v2293 = vpack.c.b16 %v1628, %v1621
    %v2294 = vpack.c.b16 %v1629, %v1622
    %v2295 = vpack.c.b16 %v1630, %v1623
    %v2296 = vpack.c.b16 %v1631, %v1624
    %v2297 = vpack.c.b16 %v1639, %v1632
    %v2298 = vpack.c.b16 %v1640, %v1633
    %v2299 = vpack.c.b16 %v1641, %v1634
    %v2300 = vpack.c.b16 %v1642, %v1635
    %v2301 = vpack.c.b16 %v1643, %v1636
    %v2302 = vpack.c.b16 %v1644, %v1637
    %v2303 = vpack.c.b16 %v1645, %v1638
    %v2304 = vpack.c.b16 %v1653, %v1646
    %v2305 = vpack.c.b16 %v1654, %v1647
    %v2306 = vpack.c.b16 %v1655, %v1648
    %v2307 = vpack.c.b16 %v1656, %v1649
    %v2308 = vpack.c.b16 %v1657, %v1650
    %v2309 = vpack.c.b16 %v1658, %v1651
    %v2310 = vpack.c.b16 %v1659, %v1652
    %v2311 = vpack.c.b16 %v1667, %v1660
    %v2312 = vpack.c.b16 %v1668, %v1661
    %v2313 = vpack.c.b16 %v1669, %v1662
    %v2314 = vpack.c.b16 %v1670, %v1663
    %v2315 = vpack.c.b16 %v1671, %v1664
    %v2316 = vpack.c.b16 %v1672, %v1665
    %v2317 = vpack.c.b16 %v1673, %v1666
    %v2318 = vpack.c.b16 %v1681, %v1674
    %v2319 = vpack.c.b16 %v1682, %v1675
    %v2320 = vpack.c.b16 %v1683, %v1676
    %v2321 = vpack.c.b16 %v1684, %v1677
    %v2322 = vpack.c.b16 %v1685, %v1678
    %v2323 = vpack.c.b16 %v1686, %v1679
    %v2324 = vpack.c.b16 %v1687, %v1680
    %v2325 = vpack.c.b16 %v1695, %v1688
    %v2326 = vpack.c.b16 %v1696, %v1689
    %v2327 = vpack.c.b16 %v1697, %v1690
    %v2328 = vpack.c.b16 %v1698, %v1691
    %v2329 = vpack.c.b16 %v1699, %v1692
    %v2330 = vpack.c.b16 %v1700, %v1693
    %v2331 = vpack.c.b16 %v1701, %v1694
    %v2332 = vpack.c.b16 %v1709, %v1702
    %v2333 = vpack.c.b16 %v1710, %v1703
    %v2334 = vpack.c.b16 %v1711, %v1704
    %v2335 = vpack.c.b16 %v1712, %v1705
    %v2336 = vpack.c.b16 %v1713, %v1706
    %v2337 = vpack.c.b16 %v1714, %v1707
    %v2338 = vpack.c.b16 %v1715, %v1708
    %v2339 = vpack.c.b16 %v1723, %v1716
    %v2340 = vpack.c.b16 %v1724, %v1717
    %v2341 = vpack.c.b16 %v1725, %v1718
    %v2342 = vpack.c.b16 %v1726, %v1719
    %v2343 = vpack.c.b16 %v1727, %v1720
    %v2344 = vpack.c.b16 %v1728, %v1721
    %v2345 = vpack.c.b16 %v1729, %v1722
    %v2346 = vpack.c.b16 %v1737, %v1730
    %v2347 = vpack.c.b16 %v1738, %v1731
    %v2348 = vpack.c.b16 %v1739, %v1732
    %v2349 = vpack.c.b16 %v1740, %v1733
    %v2350 = vpack.c.b16 %v1741, %v1734
    %v2351 = vpack.c.b16 %v1742, %v1735
    %v2352 = vpack.c.b16 %v1743, %v1736
    %v2353 = vpack.c.b16 %v1751, %v1744
    %v2354 = vpack.c.b16 %v1752, %v1745
    %v2355 = vpack.c.b16 %v1753, %v1746
    %v2356 = vpack.c.b16 %v1754, %v1747
    %v2357 = vpack.c.b16 %v1755, %v1748
    %v2358 = vpack.c.b16 %v1756, %v1749
    %v2359 = vpack.c.b16 %v1757, %v1750
    %v2360 = vpack.c.b16 %v1765, %v1758
    %v2361 = vpack.c.b16 %v1766, %v1759
    %v2362 = vpack.c.b16 %v1767, %v1760
    %v2363 = vpack.c.b16 %v1768, %v1761
    %v2364 = vpack.c.b16 %v1769, %v1762
    %v2365 = vpack.c.b16 %v1770, %v1763
    %v2366 = vpack.c.b16 %v1771, %v1764
    %v2367 = vpack.c.b16 %v1779, %v1772
    %v2368 = vpack.c.b16 %v1780, %v1773
    %v2369 = vpack.c.b16 %v1781, %v1774
    %v2370 = vpack.c.b16 %v1782, %v1775
    %v2371 = vpack.c.b16 %v1783, %v1776
    %v2372 = vpack.c.b16 %v1784, %v1777
    %v2373 = vpack.c.b16 %v1785, %v1778
    %v2374 = vpack.c.b16 %v1793, %v1786
    %v2375 = vpack.c.b16 %v1794, %v1787
    %v2376 = vpack.c.b16 %v1795, %v1788
    %v2377 = vpack.c.b16 %v1796, %v1789
    %v2378 = vpack.c.b16 %v1797, %v1790
    %v2379 = vpack.c.b16 %v1798, %v1791
    %v2380 = vpack.c.b16 %v1799, %v1792
    %v2381 = vpack.c.b16 %v1807, %v1800
    %v2382 = vpack.c.b16 %v1808, %v1801
    %v2383 = vpack.c.b16 %v1809, %v1802
    %v2384 = vpack.c.b16 %v1810, %v1803
    %v2385 = vpack.c.b16 %v1811, %v1804
    %v2386 = vpack.c.b16 %v1812, %v1805
    %v2387 = vpack.c.b16 %v1813, %v1806
    %v2388 = vpack.c.b16 %v1821, %v1814
    %v2389 = vpack.c.b16 %v1822, %v1815
    %v2390 = vpack.c.b16 %v1823, %v1816
    %v2391 = vpack.c.b16 %v1824, %v1817
    %v2392 = vpack.c.b16 %v1825, %v1818
    %v2393 = vpack.c.b16 %v1826, %v1819
    %v2394 = vpack.c.b16 %v1827, %v1820
    %v2395 = vpack.c.b16 %v1835, %v1828
    %v2396 = vpack.c.b16 %v1836, %v1829
    %v2397 = vpack.c.b16 %v1837, %v1830
    %v2398 = vpack.c.b16 %v1838, %v1831
    %v2399 = vpack.c.b16 %v1839, %v1832
    %v2400 = vpack.c.b16 %v1840, %v1833
    %v2401 = vpack.c.b16 %v1841, %v1834
    %v2402 = vpack.c.b16 %v1849, %v1842
    %v2403 = vpack.c.b16 %v1850, %v1843
    %v2404 = vpack.c.b16 %v1851, %v1844
    %v2405 = vpack.c.b16 %v1852, %v1845
    %v2406 = vpack.c.b16 %v1853, %v1846
    %v2407 = vpack.c.b16 %v1854, %v1847
    %v2408 = vpack.c.b16 %v1855, %v1848
    %v2409 = vpack.c.b16 %v1863, %v1856
    %v2410 = vpack.c.b16 %v1864, %v1857
    %v2411 = vpack.c.b16 %v1865, %v1858
    %v2412 = vpack.c.b16 %v1866, %v1859
    %v2413 = vpack.c.b16 %v1867, %v1860
    %v2414 = vpack.c.b16 %v1868, %v1861
    %v2415 = vpack.c.b16 %v1869, %v1862
    %v2416 = vpack.c.b16 %v1877, %v1870
    %v2417 = vpack.c.b16 %v1878, %v1871
    %v2418 = vpack.c.b16 %v1879, %v1872
    %v2419 = vpack.c.b16 %v1880, %v1873
    %v2420 = vpack.c.b16 %v1881, %v1874
    %v2421 = vpack.c.b16 %v1882, %v1875
    %v2422 = vpack.c.b16 %v1883, %v1876
    %v2423 = vpack.c.b16 %v1891, %v1884
    %v2424 = vpack.c.b16 %v1892, %v1885
    %v2425 = vpack.c.b16 %v1893, %v1886
    %v2426 = vpack.c.b16 %v1894, %v1887
    %v2427 = vpack.c.b16 %v1895, %v1888
    %v2428 = vpack.c.b16 %v1896, %v1889
    %v2429 = vpack.c.b16 %v1897, %v1890
    %v2430 = vpack.c.b16 %v1905, %v1898
    %v2431 = vpack.c.b16 %v1906, %v1899
    %v2432 = vpack.c.b16 %v1907, %v1900
    %v2433 = vpack.c.b16 %v1908, %v1901
    %v2434 = vpack.c.b16 %v1909, %v1902
    %v2435 = vpack.c.b16 %v1910, %v1903
    %v2436 = vpack.c.b16 %v1911, %v1904
    %v2437 = vpack.c.b16 %v1919, %v1912
    %v2438 = vpack.c.b16 %v1920, %v1913
    %v2439 = vpack.c.b16 %v1921, %v1914
    %v2440 = vpack.c.b16 %v1922, %v1915
    %v2441 = vpack.c.b16 %v1923, %v1916
    %v2442 = vpack.c.b16 %v1924, %v1917
    %v2443 = vpack.c.b16 %v1925, %v1918
    %v2444 = vpack.c.b16 %v1933, %v1926
    %v2445 = vpack.c.b16 %v1934, %v1927
    %v2446 = vpack.c.b16 %v1935, %v1928
    %v2447 = vpack.c.b16 %v1936, %v1929
    %v2448 = vpack.c.b16 %v1937, %v1930
    %v2449 = vpack.c.b16 %v1938, %v1931
    %v2450 = vpack.c.b16 %v1939, %v1932
    %v2451 = vpack.c.b16 %v1947, %v1940
    %v2452 = vpack.c.b16 %v1948, %v1941
    %v2453 = vpack.c.b16 %v1949, %v1942
    %v2454 = vpack.c.b16 %v1950, %v1943
    %v2455 = vpack.c.b16 %v1951, %v1944
    %v2456 = vpack.c.b16 %v1952, %v1945
    %v2457 = vpack.c.b16 %v1953, %v1946
    %v2458 = vpack.c.b16 %v1961, %v1954
    %v2459 = vpack.c.b16 %v1962, %v1955
    %v2460 = vpack.c.b16 %v1963, %v1956
    %v2461 = vpack.c.b16 %v1964, %v1957
    %v2462 = vpack.c.b16 %v1965, %v1958
    %v2463 = vpack.c.b16 %v1966, %v1959
    %v2464 = vpack.c.b16 %v1967, %v1960
    %v2465 = vpack.c.b16 %v1975, %v1968
    %v2466 = vpack.c.b16 %v1976, %v1969
    %v2467 = vpack.c.b16 %v1977, %v1970
    %v2468 = vpack.c.b16 %v1978, %v1971
    %v2469 = vpack.c.b16 %v1979, %v1972
    %v2470 = vpack.c.b16 %v1980, %v1973
    %v2471 = vpack.c.b16 %v1981, %v1974
    %v2472 = vpack.c.b16 %v1989, %v1982
    %v2473 = vpack.c.b16 %v1990, %v1983
    %v2474 = vpack.c.b16 %v1991, %v1984
    %v2475 = vpack.c.b16 %v1992, %v1985
    %v2476 = vpack.c.b16 %v1993, %v1986
    %v2477 = vpack.c.b16 %v1994, %v1987
    %v2478 = vpack.c.b16 %v1995, %v1988
    %v2479 = vpack.c.b16 %v2003, %v1996
    %v2480 = vpack.c.b16 %v2004, %v1997
    %v2481 = vpack.c.b16 %v2005, %v1998
    %v2482 = vpack.c.b16 %v2006, %v1999
    %v2483 = vpack.c.b16 %v2007, %v2000
    %v2484 = vpack.c.b16 %v2008, %v2001
    %v2485 = vpack.c.b16 %v2009, %v2002
    %v2486 = vpack.c.b16 %v2017, %v2010
    %v2487 = vpack.c.b16 %v2018, %v2011
    %v2488 = vpack.c.b16 %v2019, %v2012
    %v2489 = vpack.c.b16 %v2020, %v2013
    %v2490 = vpack.c.b16 %v2021, %v2014
    %v2491 = vpack.c.b16 %v2022, %v2015
    %v2492 = vpack.c.b16 %v2023, %v2016
    %v2493 = vpack.c.b16 %v2031, %v2024
    %v2494 = vpack.c.b16 %v2032, %v2025
    %v2495 = vpack.c.b16 %v2033, %v2026
    %v2496 = vpack.c.b16 %v2034, %v2027
    %v2497 = vpack.c.b16 %v2035, %v2028
    %v2498 = vpack.c.b16 %v2036, %v2029
    %v2499 = vpack.c.b16 %v2037, %v2030
    %v2500 = vpack.c.b16 %v2045, %v2038
    %v2501 = vpack.c.b16 %v2046, %v2039
    %v2502 = vpack.c.b16 %v2047, %v2040
    %v2503 = vpack.c.b16 %v2048, %v2041
    %v2504 = vpack.c.b16 %v2049, %v2042
    %v2505 = vpack.c.b16 %v2050, %v2043
    %v2506 = vpack.c.b16 %v2051, %v2044
    %v2507 = vpack.c.b16 %v2059, %v2052
    %v2508 = vpack.c.b16 %v2060, %v2053
    %v2509 = vpack.c.b16 %v2061, %v2054
    %v2510 = vpack.c.b16 %v2062, %v2055
    %v2511 = vpack.c.b16 %v2063, %v2056
    %v2512 = vpack.c.b16 %v2064, %v2057
    %v2513 = vpack.c.b16 %v2065, %v2058
    %v2514 = vpack.c.b16 %v2073, %v2066
    %v2515 = vpack.c.b16 %v2074, %v2067
    %v2516 = vpack.c.b16 %v2075, %v2068
    %v2517 = vpack.c.b16 %v2076, %v2069
    %v2518 = vpack.c.b16 %v2077, %v2070
    %v2519 = vpack.c.b16 %v2078, %v2071
    %v2520 = vpack.c.b16 %v2079, %v2072
    %v2521 = vpack.c.b16 %v2087, %v2080
    %v2522 = vpack.c.b16 %v2088, %v2081
    %v2523 = vpack.c.b16 %v2089, %v2082
    %v2524 = vpack.c.b16 %v2090, %v2083
    %v2525 = vpack.c.b16 %v2091, %v2084
    %v2526 = vpack.c.b16 %v2092, %v2085
    %v2527 = vpack.c.b16 %v2093, %v2086
    %v2528 = vpack.c.b16 %v2101, %v2094
    %v2529 = vpack.c.b16 %v2102, %v2095
    %v2530 = vpack.c.b16 %v2103, %v2096
    %v2531 = vpack.c.b16 %v2104, %v2097
    %v2532 = vpack.c.b16 %v2105, %v2098
    %v2533 = vpack.c.b16 %v2106, %v2099
    %v2534 = vpack.c.b16 %v2107, %v2100
    %v2535 = vpack.c.b16 %v2115, %v2108
    %v2536 = vpack.c.b16 %v2116, %v2109
    %v2537 = vpack.c.b16 %v2117, %v2110
    %v2538 = vpack.c.b16 %v2118, %v2111
    %v2539 = vpack.c.b16 %v2119, %v2112
    %v2540 = vpack.c.b16 %v2120, %v2113
    %v2541 = vpack.c.b16 %v2121, %v2114
    %v2542 = vpack.c.b16 %v2129, %v2122
    %v2543 = vpack.c.b16 %v2130, %v2123
    %v2544 = vpack.c.b16 %v2131, %v2124
    %v2545 = vpack.c.b16 %v2132, %v2125
    %v2546 = vpack.c.b16 %v2133, %v2126
    %v2547 = vpack.c.b16 %v2134, %v2127
    %v2548 = vpack.c.b16 %v2135, %v2128
    %v2549 = vpack.c.b16 %v2143, %v2136
    %v2550 = vpack.c.b16 %v2144, %v2137
    %v2551 = vpack.c.b16 %v2145, %v2138
    %v2552 = vpack.c.b16 %v2146, %v2139
    %v2553 = vpack.c.b16 %v2147, %v2140
    %v2554 = vpack.c.b16 %v2148, %v2141
    %v2555 = vpack.c.b16 %v2149, %v2142
    %v2556 = vpack.c.b16 %v2157, %v2150
    %v2557 = vpack.c.b16 %v2158, %v2151
    %v2558 = vpack.c.b16 %v2159, %v2152
    %v2559 = vpack.c.b16 %v2160, %v2153
    %v2560 = vpack.c.b16 %v2161, %v2154
    %v2561 = vpack.c.b16 %v2162, %v2155
    %v2562 = vpack.c.b16 %v2163, %v2156
    %v2563 = vpack.c.b16 %v2171, %v2164
    %v2564 = vpack.c.b16 %v2172, %v2165
    %v2565 = vpack.c.b16 %v2173, %v2166
    %v2566 = vpack.c.b16 %v2174, %v2167
    %v2567 = vpack.c.b16 %v2175, %v2168
    %v2568 = vpack.c.b16 %v2176, %v2169
    %v2569 = vpack.c.b16 %v2177, %v2170
    %2962 = vmatpush.bf16.msra.mxu0 %v2227
    %2963 = vmatpush.bf16.msra.mxu0 %v2220
    %2964 = vmatpush.bf16.msra.mxu0 %v2213
    %2965 = vmatpush.bf16.msra.mxu0 %v2206
    %2966 = vmatpush.bf16.msra.mxu0 %v2199
    %2967 = vmatpush.bf16.msra.mxu0 %v2192
    %2968 = vmatpush.bf16.msra.mxu0 %v2185
    %2969 = vmatpush.bf16.msra.mxu0 %v2178
    %2970 = vmatmul.bf16.gmra.mxu0 %v834
    %v2971 = vpop.f32.mrf.mxu0
    %v2972 = vadd.f32 %v644, %v2971
    %v2973 = vpop.f32.mrf.mxu0
    %v2974 = vadd.f32 %v644, %v2973
    %2975 = vmatmul.bf16.gmra.mxu0 %v841
    %v2976 = vpop.f32.mrf.mxu0
    %v2977 = vadd.f32 %v644, %v2976
    %v2978 = vpop.f32.mrf.mxu0
    %v2979 = vadd.f32 %v644, %v2978
    %2980 = vmatmul.bf16.gmra.mxu0 %v848
    %v2981 = vpop.f32.mrf.mxu0
    %v2982 = vadd.f32 %v644, %v2981
    %v2983 = vpop.f32.mrf.mxu0
    %v2984 = vadd.f32 %v644, %v2983
    %2985 = vmatmul.bf16.gmra.mxu0 %v855
    %v2986 = vpop.f32.mrf.mxu0
    %v2987 = vadd.f32 %v644, %v2986
    %v2988 = vpop.f32.mrf.mxu0
    %v2989 = vadd.f32 %v644, %v2988
    %2990 = vmatmul.bf16.gmra.mxu0 %v862
    %v2991 = vpop.f32.mrf.mxu0
    %v2992 = vadd.f32 %v644, %v2991
    %v2993 = vpop.f32.mrf.mxu0
    %v2994 = vadd.f32 %v644, %v2993
    %2995 = vmatmul.bf16.gmra.mxu0 %v869
    %v2996 = vpop.f32.mrf.mxu0
    %v2997 = vadd.f32 %v644, %v2996
    %v2998 = vpop.f32.mrf.mxu0
    %v2999 = vadd.f32 %v644, %v2998
    %3000 = vmatmul.bf16.gmra.mxu0 %v876
    %v3001 = vpop.f32.mrf.mxu0
    %v3002 = vadd.f32 %v644, %v3001
    %v3003 = vpop.f32.mrf.mxu0
    %v3004 = vadd.f32 %v644, %v3003
    %3005 = vmatmul.bf16.gmra.mxu0 %v883
    %v3006 = vpop.f32.mrf.mxu0
    %v3007 = vadd.f32 %v644, %v3006
    %v3008 = vpop.f32.mrf.mxu0
    %v3009 = vadd.f32 %v644, %v3008
    %3010 = vdwg.mxu0
    %3011 = vmatpush.bf16.msra.mxu0 %v2283
    %3012 = vmatpush.bf16.msra.mxu0 %v2276
    %3013 = vmatpush.bf16.msra.mxu0 %v2269
    %3014 = vmatpush.bf16.msra.mxu0 %v2262
    %3015 = vmatpush.bf16.msra.mxu0 %v2255
    %3016 = vmatpush.bf16.msra.mxu0 %v2248
    %3017 = vmatpush.bf16.msra.mxu0 %v2241
    %3018 = vmatpush.bf16.msra.mxu0 %v2234
    %3019 = vmatmul.bf16.gmra.mxu0 %v835
    %v3020 = vpop.f32.mrf.mxu0
    %v3021 = vadd.f32 %v2972, %v3020
    %v3022 = vpop.f32.mrf.mxu0
    %v3023 = vadd.f32 %v2974, %v3022
    %3024 = vmatmul.bf16.gmra.mxu0 %v842
    %v3025 = vpop.f32.mrf.mxu0
    %v3026 = vadd.f32 %v2977, %v3025
    %v3027 = vpop.f32.mrf.mxu0
    %v3028 = vadd.f32 %v2979, %v3027
    %3029 = vmatmul.bf16.gmra.mxu0 %v849
    %v3030 = vpop.f32.mrf.mxu0
    %v3031 = vadd.f32 %v2982, %v3030
    %v3032 = vpop.f32.mrf.mxu0
    %v3033 = vadd.f32 %v2984, %v3032
    %3034 = vmatmul.bf16.gmra.mxu0 %v856
    %v3035 = vpop.f32.mrf.mxu0
    %v3036 = vadd.f32 %v2987, %v3035
    %v3037 = vpop.f32.mrf.mxu0
    %v3038 = vadd.f32 %v2989, %v3037
    %3039 = vmatmul.bf16.gmra.mxu0 %v863
    %v3040 = vpop.f32.mrf.mxu0
    %v3041 = vadd.f32 %v2992, %v3040
    %v3042 = vpop.f32.mrf.mxu0
    %v3043 = vadd.f32 %v2994, %v3042
    %3044 = vmatmul.bf16.gmra.mxu0 %v870
    %v3045 = vpop.f32.mrf.mxu0
    %v3046 = vadd.f32 %v2997, %v3045
    %v3047 = vpop.f32.mrf.mxu0
    %v3048 = vadd.f32 %v2999, %v3047
    %3049 = vmatmul.bf16.gmra.mxu0 %v877
    %v3050 = vpop.f32.mrf.mxu0
    %v3051 = vadd.f32 %v3002, %v3050
    %v3052 = vpop.f32.mrf.mxu0
    %v3053 = vadd.f32 %v3004, %v3052
    %3054 = vmatmul.bf16.gmra.mxu0 %v884
    %v3055 = vpop.f32.mrf.mxu0
    %v3056 = vadd.f32 %v3007, %v3055
    %v3057 = vpop.f32.mrf.mxu0
    %v3058 = vadd.f32 %v3009, %v3057
    %3059 = vdwg.mxu0
    %3060 = vmatpush.bf16.msra.mxu0 %v2339
    %3061 = vmatpush.bf16.msra.mxu0 %v2332
    %3062 = vmatpush.bf16.msra.mxu0 %v2325
    %3063 = vmatpush.bf16.msra.mxu0 %v2318
    %3064 = vmatpush.bf16.msra.mxu0 %v2311
    %3065 = vmatpush.bf16.msra.mxu0 %v2304
    %3066 = vmatpush.bf16.msra.mxu0 %v2297
    %3067 = vmatpush.bf16.msra.mxu0 %v2290
    %3068 = vmatmul.bf16.gmra.mxu0 %v836
    %v3069 = vpop.f32.mrf.mxu0
    %v3070 = vadd.f32 %v3021, %v3069
    %v3071 = vpop.f32.mrf.mxu0
    %v3072 = vadd.f32 %v3023, %v3071
    %3073 = vmatmul.bf16.gmra.mxu0 %v843
    %v3074 = vpop.f32.mrf.mxu0
    %v3075 = vadd.f32 %v3026, %v3074
    %v3076 = vpop.f32.mrf.mxu0
    %v3077 = vadd.f32 %v3028, %v3076
    %3078 = vmatmul.bf16.gmra.mxu0 %v850
    %v3079 = vpop.f32.mrf.mxu0
    %v3080 = vadd.f32 %v3031, %v3079
    %v3081 = vpop.f32.mrf.mxu0
    %v3082 = vadd.f32 %v3033, %v3081
    %3083 = vmatmul.bf16.gmra.mxu0 %v857
    %v3084 = vpop.f32.mrf.mxu0
    %v3085 = vadd.f32 %v3036, %v3084
    %v3086 = vpop.f32.mrf.mxu0
    %v3087 = vadd.f32 %v3038, %v3086
    %3088 = vmatmul.bf16.gmra.mxu0 %v864
    %v3089 = vpop.f32.mrf.mxu0
    %v3090 = vadd.f32 %v3041, %v3089
    %v3091 = vpop.f32.mrf.mxu0
    %v3092 = vadd.f32 %v3043, %v3091
    %3093 = vmatmul.bf16.gmra.mxu0 %v871
    %v3094 = vpop.f32.mrf.mxu0
    %v3095 = vadd.f32 %v3046, %v3094
    %v3096 = vpop.f32.mrf.mxu0
    %v3097 = vadd.f32 %v3048, %v3096
    %3098 = vmatmul.bf16.gmra.mxu0 %v878
    %v3099 = vpop.f32.mrf.mxu0
    %v3100 = vadd.f32 %v3051, %v3099
    %v3101 = vpop.f32.mrf.mxu0
    %v3102 = vadd.f32 %v3053, %v3101
    %3103 = vmatmul.bf16.gmra.mxu0 %v885
    %v3104 = vpop.f32.mrf.mxu0
    %v3105 = vadd.f32 %v3056, %v3104
    %v3106 = vpop.f32.mrf.mxu0
    %v3107 = vadd.f32 %v3058, %v3106
    %3108 = vdwg.mxu0
    %3109 = vmatpush.bf16.msra.mxu0 %v2395
    %3110 = vmatpush.bf16.msra.mxu0 %v2388
    %3111 = vmatpush.bf16.msra.mxu0 %v2381
    %3112 = vmatpush.bf16.msra.mxu0 %v2374
    %3113 = vmatpush.bf16.msra.mxu0 %v2367
    %3114 = vmatpush.bf16.msra.mxu0 %v2360
    %3115 = vmatpush.bf16.msra.mxu0 %v2353
    %3116 = vmatpush.bf16.msra.mxu0 %v2346
    %3117 = vmatmul.bf16.gmra.mxu0 %v837
    %v3118 = vpop.f32.mrf.mxu0
    %v3119 = vadd.f32 %v3070, %v3118
    %v3120 = vpop.f32.mrf.mxu0
    %v3121 = vadd.f32 %v3072, %v3120
    %3122 = vmatmul.bf16.gmra.mxu0 %v844
    %v3123 = vpop.f32.mrf.mxu0
    %v3124 = vadd.f32 %v3075, %v3123
    %v3125 = vpop.f32.mrf.mxu0
    %v3126 = vadd.f32 %v3077, %v3125
    %3127 = vmatmul.bf16.gmra.mxu0 %v851
    %v3128 = vpop.f32.mrf.mxu0
    %v3129 = vadd.f32 %v3080, %v3128
    %v3130 = vpop.f32.mrf.mxu0
    %v3131 = vadd.f32 %v3082, %v3130
    %3132 = vmatmul.bf16.gmra.mxu0 %v858
    %v3133 = vpop.f32.mrf.mxu0
    %v3134 = vadd.f32 %v3085, %v3133
    %v3135 = vpop.f32.mrf.mxu0
    %v3136 = vadd.f32 %v3087, %v3135
    %3137 = vmatmul.bf16.gmra.mxu0 %v865
    %v3138 = vpop.f32.mrf.mxu0
    %v3139 = vadd.f32 %v3090, %v3138
    %v3140 = vpop.f32.mrf.mxu0
    %v3141 = vadd.f32 %v3092, %v3140
    %3142 = vmatmul.bf16.gmra.mxu0 %v872
    %v3143 = vpop.f32.mrf.mxu0
    %v3144 = vadd.f32 %v3095, %v3143
    %v3145 = vpop.f32.mrf.mxu0
    %v3146 = vadd.f32 %v3097, %v3145
    %3147 = vmatmul.bf16.gmra.mxu0 %v879
    %v3148 = vpop.f32.mrf.mxu0
    %v3149 = vadd.f32 %v3100, %v3148
    %v3150 = vpop.f32.mrf.mxu0
    %v3151 = vadd.f32 %v3102, %v3150
    %3152 = vmatmul.bf16.gmra.mxu0 %v886
    %v3153 = vpop.f32.mrf.mxu0
    %v3154 = vadd.f32 %v3105, %v3153
    %v3155 = vpop.f32.mrf.mxu0
    %v3156 = vadd.f32 %v3107, %v3155
    %3157 = vdwg.mxu0
    %3158 = vmatpush.bf16.msra.mxu0 %v2451
    %3159 = vmatpush.bf16.msra.mxu0 %v2444
    %3160 = vmatpush.bf16.msra.mxu0 %v2437
    %3161 = vmatpush.bf16.msra.mxu0 %v2430
    %3162 = vmatpush.bf16.msra.mxu0 %v2423
    %3163 = vmatpush.bf16.msra.mxu0 %v2416
    %3164 = vmatpush.bf16.msra.mxu0 %v2409
    %3165 = vmatpush.bf16.msra.mxu0 %v2402
    %3166 = vmatmul.bf16.gmra.mxu0 %v838
    %v3167 = vpop.f32.mrf.mxu0
    %v3168 = vadd.f32 %v3119, %v3167
    %v3169 = vpop.f32.mrf.mxu0
    %v3170 = vadd.f32 %v3121, %v3169
    %3171 = vmatmul.bf16.gmra.mxu0 %v845
    %v3172 = vpop.f32.mrf.mxu0
    %v3173 = vadd.f32 %v3124, %v3172
    %v3174 = vpop.f32.mrf.mxu0
    %v3175 = vadd.f32 %v3126, %v3174
    %3176 = vmatmul.bf16.gmra.mxu0 %v852
    %v3177 = vpop.f32.mrf.mxu0
    %v3178 = vadd.f32 %v3129, %v3177
    %v3179 = vpop.f32.mrf.mxu0
    %v3180 = vadd.f32 %v3131, %v3179
    %3181 = vmatmul.bf16.gmra.mxu0 %v859
    %v3182 = vpop.f32.mrf.mxu0
    %v3183 = vadd.f32 %v3134, %v3182
    %v3184 = vpop.f32.mrf.mxu0
    %v3185 = vadd.f32 %v3136, %v3184
    %3186 = vmatmul.bf16.gmra.mxu0 %v866
    %v3187 = vpop.f32.mrf.mxu0
    %v3188 = vadd.f32 %v3139, %v3187
    %v3189 = vpop.f32.mrf.mxu0
    %v3190 = vadd.f32 %v3141, %v3189
    %3191 = vmatmul.bf16.gmra.mxu0 %v873
    %v3192 = vpop.f32.mrf.mxu0
    %v3193 = vadd.f32 %v3144, %v3192
    %v3194 = vpop.f32.mrf.mxu0
    %v3195 = vadd.f32 %v3146, %v3194
    %3196 = vmatmul.bf16.gmra.mxu0 %v880
    %v3197 = vpop.f32.mrf.mxu0
    %v3198 = vadd.f32 %v3149, %v3197
    %v3199 = vpop.f32.mrf.mxu0
    %v3200 = vadd.f32 %v3151, %v3199
    %3201 = vmatmul.bf16.gmra.mxu0 %v887
    %v3202 = vpop.f32.mrf.mxu0
    %v3203 = vadd.f32 %v3154, %v3202
    %v3204 = vpop.f32.mrf.mxu0
    %v3205 = vadd.f32 %v3156, %v3204
    %3206 = vdwg.mxu0
    %3207 = vmatpush.bf16.msra.mxu0 %v2507
    %3208 = vmatpush.bf16.msra.mxu0 %v2500
    %3209 = vmatpush.bf16.msra.mxu0 %v2493
    %3210 = vmatpush.bf16.msra.mxu0 %v2486
    %3211 = vmatpush.bf16.msra.mxu0 %v2479
    %3212 = vmatpush.bf16.msra.mxu0 %v2472
    %3213 = vmatpush.bf16.msra.mxu0 %v2465
    %3214 = vmatpush.bf16.msra.mxu0 %v2458
    %3215 = vmatmul.bf16.gmra.mxu0 %v839
    %v3216 = vpop.f32.mrf.mxu0
    %v3217 = vadd.f32 %v3168, %v3216
    %v3218 = vpop.f32.mrf.mxu0
    %v3219 = vadd.f32 %v3170, %v3218
    %3220 = vmatmul.bf16.gmra.mxu0 %v846
    %v3221 = vpop.f32.mrf.mxu0
    %v3222 = vadd.f32 %v3173, %v3221
    %v3223 = vpop.f32.mrf.mxu0
    %v3224 = vadd.f32 %v3175, %v3223
    %3225 = vmatmul.bf16.gmra.mxu0 %v853
    %v3226 = vpop.f32.mrf.mxu0
    %v3227 = vadd.f32 %v3178, %v3226
    %v3228 = vpop.f32.mrf.mxu0
    %v3229 = vadd.f32 %v3180, %v3228
    %3230 = vmatmul.bf16.gmra.mxu0 %v860
    %v3231 = vpop.f32.mrf.mxu0
    %v3232 = vadd.f32 %v3183, %v3231
    %v3233 = vpop.f32.mrf.mxu0
    %v3234 = vadd.f32 %v3185, %v3233
    %3235 = vmatmul.bf16.gmra.mxu0 %v867
    %v3236 = vpop.f32.mrf.mxu0
    %v3237 = vadd.f32 %v3188, %v3236
    %v3238 = vpop.f32.mrf.mxu0
    %v3239 = vadd.f32 %v3190, %v3238
    %3240 = vmatmul.bf16.gmra.mxu0 %v874
    %v3241 = vpop.f32.mrf.mxu0
    %v3242 = vadd.f32 %v3193, %v3241
    %v3243 = vpop.f32.mrf.mxu0
    %v3244 = vadd.f32 %v3195, %v3243
    %3245 = vmatmul.bf16.gmra.mxu0 %v881
    %v3246 = vpop.f32.mrf.mxu0
    %v3247 = vadd.f32 %v3198, %v3246
    %v3248 = vpop.f32.mrf.mxu0
    %v3249 = vadd.f32 %v3200, %v3248
    %3250 = vmatmul.bf16.gmra.mxu0 %v888
    %v3251 = vpop.f32.mrf.mxu0
    %v3252 = vadd.f32 %v3203, %v3251
    %v3253 = vpop.f32.mrf.mxu0
    %v3254 = vadd.f32 %v3205, %v3253
    %3255 = vdwg.mxu0
    %3256 = vmatpush.bf16.msra.mxu0 %v2563
    %3257 = vmatpush.bf16.msra.mxu0 %v2556
    %3258 = vmatpush.bf16.msra.mxu0 %v2549
    %3259 = vmatpush.bf16.msra.mxu0 %v2542
    %3260 = vmatpush.bf16.msra.mxu0 %v2535
    %3261 = vmatpush.bf16.msra.mxu0 %v2528
    %3262 = vmatpush.bf16.msra.mxu0 %v2521
    %3263 = vmatpush.bf16.msra.mxu0 %v2514
    %3264 = vmatmul.bf16.gmra.mxu0 %v840
    %v3265 = vpop.f32.mrf.mxu0
    %v3266 = vadd.f32 %v3217, %v3265
    %v3267 = vpop.f32.mrf.mxu0
    %v3268 = vadd.f32 %v3219, %v3267
    %3269 = vmatmul.bf16.gmra.mxu0 %v847
    %v3270 = vpop.f32.mrf.mxu0
    %v3271 = vadd.f32 %v3222, %v3270
    %v3272 = vpop.f32.mrf.mxu0
    %v3273 = vadd.f32 %v3224, %v3272
    %3274 = vmatmul.bf16.gmra.mxu0 %v854
    %v3275 = vpop.f32.mrf.mxu0
    %v3276 = vadd.f32 %v3227, %v3275
    %v3277 = vpop.f32.mrf.mxu0
    %v3278 = vadd.f32 %v3229, %v3277
    %3279 = vmatmul.bf16.gmra.mxu0 %v861
    %v3280 = vpop.f32.mrf.mxu0
    %v3281 = vadd.f32 %v3232, %v3280
    %v3282 = vpop.f32.mrf.mxu0
    %v3283 = vadd.f32 %v3234, %v3282
    %3284 = vmatmul.bf16.gmra.mxu0 %v868
    %v3285 = vpop.f32.mrf.mxu0
    %v3286 = vadd.f32 %v3237, %v3285
    %v3287 = vpop.f32.mrf.mxu0
    %v3288 = vadd.f32 %v3239, %v3287
    %3289 = vmatmul.bf16.gmra.mxu0 %v875
    %v3290 = vpop.f32.mrf.mxu0
    %v3291 = vadd.f32 %v3242, %v3290
    %v3292 = vpop.f32.mrf.mxu0
    %v3293 = vadd.f32 %v3244, %v3292
    %3294 = vmatmul.bf16.gmra.mxu0 %v882
    %v3295 = vpop.f32.mrf.mxu0
    %v3296 = vadd.f32 %v3247, %v3295
    %v3297 = vpop.f32.mrf.mxu0
    %v3298 = vadd.f32 %v3249, %v3297
    %3299 = vmatmul.bf16.gmra.mxu0 %v889
    %v3300 = vpop.f32.mrf.mxu0
    %v3301 = vadd.f32 %v3252, %v3300
    %v3302 = vpop.f32.mrf.mxu0
    %v3303 = vadd.f32 %v3254, %v3302
    %3304 = vdwg.mxu0
    %3305 = vmatpush.bf16.msra.mxu0 %v2228
    %3306 = vmatpush.bf16.msra.mxu0 %v2221
    %3307 = vmatpush.bf16.msra.mxu0 %v2214
    %3308 = vmatpush.bf16.msra.mxu0 %v2207
    %3309 = vmatpush.bf16.msra.mxu0 %v2200
    %3310 = vmatpush.bf16.msra.mxu0 %v2193
    %3311 = vmatpush.bf16.msra.mxu0 %v2186
    %3312 = vmatpush.bf16.msra.mxu0 %v2179
    %3313 = vmatmul.bf16.gmra.mxu0 %v834
    %v3314 = vpop.f32.mrf.mxu0
    %v3315 = vadd.f32 %v645, %v3314
    %v3316 = vpop.f32.mrf.mxu0
    %v3317 = vadd.f32 %v645, %v3316
    %3318 = vmatmul.bf16.gmra.mxu0 %v841
    %v3319 = vpop.f32.mrf.mxu0
    %v3320 = vadd.f32 %v645, %v3319
    %v3321 = vpop.f32.mrf.mxu0
    %v3322 = vadd.f32 %v645, %v3321
    %3323 = vmatmul.bf16.gmra.mxu0 %v848
    %v3324 = vpop.f32.mrf.mxu0
    %v3325 = vadd.f32 %v645, %v3324
    %v3326 = vpop.f32.mrf.mxu0
    %v3327 = vadd.f32 %v645, %v3326
    %3328 = vmatmul.bf16.gmra.mxu0 %v855
    %v3329 = vpop.f32.mrf.mxu0
    %v3330 = vadd.f32 %v645, %v3329
    %v3331 = vpop.f32.mrf.mxu0
    %v3332 = vadd.f32 %v645, %v3331
    %3333 = vmatmul.bf16.gmra.mxu0 %v862
    %v3334 = vpop.f32.mrf.mxu0
    %v3335 = vadd.f32 %v645, %v3334
    %v3336 = vpop.f32.mrf.mxu0
    %v3337 = vadd.f32 %v645, %v3336
    %3338 = vmatmul.bf16.gmra.mxu0 %v869
    %v3339 = vpop.f32.mrf.mxu0
    %v3340 = vadd.f32 %v645, %v3339
    %v3341 = vpop.f32.mrf.mxu0
    %v3342 = vadd.f32 %v645, %v3341
    %3343 = vmatmul.bf16.gmra.mxu0 %v876
    %v3344 = vpop.f32.mrf.mxu0
    %v3345 = vadd.f32 %v645, %v3344
    %v3346 = vpop.f32.mrf.mxu0
    %v3347 = vadd.f32 %v645, %v3346
    %3348 = vmatmul.bf16.gmra.mxu0 %v883
    %v3349 = vpop.f32.mrf.mxu0
    %v3350 = vadd.f32 %v645, %v3349
    %v3351 = vpop.f32.mrf.mxu0
    %v3352 = vadd.f32 %v645, %v3351
    %3353 = vdwg.mxu0
    %3354 = vmatpush.bf16.msra.mxu0 %v2284
    %3355 = vmatpush.bf16.msra.mxu0 %v2277
    %3356 = vmatpush.bf16.msra.mxu0 %v2270
    %3357 = vmatpush.bf16.msra.mxu0 %v2263
    %3358 = vmatpush.bf16.msra.mxu0 %v2256
    %3359 = vmatpush.bf16.msra.mxu0 %v2249
    %3360 = vmatpush.bf16.msra.mxu0 %v2242
    %3361 = vmatpush.bf16.msra.mxu0 %v2235
    %3362 = vmatmul.bf16.gmra.mxu0 %v835
    %v3363 = vpop.f32.mrf.mxu0
    %v3364 = vadd.f32 %v3315, %v3363
    %v3365 = vpop.f32.mrf.mxu0
    %v3366 = vadd.f32 %v3317, %v3365
    %3367 = vmatmul.bf16.gmra.mxu0 %v842
    %v3368 = vpop.f32.mrf.mxu0
    %v3369 = vadd.f32 %v3320, %v3368
    %v3370 = vpop.f32.mrf.mxu0
    %v3371 = vadd.f32 %v3322, %v3370
    %3372 = vmatmul.bf16.gmra.mxu0 %v849
    %v3373 = vpop.f32.mrf.mxu0
    %v3374 = vadd.f32 %v3325, %v3373
    %v3375 = vpop.f32.mrf.mxu0
    %v3376 = vadd.f32 %v3327, %v3375
    %3377 = vmatmul.bf16.gmra.mxu0 %v856
    %v3378 = vpop.f32.mrf.mxu0
    %v3379 = vadd.f32 %v3330, %v3378
    %v3380 = vpop.f32.mrf.mxu0
    %v3381 = vadd.f32 %v3332, %v3380
    %3382 = vmatmul.bf16.gmra.mxu0 %v863
    %v3383 = vpop.f32.mrf.mxu0
    %v3384 = vadd.f32 %v3335, %v3383
    %v3385 = vpop.f32.mrf.mxu0
    %v3386 = vadd.f32 %v3337, %v3385
    %3387 = vmatmul.bf16.gmra.mxu0 %v870
    %v3388 = vpop.f32.mrf.mxu0
    %v3389 = vadd.f32 %v3340, %v3388
    %v3390 = vpop.f32.mrf.mxu0
    %v3391 = vadd.f32 %v3342, %v3390
    %3392 = vmatmul.bf16.gmra.mxu0 %v877
    %v3393 = vpop.f32.mrf.mxu0
    %v3394 = vadd.f32 %v3345, %v3393
    %v3395 = vpop.f32.mrf.mxu0
    %v3396 = vadd.f32 %v3347, %v3395
    %3397 = vmatmul.bf16.gmra.mxu0 %v884
    %v3398 = vpop.f32.mrf.mxu0
    %v3399 = vadd.f32 %v3350, %v3398
    %v3400 = vpop.f32.mrf.mxu0
    %v3401 = vadd.f32 %v3352, %v3400
    %3402 = vdwg.mxu0
    %3403 = vmatpush.bf16.msra.mxu0 %v2340
    %3404 = vmatpush.bf16.msra.mxu0 %v2333
    %3405 = vmatpush.bf16.msra.mxu0 %v2326
    %3406 = vmatpush.bf16.msra.mxu0 %v2319
    %3407 = vmatpush.bf16.msra.mxu0 %v2312
    %3408 = vmatpush.bf16.msra.mxu0 %v2305
    %3409 = vmatpush.bf16.msra.mxu0 %v2298
    %3410 = vmatpush.bf16.msra.mxu0 %v2291
    %3411 = vmatmul.bf16.gmra.mxu0 %v836
    %v3412 = vpop.f32.mrf.mxu0
    %v3413 = vadd.f32 %v3364, %v3412
    %v3414 = vpop.f32.mrf.mxu0
    %v3415 = vadd.f32 %v3366, %v3414
    %3416 = vmatmul.bf16.gmra.mxu0 %v843
    %v3417 = vpop.f32.mrf.mxu0
    %v3418 = vadd.f32 %v3369, %v3417
    %v3419 = vpop.f32.mrf.mxu0
    %v3420 = vadd.f32 %v3371, %v3419
    %3421 = vmatmul.bf16.gmra.mxu0 %v850
    %v3422 = vpop.f32.mrf.mxu0
    %v3423 = vadd.f32 %v3374, %v3422
    %v3424 = vpop.f32.mrf.mxu0
    %v3425 = vadd.f32 %v3376, %v3424
    %3426 = vmatmul.bf16.gmra.mxu0 %v857
    %v3427 = vpop.f32.mrf.mxu0
    %v3428 = vadd.f32 %v3379, %v3427
    %v3429 = vpop.f32.mrf.mxu0
    %v3430 = vadd.f32 %v3381, %v3429
    %3431 = vmatmul.bf16.gmra.mxu0 %v864
    %v3432 = vpop.f32.mrf.mxu0
    %v3433 = vadd.f32 %v3384, %v3432
    %v3434 = vpop.f32.mrf.mxu0
    %v3435 = vadd.f32 %v3386, %v3434
    %3436 = vmatmul.bf16.gmra.mxu0 %v871
    %v3437 = vpop.f32.mrf.mxu0
    %v3438 = vadd.f32 %v3389, %v3437
    %v3439 = vpop.f32.mrf.mxu0
    %v3440 = vadd.f32 %v3391, %v3439
    %3441 = vmatmul.bf16.gmra.mxu0 %v878
    %v3442 = vpop.f32.mrf.mxu0
    %v3443 = vadd.f32 %v3394, %v3442
    %v3444 = vpop.f32.mrf.mxu0
    %v3445 = vadd.f32 %v3396, %v3444
    %3446 = vmatmul.bf16.gmra.mxu0 %v885
    %v3447 = vpop.f32.mrf.mxu0
    %v3448 = vadd.f32 %v3399, %v3447
    %v3449 = vpop.f32.mrf.mxu0
    %v3450 = vadd.f32 %v3401, %v3449
    %3451 = vdwg.mxu0
    %3452 = vmatpush.bf16.msra.mxu0 %v2396
    %3453 = vmatpush.bf16.msra.mxu0 %v2389
    %3454 = vmatpush.bf16.msra.mxu0 %v2382
    %3455 = vmatpush.bf16.msra.mxu0 %v2375
    %3456 = vmatpush.bf16.msra.mxu0 %v2368
    %3457 = vmatpush.bf16.msra.mxu0 %v2361
    %3458 = vmatpush.bf16.msra.mxu0 %v2354
    %3459 = vmatpush.bf16.msra.mxu0 %v2347
    %3460 = vmatmul.bf16.gmra.mxu0 %v837
    %v3461 = vpop.f32.mrf.mxu0
    %v3462 = vadd.f32 %v3413, %v3461
    %v3463 = vpop.f32.mrf.mxu0
    %v3464 = vadd.f32 %v3415, %v3463
    %3465 = vmatmul.bf16.gmra.mxu0 %v844
    %v3466 = vpop.f32.mrf.mxu0
    %v3467 = vadd.f32 %v3418, %v3466
    %v3468 = vpop.f32.mrf.mxu0
    %v3469 = vadd.f32 %v3420, %v3468
    %3470 = vmatmul.bf16.gmra.mxu0 %v851
    %v3471 = vpop.f32.mrf.mxu0
    %v3472 = vadd.f32 %v3423, %v3471
    %v3473 = vpop.f32.mrf.mxu0
    %v3474 = vadd.f32 %v3425, %v3473
    %3475 = vmatmul.bf16.gmra.mxu0 %v858
    %v3476 = vpop.f32.mrf.mxu0
    %v3477 = vadd.f32 %v3428, %v3476
    %v3478 = vpop.f32.mrf.mxu0
    %v3479 = vadd.f32 %v3430, %v3478
    %3480 = vmatmul.bf16.gmra.mxu0 %v865
    %v3481 = vpop.f32.mrf.mxu0
    %v3482 = vadd.f32 %v3433, %v3481
    %v3483 = vpop.f32.mrf.mxu0
    %v3484 = vadd.f32 %v3435, %v3483
    %3485 = vmatmul.bf16.gmra.mxu0 %v872
    %v3486 = vpop.f32.mrf.mxu0
    %v3487 = vadd.f32 %v3438, %v3486
    %v3488 = vpop.f32.mrf.mxu0
    %v3489 = vadd.f32 %v3440, %v3488
    %3490 = vmatmul.bf16.gmra.mxu0 %v879
    %v3491 = vpop.f32.mrf.mxu0
    %v3492 = vadd.f32 %v3443, %v3491
    %v3493 = vpop.f32.mrf.mxu0
    %v3494 = vadd.f32 %v3445, %v3493
    %3495 = vmatmul.bf16.gmra.mxu0 %v886
    %v3496 = vpop.f32.mrf.mxu0
    %v3497 = vadd.f32 %v3448, %v3496
    %v3498 = vpop.f32.mrf.mxu0
    %v3499 = vadd.f32 %v3450, %v3498
    %3500 = vdwg.mxu0
    %3501 = vmatpush.bf16.msra.mxu0 %v2452
    %3502 = vmatpush.bf16.msra.mxu0 %v2445
    %3503 = vmatpush.bf16.msra.mxu0 %v2438
    %3504 = vmatpush.bf16.msra.mxu0 %v2431
    %3505 = vmatpush.bf16.msra.mxu0 %v2424
    %3506 = vmatpush.bf16.msra.mxu0 %v2417
    %3507 = vmatpush.bf16.msra.mxu0 %v2410
    %3508 = vmatpush.bf16.msra.mxu0 %v2403
    %3509 = vmatmul.bf16.gmra.mxu0 %v838
    %v3510 = vpop.f32.mrf.mxu0
    %v3511 = vadd.f32 %v3462, %v3510
    %v3512 = vpop.f32.mrf.mxu0
    %v3513 = vadd.f32 %v3464, %v3512
    %3514 = vmatmul.bf16.gmra.mxu0 %v845
    %v3515 = vpop.f32.mrf.mxu0
    %v3516 = vadd.f32 %v3467, %v3515
    %v3517 = vpop.f32.mrf.mxu0
    %v3518 = vadd.f32 %v3469, %v3517
    %3519 = vmatmul.bf16.gmra.mxu0 %v852
    %v3520 = vpop.f32.mrf.mxu0
    %v3521 = vadd.f32 %v3472, %v3520
    %v3522 = vpop.f32.mrf.mxu0
    %v3523 = vadd.f32 %v3474, %v3522
    %3524 = vmatmul.bf16.gmra.mxu0 %v859
    %v3525 = vpop.f32.mrf.mxu0
    %v3526 = vadd.f32 %v3477, %v3525
    %v3527 = vpop.f32.mrf.mxu0
    %v3528 = vadd.f32 %v3479, %v3527
    %3529 = vmatmul.bf16.gmra.mxu0 %v866
    %v3530 = vpop.f32.mrf.mxu0
    %v3531 = vadd.f32 %v3482, %v3530
    %v3532 = vpop.f32.mrf.mxu0
    %v3533 = vadd.f32 %v3484, %v3532
    %3534 = vmatmul.bf16.gmra.mxu0 %v873
    %v3535 = vpop.f32.mrf.mxu0
    %v3536 = vadd.f32 %v3487, %v3535
    %v3537 = vpop.f32.mrf.mxu0
    %v3538 = vadd.f32 %v3489, %v3537
    %3539 = vmatmul.bf16.gmra.mxu0 %v880
    %v3540 = vpop.f32.mrf.mxu0
    %v3541 = vadd.f32 %v3492, %v3540
    %v3542 = vpop.f32.mrf.mxu0
    %v3543 = vadd.f32 %v3494, %v3542
    %3544 = vmatmul.bf16.gmra.mxu0 %v887
    %v3545 = vpop.f32.mrf.mxu0
    %v3546 = vadd.f32 %v3497, %v3545
    %v3547 = vpop.f32.mrf.mxu0
    %v3548 = vadd.f32 %v3499, %v3547
    %3549 = vdwg.mxu0
    %3550 = vmatpush.bf16.msra.mxu0 %v2508
    %3551 = vmatpush.bf16.msra.mxu0 %v2501
    %3552 = vmatpush.bf16.msra.mxu0 %v2494
    %3553 = vmatpush.bf16.msra.mxu0 %v2487
    %3554 = vmatpush.bf16.msra.mxu0 %v2480
    %3555 = vmatpush.bf16.msra.mxu0 %v2473
    %3556 = vmatpush.bf16.msra.mxu0 %v2466
    %3557 = vmatpush.bf16.msra.mxu0 %v2459
    %3558 = vmatmul.bf16.gmra.mxu0 %v839
    %v3559 = vpop.f32.mrf.mxu0
    %v3560 = vadd.f32 %v3511, %v3559
    %v3561 = vpop.f32.mrf.mxu0
    %v3562 = vadd.f32 %v3513, %v3561
    %3563 = vmatmul.bf16.gmra.mxu0 %v846
    %v3564 = vpop.f32.mrf.mxu0
    %v3565 = vadd.f32 %v3516, %v3564
    %v3566 = vpop.f32.mrf.mxu0
    %v3567 = vadd.f32 %v3518, %v3566
    %3568 = vmatmul.bf16.gmra.mxu0 %v853
    %v3569 = vpop.f32.mrf.mxu0
    %v3570 = vadd.f32 %v3521, %v3569
    %v3571 = vpop.f32.mrf.mxu0
    %v3572 = vadd.f32 %v3523, %v3571
    %3573 = vmatmul.bf16.gmra.mxu0 %v860
    %v3574 = vpop.f32.mrf.mxu0
    %v3575 = vadd.f32 %v3526, %v3574
    %v3576 = vpop.f32.mrf.mxu0
    %v3577 = vadd.f32 %v3528, %v3576
    %3578 = vmatmul.bf16.gmra.mxu0 %v867
    %v3579 = vpop.f32.mrf.mxu0
    %v3580 = vadd.f32 %v3531, %v3579
    %v3581 = vpop.f32.mrf.mxu0
    %v3582 = vadd.f32 %v3533, %v3581
    %3583 = vmatmul.bf16.gmra.mxu0 %v874
    %v3584 = vpop.f32.mrf.mxu0
    %v3585 = vadd.f32 %v3536, %v3584
    %v3586 = vpop.f32.mrf.mxu0
    %v3587 = vadd.f32 %v3538, %v3586
    %3588 = vmatmul.bf16.gmra.mxu0 %v881
    %v3589 = vpop.f32.mrf.mxu0
    %v3590 = vadd.f32 %v3541, %v3589
    %v3591 = vpop.f32.mrf.mxu0
    %v3592 = vadd.f32 %v3543, %v3591
    %3593 = vmatmul.bf16.gmra.mxu0 %v888
    %v3594 = vpop.f32.mrf.mxu0
    %v3595 = vadd.f32 %v3546, %v3594
    %v3596 = vpop.f32.mrf.mxu0
    %v3597 = vadd.f32 %v3548, %v3596
    %3598 = vdwg.mxu0
    %3599 = vmatpush.bf16.msra.mxu0 %v2564
    %3600 = vmatpush.bf16.msra.mxu0 %v2557
    %3601 = vmatpush.bf16.msra.mxu0 %v2550
    %3602 = vmatpush.bf16.msra.mxu0 %v2543
    %3603 = vmatpush.bf16.msra.mxu0 %v2536
    %3604 = vmatpush.bf16.msra.mxu0 %v2529
    %3605 = vmatpush.bf16.msra.mxu0 %v2522
    %3606 = vmatpush.bf16.msra.mxu0 %v2515
    %3607 = vmatmul.bf16.gmra.mxu0 %v840
    %v3608 = vpop.f32.mrf.mxu0
    %v3609 = vadd.f32 %v3560, %v3608
    %v3610 = vpop.f32.mrf.mxu0
    %v3611 = vadd.f32 %v3562, %v3610
    %3612 = vmatmul.bf16.gmra.mxu0 %v847
    %v3613 = vpop.f32.mrf.mxu0
    %v3614 = vadd.f32 %v3565, %v3613
    %v3615 = vpop.f32.mrf.mxu0
    %v3616 = vadd.f32 %v3567, %v3615
    %3617 = vmatmul.bf16.gmra.mxu0 %v854
    %v3618 = vpop.f32.mrf.mxu0
    %v3619 = vadd.f32 %v3570, %v3618
    %v3620 = vpop.f32.mrf.mxu0
    %v3621 = vadd.f32 %v3572, %v3620
    %3622 = vmatmul.bf16.gmra.mxu0 %v861
    %v3623 = vpop.f32.mrf.mxu0
    %v3624 = vadd.f32 %v3575, %v3623
    %v3625 = vpop.f32.mrf.mxu0
    %v3626 = vadd.f32 %v3577, %v3625
    %3627 = vmatmul.bf16.gmra.mxu0 %v868
    %v3628 = vpop.f32.mrf.mxu0
    %v3629 = vadd.f32 %v3580, %v3628
    %v3630 = vpop.f32.mrf.mxu0
    %v3631 = vadd.f32 %v3582, %v3630
    %3632 = vmatmul.bf16.gmra.mxu0 %v875
    %v3633 = vpop.f32.mrf.mxu0
    %v3634 = vadd.f32 %v3585, %v3633
    %v3635 = vpop.f32.mrf.mxu0
    %v3636 = vadd.f32 %v3587, %v3635
    %3637 = vmatmul.bf16.gmra.mxu0 %v882
    %v3638 = vpop.f32.mrf.mxu0
    %v3639 = vadd.f32 %v3590, %v3638
    %v3640 = vpop.f32.mrf.mxu0
    %v3641 = vadd.f32 %v3592, %v3640
    %3642 = vmatmul.bf16.gmra.mxu0 %v889
    %v3643 = vpop.f32.mrf.mxu0
    %v3644 = vadd.f32 %v3595, %v3643
    %v3645 = vpop.f32.mrf.mxu0
    %v3646 = vadd.f32 %v3597, %v3645
    %3647 = vdwg.mxu0
    %3648 = vmatpush.bf16.msra.mxu0 %v2229
    %3649 = vmatpush.bf16.msra.mxu0 %v2222
    %3650 = vmatpush.bf16.msra.mxu0 %v2215
    %3651 = vmatpush.bf16.msra.mxu0 %v2208
    %3652 = vmatpush.bf16.msra.mxu0 %v2201
    %3653 = vmatpush.bf16.msra.mxu0 %v2194
    %3654 = vmatpush.bf16.msra.mxu0 %v2187
    %3655 = vmatpush.bf16.msra.mxu0 %v2180
    %3656 = vmatmul.bf16.gmra.mxu0 %v834
    %v3657 = vpop.f32.mrf.mxu0
    %v3658 = vadd.f32 %v646, %v3657
    %v3659 = vpop.f32.mrf.mxu0
    %v3660 = vadd.f32 %v646, %v3659
    %3661 = vmatmul.bf16.gmra.mxu0 %v841
    %v3662 = vpop.f32.mrf.mxu0
    %v3663 = vadd.f32 %v646, %v3662
    %v3664 = vpop.f32.mrf.mxu0
    %v3665 = vadd.f32 %v646, %v3664
    %3666 = vmatmul.bf16.gmra.mxu0 %v848
    %v3667 = vpop.f32.mrf.mxu0
    %v3668 = vadd.f32 %v646, %v3667
    %v3669 = vpop.f32.mrf.mxu0
    %v3670 = vadd.f32 %v646, %v3669
    %3671 = vmatmul.bf16.gmra.mxu0 %v855
    %v3672 = vpop.f32.mrf.mxu0
    %v3673 = vadd.f32 %v646, %v3672
    %v3674 = vpop.f32.mrf.mxu0
    %v3675 = vadd.f32 %v646, %v3674
    %3676 = vmatmul.bf16.gmra.mxu0 %v862
    %v3677 = vpop.f32.mrf.mxu0
    %v3678 = vadd.f32 %v646, %v3677
    %v3679 = vpop.f32.mrf.mxu0
    %v3680 = vadd.f32 %v646, %v3679
    %3681 = vmatmul.bf16.gmra.mxu0 %v869
    %v3682 = vpop.f32.mrf.mxu0
    %v3683 = vadd.f32 %v646, %v3682
    %v3684 = vpop.f32.mrf.mxu0
    %v3685 = vadd.f32 %v646, %v3684
    %3686 = vmatmul.bf16.gmra.mxu0 %v876
    %v3687 = vpop.f32.mrf.mxu0
    %v3688 = vadd.f32 %v646, %v3687
    %v3689 = vpop.f32.mrf.mxu0
    %v3690 = vadd.f32 %v646, %v3689
    %3691 = vmatmul.bf16.gmra.mxu0 %v883
    %v3692 = vpop.f32.mrf.mxu0
    %v3693 = vadd.f32 %v646, %v3692
    %v3694 = vpop.f32.mrf.mxu0
    %v3695 = vadd.f32 %v646, %v3694
    %3696 = vdwg.mxu0
    %3697 = vmatpush.bf16.msra.mxu0 %v2285
    %3698 = vmatpush.bf16.msra.mxu0 %v2278
    %3699 = vmatpush.bf16.msra.mxu0 %v2271
    %3700 = vmatpush.bf16.msra.mxu0 %v2264
    %3701 = vmatpush.bf16.msra.mxu0 %v2257
    %3702 = vmatpush.bf16.msra.mxu0 %v2250
    %3703 = vmatpush.bf16.msra.mxu0 %v2243
    %3704 = vmatpush.bf16.msra.mxu0 %v2236
    %3705 = vmatmul.bf16.gmra.mxu0 %v835
    %v3706 = vpop.f32.mrf.mxu0
    %v3707 = vadd.f32 %v3658, %v3706
    %v3708 = vpop.f32.mrf.mxu0
    %v3709 = vadd.f32 %v3660, %v3708
    %3710 = vmatmul.bf16.gmra.mxu0 %v842
    %v3711 = vpop.f32.mrf.mxu0
    %v3712 = vadd.f32 %v3663, %v3711
    %v3713 = vpop.f32.mrf.mxu0
    %v3714 = vadd.f32 %v3665, %v3713
    %3715 = vmatmul.bf16.gmra.mxu0 %v849
    %v3716 = vpop.f32.mrf.mxu0
    %v3717 = vadd.f32 %v3668, %v3716
    %v3718 = vpop.f32.mrf.mxu0
    %v3719 = vadd.f32 %v3670, %v3718
    %3720 = vmatmul.bf16.gmra.mxu0 %v856
    %v3721 = vpop.f32.mrf.mxu0
    %v3722 = vadd.f32 %v3673, %v3721
    %v3723 = vpop.f32.mrf.mxu0
    %v3724 = vadd.f32 %v3675, %v3723
    %3725 = vmatmul.bf16.gmra.mxu0 %v863
    %v3726 = vpop.f32.mrf.mxu0
    %v3727 = vadd.f32 %v3678, %v3726
    %v3728 = vpop.f32.mrf.mxu0
    %v3729 = vadd.f32 %v3680, %v3728
    %3730 = vmatmul.bf16.gmra.mxu0 %v870
    %v3731 = vpop.f32.mrf.mxu0
    %v3732 = vadd.f32 %v3683, %v3731
    %v3733 = vpop.f32.mrf.mxu0
    %v3734 = vadd.f32 %v3685, %v3733
    %3735 = vmatmul.bf16.gmra.mxu0 %v877
    %v3736 = vpop.f32.mrf.mxu0
    %v3737 = vadd.f32 %v3688, %v3736
    %v3738 = vpop.f32.mrf.mxu0
    %v3739 = vadd.f32 %v3690, %v3738
    %3740 = vmatmul.bf16.gmra.mxu0 %v884
    %v3741 = vpop.f32.mrf.mxu0
    %v3742 = vadd.f32 %v3693, %v3741
    %v3743 = vpop.f32.mrf.mxu0
    %v3744 = vadd.f32 %v3695, %v3743
    %3745 = vdwg.mxu0
    %3746 = vmatpush.bf16.msra.mxu0 %v2341
    %3747 = vmatpush.bf16.msra.mxu0 %v2334
    %3748 = vmatpush.bf16.msra.mxu0 %v2327
    %3749 = vmatpush.bf16.msra.mxu0 %v2320
    %3750 = vmatpush.bf16.msra.mxu0 %v2313
    %3751 = vmatpush.bf16.msra.mxu0 %v2306
    %3752 = vmatpush.bf16.msra.mxu0 %v2299
    %3753 = vmatpush.bf16.msra.mxu0 %v2292
    %3754 = vmatmul.bf16.gmra.mxu0 %v836
    %v3755 = vpop.f32.mrf.mxu0
    %v3756 = vadd.f32 %v3707, %v3755
    %v3757 = vpop.f32.mrf.mxu0
    %v3758 = vadd.f32 %v3709, %v3757
    %3759 = vmatmul.bf16.gmra.mxu0 %v843
    %v3760 = vpop.f32.mrf.mxu0
    %v3761 = vadd.f32 %v3712, %v3760
    %v3762 = vpop.f32.mrf.mxu0
    %v3763 = vadd.f32 %v3714, %v3762
    %3764 = vmatmul.bf16.gmra.mxu0 %v850
    %v3765 = vpop.f32.mrf.mxu0
    %v3766 = vadd.f32 %v3717, %v3765
    %v3767 = vpop.f32.mrf.mxu0
    %v3768 = vadd.f32 %v3719, %v3767
    %3769 = vmatmul.bf16.gmra.mxu0 %v857
    %v3770 = vpop.f32.mrf.mxu0
    %v3771 = vadd.f32 %v3722, %v3770
    %v3772 = vpop.f32.mrf.mxu0
    %v3773 = vadd.f32 %v3724, %v3772
    %3774 = vmatmul.bf16.gmra.mxu0 %v864
    %v3775 = vpop.f32.mrf.mxu0
    %v3776 = vadd.f32 %v3727, %v3775
    %v3777 = vpop.f32.mrf.mxu0
    %v3778 = vadd.f32 %v3729, %v3777
    %3779 = vmatmul.bf16.gmra.mxu0 %v871
    %v3780 = vpop.f32.mrf.mxu0
    %v3781 = vadd.f32 %v3732, %v3780
    %v3782 = vpop.f32.mrf.mxu0
    %v3783 = vadd.f32 %v3734, %v3782
    %3784 = vmatmul.bf16.gmra.mxu0 %v878
    %v3785 = vpop.f32.mrf.mxu0
    %v3786 = vadd.f32 %v3737, %v3785
    %v3787 = vpop.f32.mrf.mxu0
    %v3788 = vadd.f32 %v3739, %v3787
    %3789 = vmatmul.bf16.gmra.mxu0 %v885
    %v3790 = vpop.f32.mrf.mxu0
    %v3791 = vadd.f32 %v3742, %v3790
    %v3792 = vpop.f32.mrf.mxu0
    %v3793 = vadd.f32 %v3744, %v3792
    %3794 = vdwg.mxu0
    %3795 = vmatpush.bf16.msra.mxu0 %v2397
    %3796 = vmatpush.bf16.msra.mxu0 %v2390
    %3797 = vmatpush.bf16.msra.mxu0 %v2383
    %3798 = vmatpush.bf16.msra.mxu0 %v2376
    %3799 = vmatpush.bf16.msra.mxu0 %v2369
    %3800 = vmatpush.bf16.msra.mxu0 %v2362
    %3801 = vmatpush.bf16.msra.mxu0 %v2355
    %3802 = vmatpush.bf16.msra.mxu0 %v2348
    %3803 = vmatmul.bf16.gmra.mxu0 %v837
    %v3804 = vpop.f32.mrf.mxu0
    %v3805 = vadd.f32 %v3756, %v3804
    %v3806 = vpop.f32.mrf.mxu0
    %v3807 = vadd.f32 %v3758, %v3806
    %3808 = vmatmul.bf16.gmra.mxu0 %v844
    %v3809 = vpop.f32.mrf.mxu0
    %v3810 = vadd.f32 %v3761, %v3809
    %v3811 = vpop.f32.mrf.mxu0
    %v3812 = vadd.f32 %v3763, %v3811
    %3813 = vmatmul.bf16.gmra.mxu0 %v851
    %v3814 = vpop.f32.mrf.mxu0
    %v3815 = vadd.f32 %v3766, %v3814
    %v3816 = vpop.f32.mrf.mxu0
    %v3817 = vadd.f32 %v3768, %v3816
    %3818 = vmatmul.bf16.gmra.mxu0 %v858
    %v3819 = vpop.f32.mrf.mxu0
    %v3820 = vadd.f32 %v3771, %v3819
    %v3821 = vpop.f32.mrf.mxu0
    %v3822 = vadd.f32 %v3773, %v3821
    %3823 = vmatmul.bf16.gmra.mxu0 %v865
    %v3824 = vpop.f32.mrf.mxu0
    %v3825 = vadd.f32 %v3776, %v3824
    %v3826 = vpop.f32.mrf.mxu0
    %v3827 = vadd.f32 %v3778, %v3826
    %3828 = vmatmul.bf16.gmra.mxu0 %v872
    %v3829 = vpop.f32.mrf.mxu0
    %v3830 = vadd.f32 %v3781, %v3829
    %v3831 = vpop.f32.mrf.mxu0
    %v3832 = vadd.f32 %v3783, %v3831
    %3833 = vmatmul.bf16.gmra.mxu0 %v879
    %v3834 = vpop.f32.mrf.mxu0
    %v3835 = vadd.f32 %v3786, %v3834
    %v3836 = vpop.f32.mrf.mxu0
    %v3837 = vadd.f32 %v3788, %v3836
    %3838 = vmatmul.bf16.gmra.mxu0 %v886
    %v3839 = vpop.f32.mrf.mxu0
    %v3840 = vadd.f32 %v3791, %v3839
    %v3841 = vpop.f32.mrf.mxu0
    %v3842 = vadd.f32 %v3793, %v3841
    %3843 = vdwg.mxu0
    %3844 = vmatpush.bf16.msra.mxu0 %v2453
    %3845 = vmatpush.bf16.msra.mxu0 %v2446
    %3846 = vmatpush.bf16.msra.mxu0 %v2439
    %3847 = vmatpush.bf16.msra.mxu0 %v2432
    %3848 = vmatpush.bf16.msra.mxu0 %v2425
    %3849 = vmatpush.bf16.msra.mxu0 %v2418
    %3850 = vmatpush.bf16.msra.mxu0 %v2411
    %3851 = vmatpush.bf16.msra.mxu0 %v2404
    %3852 = vmatmul.bf16.gmra.mxu0 %v838
    %v3853 = vpop.f32.mrf.mxu0
    %v3854 = vadd.f32 %v3805, %v3853
    %v3855 = vpop.f32.mrf.mxu0
    %v3856 = vadd.f32 %v3807, %v3855
    %3857 = vmatmul.bf16.gmra.mxu0 %v845
    %v3858 = vpop.f32.mrf.mxu0
    %v3859 = vadd.f32 %v3810, %v3858
    %v3860 = vpop.f32.mrf.mxu0
    %v3861 = vadd.f32 %v3812, %v3860
    %3862 = vmatmul.bf16.gmra.mxu0 %v852
    %v3863 = vpop.f32.mrf.mxu0
    %v3864 = vadd.f32 %v3815, %v3863
    %v3865 = vpop.f32.mrf.mxu0
    %v3866 = vadd.f32 %v3817, %v3865
    %3867 = vmatmul.bf16.gmra.mxu0 %v859
    %v3868 = vpop.f32.mrf.mxu0
    %v3869 = vadd.f32 %v3820, %v3868
    %v3870 = vpop.f32.mrf.mxu0
    %v3871 = vadd.f32 %v3822, %v3870
    %3872 = vmatmul.bf16.gmra.mxu0 %v866
    %v3873 = vpop.f32.mrf.mxu0
    %v3874 = vadd.f32 %v3825, %v3873
    %v3875 = vpop.f32.mrf.mxu0
    %v3876 = vadd.f32 %v3827, %v3875
    %3877 = vmatmul.bf16.gmra.mxu0 %v873
    %v3878 = vpop.f32.mrf.mxu0
    %v3879 = vadd.f32 %v3830, %v3878
    %v3880 = vpop.f32.mrf.mxu0
    %v3881 = vadd.f32 %v3832, %v3880
    %3882 = vmatmul.bf16.gmra.mxu0 %v880
    %v3883 = vpop.f32.mrf.mxu0
    %v3884 = vadd.f32 %v3835, %v3883
    %v3885 = vpop.f32.mrf.mxu0
    %v3886 = vadd.f32 %v3837, %v3885
    %3887 = vmatmul.bf16.gmra.mxu0 %v887
    %v3888 = vpop.f32.mrf.mxu0
    %v3889 = vadd.f32 %v3840, %v3888
    %v3890 = vpop.f32.mrf.mxu0
    %v3891 = vadd.f32 %v3842, %v3890
    %3892 = vdwg.mxu0
    %3893 = vmatpush.bf16.msra.mxu0 %v2509
    %3894 = vmatpush.bf16.msra.mxu0 %v2502
    %3895 = vmatpush.bf16.msra.mxu0 %v2495
    %3896 = vmatpush.bf16.msra.mxu0 %v2488
    %3897 = vmatpush.bf16.msra.mxu0 %v2481
    %3898 = vmatpush.bf16.msra.mxu0 %v2474
    %3899 = vmatpush.bf16.msra.mxu0 %v2467
    %3900 = vmatpush.bf16.msra.mxu0 %v2460
    %3901 = vmatmul.bf16.gmra.mxu0 %v839
    %v3902 = vpop.f32.mrf.mxu0
    %v3903 = vadd.f32 %v3854, %v3902
    %v3904 = vpop.f32.mrf.mxu0
    %v3905 = vadd.f32 %v3856, %v3904
    %3906 = vmatmul.bf16.gmra.mxu0 %v846
    %v3907 = vpop.f32.mrf.mxu0
    %v3908 = vadd.f32 %v3859, %v3907
    %v3909 = vpop.f32.mrf.mxu0
    %v3910 = vadd.f32 %v3861, %v3909
    %3911 = vmatmul.bf16.gmra.mxu0 %v853
    %v3912 = vpop.f32.mrf.mxu0
    %v3913 = vadd.f32 %v3864, %v3912
    %v3914 = vpop.f32.mrf.mxu0
    %v3915 = vadd.f32 %v3866, %v3914
    %3916 = vmatmul.bf16.gmra.mxu0 %v860
    %v3917 = vpop.f32.mrf.mxu0
    %v3918 = vadd.f32 %v3869, %v3917
    %v3919 = vpop.f32.mrf.mxu0
    %v3920 = vadd.f32 %v3871, %v3919
    %3921 = vmatmul.bf16.gmra.mxu0 %v867
    %v3922 = vpop.f32.mrf.mxu0
    %v3923 = vadd.f32 %v3874, %v3922
    %v3924 = vpop.f32.mrf.mxu0
    %v3925 = vadd.f32 %v3876, %v3924
    %3926 = vmatmul.bf16.gmra.mxu0 %v874
    %v3927 = vpop.f32.mrf.mxu0
    %v3928 = vadd.f32 %v3879, %v3927
    %v3929 = vpop.f32.mrf.mxu0
    %v3930 = vadd.f32 %v3881, %v3929
    %3931 = vmatmul.bf16.gmra.mxu0 %v881
    %v3932 = vpop.f32.mrf.mxu0
    %v3933 = vadd.f32 %v3884, %v3932
    %v3934 = vpop.f32.mrf.mxu0
    %v3935 = vadd.f32 %v3886, %v3934
    %3936 = vmatmul.bf16.gmra.mxu0 %v888
    %v3937 = vpop.f32.mrf.mxu0
    %v3938 = vadd.f32 %v3889, %v3937
    %v3939 = vpop.f32.mrf.mxu0
    %v3940 = vadd.f32 %v3891, %v3939
    %3941 = vdwg.mxu0
    %3942 = vmatpush.bf16.msra.mxu0 %v2565
    %3943 = vmatpush.bf16.msra.mxu0 %v2558
    %3944 = vmatpush.bf16.msra.mxu0 %v2551
    %3945 = vmatpush.bf16.msra.mxu0 %v2544
    %3946 = vmatpush.bf16.msra.mxu0 %v2537
    %3947 = vmatpush.bf16.msra.mxu0 %v2530
    %3948 = vmatpush.bf16.msra.mxu0 %v2523
    %3949 = vmatpush.bf16.msra.mxu0 %v2516
    %3950 = vmatmul.bf16.gmra.mxu0 %v840
    %v3951 = vpop.f32.mrf.mxu0
    %v3952 = vadd.f32 %v3903, %v3951
    %v3953 = vpop.f32.mrf.mxu0
    %v3954 = vadd.f32 %v3905, %v3953
    %3955 = vmatmul.bf16.gmra.mxu0 %v847
    %v3956 = vpop.f32.mrf.mxu0
    %v3957 = vadd.f32 %v3908, %v3956
    %v3958 = vpop.f32.mrf.mxu0
    %v3959 = vadd.f32 %v3910, %v3958
    %3960 = vmatmul.bf16.gmra.mxu0 %v854
    %v3961 = vpop.f32.mrf.mxu0
    %v3962 = vadd.f32 %v3913, %v3961
    %v3963 = vpop.f32.mrf.mxu0
    %v3964 = vadd.f32 %v3915, %v3963
    %3965 = vmatmul.bf16.gmra.mxu0 %v861
    %v3966 = vpop.f32.mrf.mxu0
    %v3967 = vadd.f32 %v3918, %v3966
    %v3968 = vpop.f32.mrf.mxu0
    %v3969 = vadd.f32 %v3920, %v3968
    %3970 = vmatmul.bf16.gmra.mxu0 %v868
    %v3971 = vpop.f32.mrf.mxu0
    %v3972 = vadd.f32 %v3923, %v3971
    %v3973 = vpop.f32.mrf.mxu0
    %v3974 = vadd.f32 %v3925, %v3973
    %3975 = vmatmul.bf16.gmra.mxu0 %v875
    %v3976 = vpop.f32.mrf.mxu0
    %v3977 = vadd.f32 %v3928, %v3976
    %v3978 = vpop.f32.mrf.mxu0
    %v3979 = vadd.f32 %v3930, %v3978
    %3980 = vmatmul.bf16.gmra.mxu0 %v882
    %v3981 = vpop.f32.mrf.mxu0
    %v3982 = vadd.f32 %v3933, %v3981
    %v3983 = vpop.f32.mrf.mxu0
    %v3984 = vadd.f32 %v3935, %v3983
    %3985 = vmatmul.bf16.gmra.mxu0 %v889
    %v3986 = vpop.f32.mrf.mxu0
    %v3987 = vadd.f32 %v3938, %v3986
    %v3988 = vpop.f32.mrf.mxu0
    %v3989 = vadd.f32 %v3940, %v3988
    %3990 = vdwg.mxu0
    %3991 = vmatpush.bf16.msra.mxu0 %v2230
    %3992 = vmatpush.bf16.msra.mxu0 %v2223
    %3993 = vmatpush.bf16.msra.mxu0 %v2216
    %3994 = vmatpush.bf16.msra.mxu0 %v2209
    %3995 = vmatpush.bf16.msra.mxu0 %v2202
    %3996 = vmatpush.bf16.msra.mxu0 %v2195
    %3997 = vmatpush.bf16.msra.mxu0 %v2188
    %3998 = vmatpush.bf16.msra.mxu0 %v2181
    %3999 = vmatmul.bf16.gmra.mxu0 %v834
    %v4000 = vpop.f32.mrf.mxu0
    %v4001 = vadd.f32 %v647, %v4000
    %v4002 = vpop.f32.mrf.mxu0
    %v4003 = vadd.f32 %v647, %v4002
    %4004 = vmatmul.bf16.gmra.mxu0 %v841
    %v4005 = vpop.f32.mrf.mxu0
    %v4006 = vadd.f32 %v647, %v4005
    %v4007 = vpop.f32.mrf.mxu0
    %v4008 = vadd.f32 %v647, %v4007
    %4009 = vmatmul.bf16.gmra.mxu0 %v848
    %v4010 = vpop.f32.mrf.mxu0
    %v4011 = vadd.f32 %v647, %v4010
    %v4012 = vpop.f32.mrf.mxu0
    %v4013 = vadd.f32 %v647, %v4012
    %4014 = vmatmul.bf16.gmra.mxu0 %v855
    %v4015 = vpop.f32.mrf.mxu0
    %v4016 = vadd.f32 %v647, %v4015
    %v4017 = vpop.f32.mrf.mxu0
    %v4018 = vadd.f32 %v647, %v4017
    %4019 = vmatmul.bf16.gmra.mxu0 %v862
    %v4020 = vpop.f32.mrf.mxu0
    %v4021 = vadd.f32 %v647, %v4020
    %v4022 = vpop.f32.mrf.mxu0
    %v4023 = vadd.f32 %v647, %v4022
    %4024 = vmatmul.bf16.gmra.mxu0 %v869
    %v4025 = vpop.f32.mrf.mxu0
    %v4026 = vadd.f32 %v647, %v4025
    %v4027 = vpop.f32.mrf.mxu0
    %v4028 = vadd.f32 %v647, %v4027
    %4029 = vmatmul.bf16.gmra.mxu0 %v876
    %v4030 = vpop.f32.mrf.mxu0
    %v4031 = vadd.f32 %v647, %v4030
    %v4032 = vpop.f32.mrf.mxu0
    %v4033 = vadd.f32 %v647, %v4032
    %4034 = vmatmul.bf16.gmra.mxu0 %v883
    %v4035 = vpop.f32.mrf.mxu0
    %v4036 = vadd.f32 %v647, %v4035
    %v4037 = vpop.f32.mrf.mxu0
    %v4038 = vadd.f32 %v647, %v4037
    %4039 = vdwg.mxu0
    %4040 = vmatpush.bf16.msra.mxu0 %v2286
    %4041 = vmatpush.bf16.msra.mxu0 %v2279
    %4042 = vmatpush.bf16.msra.mxu0 %v2272
    %4043 = vmatpush.bf16.msra.mxu0 %v2265
    %4044 = vmatpush.bf16.msra.mxu0 %v2258
    %4045 = vmatpush.bf16.msra.mxu0 %v2251
    %4046 = vmatpush.bf16.msra.mxu0 %v2244
    %4047 = vmatpush.bf16.msra.mxu0 %v2237
    %4048 = vmatmul.bf16.gmra.mxu0 %v835
    %v4049 = vpop.f32.mrf.mxu0
    %v4050 = vadd.f32 %v4001, %v4049
    %v4051 = vpop.f32.mrf.mxu0
    %v4052 = vadd.f32 %v4003, %v4051
    %4053 = vmatmul.bf16.gmra.mxu0 %v842
    %v4054 = vpop.f32.mrf.mxu0
    %v4055 = vadd.f32 %v4006, %v4054
    %v4056 = vpop.f32.mrf.mxu0
    %v4057 = vadd.f32 %v4008, %v4056
    %4058 = vmatmul.bf16.gmra.mxu0 %v849
    %v4059 = vpop.f32.mrf.mxu0
    %v4060 = vadd.f32 %v4011, %v4059
    %v4061 = vpop.f32.mrf.mxu0
    %v4062 = vadd.f32 %v4013, %v4061
    %4063 = vmatmul.bf16.gmra.mxu0 %v856
    %v4064 = vpop.f32.mrf.mxu0
    %v4065 = vadd.f32 %v4016, %v4064
    %v4066 = vpop.f32.mrf.mxu0
    %v4067 = vadd.f32 %v4018, %v4066
    %4068 = vmatmul.bf16.gmra.mxu0 %v863
    %v4069 = vpop.f32.mrf.mxu0
    %v4070 = vadd.f32 %v4021, %v4069
    %v4071 = vpop.f32.mrf.mxu0
    %v4072 = vadd.f32 %v4023, %v4071
    %4073 = vmatmul.bf16.gmra.mxu0 %v870
    %v4074 = vpop.f32.mrf.mxu0
    %v4075 = vadd.f32 %v4026, %v4074
    %v4076 = vpop.f32.mrf.mxu0
    %v4077 = vadd.f32 %v4028, %v4076
    %4078 = vmatmul.bf16.gmra.mxu0 %v877
    %v4079 = vpop.f32.mrf.mxu0
    %v4080 = vadd.f32 %v4031, %v4079
    %v4081 = vpop.f32.mrf.mxu0
    %v4082 = vadd.f32 %v4033, %v4081
    %4083 = vmatmul.bf16.gmra.mxu0 %v884
    %v4084 = vpop.f32.mrf.mxu0
    %v4085 = vadd.f32 %v4036, %v4084
    %v4086 = vpop.f32.mrf.mxu0
    %v4087 = vadd.f32 %v4038, %v4086
    %4088 = vdwg.mxu0
    %4089 = vmatpush.bf16.msra.mxu0 %v2342
    %4090 = vmatpush.bf16.msra.mxu0 %v2335
    %4091 = vmatpush.bf16.msra.mxu0 %v2328
    %4092 = vmatpush.bf16.msra.mxu0 %v2321
    %4093 = vmatpush.bf16.msra.mxu0 %v2314
    %4094 = vmatpush.bf16.msra.mxu0 %v2307
    %4095 = vmatpush.bf16.msra.mxu0 %v2300
    %4096 = vmatpush.bf16.msra.mxu0 %v2293
    %4097 = vmatmul.bf16.gmra.mxu0 %v836
    %v4098 = vpop.f32.mrf.mxu0
    %v4099 = vadd.f32 %v4050, %v4098
    %v4100 = vpop.f32.mrf.mxu0
    %v4101 = vadd.f32 %v4052, %v4100
    %4102 = vmatmul.bf16.gmra.mxu0 %v843
    %v4103 = vpop.f32.mrf.mxu0
    %v4104 = vadd.f32 %v4055, %v4103
    %v4105 = vpop.f32.mrf.mxu0
    %v4106 = vadd.f32 %v4057, %v4105
    %4107 = vmatmul.bf16.gmra.mxu0 %v850
    %v4108 = vpop.f32.mrf.mxu0
    %v4109 = vadd.f32 %v4060, %v4108
    %v4110 = vpop.f32.mrf.mxu0
    %v4111 = vadd.f32 %v4062, %v4110
    %4112 = vmatmul.bf16.gmra.mxu0 %v857
    %v4113 = vpop.f32.mrf.mxu0
    %v4114 = vadd.f32 %v4065, %v4113
    %v4115 = vpop.f32.mrf.mxu0
    %v4116 = vadd.f32 %v4067, %v4115
    %4117 = vmatmul.bf16.gmra.mxu0 %v864
    %v4118 = vpop.f32.mrf.mxu0
    %v4119 = vadd.f32 %v4070, %v4118
    %v4120 = vpop.f32.mrf.mxu0
    %v4121 = vadd.f32 %v4072, %v4120
    %4122 = vmatmul.bf16.gmra.mxu0 %v871
    %v4123 = vpop.f32.mrf.mxu0
    %v4124 = vadd.f32 %v4075, %v4123
    %v4125 = vpop.f32.mrf.mxu0
    %v4126 = vadd.f32 %v4077, %v4125
    %4127 = vmatmul.bf16.gmra.mxu0 %v878
    %v4128 = vpop.f32.mrf.mxu0
    %v4129 = vadd.f32 %v4080, %v4128
    %v4130 = vpop.f32.mrf.mxu0
    %v4131 = vadd.f32 %v4082, %v4130
    %4132 = vmatmul.bf16.gmra.mxu0 %v885
    %v4133 = vpop.f32.mrf.mxu0
    %v4134 = vadd.f32 %v4085, %v4133
    %v4135 = vpop.f32.mrf.mxu0
    %v4136 = vadd.f32 %v4087, %v4135
    %4137 = vdwg.mxu0
    %4138 = vmatpush.bf16.msra.mxu0 %v2398
    %4139 = vmatpush.bf16.msra.mxu0 %v2391
    %4140 = vmatpush.bf16.msra.mxu0 %v2384
    %4141 = vmatpush.bf16.msra.mxu0 %v2377
    %4142 = vmatpush.bf16.msra.mxu0 %v2370
    %4143 = vmatpush.bf16.msra.mxu0 %v2363
    %4144 = vmatpush.bf16.msra.mxu0 %v2356
    %4145 = vmatpush.bf16.msra.mxu0 %v2349
    %4146 = vmatmul.bf16.gmra.mxu0 %v837
    %v4147 = vpop.f32.mrf.mxu0
    %v4148 = vadd.f32 %v4099, %v4147
    %v4149 = vpop.f32.mrf.mxu0
    %v4150 = vadd.f32 %v4101, %v4149
    %4151 = vmatmul.bf16.gmra.mxu0 %v844
    %v4152 = vpop.f32.mrf.mxu0
    %v4153 = vadd.f32 %v4104, %v4152
    %v4154 = vpop.f32.mrf.mxu0
    %v4155 = vadd.f32 %v4106, %v4154
    %4156 = vmatmul.bf16.gmra.mxu0 %v851
    %v4157 = vpop.f32.mrf.mxu0
    %v4158 = vadd.f32 %v4109, %v4157
    %v4159 = vpop.f32.mrf.mxu0
    %v4160 = vadd.f32 %v4111, %v4159
    %4161 = vmatmul.bf16.gmra.mxu0 %v858
    %v4162 = vpop.f32.mrf.mxu0
    %v4163 = vadd.f32 %v4114, %v4162
    %v4164 = vpop.f32.mrf.mxu0
    %v4165 = vadd.f32 %v4116, %v4164
    %4166 = vmatmul.bf16.gmra.mxu0 %v865
    %v4167 = vpop.f32.mrf.mxu0
    %v4168 = vadd.f32 %v4119, %v4167
    %v4169 = vpop.f32.mrf.mxu0
    %v4170 = vadd.f32 %v4121, %v4169
    %4171 = vmatmul.bf16.gmra.mxu0 %v872
    %v4172 = vpop.f32.mrf.mxu0
    %v4173 = vadd.f32 %v4124, %v4172
    %v4174 = vpop.f32.mrf.mxu0
    %v4175 = vadd.f32 %v4126, %v4174
    %4176 = vmatmul.bf16.gmra.mxu0 %v879
    %v4177 = vpop.f32.mrf.mxu0
    %v4178 = vadd.f32 %v4129, %v4177
    %v4179 = vpop.f32.mrf.mxu0
    %v4180 = vadd.f32 %v4131, %v4179
    %4181 = vmatmul.bf16.gmra.mxu0 %v886
    %v4182 = vpop.f32.mrf.mxu0
    %v4183 = vadd.f32 %v4134, %v4182
    %v4184 = vpop.f32.mrf.mxu0
    %v4185 = vadd.f32 %v4136, %v4184
    %4186 = vdwg.mxu0
    %4187 = vmatpush.bf16.msra.mxu0 %v2454
    %4188 = vmatpush.bf16.msra.mxu0 %v2447
    %4189 = vmatpush.bf16.msra.mxu0 %v2440
    %4190 = vmatpush.bf16.msra.mxu0 %v2433
    %4191 = vmatpush.bf16.msra.mxu0 %v2426
    %4192 = vmatpush.bf16.msra.mxu0 %v2419
    %4193 = vmatpush.bf16.msra.mxu0 %v2412
    %4194 = vmatpush.bf16.msra.mxu0 %v2405
    %4195 = vmatmul.bf16.gmra.mxu0 %v838
    %v4196 = vpop.f32.mrf.mxu0
    %v4197 = vadd.f32 %v4148, %v4196
    %v4198 = vpop.f32.mrf.mxu0
    %v4199 = vadd.f32 %v4150, %v4198
    %4200 = vmatmul.bf16.gmra.mxu0 %v845
    %v4201 = vpop.f32.mrf.mxu0
    %v4202 = vadd.f32 %v4153, %v4201
    %v4203 = vpop.f32.mrf.mxu0
    %v4204 = vadd.f32 %v4155, %v4203
    %4205 = vmatmul.bf16.gmra.mxu0 %v852
    %v4206 = vpop.f32.mrf.mxu0
    %v4207 = vadd.f32 %v4158, %v4206
    %v4208 = vpop.f32.mrf.mxu0
    %v4209 = vadd.f32 %v4160, %v4208
    %4210 = vmatmul.bf16.gmra.mxu0 %v859
    %v4211 = vpop.f32.mrf.mxu0
    %v4212 = vadd.f32 %v4163, %v4211
    %v4213 = vpop.f32.mrf.mxu0
    %v4214 = vadd.f32 %v4165, %v4213
    %4215 = vmatmul.bf16.gmra.mxu0 %v866
    %v4216 = vpop.f32.mrf.mxu0
    %v4217 = vadd.f32 %v4168, %v4216
    %v4218 = vpop.f32.mrf.mxu0
    %v4219 = vadd.f32 %v4170, %v4218
    %4220 = vmatmul.bf16.gmra.mxu0 %v873
    %v4221 = vpop.f32.mrf.mxu0
    %v4222 = vadd.f32 %v4173, %v4221
    %v4223 = vpop.f32.mrf.mxu0
    %v4224 = vadd.f32 %v4175, %v4223
    %4225 = vmatmul.bf16.gmra.mxu0 %v880
    %v4226 = vpop.f32.mrf.mxu0
    %v4227 = vadd.f32 %v4178, %v4226
    %v4228 = vpop.f32.mrf.mxu0
    %v4229 = vadd.f32 %v4180, %v4228
    %4230 = vmatmul.bf16.gmra.mxu0 %v887
    %v4231 = vpop.f32.mrf.mxu0
    %v4232 = vadd.f32 %v4183, %v4231
    %v4233 = vpop.f32.mrf.mxu0
    %v4234 = vadd.f32 %v4185, %v4233
    %4235 = vdwg.mxu0
    %4236 = vmatpush.bf16.msra.mxu0 %v2510
    %4237 = vmatpush.bf16.msra.mxu0 %v2503
    %4238 = vmatpush.bf16.msra.mxu0 %v2496
    %4239 = vmatpush.bf16.msra.mxu0 %v2489
    %4240 = vmatpush.bf16.msra.mxu0 %v2482
    %4241 = vmatpush.bf16.msra.mxu0 %v2475
    %4242 = vmatpush.bf16.msra.mxu0 %v2468
    %4243 = vmatpush.bf16.msra.mxu0 %v2461
    %4244 = vmatmul.bf16.gmra.mxu0 %v839
    %v4245 = vpop.f32.mrf.mxu0
    %v4246 = vadd.f32 %v4197, %v4245
    %v4247 = vpop.f32.mrf.mxu0
    %v4248 = vadd.f32 %v4199, %v4247
    %4249 = vmatmul.bf16.gmra.mxu0 %v846
    %v4250 = vpop.f32.mrf.mxu0
    %v4251 = vadd.f32 %v4202, %v4250
    %v4252 = vpop.f32.mrf.mxu0
    %v4253 = vadd.f32 %v4204, %v4252
    %4254 = vmatmul.bf16.gmra.mxu0 %v853
    %v4255 = vpop.f32.mrf.mxu0
    %v4256 = vadd.f32 %v4207, %v4255
    %v4257 = vpop.f32.mrf.mxu0
    %v4258 = vadd.f32 %v4209, %v4257
    %4259 = vmatmul.bf16.gmra.mxu0 %v860
    %v4260 = vpop.f32.mrf.mxu0
    %v4261 = vadd.f32 %v4212, %v4260
    %v4262 = vpop.f32.mrf.mxu0
    %v4263 = vadd.f32 %v4214, %v4262
    %4264 = vmatmul.bf16.gmra.mxu0 %v867
    %v4265 = vpop.f32.mrf.mxu0
    %v4266 = vadd.f32 %v4217, %v4265
    %v4267 = vpop.f32.mrf.mxu0
    %v4268 = vadd.f32 %v4219, %v4267
    %4269 = vmatmul.bf16.gmra.mxu0 %v874
    %v4270 = vpop.f32.mrf.mxu0
    %v4271 = vadd.f32 %v4222, %v4270
    %v4272 = vpop.f32.mrf.mxu0
    %v4273 = vadd.f32 %v4224, %v4272
    %4274 = vmatmul.bf16.gmra.mxu0 %v881
    %v4275 = vpop.f32.mrf.mxu0
    %v4276 = vadd.f32 %v4227, %v4275
    %v4277 = vpop.f32.mrf.mxu0
    %v4278 = vadd.f32 %v4229, %v4277
    %4279 = vmatmul.bf16.gmra.mxu0 %v888
    %v4280 = vpop.f32.mrf.mxu0
    %v4281 = vadd.f32 %v4232, %v4280
    %v4282 = vpop.f32.mrf.mxu0
    %v4283 = vadd.f32 %v4234, %v4282
    %4284 = vdwg.mxu0
    %4285 = vmatpush.bf16.msra.mxu0 %v2566
    %4286 = vmatpush.bf16.msra.mxu0 %v2559
    %4287 = vmatpush.bf16.msra.mxu0 %v2552
    %4288 = vmatpush.bf16.msra.mxu0 %v2545
    %4289 = vmatpush.bf16.msra.mxu0 %v2538
    %4290 = vmatpush.bf16.msra.mxu0 %v2531
    %4291 = vmatpush.bf16.msra.mxu0 %v2524
    %4292 = vmatpush.bf16.msra.mxu0 %v2517
    %4293 = vmatmul.bf16.gmra.mxu0 %v840
    %v4294 = vpop.f32.mrf.mxu0
    %v4295 = vadd.f32 %v4246, %v4294
    %v4296 = vpop.f32.mrf.mxu0
    %v4297 = vadd.f32 %v4248, %v4296
    %4298 = vmatmul.bf16.gmra.mxu0 %v847
    %v4299 = vpop.f32.mrf.mxu0
    %v4300 = vadd.f32 %v4251, %v4299
    %v4301 = vpop.f32.mrf.mxu0
    %v4302 = vadd.f32 %v4253, %v4301
    %4303 = vmatmul.bf16.gmra.mxu0 %v854
    %v4304 = vpop.f32.mrf.mxu0
    %v4305 = vadd.f32 %v4256, %v4304
    %v4306 = vpop.f32.mrf.mxu0
    %v4307 = vadd.f32 %v4258, %v4306
    %4308 = vmatmul.bf16.gmra.mxu0 %v861
    %v4309 = vpop.f32.mrf.mxu0
    %v4310 = vadd.f32 %v4261, %v4309
    %v4311 = vpop.f32.mrf.mxu0
    %v4312 = vadd.f32 %v4263, %v4311
    %4313 = vmatmul.bf16.gmra.mxu0 %v868
    %v4314 = vpop.f32.mrf.mxu0
    %v4315 = vadd.f32 %v4266, %v4314
    %v4316 = vpop.f32.mrf.mxu0
    %v4317 = vadd.f32 %v4268, %v4316
    %4318 = vmatmul.bf16.gmra.mxu0 %v875
    %v4319 = vpop.f32.mrf.mxu0
    %v4320 = vadd.f32 %v4271, %v4319
    %v4321 = vpop.f32.mrf.mxu0
    %v4322 = vadd.f32 %v4273, %v4321
    %4323 = vmatmul.bf16.gmra.mxu0 %v882
    %v4324 = vpop.f32.mrf.mxu0
    %v4325 = vadd.f32 %v4276, %v4324
    %v4326 = vpop.f32.mrf.mxu0
    %v4327 = vadd.f32 %v4278, %v4326
    %4328 = vmatmul.bf16.gmra.mxu0 %v889
    %v4329 = vpop.f32.mrf.mxu0
    %v4330 = vadd.f32 %v4281, %v4329
    %v4331 = vpop.f32.mrf.mxu0
    %v4332 = vadd.f32 %v4283, %v4331
    %4333 = vdwg.mxu0
    %4334 = vmatpush.bf16.msra.mxu0 %v2231
    %4335 = vmatpush.bf16.msra.mxu0 %v2224
    %4336 = vmatpush.bf16.msra.mxu0 %v2217
    %4337 = vmatpush.bf16.msra.mxu0 %v2210
    %4338 = vmatpush.bf16.msra.mxu0 %v2203
    %4339 = vmatpush.bf16.msra.mxu0 %v2196
    %4340 = vmatpush.bf16.msra.mxu0 %v2189
    %4341 = vmatpush.bf16.msra.mxu0 %v2182
    %4342 = vmatmul.bf16.gmra.mxu0 %v834
    %v4343 = vpop.f32.mrf.mxu0
    %v4344 = vadd.f32 %v648, %v4343
    %v4345 = vpop.f32.mrf.mxu0
    %v4346 = vadd.f32 %v648, %v4345
    %4347 = vmatmul.bf16.gmra.mxu0 %v841
    %v4348 = vpop.f32.mrf.mxu0
    %v4349 = vadd.f32 %v648, %v4348
    %v4350 = vpop.f32.mrf.mxu0
    %v4351 = vadd.f32 %v648, %v4350
    %4352 = vmatmul.bf16.gmra.mxu0 %v848
    %v4353 = vpop.f32.mrf.mxu0
    %v4354 = vadd.f32 %v648, %v4353
    %v4355 = vpop.f32.mrf.mxu0
    %v4356 = vadd.f32 %v648, %v4355
    %4357 = vmatmul.bf16.gmra.mxu0 %v855
    %v4358 = vpop.f32.mrf.mxu0
    %v4359 = vadd.f32 %v648, %v4358
    %v4360 = vpop.f32.mrf.mxu0
    %v4361 = vadd.f32 %v648, %v4360
    %4362 = vmatmul.bf16.gmra.mxu0 %v862
    %v4363 = vpop.f32.mrf.mxu0
    %v4364 = vadd.f32 %v648, %v4363
    %v4365 = vpop.f32.mrf.mxu0
    %v4366 = vadd.f32 %v648, %v4365
    %4367 = vmatmul.bf16.gmra.mxu0 %v869
    %v4368 = vpop.f32.mrf.mxu0
    %v4369 = vadd.f32 %v648, %v4368
    %v4370 = vpop.f32.mrf.mxu0
    %v4371 = vadd.f32 %v648, %v4370
    %4372 = vmatmul.bf16.gmra.mxu0 %v876
    %v4373 = vpop.f32.mrf.mxu0
    %v4374 = vadd.f32 %v648, %v4373
    %v4375 = vpop.f32.mrf.mxu0
    %v4376 = vadd.f32 %v648, %v4375
    %4377 = vmatmul.bf16.gmra.mxu0 %v883
    %v4378 = vpop.f32.mrf.mxu0
    %v4379 = vadd.f32 %v648, %v4378
    %v4380 = vpop.f32.mrf.mxu0
    %v4381 = vadd.f32 %v648, %v4380
    %4382 = vdwg.mxu0
    %4383 = vmatpush.bf16.msra.mxu0 %v2287
    %4384 = vmatpush.bf16.msra.mxu0 %v2280
    %4385 = vmatpush.bf16.msra.mxu0 %v2273
    %4386 = vmatpush.bf16.msra.mxu0 %v2266
    %4387 = vmatpush.bf16.msra.mxu0 %v2259
    %4388 = vmatpush.bf16.msra.mxu0 %v2252
    %4389 = vmatpush.bf16.msra.mxu0 %v2245
    %4390 = vmatpush.bf16.msra.mxu0 %v2238
    %4391 = vmatmul.bf16.gmra.mxu0 %v835
    %v4392 = vpop.f32.mrf.mxu0
    %v4393 = vadd.f32 %v4344, %v4392
    %v4394 = vpop.f32.mrf.mxu0
    %v4395 = vadd.f32 %v4346, %v4394
    %4396 = vmatmul.bf16.gmra.mxu0 %v842
    %v4397 = vpop.f32.mrf.mxu0
    %v4398 = vadd.f32 %v4349, %v4397
    %v4399 = vpop.f32.mrf.mxu0
    %v4400 = vadd.f32 %v4351, %v4399
    %4401 = vmatmul.bf16.gmra.mxu0 %v849
    %v4402 = vpop.f32.mrf.mxu0
    %v4403 = vadd.f32 %v4354, %v4402
    %v4404 = vpop.f32.mrf.mxu0
    %v4405 = vadd.f32 %v4356, %v4404
    %4406 = vmatmul.bf16.gmra.mxu0 %v856
    %v4407 = vpop.f32.mrf.mxu0
    %v4408 = vadd.f32 %v4359, %v4407
    %v4409 = vpop.f32.mrf.mxu0
    %v4410 = vadd.f32 %v4361, %v4409
    %4411 = vmatmul.bf16.gmra.mxu0 %v863
    %v4412 = vpop.f32.mrf.mxu0
    %v4413 = vadd.f32 %v4364, %v4412
    %v4414 = vpop.f32.mrf.mxu0
    %v4415 = vadd.f32 %v4366, %v4414
    %4416 = vmatmul.bf16.gmra.mxu0 %v870
    %v4417 = vpop.f32.mrf.mxu0
    %v4418 = vadd.f32 %v4369, %v4417
    %v4419 = vpop.f32.mrf.mxu0
    %v4420 = vadd.f32 %v4371, %v4419
    %4421 = vmatmul.bf16.gmra.mxu0 %v877
    %v4422 = vpop.f32.mrf.mxu0
    %v4423 = vadd.f32 %v4374, %v4422
    %v4424 = vpop.f32.mrf.mxu0
    %v4425 = vadd.f32 %v4376, %v4424
    %4426 = vmatmul.bf16.gmra.mxu0 %v884
    %v4427 = vpop.f32.mrf.mxu0
    %v4428 = vadd.f32 %v4379, %v4427
    %v4429 = vpop.f32.mrf.mxu0
    %v4430 = vadd.f32 %v4381, %v4429
    %4431 = vdwg.mxu0
    %4432 = vmatpush.bf16.msra.mxu0 %v2343
    %4433 = vmatpush.bf16.msra.mxu0 %v2336
    %4434 = vmatpush.bf16.msra.mxu0 %v2329
    %4435 = vmatpush.bf16.msra.mxu0 %v2322
    %4436 = vmatpush.bf16.msra.mxu0 %v2315
    %4437 = vmatpush.bf16.msra.mxu0 %v2308
    %4438 = vmatpush.bf16.msra.mxu0 %v2301
    %4439 = vmatpush.bf16.msra.mxu0 %v2294
    %4440 = vmatmul.bf16.gmra.mxu0 %v836
    %v4441 = vpop.f32.mrf.mxu0
    %v4442 = vadd.f32 %v4393, %v4441
    %v4443 = vpop.f32.mrf.mxu0
    %v4444 = vadd.f32 %v4395, %v4443
    %4445 = vmatmul.bf16.gmra.mxu0 %v843
    %v4446 = vpop.f32.mrf.mxu0
    %v4447 = vadd.f32 %v4398, %v4446
    %v4448 = vpop.f32.mrf.mxu0
    %v4449 = vadd.f32 %v4400, %v4448
    %4450 = vmatmul.bf16.gmra.mxu0 %v850
    %v4451 = vpop.f32.mrf.mxu0
    %v4452 = vadd.f32 %v4403, %v4451
    %v4453 = vpop.f32.mrf.mxu0
    %v4454 = vadd.f32 %v4405, %v4453
    %4455 = vmatmul.bf16.gmra.mxu0 %v857
    %v4456 = vpop.f32.mrf.mxu0
    %v4457 = vadd.f32 %v4408, %v4456
    %v4458 = vpop.f32.mrf.mxu0
    %v4459 = vadd.f32 %v4410, %v4458
    %4460 = vmatmul.bf16.gmra.mxu0 %v864
    %v4461 = vpop.f32.mrf.mxu0
    %v4462 = vadd.f32 %v4413, %v4461
    %v4463 = vpop.f32.mrf.mxu0
    %v4464 = vadd.f32 %v4415, %v4463
    %4465 = vmatmul.bf16.gmra.mxu0 %v871
    %v4466 = vpop.f32.mrf.mxu0
    %v4467 = vadd.f32 %v4418, %v4466
    %v4468 = vpop.f32.mrf.mxu0
    %v4469 = vadd.f32 %v4420, %v4468
    %4470 = vmatmul.bf16.gmra.mxu0 %v878
    %v4471 = vpop.f32.mrf.mxu0
    %v4472 = vadd.f32 %v4423, %v4471
    %v4473 = vpop.f32.mrf.mxu0
    %v4474 = vadd.f32 %v4425, %v4473
    %4475 = vmatmul.bf16.gmra.mxu0 %v885
    %v4476 = vpop.f32.mrf.mxu0
    %v4477 = vadd.f32 %v4428, %v4476
    %v4478 = vpop.f32.mrf.mxu0
    %v4479 = vadd.f32 %v4430, %v4478
    %4480 = vdwg.mxu0
    %4481 = vmatpush.bf16.msra.mxu0 %v2399
    %4482 = vmatpush.bf16.msra.mxu0 %v2392
    %4483 = vmatpush.bf16.msra.mxu0 %v2385
    %4484 = vmatpush.bf16.msra.mxu0 %v2378
    %4485 = vmatpush.bf16.msra.mxu0 %v2371
    %4486 = vmatpush.bf16.msra.mxu0 %v2364
    %4487 = vmatpush.bf16.msra.mxu0 %v2357
    %4488 = vmatpush.bf16.msra.mxu0 %v2350
    %4489 = vmatmul.bf16.gmra.mxu0 %v837
    %v4490 = vpop.f32.mrf.mxu0
    %v4491 = vadd.f32 %v4442, %v4490
    %v4492 = vpop.f32.mrf.mxu0
    %v4493 = vadd.f32 %v4444, %v4492
    %4494 = vmatmul.bf16.gmra.mxu0 %v844
    %v4495 = vpop.f32.mrf.mxu0
    %v4496 = vadd.f32 %v4447, %v4495
    %v4497 = vpop.f32.mrf.mxu0
    %v4498 = vadd.f32 %v4449, %v4497
    %4499 = vmatmul.bf16.gmra.mxu0 %v851
    %v4500 = vpop.f32.mrf.mxu0
    %v4501 = vadd.f32 %v4452, %v4500
    %v4502 = vpop.f32.mrf.mxu0
    %v4503 = vadd.f32 %v4454, %v4502
    %4504 = vmatmul.bf16.gmra.mxu0 %v858
    %v4505 = vpop.f32.mrf.mxu0
    %v4506 = vadd.f32 %v4457, %v4505
    %v4507 = vpop.f32.mrf.mxu0
    %v4508 = vadd.f32 %v4459, %v4507
    %4509 = vmatmul.bf16.gmra.mxu0 %v865
    %v4510 = vpop.f32.mrf.mxu0
    %v4511 = vadd.f32 %v4462, %v4510
    %v4512 = vpop.f32.mrf.mxu0
    %v4513 = vadd.f32 %v4464, %v4512
    %4514 = vmatmul.bf16.gmra.mxu0 %v872
    %v4515 = vpop.f32.mrf.mxu0
    %v4516 = vadd.f32 %v4467, %v4515
    %v4517 = vpop.f32.mrf.mxu0
    %v4518 = vadd.f32 %v4469, %v4517
    %4519 = vmatmul.bf16.gmra.mxu0 %v879
    %v4520 = vpop.f32.mrf.mxu0
    %v4521 = vadd.f32 %v4472, %v4520
    %v4522 = vpop.f32.mrf.mxu0
    %v4523 = vadd.f32 %v4474, %v4522
    %4524 = vmatmul.bf16.gmra.mxu0 %v886
    %v4525 = vpop.f32.mrf.mxu0
    %v4526 = vadd.f32 %v4477, %v4525
    %v4527 = vpop.f32.mrf.mxu0
    %v4528 = vadd.f32 %v4479, %v4527
    %4529 = vdwg.mxu0
    %4530 = vmatpush.bf16.msra.mxu0 %v2455
    %4531 = vmatpush.bf16.msra.mxu0 %v2448
    %4532 = vmatpush.bf16.msra.mxu0 %v2441
    %4533 = vmatpush.bf16.msra.mxu0 %v2434
    %4534 = vmatpush.bf16.msra.mxu0 %v2427
    %4535 = vmatpush.bf16.msra.mxu0 %v2420
    %4536 = vmatpush.bf16.msra.mxu0 %v2413
    %4537 = vmatpush.bf16.msra.mxu0 %v2406
    %4538 = vmatmul.bf16.gmra.mxu0 %v838
    %v4539 = vpop.f32.mrf.mxu0
    %v4540 = vadd.f32 %v4491, %v4539
    %v4541 = vpop.f32.mrf.mxu0
    %v4542 = vadd.f32 %v4493, %v4541
    %4543 = vmatmul.bf16.gmra.mxu0 %v845
    %v4544 = vpop.f32.mrf.mxu0
    %v4545 = vadd.f32 %v4496, %v4544
    %v4546 = vpop.f32.mrf.mxu0
    %v4547 = vadd.f32 %v4498, %v4546
    %4548 = vmatmul.bf16.gmra.mxu0 %v852
    %v4549 = vpop.f32.mrf.mxu0
    %v4550 = vadd.f32 %v4501, %v4549
    %v4551 = vpop.f32.mrf.mxu0
    %v4552 = vadd.f32 %v4503, %v4551
    %4553 = vmatmul.bf16.gmra.mxu0 %v859
    %v4554 = vpop.f32.mrf.mxu0
    %v4555 = vadd.f32 %v4506, %v4554
    %v4556 = vpop.f32.mrf.mxu0
    %v4557 = vadd.f32 %v4508, %v4556
    %4558 = vmatmul.bf16.gmra.mxu0 %v866
    %v4559 = vpop.f32.mrf.mxu0
    %v4560 = vadd.f32 %v4511, %v4559
    %v4561 = vpop.f32.mrf.mxu0
    %v4562 = vadd.f32 %v4513, %v4561
    %4563 = vmatmul.bf16.gmra.mxu0 %v873
    %v4564 = vpop.f32.mrf.mxu0
    %v4565 = vadd.f32 %v4516, %v4564
    %v4566 = vpop.f32.mrf.mxu0
    %v4567 = vadd.f32 %v4518, %v4566
    %4568 = vmatmul.bf16.gmra.mxu0 %v880
    %v4569 = vpop.f32.mrf.mxu0
    %v4570 = vadd.f32 %v4521, %v4569
    %v4571 = vpop.f32.mrf.mxu0
    %v4572 = vadd.f32 %v4523, %v4571
    %4573 = vmatmul.bf16.gmra.mxu0 %v887
    %v4574 = vpop.f32.mrf.mxu0
    %v4575 = vadd.f32 %v4526, %v4574
    %v4576 = vpop.f32.mrf.mxu0
    %v4577 = vadd.f32 %v4528, %v4576
    %4578 = vdwg.mxu0
    %4579 = vmatpush.bf16.msra.mxu0 %v2511
    %4580 = vmatpush.bf16.msra.mxu0 %v2504
    %4581 = vmatpush.bf16.msra.mxu0 %v2497
    %4582 = vmatpush.bf16.msra.mxu0 %v2490
    %4583 = vmatpush.bf16.msra.mxu0 %v2483
    %4584 = vmatpush.bf16.msra.mxu0 %v2476
    %4585 = vmatpush.bf16.msra.mxu0 %v2469
    %4586 = vmatpush.bf16.msra.mxu0 %v2462
    %4587 = vmatmul.bf16.gmra.mxu0 %v839
    %v4588 = vpop.f32.mrf.mxu0
    %v4589 = vadd.f32 %v4540, %v4588
    %v4590 = vpop.f32.mrf.mxu0
    %v4591 = vadd.f32 %v4542, %v4590
    %4592 = vmatmul.bf16.gmra.mxu0 %v846
    %v4593 = vpop.f32.mrf.mxu0
    %v4594 = vadd.f32 %v4545, %v4593
    %v4595 = vpop.f32.mrf.mxu0
    %v4596 = vadd.f32 %v4547, %v4595
    %4597 = vmatmul.bf16.gmra.mxu0 %v853
    %v4598 = vpop.f32.mrf.mxu0
    %v4599 = vadd.f32 %v4550, %v4598
    %v4600 = vpop.f32.mrf.mxu0
    %v4601 = vadd.f32 %v4552, %v4600
    %4602 = vmatmul.bf16.gmra.mxu0 %v860
    %v4603 = vpop.f32.mrf.mxu0
    %v4604 = vadd.f32 %v4555, %v4603
    %v4605 = vpop.f32.mrf.mxu0
    %v4606 = vadd.f32 %v4557, %v4605
    %4607 = vmatmul.bf16.gmra.mxu0 %v867
    %v4608 = vpop.f32.mrf.mxu0
    %v4609 = vadd.f32 %v4560, %v4608
    %v4610 = vpop.f32.mrf.mxu0
    %v4611 = vadd.f32 %v4562, %v4610
    %4612 = vmatmul.bf16.gmra.mxu0 %v874
    %v4613 = vpop.f32.mrf.mxu0
    %v4614 = vadd.f32 %v4565, %v4613
    %v4615 = vpop.f32.mrf.mxu0
    %v4616 = vadd.f32 %v4567, %v4615
    %4617 = vmatmul.bf16.gmra.mxu0 %v881
    %v4618 = vpop.f32.mrf.mxu0
    %v4619 = vadd.f32 %v4570, %v4618
    %v4620 = vpop.f32.mrf.mxu0
    %v4621 = vadd.f32 %v4572, %v4620
    %4622 = vmatmul.bf16.gmra.mxu0 %v888
    %v4623 = vpop.f32.mrf.mxu0
    %v4624 = vadd.f32 %v4575, %v4623
    %v4625 = vpop.f32.mrf.mxu0
    %v4626 = vadd.f32 %v4577, %v4625
    %4627 = vdwg.mxu0
    %4628 = vmatpush.bf16.msra.mxu0 %v2567
    %4629 = vmatpush.bf16.msra.mxu0 %v2560
    %4630 = vmatpush.bf16.msra.mxu0 %v2553
    %4631 = vmatpush.bf16.msra.mxu0 %v2546
    %4632 = vmatpush.bf16.msra.mxu0 %v2539
    %4633 = vmatpush.bf16.msra.mxu0 %v2532
    %4634 = vmatpush.bf16.msra.mxu0 %v2525
    %4635 = vmatpush.bf16.msra.mxu0 %v2518
    %4636 = vmatmul.bf16.gmra.mxu0 %v840
    %v4637 = vpop.f32.mrf.mxu0
    %v4638 = vadd.f32 %v4589, %v4637
    %v4639 = vpop.f32.mrf.mxu0
    %v4640 = vadd.f32 %v4591, %v4639
    %4641 = vmatmul.bf16.gmra.mxu0 %v847
    %v4642 = vpop.f32.mrf.mxu0
    %v4643 = vadd.f32 %v4594, %v4642
    %v4644 = vpop.f32.mrf.mxu0
    %v4645 = vadd.f32 %v4596, %v4644
    %4646 = vmatmul.bf16.gmra.mxu0 %v854
    %v4647 = vpop.f32.mrf.mxu0
    %v4648 = vadd.f32 %v4599, %v4647
    %v4649 = vpop.f32.mrf.mxu0
    %v4650 = vadd.f32 %v4601, %v4649
    %4651 = vmatmul.bf16.gmra.mxu0 %v861
    %v4652 = vpop.f32.mrf.mxu0
    %v4653 = vadd.f32 %v4604, %v4652
    %v4654 = vpop.f32.mrf.mxu0
    %v4655 = vadd.f32 %v4606, %v4654
    %4656 = vmatmul.bf16.gmra.mxu0 %v868
    %v4657 = vpop.f32.mrf.mxu0
    %v4658 = vadd.f32 %v4609, %v4657
    %v4659 = vpop.f32.mrf.mxu0
    %v4660 = vadd.f32 %v4611, %v4659
    %4661 = vmatmul.bf16.gmra.mxu0 %v875
    %v4662 = vpop.f32.mrf.mxu0
    %v4663 = vadd.f32 %v4614, %v4662
    %v4664 = vpop.f32.mrf.mxu0
    %v4665 = vadd.f32 %v4616, %v4664
    %4666 = vmatmul.bf16.gmra.mxu0 %v882
    %v4667 = vpop.f32.mrf.mxu0
    %v4668 = vadd.f32 %v4619, %v4667
    %v4669 = vpop.f32.mrf.mxu0
    %v4670 = vadd.f32 %v4621, %v4669
    %4671 = vmatmul.bf16.gmra.mxu0 %v889
    %v4672 = vpop.f32.mrf.mxu0
    %v4673 = vadd.f32 %v4624, %v4672
    %v4674 = vpop.f32.mrf.mxu0
    %v4675 = vadd.f32 %v4626, %v4674
    %4676 = vdwg.mxu0
    %4677 = vmatpush.bf16.msra.mxu0 %v2232
    %4678 = vmatpush.bf16.msra.mxu0 %v2225
    %4679 = vmatpush.bf16.msra.mxu0 %v2218
    %4680 = vmatpush.bf16.msra.mxu0 %v2211
    %4681 = vmatpush.bf16.msra.mxu0 %v2204
    %4682 = vmatpush.bf16.msra.mxu0 %v2197
    %4683 = vmatpush.bf16.msra.mxu0 %v2190
    %4684 = vmatpush.bf16.msra.mxu0 %v2183
    %4685 = vmatmul.bf16.gmra.mxu0 %v834
    %v4686 = vpop.f32.mrf.mxu0
    %v4687 = vadd.f32 %v649, %v4686
    %v4688 = vpop.f32.mrf.mxu0
    %v4689 = vadd.f32 %v649, %v4688
    %4690 = vmatmul.bf16.gmra.mxu0 %v841
    %v4691 = vpop.f32.mrf.mxu0
    %v4692 = vadd.f32 %v649, %v4691
    %v4693 = vpop.f32.mrf.mxu0
    %v4694 = vadd.f32 %v649, %v4693
    %4695 = vmatmul.bf16.gmra.mxu0 %v848
    %v4696 = vpop.f32.mrf.mxu0
    %v4697 = vadd.f32 %v649, %v4696
    %v4698 = vpop.f32.mrf.mxu0
    %v4699 = vadd.f32 %v649, %v4698
    %4700 = vmatmul.bf16.gmra.mxu0 %v855
    %v4701 = vpop.f32.mrf.mxu0
    %v4702 = vadd.f32 %v649, %v4701
    %v4703 = vpop.f32.mrf.mxu0
    %v4704 = vadd.f32 %v649, %v4703
    %4705 = vmatmul.bf16.gmra.mxu0 %v862
    %v4706 = vpop.f32.mrf.mxu0
    %v4707 = vadd.f32 %v649, %v4706
    %v4708 = vpop.f32.mrf.mxu0
    %v4709 = vadd.f32 %v649, %v4708
    %4710 = vmatmul.bf16.gmra.mxu0 %v869
    %v4711 = vpop.f32.mrf.mxu0
    %v4712 = vadd.f32 %v649, %v4711
    %v4713 = vpop.f32.mrf.mxu0
    %v4714 = vadd.f32 %v649, %v4713
    %4715 = vmatmul.bf16.gmra.mxu0 %v876
    %v4716 = vpop.f32.mrf.mxu0
    %v4717 = vadd.f32 %v649, %v4716
    %v4718 = vpop.f32.mrf.mxu0
    %v4719 = vadd.f32 %v649, %v4718
    %4720 = vmatmul.bf16.gmra.mxu0 %v883
    %v4721 = vpop.f32.mrf.mxu0
    %v4722 = vadd.f32 %v649, %v4721
    %v4723 = vpop.f32.mrf.mxu0
    %v4724 = vadd.f32 %v649, %v4723
    %4725 = vdwg.mxu0
    %4726 = vmatpush.bf16.msra.mxu0 %v2288
    %4727 = vmatpush.bf16.msra.mxu0 %v2281
    %4728 = vmatpush.bf16.msra.mxu0 %v2274
    %4729 = vmatpush.bf16.msra.mxu0 %v2267
    %4730 = vmatpush.bf16.msra.mxu0 %v2260
    %4731 = vmatpush.bf16.msra.mxu0 %v2253
    %4732 = vmatpush.bf16.msra.mxu0 %v2246
    %4733 = vmatpush.bf16.msra.mxu0 %v2239
    %4734 = vmatmul.bf16.gmra.mxu0 %v835
    %v4735 = vpop.f32.mrf.mxu0
    %v4736 = vadd.f32 %v4687, %v4735
    %v4737 = vpop.f32.mrf.mxu0
    %v4738 = vadd.f32 %v4689, %v4737
    %4739 = vmatmul.bf16.gmra.mxu0 %v842
    %v4740 = vpop.f32.mrf.mxu0
    %v4741 = vadd.f32 %v4692, %v4740
    %v4742 = vpop.f32.mrf.mxu0
    %v4743 = vadd.f32 %v4694, %v4742
    %4744 = vmatmul.bf16.gmra.mxu0 %v849
    %v4745 = vpop.f32.mrf.mxu0
    %v4746 = vadd.f32 %v4697, %v4745
    %v4747 = vpop.f32.mrf.mxu0
    %v4748 = vadd.f32 %v4699, %v4747
    %4749 = vmatmul.bf16.gmra.mxu0 %v856
    %v4750 = vpop.f32.mrf.mxu0
    %v4751 = vadd.f32 %v4702, %v4750
    %v4752 = vpop.f32.mrf.mxu0
    %v4753 = vadd.f32 %v4704, %v4752
    %4754 = vmatmul.bf16.gmra.mxu0 %v863
    %v4755 = vpop.f32.mrf.mxu0
    %v4756 = vadd.f32 %v4707, %v4755
    %v4757 = vpop.f32.mrf.mxu0
    %v4758 = vadd.f32 %v4709, %v4757
    %4759 = vmatmul.bf16.gmra.mxu0 %v870
    %v4760 = vpop.f32.mrf.mxu0
    %v4761 = vadd.f32 %v4712, %v4760
    %v4762 = vpop.f32.mrf.mxu0
    %v4763 = vadd.f32 %v4714, %v4762
    %4764 = vmatmul.bf16.gmra.mxu0 %v877
    %v4765 = vpop.f32.mrf.mxu0
    %v4766 = vadd.f32 %v4717, %v4765
    %v4767 = vpop.f32.mrf.mxu0
    %v4768 = vadd.f32 %v4719, %v4767
    %4769 = vmatmul.bf16.gmra.mxu0 %v884
    %v4770 = vpop.f32.mrf.mxu0
    %v4771 = vadd.f32 %v4722, %v4770
    %v4772 = vpop.f32.mrf.mxu0
    %v4773 = vadd.f32 %v4724, %v4772
    %4774 = vdwg.mxu0
    %4775 = vmatpush.bf16.msra.mxu0 %v2344
    %4776 = vmatpush.bf16.msra.mxu0 %v2337
    %4777 = vmatpush.bf16.msra.mxu0 %v2330
    %4778 = vmatpush.bf16.msra.mxu0 %v2323
    %4779 = vmatpush.bf16.msra.mxu0 %v2316
    %4780 = vmatpush.bf16.msra.mxu0 %v2309
    %4781 = vmatpush.bf16.msra.mxu0 %v2302
    %4782 = vmatpush.bf16.msra.mxu0 %v2295
    %4783 = vmatmul.bf16.gmra.mxu0 %v836
    %v4784 = vpop.f32.mrf.mxu0
    %v4785 = vadd.f32 %v4736, %v4784
    %v4786 = vpop.f32.mrf.mxu0
    %v4787 = vadd.f32 %v4738, %v4786
    %4788 = vmatmul.bf16.gmra.mxu0 %v843
    %v4789 = vpop.f32.mrf.mxu0
    %v4790 = vadd.f32 %v4741, %v4789
    %v4791 = vpop.f32.mrf.mxu0
    %v4792 = vadd.f32 %v4743, %v4791
    %4793 = vmatmul.bf16.gmra.mxu0 %v850
    %v4794 = vpop.f32.mrf.mxu0
    %v4795 = vadd.f32 %v4746, %v4794
    %v4796 = vpop.f32.mrf.mxu0
    %v4797 = vadd.f32 %v4748, %v4796
    %4798 = vmatmul.bf16.gmra.mxu0 %v857
    %v4799 = vpop.f32.mrf.mxu0
    %v4800 = vadd.f32 %v4751, %v4799
    %v4801 = vpop.f32.mrf.mxu0
    %v4802 = vadd.f32 %v4753, %v4801
    %4803 = vmatmul.bf16.gmra.mxu0 %v864
    %v4804 = vpop.f32.mrf.mxu0
    %v4805 = vadd.f32 %v4756, %v4804
    %v4806 = vpop.f32.mrf.mxu0
    %v4807 = vadd.f32 %v4758, %v4806
    %4808 = vmatmul.bf16.gmra.mxu0 %v871
    %v4809 = vpop.f32.mrf.mxu0
    %v4810 = vadd.f32 %v4761, %v4809
    %v4811 = vpop.f32.mrf.mxu0
    %v4812 = vadd.f32 %v4763, %v4811
    %4813 = vmatmul.bf16.gmra.mxu0 %v878
    %v4814 = vpop.f32.mrf.mxu0
    %v4815 = vadd.f32 %v4766, %v4814
    %v4816 = vpop.f32.mrf.mxu0
    %v4817 = vadd.f32 %v4768, %v4816
    %4818 = vmatmul.bf16.gmra.mxu0 %v885
    %v4819 = vpop.f32.mrf.mxu0
    %v4820 = vadd.f32 %v4771, %v4819
    %v4821 = vpop.f32.mrf.mxu0
    %v4822 = vadd.f32 %v4773, %v4821
    %4823 = vdwg.mxu0
    %4824 = vmatpush.bf16.msra.mxu0 %v2400
    %4825 = vmatpush.bf16.msra.mxu0 %v2393
    %4826 = vmatpush.bf16.msra.mxu0 %v2386
    %4827 = vmatpush.bf16.msra.mxu0 %v2379
    %4828 = vmatpush.bf16.msra.mxu0 %v2372
    %4829 = vmatpush.bf16.msra.mxu0 %v2365
    %4830 = vmatpush.bf16.msra.mxu0 %v2358
    %4831 = vmatpush.bf16.msra.mxu0 %v2351
    %4832 = vmatmul.bf16.gmra.mxu0 %v837
    %v4833 = vpop.f32.mrf.mxu0
    %v4834 = vadd.f32 %v4785, %v4833
    %v4835 = vpop.f32.mrf.mxu0
    %v4836 = vadd.f32 %v4787, %v4835
    %4837 = vmatmul.bf16.gmra.mxu0 %v844
    %v4838 = vpop.f32.mrf.mxu0
    %v4839 = vadd.f32 %v4790, %v4838
    %v4840 = vpop.f32.mrf.mxu0
    %v4841 = vadd.f32 %v4792, %v4840
    %4842 = vmatmul.bf16.gmra.mxu0 %v851
    %v4843 = vpop.f32.mrf.mxu0
    %v4844 = vadd.f32 %v4795, %v4843
    %v4845 = vpop.f32.mrf.mxu0
    %v4846 = vadd.f32 %v4797, %v4845
    %4847 = vmatmul.bf16.gmra.mxu0 %v858
    %v4848 = vpop.f32.mrf.mxu0
    %v4849 = vadd.f32 %v4800, %v4848
    %v4850 = vpop.f32.mrf.mxu0
    %v4851 = vadd.f32 %v4802, %v4850
    %4852 = vmatmul.bf16.gmra.mxu0 %v865
    %v4853 = vpop.f32.mrf.mxu0
    %v4854 = vadd.f32 %v4805, %v4853
    %v4855 = vpop.f32.mrf.mxu0
    %v4856 = vadd.f32 %v4807, %v4855
    %4857 = vmatmul.bf16.gmra.mxu0 %v872
    %v4858 = vpop.f32.mrf.mxu0
    %v4859 = vadd.f32 %v4810, %v4858
    %v4860 = vpop.f32.mrf.mxu0
    %v4861 = vadd.f32 %v4812, %v4860
    %4862 = vmatmul.bf16.gmra.mxu0 %v879
    %v4863 = vpop.f32.mrf.mxu0
    %v4864 = vadd.f32 %v4815, %v4863
    %v4865 = vpop.f32.mrf.mxu0
    %v4866 = vadd.f32 %v4817, %v4865
    %4867 = vmatmul.bf16.gmra.mxu0 %v886
    %v4868 = vpop.f32.mrf.mxu0
    %v4869 = vadd.f32 %v4820, %v4868
    %v4870 = vpop.f32.mrf.mxu0
    %v4871 = vadd.f32 %v4822, %v4870
    %4872 = vdwg.mxu0
    %4873 = vmatpush.bf16.msra.mxu0 %v2456
    %4874 = vmatpush.bf16.msra.mxu0 %v2449
    %4875 = vmatpush.bf16.msra.mxu0 %v2442
    %4876 = vmatpush.bf16.msra.mxu0 %v2435
    %4877 = vmatpush.bf16.msra.mxu0 %v2428
    %4878 = vmatpush.bf16.msra.mxu0 %v2421
    %4879 = vmatpush.bf16.msra.mxu0 %v2414
    %4880 = vmatpush.bf16.msra.mxu0 %v2407
    %4881 = vmatmul.bf16.gmra.mxu0 %v838
    %v4882 = vpop.f32.mrf.mxu0
    %v4883 = vadd.f32 %v4834, %v4882
    %v4884 = vpop.f32.mrf.mxu0
    %v4885 = vadd.f32 %v4836, %v4884
    %4886 = vmatmul.bf16.gmra.mxu0 %v845
    %v4887 = vpop.f32.mrf.mxu0
    %v4888 = vadd.f32 %v4839, %v4887
    %v4889 = vpop.f32.mrf.mxu0
    %v4890 = vadd.f32 %v4841, %v4889
    %4891 = vmatmul.bf16.gmra.mxu0 %v852
    %v4892 = vpop.f32.mrf.mxu0
    %v4893 = vadd.f32 %v4844, %v4892
    %v4894 = vpop.f32.mrf.mxu0
    %v4895 = vadd.f32 %v4846, %v4894
    %4896 = vmatmul.bf16.gmra.mxu0 %v859
    %v4897 = vpop.f32.mrf.mxu0
    %v4898 = vadd.f32 %v4849, %v4897
    %v4899 = vpop.f32.mrf.mxu0
    %v4900 = vadd.f32 %v4851, %v4899
    %4901 = vmatmul.bf16.gmra.mxu0 %v866
    %v4902 = vpop.f32.mrf.mxu0
    %v4903 = vadd.f32 %v4854, %v4902
    %v4904 = vpop.f32.mrf.mxu0
    %v4905 = vadd.f32 %v4856, %v4904
    %4906 = vmatmul.bf16.gmra.mxu0 %v873
    %v4907 = vpop.f32.mrf.mxu0
    %v4908 = vadd.f32 %v4859, %v4907
    %v4909 = vpop.f32.mrf.mxu0
    %v4910 = vadd.f32 %v4861, %v4909
    %4911 = vmatmul.bf16.gmra.mxu0 %v880
    %v4912 = vpop.f32.mrf.mxu0
    %v4913 = vadd.f32 %v4864, %v4912
    %v4914 = vpop.f32.mrf.mxu0
    %v4915 = vadd.f32 %v4866, %v4914
    %4916 = vmatmul.bf16.gmra.mxu0 %v887
    %v4917 = vpop.f32.mrf.mxu0
    %v4918 = vadd.f32 %v4869, %v4917
    %v4919 = vpop.f32.mrf.mxu0
    %v4920 = vadd.f32 %v4871, %v4919
    %4921 = vdwg.mxu0
    %4922 = vmatpush.bf16.msra.mxu0 %v2512
    %4923 = vmatpush.bf16.msra.mxu0 %v2505
    %4924 = vmatpush.bf16.msra.mxu0 %v2498
    %4925 = vmatpush.bf16.msra.mxu0 %v2491
    %4926 = vmatpush.bf16.msra.mxu0 %v2484
    %4927 = vmatpush.bf16.msra.mxu0 %v2477
    %4928 = vmatpush.bf16.msra.mxu0 %v2470
    %4929 = vmatpush.bf16.msra.mxu0 %v2463
    %4930 = vmatmul.bf16.gmra.mxu0 %v839
    %v4931 = vpop.f32.mrf.mxu0
    %v4932 = vadd.f32 %v4883, %v4931
    %v4933 = vpop.f32.mrf.mxu0
    %v4934 = vadd.f32 %v4885, %v4933
    %4935 = vmatmul.bf16.gmra.mxu0 %v846
    %v4936 = vpop.f32.mrf.mxu0
    %v4937 = vadd.f32 %v4888, %v4936
    %v4938 = vpop.f32.mrf.mxu0
    %v4939 = vadd.f32 %v4890, %v4938
    %4940 = vmatmul.bf16.gmra.mxu0 %v853
    %v4941 = vpop.f32.mrf.mxu0
    %v4942 = vadd.f32 %v4893, %v4941
    %v4943 = vpop.f32.mrf.mxu0
    %v4944 = vadd.f32 %v4895, %v4943
    %4945 = vmatmul.bf16.gmra.mxu0 %v860
    %v4946 = vpop.f32.mrf.mxu0
    %v4947 = vadd.f32 %v4898, %v4946
    %v4948 = vpop.f32.mrf.mxu0
    %v4949 = vadd.f32 %v4900, %v4948
    %4950 = vmatmul.bf16.gmra.mxu0 %v867
    %v4951 = vpop.f32.mrf.mxu0
    %v4952 = vadd.f32 %v4903, %v4951
    %v4953 = vpop.f32.mrf.mxu0
    %v4954 = vadd.f32 %v4905, %v4953
    %4955 = vmatmul.bf16.gmra.mxu0 %v874
    %v4956 = vpop.f32.mrf.mxu0
    %v4957 = vadd.f32 %v4908, %v4956
    %v4958 = vpop.f32.mrf.mxu0
    %v4959 = vadd.f32 %v4910, %v4958
    %4960 = vmatmul.bf16.gmra.mxu0 %v881
    %v4961 = vpop.f32.mrf.mxu0
    %v4962 = vadd.f32 %v4913, %v4961
    %v4963 = vpop.f32.mrf.mxu0
    %v4964 = vadd.f32 %v4915, %v4963
    %4965 = vmatmul.bf16.gmra.mxu0 %v888
    %v4966 = vpop.f32.mrf.mxu0
    %v4967 = vadd.f32 %v4918, %v4966
    %v4968 = vpop.f32.mrf.mxu0
    %v4969 = vadd.f32 %v4920, %v4968
    %4970 = vdwg.mxu0
    %4971 = vmatpush.bf16.msra.mxu0 %v2568
    %4972 = vmatpush.bf16.msra.mxu0 %v2561
    %4973 = vmatpush.bf16.msra.mxu0 %v2554
    %4974 = vmatpush.bf16.msra.mxu0 %v2547
    %4975 = vmatpush.bf16.msra.mxu0 %v2540
    %4976 = vmatpush.bf16.msra.mxu0 %v2533
    %4977 = vmatpush.bf16.msra.mxu0 %v2526
    %4978 = vmatpush.bf16.msra.mxu0 %v2519
    %4979 = vmatmul.bf16.gmra.mxu0 %v840
    %v4980 = vpop.f32.mrf.mxu0
    %v4981 = vadd.f32 %v4932, %v4980
    %v4982 = vpop.f32.mrf.mxu0
    %v4983 = vadd.f32 %v4934, %v4982
    %4984 = vmatmul.bf16.gmra.mxu0 %v847
    %v4985 = vpop.f32.mrf.mxu0
    %v4986 = vadd.f32 %v4937, %v4985
    %v4987 = vpop.f32.mrf.mxu0
    %v4988 = vadd.f32 %v4939, %v4987
    %4989 = vmatmul.bf16.gmra.mxu0 %v854
    %v4990 = vpop.f32.mrf.mxu0
    %v4991 = vadd.f32 %v4942, %v4990
    %v4992 = vpop.f32.mrf.mxu0
    %v4993 = vadd.f32 %v4944, %v4992
    %4994 = vmatmul.bf16.gmra.mxu0 %v861
    %v4995 = vpop.f32.mrf.mxu0
    %v4996 = vadd.f32 %v4947, %v4995
    %v4997 = vpop.f32.mrf.mxu0
    %v4998 = vadd.f32 %v4949, %v4997
    %4999 = vmatmul.bf16.gmra.mxu0 %v868
    %v5000 = vpop.f32.mrf.mxu0
    %v5001 = vadd.f32 %v4952, %v5000
    %v5002 = vpop.f32.mrf.mxu0
    %v5003 = vadd.f32 %v4954, %v5002
    %5004 = vmatmul.bf16.gmra.mxu0 %v875
    %v5005 = vpop.f32.mrf.mxu0
    %v5006 = vadd.f32 %v4957, %v5005
    %v5007 = vpop.f32.mrf.mxu0
    %v5008 = vadd.f32 %v4959, %v5007
    %5009 = vmatmul.bf16.gmra.mxu0 %v882
    %v5010 = vpop.f32.mrf.mxu0
    %v5011 = vadd.f32 %v4962, %v5010
    %v5012 = vpop.f32.mrf.mxu0
    %v5013 = vadd.f32 %v4964, %v5012
    %5014 = vmatmul.bf16.gmra.mxu0 %v889
    %v5015 = vpop.f32.mrf.mxu0
    %v5016 = vadd.f32 %v4967, %v5015
    %v5017 = vpop.f32.mrf.mxu0
    %v5018 = vadd.f32 %v4969, %v5017
    %5019 = vdwg.mxu0
    %5020 = vmatpush.bf16.msra.mxu0 %v2233
    %5021 = vmatpush.bf16.msra.mxu0 %v2226
    %5022 = vmatpush.bf16.msra.mxu0 %v2219
    %5023 = vmatpush.bf16.msra.mxu0 %v2212
    %5024 = vmatpush.bf16.msra.mxu0 %v2205
    %5025 = vmatpush.bf16.msra.mxu0 %v2198
    %5026 = vmatpush.bf16.msra.mxu0 %v2191
    %5027 = vmatpush.bf16.msra.mxu0 %v2184
    %5028 = vmatmul.bf16.gmra.mxu0 %v834
    %v5029 = vpop.f32.mrf.mxu0
    %v5030 = vadd.f32 %v650, %v5029
    %v5031 = vpop.f32.mrf.mxu0
    %v5032 = vadd.f32 %v650, %v5031
    %5033 = vmatmul.bf16.gmra.mxu0 %v841
    %v5034 = vpop.f32.mrf.mxu0
    %v5035 = vadd.f32 %v650, %v5034
    %v5036 = vpop.f32.mrf.mxu0
    %v5037 = vadd.f32 %v650, %v5036
    %5038 = vmatmul.bf16.gmra.mxu0 %v848
    %v5039 = vpop.f32.mrf.mxu0
    %v5040 = vadd.f32 %v650, %v5039
    %v5041 = vpop.f32.mrf.mxu0
    %v5042 = vadd.f32 %v650, %v5041
    %5043 = vmatmul.bf16.gmra.mxu0 %v855
    %v5044 = vpop.f32.mrf.mxu0
    %v5045 = vadd.f32 %v650, %v5044
    %v5046 = vpop.f32.mrf.mxu0
    %v5047 = vadd.f32 %v650, %v5046
    %5048 = vmatmul.bf16.gmra.mxu0 %v862
    %v5049 = vpop.f32.mrf.mxu0
    %v5050 = vadd.f32 %v650, %v5049
    %v5051 = vpop.f32.mrf.mxu0
    %v5052 = vadd.f32 %v650, %v5051
    %5053 = vmatmul.bf16.gmra.mxu0 %v869
    %v5054 = vpop.f32.mrf.mxu0
    %v5055 = vadd.f32 %v650, %v5054
    %v5056 = vpop.f32.mrf.mxu0
    %v5057 = vadd.f32 %v650, %v5056
    %5058 = vmatmul.bf16.gmra.mxu0 %v876
    %v5059 = vpop.f32.mrf.mxu0
    %v5060 = vadd.f32 %v650, %v5059
    %v5061 = vpop.f32.mrf.mxu0
    %v5062 = vadd.f32 %v650, %v5061
    %5063 = vmatmul.bf16.gmra.mxu0 %v883
    %v5064 = vpop.f32.mrf.mxu0
    %v5065 = vadd.f32 %v650, %v5064
    %v5066 = vpop.f32.mrf.mxu0
    %v5067 = vadd.f32 %v650, %v5066
    %5068 = vdwg.mxu0
    %5069 = vmatpush.bf16.msra.mxu0 %v2289
    %5070 = vmatpush.bf16.msra.mxu0 %v2282
    %5071 = vmatpush.bf16.msra.mxu0 %v2275
    %5072 = vmatpush.bf16.msra.mxu0 %v2268
    %5073 = vmatpush.bf16.msra.mxu0 %v2261
    %5074 = vmatpush.bf16.msra.mxu0 %v2254
    %5075 = vmatpush.bf16.msra.mxu0 %v2247
    %5076 = vmatpush.bf16.msra.mxu0 %v2240
    %5077 = vmatmul.bf16.gmra.mxu0 %v835
    %v5078 = vpop.f32.mrf.mxu0
    %v5079 = vadd.f32 %v5030, %v5078
    %v5080 = vpop.f32.mrf.mxu0
    %v5081 = vadd.f32 %v5032, %v5080
    %5082 = vmatmul.bf16.gmra.mxu0 %v842
    %v5083 = vpop.f32.mrf.mxu0
    %v5084 = vadd.f32 %v5035, %v5083
    %v5085 = vpop.f32.mrf.mxu0
    %v5086 = vadd.f32 %v5037, %v5085
    %5087 = vmatmul.bf16.gmra.mxu0 %v849
    %v5088 = vpop.f32.mrf.mxu0
    %v5089 = vadd.f32 %v5040, %v5088
    %v5090 = vpop.f32.mrf.mxu0
    %v5091 = vadd.f32 %v5042, %v5090
    %5092 = vmatmul.bf16.gmra.mxu0 %v856
    %v5093 = vpop.f32.mrf.mxu0
    %v5094 = vadd.f32 %v5045, %v5093
    %v5095 = vpop.f32.mrf.mxu0
    %v5096 = vadd.f32 %v5047, %v5095
    %5097 = vmatmul.bf16.gmra.mxu0 %v863
    %v5098 = vpop.f32.mrf.mxu0
    %v5099 = vadd.f32 %v5050, %v5098
    %v5100 = vpop.f32.mrf.mxu0
    %v5101 = vadd.f32 %v5052, %v5100
    %5102 = vmatmul.bf16.gmra.mxu0 %v870
    %v5103 = vpop.f32.mrf.mxu0
    %v5104 = vadd.f32 %v5055, %v5103
    %v5105 = vpop.f32.mrf.mxu0
    %v5106 = vadd.f32 %v5057, %v5105
    %5107 = vmatmul.bf16.gmra.mxu0 %v877
    %v5108 = vpop.f32.mrf.mxu0
    %v5109 = vadd.f32 %v5060, %v5108
    %v5110 = vpop.f32.mrf.mxu0
    %v5111 = vadd.f32 %v5062, %v5110
    %5112 = vmatmul.bf16.gmra.mxu0 %v884
    %v5113 = vpop.f32.mrf.mxu0
    %v5114 = vadd.f32 %v5065, %v5113
    %v5115 = vpop.f32.mrf.mxu0
    %v5116 = vadd.f32 %v5067, %v5115
    %5117 = vdwg.mxu0
    %5118 = vmatpush.bf16.msra.mxu0 %v2345
    %5119 = vmatpush.bf16.msra.mxu0 %v2338
    %5120 = vmatpush.bf16.msra.mxu0 %v2331
    %5121 = vmatpush.bf16.msra.mxu0 %v2324
    %5122 = vmatpush.bf16.msra.mxu0 %v2317
    %5123 = vmatpush.bf16.msra.mxu0 %v2310
    %5124 = vmatpush.bf16.msra.mxu0 %v2303
    %5125 = vmatpush.bf16.msra.mxu0 %v2296
    %5126 = vmatmul.bf16.gmra.mxu0 %v836
    %v5127 = vpop.f32.mrf.mxu0
    %v5128 = vadd.f32 %v5079, %v5127
    %v5129 = vpop.f32.mrf.mxu0
    %v5130 = vadd.f32 %v5081, %v5129
    %5131 = vmatmul.bf16.gmra.mxu0 %v843
    %v5132 = vpop.f32.mrf.mxu0
    %v5133 = vadd.f32 %v5084, %v5132
    %v5134 = vpop.f32.mrf.mxu0
    %v5135 = vadd.f32 %v5086, %v5134
    %5136 = vmatmul.bf16.gmra.mxu0 %v850
    %v5137 = vpop.f32.mrf.mxu0
    %v5138 = vadd.f32 %v5089, %v5137
    %v5139 = vpop.f32.mrf.mxu0
    %v5140 = vadd.f32 %v5091, %v5139
    %5141 = vmatmul.bf16.gmra.mxu0 %v857
    %v5142 = vpop.f32.mrf.mxu0
    %v5143 = vadd.f32 %v5094, %v5142
    %v5144 = vpop.f32.mrf.mxu0
    %v5145 = vadd.f32 %v5096, %v5144
    %5146 = vmatmul.bf16.gmra.mxu0 %v864
    %v5147 = vpop.f32.mrf.mxu0
    %v5148 = vadd.f32 %v5099, %v5147
    %v5149 = vpop.f32.mrf.mxu0
    %v5150 = vadd.f32 %v5101, %v5149
    %5151 = vmatmul.bf16.gmra.mxu0 %v871
    %v5152 = vpop.f32.mrf.mxu0
    %v5153 = vadd.f32 %v5104, %v5152
    %v5154 = vpop.f32.mrf.mxu0
    %v5155 = vadd.f32 %v5106, %v5154
    %5156 = vmatmul.bf16.gmra.mxu0 %v878
    %v5157 = vpop.f32.mrf.mxu0
    %v5158 = vadd.f32 %v5109, %v5157
    %v5159 = vpop.f32.mrf.mxu0
    %v5160 = vadd.f32 %v5111, %v5159
    %5161 = vmatmul.bf16.gmra.mxu0 %v885
    %v5162 = vpop.f32.mrf.mxu0
    %v5163 = vadd.f32 %v5114, %v5162
    %v5164 = vpop.f32.mrf.mxu0
    %v5165 = vadd.f32 %v5116, %v5164
    %5166 = vdwg.mxu0
    %5167 = vmatpush.bf16.msra.mxu0 %v2401
    %5168 = vmatpush.bf16.msra.mxu0 %v2394
    %5169 = vmatpush.bf16.msra.mxu0 %v2387
    %5170 = vmatpush.bf16.msra.mxu0 %v2380
    %5171 = vmatpush.bf16.msra.mxu0 %v2373
    %5172 = vmatpush.bf16.msra.mxu0 %v2366
    %5173 = vmatpush.bf16.msra.mxu0 %v2359
    %5174 = vmatpush.bf16.msra.mxu0 %v2352
    %5175 = vmatmul.bf16.gmra.mxu0 %v837
    %v5176 = vpop.f32.mrf.mxu0
    %v5177 = vadd.f32 %v5128, %v5176
    %v5178 = vpop.f32.mrf.mxu0
    %v5179 = vadd.f32 %v5130, %v5178
    %5180 = vmatmul.bf16.gmra.mxu0 %v844
    %v5181 = vpop.f32.mrf.mxu0
    %v5182 = vadd.f32 %v5133, %v5181
    %v5183 = vpop.f32.mrf.mxu0
    %v5184 = vadd.f32 %v5135, %v5183
    %5185 = vmatmul.bf16.gmra.mxu0 %v851
    %v5186 = vpop.f32.mrf.mxu0
    %v5187 = vadd.f32 %v5138, %v5186
    %v5188 = vpop.f32.mrf.mxu0
    %v5189 = vadd.f32 %v5140, %v5188
    %5190 = vmatmul.bf16.gmra.mxu0 %v858
    %v5191 = vpop.f32.mrf.mxu0
    %v5192 = vadd.f32 %v5143, %v5191
    %v5193 = vpop.f32.mrf.mxu0
    %v5194 = vadd.f32 %v5145, %v5193
    %5195 = vmatmul.bf16.gmra.mxu0 %v865
    %v5196 = vpop.f32.mrf.mxu0
    %v5197 = vadd.f32 %v5148, %v5196
    %v5198 = vpop.f32.mrf.mxu0
    %v5199 = vadd.f32 %v5150, %v5198
    %5200 = vmatmul.bf16.gmra.mxu0 %v872
    %v5201 = vpop.f32.mrf.mxu0
    %v5202 = vadd.f32 %v5153, %v5201
    %v5203 = vpop.f32.mrf.mxu0
    %v5204 = vadd.f32 %v5155, %v5203
    %5205 = vmatmul.bf16.gmra.mxu0 %v879
    %v5206 = vpop.f32.mrf.mxu0
    %v5207 = vadd.f32 %v5158, %v5206
    %v5208 = vpop.f32.mrf.mxu0
    %v5209 = vadd.f32 %v5160, %v5208
    %5210 = vmatmul.bf16.gmra.mxu0 %v886
    %v5211 = vpop.f32.mrf.mxu0
    %v5212 = vadd.f32 %v5163, %v5211
    %v5213 = vpop.f32.mrf.mxu0
    %v5214 = vadd.f32 %v5165, %v5213
    %5215 = vdwg.mxu0
    %5216 = vmatpush.bf16.msra.mxu0 %v2457
    %5217 = vmatpush.bf16.msra.mxu0 %v2450
    %5218 = vmatpush.bf16.msra.mxu0 %v2443
    %5219 = vmatpush.bf16.msra.mxu0 %v2436
    %5220 = vmatpush.bf16.msra.mxu0 %v2429
    %5221 = vmatpush.bf16.msra.mxu0 %v2422
    %5222 = vmatpush.bf16.msra.mxu0 %v2415
    %5223 = vmatpush.bf16.msra.mxu0 %v2408
    %5224 = vmatmul.bf16.gmra.mxu0 %v838
    %v5225 = vpop.f32.mrf.mxu0
    %v5226 = vadd.f32 %v5177, %v5225
    %v5227 = vpop.f32.mrf.mxu0
    %v5228 = vadd.f32 %v5179, %v5227
    %5229 = vmatmul.bf16.gmra.mxu0 %v845
    %v5230 = vpop.f32.mrf.mxu0
    %v5231 = vadd.f32 %v5182, %v5230
    %v5232 = vpop.f32.mrf.mxu0
    %v5233 = vadd.f32 %v5184, %v5232
    %5234 = vmatmul.bf16.gmra.mxu0 %v852
    %v5235 = vpop.f32.mrf.mxu0
    %v5236 = vadd.f32 %v5187, %v5235
    %v5237 = vpop.f32.mrf.mxu0
    %v5238 = vadd.f32 %v5189, %v5237
    %5239 = vmatmul.bf16.gmra.mxu0 %v859
    %v5240 = vpop.f32.mrf.mxu0
    %v5241 = vadd.f32 %v5192, %v5240
    %v5242 = vpop.f32.mrf.mxu0
    %v5243 = vadd.f32 %v5194, %v5242
    %5244 = vmatmul.bf16.gmra.mxu0 %v866
    %v5245 = vpop.f32.mrf.mxu0
    %v5246 = vadd.f32 %v5197, %v5245
    %v5247 = vpop.f32.mrf.mxu0
    %v5248 = vadd.f32 %v5199, %v5247
    %5249 = vmatmul.bf16.gmra.mxu0 %v873
    %v5250 = vpop.f32.mrf.mxu0
    %v5251 = vadd.f32 %v5202, %v5250
    %v5252 = vpop.f32.mrf.mxu0
    %v5253 = vadd.f32 %v5204, %v5252
    %5254 = vmatmul.bf16.gmra.mxu0 %v880
    %v5255 = vpop.f32.mrf.mxu0
    %v5256 = vadd.f32 %v5207, %v5255
    %v5257 = vpop.f32.mrf.mxu0
    %v5258 = vadd.f32 %v5209, %v5257
    %5259 = vmatmul.bf16.gmra.mxu0 %v887
    %v5260 = vpop.f32.mrf.mxu0
    %v5261 = vadd.f32 %v5212, %v5260
    %v5262 = vpop.f32.mrf.mxu0
    %v5263 = vadd.f32 %v5214, %v5262
    %5264 = vdwg.mxu0
    %5265 = vmatpush.bf16.msra.mxu0 %v2513
    %5266 = vmatpush.bf16.msra.mxu0 %v2506
    %5267 = vmatpush.bf16.msra.mxu0 %v2499
    %5268 = vmatpush.bf16.msra.mxu0 %v2492
    %5269 = vmatpush.bf16.msra.mxu0 %v2485
    %5270 = vmatpush.bf16.msra.mxu0 %v2478
    %5271 = vmatpush.bf16.msra.mxu0 %v2471
    %5272 = vmatpush.bf16.msra.mxu0 %v2464
    %5273 = vmatmul.bf16.gmra.mxu0 %v839
    %v5274 = vpop.f32.mrf.mxu0
    %v5275 = vadd.f32 %v5226, %v5274
    %v5276 = vpop.f32.mrf.mxu0
    %v5277 = vadd.f32 %v5228, %v5276
    %5278 = vmatmul.bf16.gmra.mxu0 %v846
    %v5279 = vpop.f32.mrf.mxu0
    %v5280 = vadd.f32 %v5231, %v5279
    %v5281 = vpop.f32.mrf.mxu0
    %v5282 = vadd.f32 %v5233, %v5281
    %5283 = vmatmul.bf16.gmra.mxu0 %v853
    %v5284 = vpop.f32.mrf.mxu0
    %v5285 = vadd.f32 %v5236, %v5284
    %v5286 = vpop.f32.mrf.mxu0
    %v5287 = vadd.f32 %v5238, %v5286
    %5288 = vmatmul.bf16.gmra.mxu0 %v860
    %v5289 = vpop.f32.mrf.mxu0
    %v5290 = vadd.f32 %v5241, %v5289
    %v5291 = vpop.f32.mrf.mxu0
    %v5292 = vadd.f32 %v5243, %v5291
    %5293 = vmatmul.bf16.gmra.mxu0 %v867
    %v5294 = vpop.f32.mrf.mxu0
    %v5295 = vadd.f32 %v5246, %v5294
    %v5296 = vpop.f32.mrf.mxu0
    %v5297 = vadd.f32 %v5248, %v5296
    %5298 = vmatmul.bf16.gmra.mxu0 %v874
    %v5299 = vpop.f32.mrf.mxu0
    %v5300 = vadd.f32 %v5251, %v5299
    %v5301 = vpop.f32.mrf.mxu0
    %v5302 = vadd.f32 %v5253, %v5301
    %5303 = vmatmul.bf16.gmra.mxu0 %v881
    %v5304 = vpop.f32.mrf.mxu0
    %v5305 = vadd.f32 %v5256, %v5304
    %v5306 = vpop.f32.mrf.mxu0
    %v5307 = vadd.f32 %v5258, %v5306
    %5308 = vmatmul.bf16.gmra.mxu0 %v888
    %v5309 = vpop.f32.mrf.mxu0
    %v5310 = vadd.f32 %v5261, %v5309
    %v5311 = vpop.f32.mrf.mxu0
    %v5312 = vadd.f32 %v5263, %v5311
    %5313 = vdwg.mxu0
    %5314 = vmatpush.bf16.msra.mxu0 %v2569
    %5315 = vmatpush.bf16.msra.mxu0 %v2562
    %5316 = vmatpush.bf16.msra.mxu0 %v2555
    %5317 = vmatpush.bf16.msra.mxu0 %v2548
    %5318 = vmatpush.bf16.msra.mxu0 %v2541
    %5319 = vmatpush.bf16.msra.mxu0 %v2534
    %5320 = vmatpush.bf16.msra.mxu0 %v2527
    %5321 = vmatpush.bf16.msra.mxu0 %v2520
    %5322 = vmatmul.bf16.gmra.mxu0 %v840
    %v5323 = vpop.f32.mrf.mxu0
    %v5324 = vadd.f32 %v5275, %v5323
    %v5325 = vpop.f32.mrf.mxu0
    %v5326 = vadd.f32 %v5277, %v5325
    %5327 = vmatmul.bf16.gmra.mxu0 %v847
    %v5328 = vpop.f32.mrf.mxu0
    %v5329 = vadd.f32 %v5280, %v5328
    %v5330 = vpop.f32.mrf.mxu0
    %v5331 = vadd.f32 %v5282, %v5330
    %5332 = vmatmul.bf16.gmra.mxu0 %v854
    %v5333 = vpop.f32.mrf.mxu0
    %v5334 = vadd.f32 %v5285, %v5333
    %v5335 = vpop.f32.mrf.mxu0
    %v5336 = vadd.f32 %v5287, %v5335
    %5337 = vmatmul.bf16.gmra.mxu0 %v861
    %v5338 = vpop.f32.mrf.mxu0
    %v5339 = vadd.f32 %v5290, %v5338
    %v5340 = vpop.f32.mrf.mxu0
    %v5341 = vadd.f32 %v5292, %v5340
    %5342 = vmatmul.bf16.gmra.mxu0 %v868
    %v5343 = vpop.f32.mrf.mxu0
    %v5344 = vadd.f32 %v5295, %v5343
    %v5345 = vpop.f32.mrf.mxu0
    %v5346 = vadd.f32 %v5297, %v5345
    %5347 = vmatmul.bf16.gmra.mxu0 %v875
    %v5348 = vpop.f32.mrf.mxu0
    %v5349 = vadd.f32 %v5300, %v5348
    %v5350 = vpop.f32.mrf.mxu0
    %v5351 = vadd.f32 %v5302, %v5350
    %5352 = vmatmul.bf16.gmra.mxu0 %v882
    %v5353 = vpop.f32.mrf.mxu0
    %v5354 = vadd.f32 %v5305, %v5353
    %v5355 = vpop.f32.mrf.mxu0
    %v5356 = vadd.f32 %v5307, %v5355
    %5357 = vmatmul.bf16.gmra.mxu0 %v889
    %v5358 = vpop.f32.mrf.mxu0
    %v5359 = vadd.f32 %v5310, %v5358
    %v5360 = vpop.f32.mrf.mxu0
    %v5361 = vadd.f32 %v5312, %v5360
    %5362 = vdwg.mxu0
    %v5363 = vmax.f32 %v3266, 0.0
    %v5364 = vmax.f32 %v3609, 0.0
    %v5365 = vmax.f32 %v3952, 0.0
    %v5366 = vmax.f32 %v4295, 0.0
    %v5367 = vmax.f32 %v4638, 0.0
    %v5368 = vmax.f32 %v4981, 0.0
    %v5369 = vmax.f32 %v5324, 0.0
    %v5370 = vmax.f32 %v3268, 0.0
    %v5371 = vmax.f32 %v3611, 0.0
    %v5372 = vmax.f32 %v3954, 0.0
    %v5373 = vmax.f32 %v4297, 0.0
    %v5374 = vmax.f32 %v4640, 0.0
    %v5375 = vmax.f32 %v4983, 0.0
    %v5376 = vmax.f32 %v5326, 0.0
    %v5377 = vmax.f32 %v3271, 0.0
    %v5378 = vmax.f32 %v3614, 0.0
    %v5379 = vmax.f32 %v3957, 0.0
    %v5380 = vmax.f32 %v4300, 0.0
    %v5381 = vmax.f32 %v4643, 0.0
    %v5382 = vmax.f32 %v4986, 0.0
    %v5383 = vmax.f32 %v5329, 0.0
    %v5384 = vmax.f32 %v3273, 0.0
    %v5385 = vmax.f32 %v3616, 0.0
    %v5386 = vmax.f32 %v3959, 0.0
    %v5387 = vmax.f32 %v4302, 0.0
    %v5388 = vmax.f32 %v4645, 0.0
    %v5389 = vmax.f32 %v4988, 0.0
    %v5390 = vmax.f32 %v5331, 0.0
    %v5391 = vmax.f32 %v3276, 0.0
    %v5392 = vmax.f32 %v3619, 0.0
    %v5393 = vmax.f32 %v3962, 0.0
    %v5394 = vmax.f32 %v4305, 0.0
    %v5395 = vmax.f32 %v4648, 0.0
    %v5396 = vmax.f32 %v4991, 0.0
    %v5397 = vmax.f32 %v5334, 0.0
    %v5398 = vmax.f32 %v3278, 0.0
    %v5399 = vmax.f32 %v3621, 0.0
    %v5400 = vmax.f32 %v3964, 0.0
    %v5401 = vmax.f32 %v4307, 0.0
    %v5402 = vmax.f32 %v4650, 0.0
    %v5403 = vmax.f32 %v4993, 0.0
    %v5404 = vmax.f32 %v5336, 0.0
    %v5405 = vmax.f32 %v3281, 0.0
    %v5406 = vmax.f32 %v3624, 0.0
    %v5407 = vmax.f32 %v3967, 0.0
    %v5408 = vmax.f32 %v4310, 0.0
    %v5409 = vmax.f32 %v4653, 0.0
    %v5410 = vmax.f32 %v4996, 0.0
    %v5411 = vmax.f32 %v5339, 0.0
    %v5412 = vmax.f32 %v3283, 0.0
    %v5413 = vmax.f32 %v3626, 0.0
    %v5414 = vmax.f32 %v3969, 0.0
    %v5415 = vmax.f32 %v4312, 0.0
    %v5416 = vmax.f32 %v4655, 0.0
    %v5417 = vmax.f32 %v4998, 0.0
    %v5418 = vmax.f32 %v5341, 0.0
    %v5419 = vmax.f32 %v3286, 0.0
    %v5420 = vmax.f32 %v3629, 0.0
    %v5421 = vmax.f32 %v3972, 0.0
    %v5422 = vmax.f32 %v4315, 0.0
    %v5423 = vmax.f32 %v4658, 0.0
    %v5424 = vmax.f32 %v5001, 0.0
    %v5425 = vmax.f32 %v5344, 0.0
    %v5426 = vmax.f32 %v3288, 0.0
    %v5427 = vmax.f32 %v3631, 0.0
    %v5428 = vmax.f32 %v3974, 0.0
    %v5429 = vmax.f32 %v4317, 0.0
    %v5430 = vmax.f32 %v4660, 0.0
    %v5431 = vmax.f32 %v5003, 0.0
    %v5432 = vmax.f32 %v5346, 0.0
    %v5433 = vmax.f32 %v3291, 0.0
    %v5434 = vmax.f32 %v3634, 0.0
    %v5435 = vmax.f32 %v3977, 0.0
    %v5436 = vmax.f32 %v4320, 0.0
    %v5437 = vmax.f32 %v4663, 0.0
    %v5438 = vmax.f32 %v5006, 0.0
    %v5439 = vmax.f32 %v5349, 0.0
    %v5440 = vmax.f32 %v3293, 0.0
    %v5441 = vmax.f32 %v3636, 0.0
    %v5442 = vmax.f32 %v3979, 0.0
    %v5443 = vmax.f32 %v4322, 0.0
    %v5444 = vmax.f32 %v4665, 0.0
    %v5445 = vmax.f32 %v5008, 0.0
    %v5446 = vmax.f32 %v5351, 0.0
    %v5447 = vmax.f32 %v3296, 0.0
    %v5448 = vmax.f32 %v3639, 0.0
    %v5449 = vmax.f32 %v3982, 0.0
    %v5450 = vmax.f32 %v4325, 0.0
    %v5451 = vmax.f32 %v4668, 0.0
    %v5452 = vmax.f32 %v5011, 0.0
    %v5453 = vmax.f32 %v5354, 0.0
    %v5454 = vmax.f32 %v3298, 0.0
    %v5455 = vmax.f32 %v3641, 0.0
    %v5456 = vmax.f32 %v3984, 0.0
    %v5457 = vmax.f32 %v4327, 0.0
    %v5458 = vmax.f32 %v4670, 0.0
    %v5459 = vmax.f32 %v5013, 0.0
    %v5460 = vmax.f32 %v5356, 0.0
    %v5461 = vmax.f32 %v3301, 0.0
    %v5462 = vmax.f32 %v3644, 0.0
    %v5463 = vmax.f32 %v3987, 0.0
    %v5464 = vmax.f32 %v4330, 0.0
    %v5465 = vmax.f32 %v4673, 0.0
    %v5466 = vmax.f32 %v5016, 0.0
    %v5467 = vmax.f32 %v5359, 0.0
    %v5468 = vmax.f32 %v3303, 0.0
    %v5469 = vmax.f32 %v3646, 0.0
    %v5470 = vmax.f32 %v3989, 0.0
    %v5471 = vmax.f32 %v4332, 0.0
    %v5472 = vmax.f32 %v4675, 0.0
    %v5473 = vmax.f32 %v5018, 0.0
    %v5474 = vmax.f32 %v5361, 0.0
    %v5475 = vpack.c.bf16 %v5370, %v5363
    %v5476 = vpack.c.bf16 %v5371, %v5364
    %v5477 = vpack.c.bf16 %v5372, %v5365
    %v5478 = vpack.c.bf16 %v5373, %v5366
    %v5479 = vpack.c.bf16 %v5374, %v5367
    %v5480 = vpack.c.bf16 %v5375, %v5368
    %v5481 = vpack.c.bf16 %v5376, %v5369
    %v5482 = vpack.c.bf16 %v5384, %v5377
    %v5483 = vpack.c.bf16 %v5385, %v5378
    %v5484 = vpack.c.bf16 %v5386, %v5379
    %v5485 = vpack.c.bf16 %v5387, %v5380
    %v5486 = vpack.c.bf16 %v5388, %v5381
    %v5487 = vpack.c.bf16 %v5389, %v5382
    %v5488 = vpack.c.bf16 %v5390, %v5383
    %v5489 = vpack.c.bf16 %v5398, %v5391
    %v5490 = vpack.c.bf16 %v5399, %v5392
    %v5491 = vpack.c.bf16 %v5400, %v5393
    %v5492 = vpack.c.bf16 %v5401, %v5394
    %v5493 = vpack.c.bf16 %v5402, %v5395
    %v5494 = vpack.c.bf16 %v5403, %v5396
    %v5495 = vpack.c.bf16 %v5404, %v5397
    %v5496 = vpack.c.bf16 %v5412, %v5405
    %v5497 = vpack.c.bf16 %v5413, %v5406
    %v5498 = vpack.c.bf16 %v5414, %v5407
    %v5499 = vpack.c.bf16 %v5415, %v5408
    %v5500 = vpack.c.bf16 %v5416, %v5409
    %v5501 = vpack.c.bf16 %v5417, %v5410
    %v5502 = vpack.c.bf16 %v5418, %v5411
    %v5503 = vpack.c.bf16 %v5426, %v5419
    %v5504 = vpack.c.bf16 %v5427, %v5420
    %v5505 = vpack.c.bf16 %v5428, %v5421
    %v5506 = vpack.c.bf16 %v5429, %v5422
    %v5507 = vpack.c.bf16 %v5430, %v5423
    %v5508 = vpack.c.bf16 %v5431, %v5424
    %v5509 = vpack.c.bf16 %v5432, %v5425
    %v5510 = vpack.c.bf16 %v5440, %v5433
    %v5511 = vpack.c.bf16 %v5441, %v5434
    %v5512 = vpack.c.bf16 %v5442, %v5435
    %v5513 = vpack.c.bf16 %v5443, %v5436
    %v5514 = vpack.c.bf16 %v5444, %v5437
    %v5515 = vpack.c.bf16 %v5445, %v5438
    %v5516 = vpack.c.bf16 %v5446, %v5439
    %v5517 = vpack.c.bf16 %v5454, %v5447
    %v5518 = vpack.c.bf16 %v5455, %v5448
    %v5519 = vpack.c.bf16 %v5456, %v5449
    %v5520 = vpack.c.bf16 %v5457, %v5450
    %v5521 = vpack.c.bf16 %v5458, %v5451
    %v5522 = vpack.c.bf16 %v5459, %v5452
    %v5523 = vpack.c.bf16 %v5460, %v5453
    %v5524 = vpack.c.bf16 %v5468, %v5461
    %v5525 = vpack.c.bf16 %v5469, %v5462
    %v5526 = vpack.c.bf16 %v5470, %v5463
    %v5527 = vpack.c.bf16 %v5471, %v5464
    %v5528 = vpack.c.bf16 %v5472, %v5465
    %v5529 = vpack.c.bf16 %v5473, %v5466
    %v5530 = vpack.c.bf16 %v5474, %v5467
    %v5531 = vld [vmem:[#allocation8] sm:$0xff]
    %v5532 = vld [vmem:[#allocation8 + $0x8] sm:$0xff]
    %v5533 = vld [vmem:[#allocation8 + $0x10] sm:$0xff]
    %v5534 = vld [vmem:[#allocation8 + $0x18] sm:$0xf]
    %v5535 = vld [vmem:[#allocation8 + $0x1c] sm:$0xff]
    %v5536 = vld [vmem:[#allocation8 + $0x24] sm:$0xff]
    %v5537 = vld [vmem:[#allocation8 + $0x2c] sm:$0xff]
    %v5538 = vld [vmem:[#allocation8 + $0x34] sm:$0xf]
    %v5539 = vld [vmem:[#allocation8 + $0x38] sm:$0xff]
    %v5540 = vld [vmem:[#allocation8 + $0x40] sm:$0xff]
    %v5541 = vld [vmem:[#allocation8 + $0x48] sm:$0xff]
    %v5542 = vld [vmem:[#allocation8 + $0x50] sm:$0xf]
    %v5543 = vld [vmem:[#allocation8 + $0x54] sm:$0xff]
    %v5544 = vld [vmem:[#allocation8 + $0x5c] sm:$0xff]
    %v5545 = vld [vmem:[#allocation8 + $0x64] sm:$0xff]
    %v5546 = vld [vmem:[#allocation8 + $0x6c] sm:$0xf]
    %v5547 = vld [vmem:[#allocation8 + $0x70] sm:$0xff]
    %v5548 = vld [vmem:[#allocation8 + $0x78] sm:$0xff]
    %v5549 = vld [vmem:[#allocation8 + $0x80] sm:$0xff]
    %v5550 = vld [vmem:[#allocation8 + $0x88] sm:$0xf]
    %v5551 = vld [vmem:[#allocation8 + $0x8c] sm:$0xff]
    %v5552 = vld [vmem:[#allocation8 + $0x94] sm:$0xff]
    %v5553 = vld [vmem:[#allocation8 + $0x9c] sm:$0xff]
    %v5554 = vld [vmem:[#allocation8 + $0xa4] sm:$0xf]
    %v5555 = vld [vmem:[#allocation8 + $0xa8] sm:$0xff]
    %v5556 = vld [vmem:[#allocation8 + $0xb0] sm:$0xff]
    %v5557 = vld [vmem:[#allocation8 + $0xb8] sm:$0xff]
    %v5558 = vld [vmem:[#allocation8 + $0xc0] sm:$0xf]
    %v5559 = vld [vmem:[#allocation8 + $0xc4] sm:$0xff]
    %v5560 = vld [vmem:[#allocation8 + $0xcc] sm:$0xff]
    %v5561 = vld [vmem:[#allocation8 + $0xd4] sm:$0xff]
    %v5562 = vld [vmem:[#allocation8 + $0xdc] sm:$0xf]
    %v5563 = vld [vmem:[#allocation8 + $0xe0] sm:$0xff]
    %v5564 = vld [vmem:[#allocation8 + $0xe8] sm:$0xff]
    %v5565 = vld [vmem:[#allocation8 + $0xf0] sm:$0xff]
    %v5566 = vld [vmem:[#allocation8 + $0xf8] sm:$0xf]
    %v5567 = vld [vmem:[#allocation8 + $0xfc] sm:$0xff]
    %v5568 = vld [vmem:[#allocation8 + $0x104] sm:$0xff]
    %v5569 = vld [vmem:[#allocation8 + $0x10c] sm:$0xff]
    %v5570 = vld [vmem:[#allocation8 + $0x114] sm:$0xf]
    %v5571 = vld [vmem:[#allocation8 + $0x118] sm:$0xff]
    %v5572 = vld [vmem:[#allocation8 + $0x120] sm:$0xff]
    %v5573 = vld [vmem:[#allocation8 + $0x128] sm:$0xff]
    %v5574 = vld [vmem:[#allocation8 + $0x130] sm:$0xf]
    %v5575 = vld [vmem:[#allocation8 + $0x134] sm:$0xff]
    %v5576 = vld [vmem:[#allocation8 + $0x13c] sm:$0xff]
    %v5577 = vld [vmem:[#allocation8 + $0x144] sm:$0xff]
    %v5578 = vld [vmem:[#allocation8 + $0x14c] sm:$0xf]
    %v5579 = vld [vmem:[#allocation8 + $0x150] sm:$0xff]
    %v5580 = vld [vmem:[#allocation8 + $0x158] sm:$0xff]
    %v5581 = vld [vmem:[#allocation8 + $0x160] sm:$0xff]
    %v5582 = vld [vmem:[#allocation8 + $0x168] sm:$0xf]
    %v5583 = vld [vmem:[#allocation8 + $0x16c] sm:$0xff]
    %v5584 = vld [vmem:[#allocation8 + $0x174] sm:$0xff]
    %v5585 = vld [vmem:[#allocation8 + $0x17c] sm:$0xff]
    %v5586 = vld [vmem:[#allocation8 + $0x184] sm:$0xf]
    %v5587 = vld [vmem:[#allocation8 + $0x188] sm:$0xff]
    %v5588 = vld [vmem:[#allocation8 + $0x190] sm:$0xff]
    %v5589 = vld [vmem:[#allocation8 + $0x198] sm:$0xff]
    %v5590 = vld [vmem:[#allocation8 + $0x1a0] sm:$0xf]
    %v5591 = vld [vmem:[#allocation8 + $0x1a4] sm:$0xff]
    %v5592 = vld [vmem:[#allocation8 + $0x1ac] sm:$0xff]
    %v5593 = vld [vmem:[#allocation8 + $0x1b4] sm:$0xff]
    %v5594 = vld [vmem:[#allocation8 + $0x1bc] sm:$0xf]
    %v5595 = vld [vmem:[#allocation8 + $0x1c0] sm:$0xff]
    %v5596 = vld [vmem:[#allocation8 + $0x1c8] sm:$0xff]
    %v5597 = vld [vmem:[#allocation8 + $0x1d0] sm:$0xff]
    %v5598 = vld [vmem:[#allocation8 + $0x1d8] sm:$0xf]
    %v5599 = vld [vmem:[#allocation8 + $0x1dc] sm:$0xff]
    %v5600 = vld [vmem:[#allocation8 + $0x1e4] sm:$0xff]
    %v5601 = vld [vmem:[#allocation8 + $0x1ec] sm:$0xff]
    %v5602 = vld [vmem:[#allocation8 + $0x1f4] sm:$0xf]
    %v5603 = vld [vmem:[#allocation8 + $0x1f8] sm:$0xff]
    %v5604 = vld [vmem:[#allocation8 + $0x200] sm:$0xff]
    %v5605 = vld [vmem:[#allocation8 + $0x208] sm:$0xff]
    %v5606 = vld [vmem:[#allocation8 + $0x210] sm:$0xf]
    %v5607 = vld [vmem:[#allocation8 + $0x214] sm:$0xff]
    %v5608 = vld [vmem:[#allocation8 + $0x21c] sm:$0xff]
    %v5609 = vld [vmem:[#allocation8 + $0x224] sm:$0xff]
    %v5610 = vld [vmem:[#allocation8 + $0x22c] sm:$0xf]
    %v5611 = vld [vmem:[#allocation8 + $0x230] sm:$0xff]
    %v5612 = vld [vmem:[#allocation8 + $0x238] sm:$0xff]
    %v5613 = vld [vmem:[#allocation8 + $0x240] sm:$0xff]
    %v5614 = vld [vmem:[#allocation8 + $0x248] sm:$0xf]
    %v5615 = vld [vmem:[#allocation8 + $0x24c] sm:$0xff]
    %v5616 = vld [vmem:[#allocation8 + $0x254] sm:$0xff]
    %v5617 = vld [vmem:[#allocation8 + $0x25c] sm:$0xff]
    %v5618 = vld [vmem:[#allocation8 + $0x264] sm:$0xf]
    %v5619 = vld [vmem:[#allocation8 + $0x268] sm:$0xff]
    %v5620 = vld [vmem:[#allocation8 + $0x270] sm:$0xff]
    %v5621 = vld [vmem:[#allocation8 + $0x278] sm:$0xff]
    %v5622 = vld [vmem:[#allocation8 + $0x280] sm:$0xf]
    %v5623 = vld [vmem:[#allocation8 + $0x284] sm:$0xff]
    %v5624 = vld [vmem:[#allocation8 + $0x28c] sm:$0xff]
    %v5625 = vld [vmem:[#allocation8 + $0x294] sm:$0xff]
    %v5626 = vld [vmem:[#allocation8 + $0x29c] sm:$0xf]
    %v5627 = vld [vmem:[#allocation8 + $0x2a0] sm:$0xff]
    %v5628 = vld [vmem:[#allocation8 + $0x2a8] sm:$0xff]
    %v5629 = vld [vmem:[#allocation8 + $0x2b0] sm:$0xff]
    %v5630 = vld [vmem:[#allocation8 + $0x2b8] sm:$0xf]
    %v5631 = vld [vmem:[#allocation8 + $0x2bc] sm:$0xff]
    %v5632 = vld [vmem:[#allocation8 + $0x2c4] sm:$0xff]
    %v5633 = vld [vmem:[#allocation8 + $0x2cc] sm:$0xff]
    %v5634 = vld [vmem:[#allocation8 + $0x2d4] sm:$0xf]
    %v5635 = vld [vmem:[#allocation8 + $0x2d8] sm:$0xff]
    %v5636 = vld [vmem:[#allocation8 + $0x2e0] sm:$0xff]
    %v5637 = vld [vmem:[#allocation8 + $0x2e8] sm:$0xff]
    %v5638 = vld [vmem:[#allocation8 + $0x2f0] sm:$0xf]
    %v5639 = vld [vmem:[#allocation8 + $0x2f4] sm:$0xff]
    %v5640 = vld [vmem:[#allocation8 + $0x2fc] sm:$0xff]
    %v5641 = vld [vmem:[#allocation8 + $0x304] sm:$0xff]
    %v5642 = vld [vmem:[#allocation8 + $0x30c] sm:$0xf]
    %v5643 = vld [vmem:[#allocation8 + $0x310] sm:$0xff]
    %v5644 = vld [vmem:[#allocation8 + $0x318] sm:$0xff]
    %v5645 = vld [vmem:[#allocation8 + $0x320] sm:$0xff]
    %v5646 = vld [vmem:[#allocation8 + $0x328] sm:$0xf]
    %v5647 = vld [vmem:[#allocation8 + $0x32c] sm:$0xff]
    %v5648 = vld [vmem:[#allocation8 + $0x334] sm:$0xff]
    %v5649 = vld [vmem:[#allocation8 + $0x33c] sm:$0xff]
    %v5650 = vld [vmem:[#allocation8 + $0x344] sm:$0xf]
    %v5651 = vld [vmem:[#allocation8 + $0x348] sm:$0xff]
    %v5652 = vld [vmem:[#allocation8 + $0x350] sm:$0xff]
    %v5653 = vld [vmem:[#allocation8 + $0x358] sm:$0xff]
    %v5654 = vld [vmem:[#allocation8 + $0x360] sm:$0xf]
    %v5655 = vld [vmem:[#allocation8 + $0x364] sm:$0xff]
    %v5656 = vld [vmem:[#allocation8 + $0x36c] sm:$0xff]
    %v5657 = vld [vmem:[#allocation8 + $0x374] sm:$0xff]
    %v5658 = vld [vmem:[#allocation8 + $0x37c] sm:$0xf]
    %v5659 = vld [vmem:[#allocation8 + $0x380] sm:$0xff]
    %v5660 = vld [vmem:[#allocation8 + $0x388] sm:$0xff]
    %v5661 = vld [vmem:[#allocation8 + $0x390] sm:$0xff]
    %v5662 = vld [vmem:[#allocation8 + $0x398] sm:$0xf]
    %v5663 = vld [vmem:[#allocation8 + $0x39c] sm:$0xff]
    %v5664 = vld [vmem:[#allocation8 + $0x3a4] sm:$0xff]
    %v5665 = vld [vmem:[#allocation8 + $0x3ac] sm:$0xff]
    %v5666 = vld [vmem:[#allocation8 + $0x3b4] sm:$0xf]
    %v5667 = vld [vmem:[#allocation8 + $0x3b8] sm:$0xff]
    %v5668 = vld [vmem:[#allocation8 + $0x3c0] sm:$0xff]
    %v5669 = vld [vmem:[#allocation8 + $0x3c8] sm:$0xff]
    %v5670 = vld [vmem:[#allocation8 + $0x3d0] sm:$0xf]
    %v5671 = vld [vmem:[#allocation8 + $0x3d4] sm:$0xff]
    %v5672 = vld [vmem:[#allocation8 + $0x3dc] sm:$0xff]
    %v5673 = vld [vmem:[#allocation8 + $0x3e4] sm:$0xff]
    %v5674 = vld [vmem:[#allocation8 + $0x3ec] sm:$0xf]
    %v5675 = vld [vmem:[#allocation8 + $0x3f0] sm:$0xff]
    %v5676 = vld [vmem:[#allocation8 + $0x3f8] sm:$0xff]
    %v5677 = vld [vmem:[#allocation8 + $0x400] sm:$0xff]
    %v5678 = vld [vmem:[#allocation8 + $0x408] sm:$0xf]
    %v5679 = vld [vmem:[#allocation8 + $0x40c] sm:$0xff]
    %v5680 = vld [vmem:[#allocation8 + $0x414] sm:$0xff]
    %v5681 = vld [vmem:[#allocation8 + $0x41c] sm:$0xff]
    %v5682 = vld [vmem:[#allocation8 + $0x424] sm:$0xf]
    %v5683 = vld [vmem:[#allocation8 + $0x428] sm:$0xff]
    %v5684 = vld [vmem:[#allocation8 + $0x430] sm:$0xff]
    %v5685 = vld [vmem:[#allocation8 + $0x438] sm:$0xff]
    %v5686 = vld [vmem:[#allocation8 + $0x440] sm:$0xf]
    %v5687 = vld [vmem:[#allocation8 + $0x444] sm:$0xff]
    %v5688 = vld [vmem:[#allocation8 + $0x44c] sm:$0xff]
    %v5689 = vld [vmem:[#allocation8 + $0x454] sm:$0xff]
    %v5690 = vld [vmem:[#allocation8 + $0x45c] sm:$0xf]
    %v5691 = vld [vmem:[#allocation8 + $0x460] sm:$0xff]
    %v5692 = vld [vmem:[#allocation8 + $0x468] sm:$0xff]
    %v5693 = vld [vmem:[#allocation8 + $0x470] sm:$0xff]
    %v5694 = vld [vmem:[#allocation8 + $0x478] sm:$0xf]
    %v5695 = vld [vmem:[#allocation8 + $0x47c] sm:$0xff]
    %v5696 = vld [vmem:[#allocation8 + $0x484] sm:$0xff]
    %v5697 = vld [vmem:[#allocation8 + $0x48c] sm:$0xff]
    %v5698 = vld [vmem:[#allocation8 + $0x494] sm:$0xf]
    %v5699 = vld [vmem:[#allocation8 + $0x498] sm:$0xff]
    %v5700 = vld [vmem:[#allocation8 + $0x4a0] sm:$0xff]
    %v5701 = vld [vmem:[#allocation8 + $0x4a8] sm:$0xff]
    %v5702 = vld [vmem:[#allocation8 + $0x4b0] sm:$0xf]
    %v5703 = vld [vmem:[#allocation8 + $0x4b4] sm:$0xff]
    %v5704 = vld [vmem:[#allocation8 + $0x4bc] sm:$0xff]
    %v5705 = vld [vmem:[#allocation8 + $0x4c4] sm:$0xff]
    %v5706 = vld [vmem:[#allocation8 + $0x4cc] sm:$0xf]
    %v5707 = vld [vmem:[#allocation8 + $0x4d0] sm:$0xff]
    %v5708 = vld [vmem:[#allocation8 + $0x4d8] sm:$0xff]
    %v5709 = vld [vmem:[#allocation8 + $0x4e0] sm:$0xff]
    %v5710 = vld [vmem:[#allocation8 + $0x4e8] sm:$0xf]
    %v5711 = vld [vmem:[#allocation8 + $0x4ec] sm:$0xff]
    %v5712 = vld [vmem:[#allocation8 + $0x4f4] sm:$0xff]
    %v5713 = vld [vmem:[#allocation8 + $0x4fc] sm:$0xff]
    %v5714 = vld [vmem:[#allocation8 + $0x504] sm:$0xf]
    %v5715 = vld [vmem:[#allocation8 + $0x508] sm:$0xff]
    %v5716 = vld [vmem:[#allocation8 + $0x510] sm:$0xff]
    %v5717 = vld [vmem:[#allocation8 + $0x518] sm:$0xff]
    %v5718 = vld [vmem:[#allocation8 + $0x520] sm:$0xf]
    %v5719 = vld [vmem:[#allocation8 + $0x524] sm:$0xff]
    %v5720 = vld [vmem:[#allocation8 + $0x52c] sm:$0xff]
    %v5721 = vld [vmem:[#allocation8 + $0x534] sm:$0xff]
    %v5722 = vld [vmem:[#allocation8 + $0x53c] sm:$0xf]
    %v5723 = vld [vmem:[#allocation8 + $0x540] sm:$0xff]
    %v5724 = vld [vmem:[#allocation8 + $0x548] sm:$0xff]
    %v5725 = vld [vmem:[#allocation8 + $0x550] sm:$0xff]
    %v5726 = vld [vmem:[#allocation8 + $0x558] sm:$0xf]
    %v5727 = vld [vmem:[#allocation8 + $0x55c] sm:$0xff]
    %v5728 = vld [vmem:[#allocation8 + $0x564] sm:$0xff]
    %v5729 = vld [vmem:[#allocation8 + $0x56c] sm:$0xff]
    %v5730 = vld [vmem:[#allocation8 + $0x574] sm:$0xf]
    %v5731 = vld [vmem:[#allocation8 + $0x578] sm:$0xff]
    %v5732 = vld [vmem:[#allocation8 + $0x580] sm:$0xff]
    %v5733 = vld [vmem:[#allocation8 + $0x588] sm:$0xff]
    %v5734 = vld [vmem:[#allocation8 + $0x590] sm:$0xf]
    %v5735 = vld [vmem:[#allocation8 + $0x594] sm:$0xff]
    %v5736 = vld [vmem:[#allocation8 + $0x59c] sm:$0xff]
    %v5737 = vld [vmem:[#allocation8 + $0x5a4] sm:$0xff]
    %v5738 = vld [vmem:[#allocation8 + $0x5ac] sm:$0xf]
    %v5739 = vld [vmem:[#allocation8 + $0x5b0] sm:$0xff]
    %v5740 = vld [vmem:[#allocation8 + $0x5b8] sm:$0xff]
    %v5741 = vld [vmem:[#allocation8 + $0x5c0] sm:$0xff]
    %v5742 = vld [vmem:[#allocation8 + $0x5c8] sm:$0xf]
    %v5743 = vld [vmem:[#allocation8 + $0x5cc] sm:$0xff]
    %v5744 = vld [vmem:[#allocation8 + $0x5d4] sm:$0xff]
    %v5745 = vld [vmem:[#allocation8 + $0x5dc] sm:$0xff]
    %v5746 = vld [vmem:[#allocation8 + $0x5e4] sm:$0xf]
    %v5747 = vld [vmem:[#allocation8 + $0x5e8] sm:$0xff]
    %v5748 = vld [vmem:[#allocation8 + $0x5f0] sm:$0xff]
    %v5749 = vld [vmem:[#allocation8 + $0x5f8] sm:$0xff]
    %v5750 = vld [vmem:[#allocation8 + $0x600] sm:$0xf]
    %v5751 = vld [vmem:[#allocation8 + $0x604] sm:$0xff]
    %v5752 = vld [vmem:[#allocation8 + $0x60c] sm:$0xff]
    %v5753 = vld [vmem:[#allocation8 + $0x614] sm:$0xff]
    %v5754 = vld [vmem:[#allocation8 + $0x61c] sm:$0xf]
    %v5755 = vld [vmem:[#allocation8 + $0x620] sm:$0xff]
    %v5756 = vld [vmem:[#allocation8 + $0x628] sm:$0xff]
    %v5757 = vld [vmem:[#allocation8 + $0x630] sm:$0xff]
    %v5758 = vld [vmem:[#allocation8 + $0x638] sm:$0xf]
    %v5759 = vld [vmem:[#allocation8 + $0x63c] sm:$0xff]
    %v5760 = vld [vmem:[#allocation8 + $0x644] sm:$0xff]
    %v5761 = vld [vmem:[#allocation8 + $0x64c] sm:$0xff]
    %v5762 = vld [vmem:[#allocation8 + $0x654] sm:$0xf]
    %v5763 = vld [vmem:[#allocation8 + $0x658] sm:$0xff]
    %v5764 = vld [vmem:[#allocation8 + $0x660] sm:$0xff]
    %v5765 = vld [vmem:[#allocation8 + $0x668] sm:$0xff]
    %v5766 = vld [vmem:[#allocation8 + $0x670] sm:$0xf]
    %v5767 = vld [vmem:[#allocation8 + $0x674] sm:$0xff]
    %v5768 = vld [vmem:[#allocation8 + $0x67c] sm:$0xff]
    %v5769 = vld [vmem:[#allocation8 + $0x684] sm:$0xff]
    %v5770 = vld [vmem:[#allocation8 + $0x68c] sm:$0xf]
    %v5771 = vld [vmem:[#allocation8 + $0x690] sm:$0xff]
    %v5772 = vld [vmem:[#allocation8 + $0x698] sm:$0xff]
    %v5773 = vld [vmem:[#allocation8 + $0x6a0] sm:$0xff]
    %v5774 = vld [vmem:[#allocation8 + $0x6a8] sm:$0xf]
    %v5775 = vld [vmem:[#allocation8 + $0x6ac] sm:$0xff]
    %v5776 = vld [vmem:[#allocation8 + $0x6b4] sm:$0xff]
    %v5777 = vld [vmem:[#allocation8 + $0x6bc] sm:$0xff]
    %v5778 = vld [vmem:[#allocation8 + $0x6c4] sm:$0xf]
    %v5779 = vld [vmem:[#allocation8 + $0x6c8] sm:$0xff]
    %v5780 = vld [vmem:[#allocation8 + $0x6d0] sm:$0xff]
    %v5781 = vld [vmem:[#allocation8 + $0x6d8] sm:$0xff]
    %v5782 = vld [vmem:[#allocation8 + $0x6e0] sm:$0xf]
    %v5783 = vld [vmem:[#allocation8 + $0x6e4] sm:$0xff]
    %v5784 = vld [vmem:[#allocation8 + $0x6ec] sm:$0xff]
    %v5785 = vld [vmem:[#allocation8 + $0x6f4] sm:$0xff]
    %v5786 = vld [vmem:[#allocation8 + $0x6fc] sm:$0xf]
    %v5787 = vld [vmem:[#allocation8 + $0x700] sm:$0xff]
    %v5788 = vld [vmem:[#allocation8 + $0x708] sm:$0xff]
    %v5789 = vld [vmem:[#allocation8 + $0x710] sm:$0xff]
    %v5790 = vld [vmem:[#allocation8 + $0x718] sm:$0xf]
    %v5791 = vld [vmem:[#allocation8 + $0x71c] sm:$0xff]
    %v5792 = vld [vmem:[#allocation8 + $0x724] sm:$0xff]
    %v5793 = vld [vmem:[#allocation8 + $0x72c] sm:$0xff]
    %v5794 = vld [vmem:[#allocation8 + $0x734] sm:$0xf]
    %v5795 = vld [vmem:[#allocation8 + $0x738] sm:$0xff]
    %v5796 = vld [vmem:[#allocation8 + $0x740] sm:$0xff]
    %v5797 = vld [vmem:[#allocation8 + $0x748] sm:$0xff]
    %v5798 = vld [vmem:[#allocation8 + $0x750] sm:$0xf]
    %v5799 = vld [vmem:[#allocation8 + $0x754] sm:$0xff]
    %v5800 = vld [vmem:[#allocation8 + $0x75c] sm:$0xff]
    %v5801 = vld [vmem:[#allocation8 + $0x764] sm:$0xff]
    %v5802 = vld [vmem:[#allocation8 + $0x76c] sm:$0xf]
    %v5803 = vld [vmem:[#allocation8 + $0x770] sm:$0xff]
    %v5804 = vld [vmem:[#allocation8 + $0x778] sm:$0xff]
    %v5805 = vld [vmem:[#allocation8 + $0x780] sm:$0xff]
    %v5806 = vld [vmem:[#allocation8 + $0x788] sm:$0xf]
    %v5807 = vld [vmem:[#allocation8 + $0x78c] sm:$0xff]
    %v5808 = vld [vmem:[#allocation8 + $0x794] sm:$0xff]
    %v5809 = vld [vmem:[#allocation8 + $0x79c] sm:$0xff]
    %v5810 = vld [vmem:[#allocation8 + $0x7a4] sm:$0xf]
    %v5811 = vld [vmem:[#allocation8 + $0x7a8] sm:$0xff]
    %v5812 = vld [vmem:[#allocation8 + $0x7b0] sm:$0xff]
    %v5813 = vld [vmem:[#allocation8 + $0x7b8] sm:$0xff]
    %v5814 = vld [vmem:[#allocation8 + $0x7c0] sm:$0xf]
    %v5815 = vld [vmem:[#allocation8 + $0x7c4] sm:$0xff]
    %v5816 = vld [vmem:[#allocation8 + $0x7cc] sm:$0xff]
    %v5817 = vld [vmem:[#allocation8 + $0x7d4] sm:$0xff]
    %v5818 = vld [vmem:[#allocation8 + $0x7dc] sm:$0xf]
    %v5819 = vld [vmem:[#allocation8 + $0x7e0] sm:$0xff]
    %v5820 = vld [vmem:[#allocation8 + $0x7e8] sm:$0xff]
    %v5821 = vld [vmem:[#allocation8 + $0x7f0] sm:$0xff]
    %v5822 = vld [vmem:[#allocation8 + $0x7f8] sm:$0xf]
    %v5823 = vld [vmem:[#allocation8 + $0x7fc] sm:$0xff]
    %v5824 = vld [vmem:[#allocation8 + $0x804] sm:$0xff]
    %v5825 = vld [vmem:[#allocation8 + $0x80c] sm:$0xff]
    %v5826 = vld [vmem:[#allocation8 + $0x814] sm:$0xf]
    %v5827 = vld [vmem:[#allocation8 + $0x818] sm:$0xff]
    %v5828 = vld [vmem:[#allocation8 + $0x820] sm:$0xff]
    %v5829 = vld [vmem:[#allocation8 + $0x828] sm:$0xff]
    %v5830 = vld [vmem:[#allocation8 + $0x830] sm:$0xf]
    %v5831 = vld [vmem:[#allocation8 + $0x834] sm:$0xff]
    %v5832 = vld [vmem:[#allocation8 + $0x83c] sm:$0xff]
    %v5833 = vld [vmem:[#allocation8 + $0x844] sm:$0xff]
    %v5834 = vld [vmem:[#allocation8 + $0x84c] sm:$0xf]
    %v5835 = vld [vmem:[#allocation8 + $0x850] sm:$0xff]
    %v5836 = vld [vmem:[#allocation8 + $0x858] sm:$0xff]
    %v5837 = vld [vmem:[#allocation8 + $0x860] sm:$0xff]
    %v5838 = vld [vmem:[#allocation8 + $0x868] sm:$0xf]
    %v5839 = vld [vmem:[#allocation8 + $0x86c] sm:$0xff]
    %v5840 = vld [vmem:[#allocation8 + $0x874] sm:$0xff]
    %v5841 = vld [vmem:[#allocation8 + $0x87c] sm:$0xff]
    %v5842 = vld [vmem:[#allocation8 + $0x884] sm:$0xf]
    %v5843 = vld [vmem:[#allocation8 + $0x888] sm:$0xff]
    %v5844 = vld [vmem:[#allocation8 + $0x890] sm:$0xff]
    %v5845 = vld [vmem:[#allocation8 + $0x898] sm:$0xff]
    %v5846 = vld [vmem:[#allocation8 + $0x8a0] sm:$0xf]
    %v5847 = vld [vmem:[#allocation8 + $0x8a4] sm:$0xff]
    %v5848 = vld [vmem:[#allocation8 + $0x8ac] sm:$0xff]
    %v5849 = vld [vmem:[#allocation8 + $0x8b4] sm:$0xff]
    %v5850 = vld [vmem:[#allocation8 + $0x8bc] sm:$0xf]
    %v5851 = vld [vmem:[#allocation8 + $0x8c0] sm:$0xff]
    %v5852 = vld [vmem:[#allocation8 + $0x8c8] sm:$0xff]
    %v5853 = vld [vmem:[#allocation8 + $0x8d0] sm:$0xff]
    %v5854 = vld [vmem:[#allocation8 + $0x8d8] sm:$0xf]
    %v5855 = vld [vmem:[#allocation8 + $0x8dc] sm:$0xff]
    %v5856 = vld [vmem:[#allocation8 + $0x8e4] sm:$0xff]
    %v5857 = vld [vmem:[#allocation8 + $0x8ec] sm:$0xff]
    %v5858 = vld [vmem:[#allocation8 + $0x8f4] sm:$0xf]
    %v5859 = vld [vmem:[#allocation8 + $0x8f8] sm:$0xff]
    %v5860 = vld [vmem:[#allocation8 + $0x900] sm:$0xff]
    %v5861 = vld [vmem:[#allocation8 + $0x908] sm:$0xff]
    %v5862 = vld [vmem:[#allocation8 + $0x910] sm:$0xf]
    %v5863 = vld [vmem:[#allocation8 + $0x914] sm:$0xff]
    %v5864 = vld [vmem:[#allocation8 + $0x91c] sm:$0xff]
    %v5865 = vld [vmem:[#allocation8 + $0x924] sm:$0xff]
    %v5866 = vld [vmem:[#allocation8 + $0x92c] sm:$0xf]
    %v5867 = vld [vmem:[#allocation8 + $0x930] sm:$0xff]
    %v5868 = vld [vmem:[#allocation8 + $0x938] sm:$0xff]
    %v5869 = vld [vmem:[#allocation8 + $0x940] sm:$0xff]
    %v5870 = vld [vmem:[#allocation8 + $0x948] sm:$0xf]
    %v5871 = vld [vmem:[#allocation8 + $0x94c] sm:$0xff]
    %v5872 = vld [vmem:[#allocation8 + $0x954] sm:$0xff]
    %v5873 = vld [vmem:[#allocation8 + $0x95c] sm:$0xff]
    %v5874 = vld [vmem:[#allocation8 + $0x964] sm:$0xf]
    %v5875 = vld [vmem:[#allocation8 + $0x968] sm:$0xff]
    %v5876 = vld [vmem:[#allocation8 + $0x970] sm:$0xff]
    %v5877 = vld [vmem:[#allocation8 + $0x978] sm:$0xff]
    %v5878 = vld [vmem:[#allocation8 + $0x980] sm:$0xf]
    %v5879 = vld [vmem:[#allocation8 + $0x984] sm:$0xff]
    %v5880 = vld [vmem:[#allocation8 + $0x98c] sm:$0xff]
    %v5881 = vld [vmem:[#allocation8 + $0x994] sm:$0xff]
    %v5882 = vld [vmem:[#allocation8 + $0x99c] sm:$0xf]
    %v5883 = vld [vmem:[#allocation8 + $0x9a0] sm:$0xff]
    %v5884 = vld [vmem:[#allocation8 + $0x9a8] sm:$0xff]
    %v5885 = vld [vmem:[#allocation8 + $0x9b0] sm:$0xff]
    %v5886 = vld [vmem:[#allocation8 + $0x9b8] sm:$0xf]
    %v5887 = vld [vmem:[#allocation8 + $0x9bc] sm:$0xff]
    %v5888 = vld [vmem:[#allocation8 + $0x9c4] sm:$0xff]
    %v5889 = vld [vmem:[#allocation8 + $0x9cc] sm:$0xff]
    %v5890 = vld [vmem:[#allocation8 + $0x9d4] sm:$0xf]
    %v5891 = vld [vmem:[#allocation8 + $0x9d8] sm:$0xff]
    %v5892 = vld [vmem:[#allocation8 + $0x9e0] sm:$0xff]
    %v5893 = vld [vmem:[#allocation8 + $0x9e8] sm:$0xff]
    %v5894 = vld [vmem:[#allocation8 + $0x9f0] sm:$0xf]
    %v5895 = vld [vmem:[#allocation8 + $0x9f4] sm:$0xff]
    %v5896 = vld [vmem:[#allocation8 + $0x9fc] sm:$0xff]
    %v5897 = vld [vmem:[#allocation8 + $0xa04] sm:$0xff]
    %v5898 = vld [vmem:[#allocation8 + $0xa0c] sm:$0xf]
    %v5899 = vld [vmem:[#allocation8 + $0xa10] sm:$0xff]
    %v5900 = vld [vmem:[#allocation8 + $0xa18] sm:$0xff]
    %v5901 = vld [vmem:[#allocation8 + $0xa20] sm:$0xff]
    %v5902 = vld [vmem:[#allocation8 + $0xa28] sm:$0xf]
    %v5903 = vld [vmem:[#allocation8 + $0xa2c] sm:$0xff]
    %v5904 = vld [vmem:[#allocation8 + $0xa34] sm:$0xff]
    %v5905 = vld [vmem:[#allocation8 + $0xa3c] sm:$0xff]
    %v5906 = vld [vmem:[#allocation8 + $0xa44] sm:$0xf]
    %v5907 = vld [vmem:[#allocation8 + $0xa48] sm:$0xff]
    %v5908 = vld [vmem:[#allocation8 + $0xa50] sm:$0xff]
    %v5909 = vld [vmem:[#allocation8 + $0xa58] sm:$0xff]
    %v5910 = vld [vmem:[#allocation8 + $0xa60] sm:$0xf]
    %v5911 = vld [vmem:[#allocation8 + $0xa64] sm:$0xff]
    %v5912 = vld [vmem:[#allocation8 + $0xa6c] sm:$0xff]
    %v5913 = vld [vmem:[#allocation8 + $0xa74] sm:$0xff]
    %v5914 = vld [vmem:[#allocation8 + $0xa7c] sm:$0xf]
    %v5915 = vld [vmem:[#allocation8 + $0xa80] sm:$0xff]
    %v5916 = vld [vmem:[#allocation8 + $0xa88] sm:$0xff]
    %v5917 = vld [vmem:[#allocation8 + $0xa90] sm:$0xff]
    %v5918 = vld [vmem:[#allocation8 + $0xa98] sm:$0xf]
    %v5919 = vld [vmem:[#allocation8 + $0xa9c] sm:$0xff]
    %v5920 = vld [vmem:[#allocation8 + $0xaa4] sm:$0xff]
    %v5921 = vld [vmem:[#allocation8 + $0xaac] sm:$0xff]
    %v5922 = vld [vmem:[#allocation8 + $0xab4] sm:$0xf]
    %v5923 = vld [vmem:[#allocation8 + $0xab8] sm:$0xff]
    %v5924 = vld [vmem:[#allocation8 + $0xac0] sm:$0xff]
    %v5925 = vld [vmem:[#allocation8 + $0xac8] sm:$0xff]
    %v5926 = vld [vmem:[#allocation8 + $0xad0] sm:$0xf]
    %v5927 = vld [vmem:[#allocation8 + $0xad4] sm:$0xff]
    %v5928 = vld [vmem:[#allocation8 + $0xadc] sm:$0xff]
    %v5929 = vld [vmem:[#allocation8 + $0xae4] sm:$0xff]
    %v5930 = vld [vmem:[#allocation8 + $0xaec] sm:$0xf]
    %v5931 = vld [vmem:[#allocation8 + $0xaf0] sm:$0xff]
    %v5932 = vld [vmem:[#allocation8 + $0xaf8] sm:$0xff]
    %v5933 = vld [vmem:[#allocation8 + $0xb00] sm:$0xff]
    %v5934 = vld [vmem:[#allocation8 + $0xb08] sm:$0xf]
    %v5935 = vld [vmem:[#allocation8 + $0xb0c] sm:$0xff]
    %v5936 = vld [vmem:[#allocation8 + $0xb14] sm:$0xff]
    %v5937 = vld [vmem:[#allocation8 + $0xb1c] sm:$0xff]
    %v5938 = vld [vmem:[#allocation8 + $0xb24] sm:$0xf]
    %v5939 = vld [vmem:[#allocation8 + $0xb28] sm:$0xff]
    %v5940 = vld [vmem:[#allocation8 + $0xb30] sm:$0xff]
    %v5941 = vld [vmem:[#allocation8 + $0xb38] sm:$0xff]
    %v5942 = vld [vmem:[#allocation8 + $0xb40] sm:$0xf]
    %v5943 = vld [vmem:[#allocation8 + $0xb44] sm:$0xff]
    %v5944 = vld [vmem:[#allocation8 + $0xb4c] sm:$0xff]
    %v5945 = vld [vmem:[#allocation8 + $0xb54] sm:$0xff]
    %v5946 = vld [vmem:[#allocation8 + $0xb5c] sm:$0xf]
    %v5947 = vld [vmem:[#allocation8 + $0xb60] sm:$0xff]
    %v5948 = vld [vmem:[#allocation8 + $0xb68] sm:$0xff]
    %v5949 = vld [vmem:[#allocation8 + $0xb70] sm:$0xff]
    %v5950 = vld [vmem:[#allocation8 + $0xb78] sm:$0xf]
    %v5951 = vld [vmem:[#allocation8 + $0xb7c] sm:$0xff]
    %v5952 = vld [vmem:[#allocation8 + $0xb84] sm:$0xff]
    %v5953 = vld [vmem:[#allocation8 + $0xb8c] sm:$0xff]
    %v5954 = vld [vmem:[#allocation8 + $0xb94] sm:$0xf]
    %v5955 = vld [vmem:[#allocation8 + $0xb98] sm:$0xff]
    %v5956 = vld [vmem:[#allocation8 + $0xba0] sm:$0xff]
    %v5957 = vld [vmem:[#allocation8 + $0xba8] sm:$0xff]
    %v5958 = vld [vmem:[#allocation8 + $0xbb0] sm:$0xf]
    %v5959 = vld [vmem:[#allocation8 + $0xbb4] sm:$0xff]
    %v5960 = vld [vmem:[#allocation8 + $0xbbc] sm:$0xff]
    %v5961 = vld [vmem:[#allocation8 + $0xbc4] sm:$0xff]
    %v5962 = vld [vmem:[#allocation8 + $0xbcc] sm:$0xf]
    %v5963 = vld [vmem:[#allocation8 + $0xbd0] sm:$0xff]
    %v5964 = vld [vmem:[#allocation8 + $0xbd8] sm:$0xff]
    %v5965 = vld [vmem:[#allocation8 + $0xbe0] sm:$0xff]
    %v5966 = vld [vmem:[#allocation8 + $0xbe8] sm:$0xf]
    %v5967 = vld [vmem:[#allocation8 + $0xbec] sm:$0xff]
    %v5968 = vld [vmem:[#allocation8 + $0xbf4] sm:$0xff]
    %v5969 = vld [vmem:[#allocation8 + $0xbfc] sm:$0xff]
    %v5970 = vld [vmem:[#allocation8 + $0xc04] sm:$0xf]
    %v5971 = vld [vmem:[#allocation8 + $0xc08] sm:$0xff]
    %v5972 = vld [vmem:[#allocation8 + $0xc10] sm:$0xff]
    %v5973 = vld [vmem:[#allocation8 + $0xc18] sm:$0xff]
    %v5974 = vld [vmem:[#allocation8 + $0xc20] sm:$0xf]
    %v5975 = vld [vmem:[#allocation8 + $0xc24] sm:$0xff]
    %v5976 = vld [vmem:[#allocation8 + $0xc2c] sm:$0xff]
    %v5977 = vld [vmem:[#allocation8 + $0xc34] sm:$0xff]
    %v5978 = vld [vmem:[#allocation8 + $0xc3c] sm:$0xf]
    %v5979 = vld [vmem:[#allocation10] sm:$0xff]
    %v5981 = vperm.slane %v5979, 0
    %v5982 = vperm.slane %v5979, 1
    %v5983 = vperm.slane %v5979, 2
    %v5984 = vperm.slane %v5979, 3
    %v5985 = vperm.slane %v5979, 4
    %v5986 = vperm.slane %v5979, 5
    %v5987 = vperm.slane %v5979, 6
    %v6443 = vunpack.c.l.b16 %v5531
    %v6444 = vunpack.c.h.b16 %v5531
    %v6445 = vunpack.c.l.b16 %v5532
    %v6446 = vunpack.c.h.b16 %v5532
    %v6447 = vunpack.c.l.b16 %v5533
    %v6448 = vunpack.c.h.b16 %v5533
    %v6449 = vunpack.c.l.b16 %v5534
    %v6450 = vunpack.c.l.b16 %v5535
    %v6451 = vunpack.c.h.b16 %v5535
    %v6452 = vunpack.c.l.b16 %v5536
    %v6453 = vunpack.c.h.b16 %v5536
    %v6454 = vunpack.c.l.b16 %v5537
    %v6455 = vunpack.c.h.b16 %v5537
    %v6456 = vunpack.c.l.b16 %v5538
    %v6457 = vunpack.c.l.b16 %v5539
    %v6458 = vunpack.c.h.b16 %v5539
    %v6459 = vunpack.c.l.b16 %v5540
    %v6460 = vunpack.c.h.b16 %v5540
    %v6461 = vunpack.c.l.b16 %v5541
    %v6462 = vunpack.c.h.b16 %v5541
    %v6463 = vunpack.c.l.b16 %v5542
    %v6464 = vunpack.c.l.b16 %v5543
    %v6465 = vunpack.c.h.b16 %v5543
    %v6466 = vunpack.c.l.b16 %v5544
    %v6467 = vunpack.c.h.b16 %v5544
    %v6468 = vunpack.c.l.b16 %v5545
    %v6469 = vunpack.c.h.b16 %v5545
    %v6470 = vunpack.c.l.b16 %v5546
    %v6471 = vunpack.c.l.b16 %v5547
    %v6472 = vunpack.c.h.b16 %v5547
    %v6473 = vunpack.c.l.b16 %v5548
    %v6474 = vunpack.c.h.b16 %v5548
    %v6475 = vunpack.c.l.b16 %v5549
    %v6476 = vunpack.c.h.b16 %v5549
    %v6477 = vunpack.c.l.b16 %v5550
    %v6478 = vunpack.c.l.b16 %v5551
    %v6479 = vunpack.c.h.b16 %v5551
    %v6480 = vunpack.c.l.b16 %v5552
    %v6481 = vunpack.c.h.b16 %v5552
    %v6482 = vunpack.c.l.b16 %v5553
    %v6483 = vunpack.c.h.b16 %v5553
    %v6484 = vunpack.c.l.b16 %v5554
    %v6485 = vunpack.c.l.b16 %v5555
    %v6486 = vunpack.c.h.b16 %v5555
    %v6487 = vunpack.c.l.b16 %v5556
    %v6488 = vunpack.c.h.b16 %v5556
    %v6489 = vunpack.c.l.b16 %v5557
    %v6490 = vunpack.c.h.b16 %v5557
    %v6491 = vunpack.c.l.b16 %v5558
    %v6492 = vunpack.c.l.b16 %v5559
    %v6493 = vunpack.c.h.b16 %v5559
    %v6494 = vunpack.c.l.b16 %v5560
    %v6495 = vunpack.c.h.b16 %v5560
    %v6496 = vunpack.c.l.b16 %v5561
    %v6497 = vunpack.c.h.b16 %v5561
    %v6498 = vunpack.c.l.b16 %v5562
    %v6499 = vunpack.c.l.b16 %v5563
    %v6500 = vunpack.c.h.b16 %v5563
    %v6501 = vunpack.c.l.b16 %v5564
    %v6502 = vunpack.c.h.b16 %v5564
    %v6503 = vunpack.c.l.b16 %v5565
    %v6504 = vunpack.c.h.b16 %v5565
    %v6505 = vunpack.c.l.b16 %v5566
    %v6506 = vunpack.c.l.b16 %v5567
    %v6507 = vunpack.c.h.b16 %v5567
    %v6508 = vunpack.c.l.b16 %v5568
    %v6509 = vunpack.c.h.b16 %v5568
    %v6510 = vunpack.c.l.b16 %v5569
    %v6511 = vunpack.c.h.b16 %v5569
    %v6512 = vunpack.c.l.b16 %v5570
    %v6513 = vunpack.c.l.b16 %v5571
    %v6514 = vunpack.c.h.b16 %v5571
    %v6515 = vunpack.c.l.b16 %v5572
    %v6516 = vunpack.c.h.b16 %v5572
    %v6517 = vunpack.c.l.b16 %v5573
    %v6518 = vunpack.c.h.b16 %v5573
    %v6519 = vunpack.c.l.b16 %v5574
    %v6520 = vunpack.c.l.b16 %v5575
    %v6521 = vunpack.c.h.b16 %v5575
    %v6522 = vunpack.c.l.b16 %v5576
    %v6523 = vunpack.c.h.b16 %v5576
    %v6524 = vunpack.c.l.b16 %v5577
    %v6525 = vunpack.c.h.b16 %v5577
    %v6526 = vunpack.c.l.b16 %v5578
    %v6527 = vunpack.c.l.b16 %v5579
    %v6528 = vunpack.c.h.b16 %v5579
    %v6529 = vunpack.c.l.b16 %v5580
    %v6530 = vunpack.c.h.b16 %v5580
    %v6531 = vunpack.c.l.b16 %v5581
    %v6532 = vunpack.c.h.b16 %v5581
    %v6533 = vunpack.c.l.b16 %v5582
    %v6534 = vunpack.c.l.b16 %v5583
    %v6535 = vunpack.c.h.b16 %v5583
    %v6536 = vunpack.c.l.b16 %v5584
    %v6537 = vunpack.c.h.b16 %v5584
    %v6538 = vunpack.c.l.b16 %v5585
    %v6539 = vunpack.c.h.b16 %v5585
    %v6540 = vunpack.c.l.b16 %v5586
    %v6541 = vunpack.c.l.b16 %v5587
    %v6542 = vunpack.c.h.b16 %v5587
    %v6543 = vunpack.c.l.b16 %v5588
    %v6544 = vunpack.c.h.b16 %v5588
    %v6545 = vunpack.c.l.b16 %v5589
    %v6546 = vunpack.c.h.b16 %v5589
    %v6547 = vunpack.c.l.b16 %v5590
    %v6548 = vunpack.c.l.b16 %v5591
    %v6549 = vunpack.c.h.b16 %v5591
    %v6550 = vunpack.c.l.b16 %v5592
    %v6551 = vunpack.c.h.b16 %v5592
    %v6552 = vunpack.c.l.b16 %v5593
    %v6553 = vunpack.c.h.b16 %v5593
    %v6554 = vunpack.c.l.b16 %v5594
    %v6555 = vunpack.c.l.b16 %v5595
    %v6556 = vunpack.c.h.b16 %v5595
    %v6557 = vunpack.c.l.b16 %v5596
    %v6558 = vunpack.c.h.b16 %v5596
    %v6559 = vunpack.c.l.b16 %v5597
    %v6560 = vunpack.c.h.b16 %v5597
    %v6561 = vunpack.c.l.b16 %v5598
    %v6562 = vunpack.c.l.b16 %v5599
    %v6563 = vunpack.c.h.b16 %v5599
    %v6564 = vunpack.c.l.b16 %v5600
    %v6565 = vunpack.c.h.b16 %v5600
    %v6566 = vunpack.c.l.b16 %v5601
    %v6567 = vunpack.c.h.b16 %v5601
    %v6568 = vunpack.c.l.b16 %v5602
    %v6569 = vunpack.c.l.b16 %v5603
    %v6570 = vunpack.c.h.b16 %v5603
    %v6571 = vunpack.c.l.b16 %v5604
    %v6572 = vunpack.c.h.b16 %v5604
    %v6573 = vunpack.c.l.b16 %v5605
    %v6574 = vunpack.c.h.b16 %v5605
    %v6575 = vunpack.c.l.b16 %v5606
    %v6576 = vunpack.c.l.b16 %v5607
    %v6577 = vunpack.c.h.b16 %v5607
    %v6578 = vunpack.c.l.b16 %v5608
    %v6579 = vunpack.c.h.b16 %v5608
    %v6580 = vunpack.c.l.b16 %v5609
    %v6581 = vunpack.c.h.b16 %v5609
    %v6582 = vunpack.c.l.b16 %v5610
    %v6583 = vunpack.c.l.b16 %v5611
    %v6584 = vunpack.c.h.b16 %v5611
    %v6585 = vunpack.c.l.b16 %v5612
    %v6586 = vunpack.c.h.b16 %v5612
    %v6587 = vunpack.c.l.b16 %v5613
    %v6588 = vunpack.c.h.b16 %v5613
    %v6589 = vunpack.c.l.b16 %v5614
    %v6590 = vunpack.c.l.b16 %v5615
    %v6591 = vunpack.c.h.b16 %v5615
    %v6592 = vunpack.c.l.b16 %v5616
    %v6593 = vunpack.c.h.b16 %v5616
    %v6594 = vunpack.c.l.b16 %v5617
    %v6595 = vunpack.c.h.b16 %v5617
    %v6596 = vunpack.c.l.b16 %v5618
    %v6597 = vunpack.c.l.b16 %v5619
    %v6598 = vunpack.c.h.b16 %v5619
    %v6599 = vunpack.c.l.b16 %v5620
    %v6600 = vunpack.c.h.b16 %v5620
    %v6601 = vunpack.c.l.b16 %v5621
    %v6602 = vunpack.c.h.b16 %v5621
    %v6603 = vunpack.c.l.b16 %v5622
    %v6604 = vunpack.c.l.b16 %v5623
    %v6605 = vunpack.c.h.b16 %v5623
    %v6606 = vunpack.c.l.b16 %v5624
    %v6607 = vunpack.c.h.b16 %v5624
    %v6608 = vunpack.c.l.b16 %v5625
    %v6609 = vunpack.c.h.b16 %v5625
    %v6610 = vunpack.c.l.b16 %v5626
    %v6611 = vunpack.c.l.b16 %v5627
    %v6612 = vunpack.c.h.b16 %v5627
    %v6613 = vunpack.c.l.b16 %v5628
    %v6614 = vunpack.c.h.b16 %v5628
    %v6615 = vunpack.c.l.b16 %v5629
    %v6616 = vunpack.c.h.b16 %v5629
    %v6617 = vunpack.c.l.b16 %v5630
    %v6618 = vunpack.c.l.b16 %v5631
    %v6619 = vunpack.c.h.b16 %v5631
    %v6620 = vunpack.c.l.b16 %v5632
    %v6621 = vunpack.c.h.b16 %v5632
    %v6622 = vunpack.c.l.b16 %v5633
    %v6623 = vunpack.c.h.b16 %v5633
    %v6624 = vunpack.c.l.b16 %v5634
    %v6625 = vunpack.c.l.b16 %v5635
    %v6626 = vunpack.c.h.b16 %v5635
    %v6627 = vunpack.c.l.b16 %v5636
    %v6628 = vunpack.c.h.b16 %v5636
    %v6629 = vunpack.c.l.b16 %v5637
    %v6630 = vunpack.c.h.b16 %v5637
    %v6631 = vunpack.c.l.b16 %v5638
    %v6632 = vunpack.c.l.b16 %v5639
    %v6633 = vunpack.c.h.b16 %v5639
    %v6634 = vunpack.c.l.b16 %v5640
    %v6635 = vunpack.c.h.b16 %v5640
    %v6636 = vunpack.c.l.b16 %v5641
    %v6637 = vunpack.c.h.b16 %v5641
    %v6638 = vunpack.c.l.b16 %v5642
    %v6639 = vunpack.c.l.b16 %v5643
    %v6640 = vunpack.c.h.b16 %v5643
    %v6641 = vunpack.c.l.b16 %v5644
    %v6642 = vunpack.c.h.b16 %v5644
    %v6643 = vunpack.c.l.b16 %v5645
    %v6644 = vunpack.c.h.b16 %v5645
    %v6645 = vunpack.c.l.b16 %v5646
    %v6646 = vunpack.c.l.b16 %v5647
    %v6647 = vunpack.c.h.b16 %v5647
    %v6648 = vunpack.c.l.b16 %v5648
    %v6649 = vunpack.c.h.b16 %v5648
    %v6650 = vunpack.c.l.b16 %v5649
    %v6651 = vunpack.c.h.b16 %v5649
    %v6652 = vunpack.c.l.b16 %v5650
    %v6653 = vunpack.c.l.b16 %v5651
    %v6654 = vunpack.c.h.b16 %v5651
    %v6655 = vunpack.c.l.b16 %v5652
    %v6656 = vunpack.c.h.b16 %v5652
    %v6657 = vunpack.c.l.b16 %v5653
    %v6658 = vunpack.c.h.b16 %v5653
    %v6659 = vunpack.c.l.b16 %v5654
    %v6660 = vunpack.c.l.b16 %v5655
    %v6661 = vunpack.c.h.b16 %v5655
    %v6662 = vunpack.c.l.b16 %v5656
    %v6663 = vunpack.c.h.b16 %v5656
    %v6664 = vunpack.c.l.b16 %v5657
    %v6665 = vunpack.c.h.b16 %v5657
    %v6666 = vunpack.c.l.b16 %v5658
    %v6667 = vunpack.c.l.b16 %v5659
    %v6668 = vunpack.c.h.b16 %v5659
    %v6669 = vunpack.c.l.b16 %v5660
    %v6670 = vunpack.c.h.b16 %v5660
    %v6671 = vunpack.c.l.b16 %v5661
    %v6672 = vunpack.c.h.b16 %v5661
    %v6673 = vunpack.c.l.b16 %v5662
    %v6674 = vunpack.c.l.b16 %v5663
    %v6675 = vunpack.c.h.b16 %v5663
    %v6676 = vunpack.c.l.b16 %v5664
    %v6677 = vunpack.c.h.b16 %v5664
    %v6678 = vunpack.c.l.b16 %v5665
    %v6679 = vunpack.c.h.b16 %v5665
    %v6680 = vunpack.c.l.b16 %v5666
    %v6681 = vunpack.c.l.b16 %v5667
    %v6682 = vunpack.c.h.b16 %v5667
    %v6683 = vunpack.c.l.b16 %v5668
    %v6684 = vunpack.c.h.b16 %v5668
    %v6685 = vunpack.c.l.b16 %v5669
    %v6686 = vunpack.c.h.b16 %v5669
    %v6687 = vunpack.c.l.b16 %v5670
    %v6688 = vunpack.c.l.b16 %v5671
    %v6689 = vunpack.c.h.b16 %v5671
    %v6690 = vunpack.c.l.b16 %v5672
    %v6691 = vunpack.c.h.b16 %v5672
    %v6692 = vunpack.c.l.b16 %v5673
    %v6693 = vunpack.c.h.b16 %v5673
    %v6694 = vunpack.c.l.b16 %v5674
    %v6695 = vunpack.c.l.b16 %v5675
    %v6696 = vunpack.c.h.b16 %v5675
    %v6697 = vunpack.c.l.b16 %v5676
    %v6698 = vunpack.c.h.b16 %v5676
    %v6699 = vunpack.c.l.b16 %v5677
    %v6700 = vunpack.c.h.b16 %v5677
    %v6701 = vunpack.c.l.b16 %v5678
    %v6702 = vunpack.c.l.b16 %v5679
    %v6703 = vunpack.c.h.b16 %v5679
    %v6704 = vunpack.c.l.b16 %v5680
    %v6705 = vunpack.c.h.b16 %v5680
    %v6706 = vunpack.c.l.b16 %v5681
    %v6707 = vunpack.c.h.b16 %v5681
    %v6708 = vunpack.c.l.b16 %v5682
    %v6709 = vunpack.c.l.b16 %v5683
    %v6710 = vunpack.c.h.b16 %v5683
    %v6711 = vunpack.c.l.b16 %v5684
    %v6712 = vunpack.c.h.b16 %v5684
    %v6713 = vunpack.c.l.b16 %v5685
    %v6714 = vunpack.c.h.b16 %v5685
    %v6715 = vunpack.c.l.b16 %v5686
    %v6716 = vunpack.c.l.b16 %v5687
    %v6717 = vunpack.c.h.b16 %v5687
    %v6718 = vunpack.c.l.b16 %v5688
    %v6719 = vunpack.c.h.b16 %v5688
    %v6720 = vunpack.c.l.b16 %v5689
    %v6721 = vunpack.c.h.b16 %v5689
    %v6722 = vunpack.c.l.b16 %v5690
    %v6723 = vunpack.c.l.b16 %v5691
    %v6724 = vunpack.c.h.b16 %v5691
    %v6725 = vunpack.c.l.b16 %v5692
    %v6726 = vunpack.c.h.b16 %v5692
    %v6727 = vunpack.c.l.b16 %v5693
    %v6728 = vunpack.c.h.b16 %v5693
    %v6729 = vunpack.c.l.b16 %v5694
    %v6730 = vunpack.c.l.b16 %v5695
    %v6731 = vunpack.c.h.b16 %v5695
    %v6732 = vunpack.c.l.b16 %v5696
    %v6733 = vunpack.c.h.b16 %v5696
    %v6734 = vunpack.c.l.b16 %v5697
    %v6735 = vunpack.c.h.b16 %v5697
    %v6736 = vunpack.c.l.b16 %v5698
    %v6737 = vunpack.c.l.b16 %v5699
    %v6738 = vunpack.c.h.b16 %v5699
    %v6739 = vunpack.c.l.b16 %v5700
    %v6740 = vunpack.c.h.b16 %v5700
    %v6741 = vunpack.c.l.b16 %v5701
    %v6742 = vunpack.c.h.b16 %v5701
    %v6743 = vunpack.c.l.b16 %v5702
    %v6744 = vunpack.c.l.b16 %v5703
    %v6745 = vunpack.c.h.b16 %v5703
    %v6746 = vunpack.c.l.b16 %v5704
    %v6747 = vunpack.c.h.b16 %v5704
    %v6748 = vunpack.c.l.b16 %v5705
    %v6749 = vunpack.c.h.b16 %v5705
    %v6750 = vunpack.c.l.b16 %v5706
    %v6751 = vunpack.c.l.b16 %v5707
    %v6752 = vunpack.c.h.b16 %v5707
    %v6753 = vunpack.c.l.b16 %v5708
    %v6754 = vunpack.c.h.b16 %v5708
    %v6755 = vunpack.c.l.b16 %v5709
    %v6756 = vunpack.c.h.b16 %v5709
    %v6757 = vunpack.c.l.b16 %v5710
    %v6758 = vunpack.c.l.b16 %v5711
    %v6759 = vunpack.c.h.b16 %v5711
    %v6760 = vunpack.c.l.b16 %v5712
    %v6761 = vunpack.c.h.b16 %v5712
    %v6762 = vunpack.c.l.b16 %v5713
    %v6763 = vunpack.c.h.b16 %v5713
    %v6764 = vunpack.c.l.b16 %v5714
    %v6765 = vunpack.c.l.b16 %v5715
    %v6766 = vunpack.c.h.b16 %v5715
    %v6767 = vunpack.c.l.b16 %v5716
    %v6768 = vunpack.c.h.b16 %v5716
    %v6769 = vunpack.c.l.b16 %v5717
    %v6770 = vunpack.c.h.b16 %v5717
    %v6771 = vunpack.c.l.b16 %v5718
    %v6772 = vunpack.c.l.b16 %v5719
    %v6773 = vunpack.c.h.b16 %v5719
    %v6774 = vunpack.c.l.b16 %v5720
    %v6775 = vunpack.c.h.b16 %v5720
    %v6776 = vunpack.c.l.b16 %v5721
    %v6777 = vunpack.c.h.b16 %v5721
    %v6778 = vunpack.c.l.b16 %v5722
    %v6779 = vunpack.c.l.b16 %v5723
    %v6780 = vunpack.c.h.b16 %v5723
    %v6781 = vunpack.c.l.b16 %v5724
    %v6782 = vunpack.c.h.b16 %v5724
    %v6783 = vunpack.c.l.b16 %v5725
    %v6784 = vunpack.c.h.b16 %v5725
    %v6785 = vunpack.c.l.b16 %v5726
    %v6786 = vunpack.c.l.b16 %v5727
    %v6787 = vunpack.c.h.b16 %v5727
    %v6788 = vunpack.c.l.b16 %v5728
    %v6789 = vunpack.c.h.b16 %v5728
    %v6790 = vunpack.c.l.b16 %v5729
    %v6791 = vunpack.c.h.b16 %v5729
    %v6792 = vunpack.c.l.b16 %v5730
    %v6793 = vunpack.c.l.b16 %v5731
    %v6794 = vunpack.c.h.b16 %v5731
    %v6795 = vunpack.c.l.b16 %v5732
    %v6796 = vunpack.c.h.b16 %v5732
    %v6797 = vunpack.c.l.b16 %v5733
    %v6798 = vunpack.c.h.b16 %v5733
    %v6799 = vunpack.c.l.b16 %v5734
    %v6800 = vunpack.c.l.b16 %v5735
    %v6801 = vunpack.c.h.b16 %v5735
    %v6802 = vunpack.c.l.b16 %v5736
    %v6803 = vunpack.c.h.b16 %v5736
    %v6804 = vunpack.c.l.b16 %v5737
    %v6805 = vunpack.c.h.b16 %v5737
    %v6806 = vunpack.c.l.b16 %v5738
    %v6807 = vunpack.c.l.b16 %v5739
    %v6808 = vunpack.c.h.b16 %v5739
    %v6809 = vunpack.c.l.b16 %v5740
    %v6810 = vunpack.c.h.b16 %v5740
    %v6811 = vunpack.c.l.b16 %v5741
    %v6812 = vunpack.c.h.b16 %v5741
    %v6813 = vunpack.c.l.b16 %v5742
    %v6814 = vunpack.c.l.b16 %v5743
    %v6815 = vunpack.c.h.b16 %v5743
    %v6816 = vunpack.c.l.b16 %v5744
    %v6817 = vunpack.c.h.b16 %v5744
    %v6818 = vunpack.c.l.b16 %v5745
    %v6819 = vunpack.c.h.b16 %v5745
    %v6820 = vunpack.c.l.b16 %v5746
    %v6821 = vunpack.c.l.b16 %v5747
    %v6822 = vunpack.c.h.b16 %v5747
    %v6823 = vunpack.c.l.b16 %v5748
    %v6824 = vunpack.c.h.b16 %v5748
    %v6825 = vunpack.c.l.b16 %v5749
    %v6826 = vunpack.c.h.b16 %v5749
    %v6827 = vunpack.c.l.b16 %v5750
    %v6828 = vunpack.c.l.b16 %v5751
    %v6829 = vunpack.c.h.b16 %v5751
    %v6830 = vunpack.c.l.b16 %v5752
    %v6831 = vunpack.c.h.b16 %v5752
    %v6832 = vunpack.c.l.b16 %v5753
    %v6833 = vunpack.c.h.b16 %v5753
    %v6834 = vunpack.c.l.b16 %v5754
    %v6835 = vunpack.c.l.b16 %v5755
    %v6836 = vunpack.c.h.b16 %v5755
    %v6837 = vunpack.c.l.b16 %v5756
    %v6838 = vunpack.c.h.b16 %v5756
    %v6839 = vunpack.c.l.b16 %v5757
    %v6840 = vunpack.c.h.b16 %v5757
    %v6841 = vunpack.c.l.b16 %v5758
    %v6842 = vunpack.c.l.b16 %v5759
    %v6843 = vunpack.c.h.b16 %v5759
    %v6844 = vunpack.c.l.b16 %v5760
    %v6845 = vunpack.c.h.b16 %v5760
    %v6846 = vunpack.c.l.b16 %v5761
    %v6847 = vunpack.c.h.b16 %v5761
    %v6848 = vunpack.c.l.b16 %v5762
    %v6849 = vunpack.c.l.b16 %v5763
    %v6850 = vunpack.c.h.b16 %v5763
    %v6851 = vunpack.c.l.b16 %v5764
    %v6852 = vunpack.c.h.b16 %v5764
    %v6853 = vunpack.c.l.b16 %v5765
    %v6854 = vunpack.c.h.b16 %v5765
    %v6855 = vunpack.c.l.b16 %v5766
    %v6856 = vunpack.c.l.b16 %v5767
    %v6857 = vunpack.c.h.b16 %v5767
    %v6858 = vunpack.c.l.b16 %v5768
    %v6859 = vunpack.c.h.b16 %v5768
    %v6860 = vunpack.c.l.b16 %v5769
    %v6861 = vunpack.c.h.b16 %v5769
    %v6862 = vunpack.c.l.b16 %v5770
    %v6863 = vunpack.c.l.b16 %v5771
    %v6864 = vunpack.c.h.b16 %v5771
    %v6865 = vunpack.c.l.b16 %v5772
    %v6866 = vunpack.c.h.b16 %v5772
    %v6867 = vunpack.c.l.b16 %v5773
    %v6868 = vunpack.c.h.b16 %v5773
    %v6869 = vunpack.c.l.b16 %v5774
    %v6870 = vunpack.c.l.b16 %v5775
    %v6871 = vunpack.c.h.b16 %v5775
    %v6872 = vunpack.c.l.b16 %v5776
    %v6873 = vunpack.c.h.b16 %v5776
    %v6874 = vunpack.c.l.b16 %v5777
    %v6875 = vunpack.c.h.b16 %v5777
    %v6876 = vunpack.c.l.b16 %v5778
    %v6877 = vunpack.c.l.b16 %v5779
    %v6878 = vunpack.c.h.b16 %v5779
    %v6879 = vunpack.c.l.b16 %v5780
    %v6880 = vunpack.c.h.b16 %v5780
    %v6881 = vunpack.c.l.b16 %v5781
    %v6882 = vunpack.c.h.b16 %v5781
    %v6883 = vunpack.c.l.b16 %v5782
    %v6884 = vunpack.c.l.b16 %v5783
    %v6885 = vunpack.c.h.b16 %v5783
    %v6886 = vunpack.c.l.b16 %v5784
    %v6887 = vunpack.c.h.b16 %v5784
    %v6888 = vunpack.c.l.b16 %v5785
    %v6889 = vunpack.c.h.b16 %v5785
    %v6890 = vunpack.c.l.b16 %v5786
    %v6891 = vunpack.c.l.b16 %v5787
    %v6892 = vunpack.c.h.b16 %v5787
    %v6893 = vunpack.c.l.b16 %v5788
    %v6894 = vunpack.c.h.b16 %v5788
    %v6895 = vunpack.c.l.b16 %v5789
    %v6896 = vunpack.c.h.b16 %v5789
    %v6897 = vunpack.c.l.b16 %v5790
    %v6898 = vunpack.c.l.b16 %v5791
    %v6899 = vunpack.c.h.b16 %v5791
    %v6900 = vunpack.c.l.b16 %v5792
    %v6901 = vunpack.c.h.b16 %v5792
    %v6902 = vunpack.c.l.b16 %v5793
    %v6903 = vunpack.c.h.b16 %v5793
    %v6904 = vunpack.c.l.b16 %v5794
    %v6905 = vunpack.c.l.b16 %v5795
    %v6906 = vunpack.c.h.b16 %v5795
    %v6907 = vunpack.c.l.b16 %v5796
    %v6908 = vunpack.c.h.b16 %v5796
    %v6909 = vunpack.c.l.b16 %v5797
    %v6910 = vunpack.c.h.b16 %v5797
    %v6911 = vunpack.c.l.b16 %v5798
    %v6912 = vunpack.c.l.b16 %v5799
    %v6913 = vunpack.c.h.b16 %v5799
    %v6914 = vunpack.c.l.b16 %v5800
    %v6915 = vunpack.c.h.b16 %v5800
    %v6916 = vunpack.c.l.b16 %v5801
    %v6917 = vunpack.c.h.b16 %v5801
    %v6918 = vunpack.c.l.b16 %v5802
    %v6919 = vunpack.c.l.b16 %v5803
    %v6920 = vunpack.c.h.b16 %v5803
    %v6921 = vunpack.c.l.b16 %v5804
    %v6922 = vunpack.c.h.b16 %v5804
    %v6923 = vunpack.c.l.b16 %v5805
    %v6924 = vunpack.c.h.b16 %v5805
    %v6925 = vunpack.c.l.b16 %v5806
    %v6926 = vunpack.c.l.b16 %v5807
    %v6927 = vunpack.c.h.b16 %v5807
    %v6928 = vunpack.c.l.b16 %v5808
    %v6929 = vunpack.c.h.b16 %v5808
    %v6930 = vunpack.c.l.b16 %v5809
    %v6931 = vunpack.c.h.b16 %v5809
    %v6932 = vunpack.c.l.b16 %v5810
    %v6933 = vunpack.c.l.b16 %v5811
    %v6934 = vunpack.c.h.b16 %v5811
    %v6935 = vunpack.c.l.b16 %v5812
    %v6936 = vunpack.c.h.b16 %v5812
    %v6937 = vunpack.c.l.b16 %v5813
    %v6938 = vunpack.c.h.b16 %v5813
    %v6939 = vunpack.c.l.b16 %v5814
    %v6940 = vunpack.c.l.b16 %v5815
    %v6941 = vunpack.c.h.b16 %v5815
    %v6942 = vunpack.c.l.b16 %v5816
    %v6943 = vunpack.c.h.b16 %v5816
    %v6944 = vunpack.c.l.b16 %v5817
    %v6945 = vunpack.c.h.b16 %v5817
    %v6946 = vunpack.c.l.b16 %v5818
    %v6947 = vunpack.c.l.b16 %v5819
    %v6948 = vunpack.c.h.b16 %v5819
    %v6949 = vunpack.c.l.b16 %v5820
    %v6950 = vunpack.c.h.b16 %v5820
    %v6951 = vunpack.c.l.b16 %v5821
    %v6952 = vunpack.c.h.b16 %v5821
    %v6953 = vunpack.c.l.b16 %v5822
    %v6954 = vunpack.c.l.b16 %v5823
    %v6955 = vunpack.c.h.b16 %v5823
    %v6956 = vunpack.c.l.b16 %v5824
    %v6957 = vunpack.c.h.b16 %v5824
    %v6958 = vunpack.c.l.b16 %v5825
    %v6959 = vunpack.c.h.b16 %v5825
    %v6960 = vunpack.c.l.b16 %v5826
    %v6961 = vunpack.c.l.b16 %v5827
    %v6962 = vunpack.c.h.b16 %v5827
    %v6963 = vunpack.c.l.b16 %v5828
    %v6964 = vunpack.c.h.b16 %v5828
    %v6965 = vunpack.c.l.b16 %v5829
    %v6966 = vunpack.c.h.b16 %v5829
    %v6967 = vunpack.c.l.b16 %v5830
    %v6968 = vunpack.c.l.b16 %v5831
    %v6969 = vunpack.c.h.b16 %v5831
    %v6970 = vunpack.c.l.b16 %v5832
    %v6971 = vunpack.c.h.b16 %v5832
    %v6972 = vunpack.c.l.b16 %v5833
    %v6973 = vunpack.c.h.b16 %v5833
    %v6974 = vunpack.c.l.b16 %v5834
    %v6975 = vunpack.c.l.b16 %v5835
    %v6976 = vunpack.c.h.b16 %v5835
    %v6977 = vunpack.c.l.b16 %v5836
    %v6978 = vunpack.c.h.b16 %v5836
    %v6979 = vunpack.c.l.b16 %v5837
    %v6980 = vunpack.c.h.b16 %v5837
    %v6981 = vunpack.c.l.b16 %v5838
    %v6982 = vunpack.c.l.b16 %v5839
    %v6983 = vunpack.c.h.b16 %v5839
    %v6984 = vunpack.c.l.b16 %v5840
    %v6985 = vunpack.c.h.b16 %v5840
    %v6986 = vunpack.c.l.b16 %v5841
    %v6987 = vunpack.c.h.b16 %v5841
    %v6988 = vunpack.c.l.b16 %v5842
    %v6989 = vunpack.c.l.b16 %v5843
    %v6990 = vunpack.c.h.b16 %v5843
    %v6991 = vunpack.c.l.b16 %v5844
    %v6992 = vunpack.c.h.b16 %v5844
    %v6993 = vunpack.c.l.b16 %v5845
    %v6994 = vunpack.c.h.b16 %v5845
    %v6995 = vunpack.c.l.b16 %v5846
    %v6996 = vunpack.c.l.b16 %v5847
    %v6997 = vunpack.c.h.b16 %v5847
    %v6998 = vunpack.c.l.b16 %v5848
    %v6999 = vunpack.c.h.b16 %v5848
    %v7000 = vunpack.c.l.b16 %v5849
    %v7001 = vunpack.c.h.b16 %v5849
    %v7002 = vunpack.c.l.b16 %v5850
    %v7003 = vunpack.c.l.b16 %v5851
    %v7004 = vunpack.c.h.b16 %v5851
    %v7005 = vunpack.c.l.b16 %v5852
    %v7006 = vunpack.c.h.b16 %v5852
    %v7007 = vunpack.c.l.b16 %v5853
    %v7008 = vunpack.c.h.b16 %v5853
    %v7009 = vunpack.c.l.b16 %v5854
    %v7010 = vunpack.c.l.b16 %v5855
    %v7011 = vunpack.c.h.b16 %v5855
    %v7012 = vunpack.c.l.b16 %v5856
    %v7013 = vunpack.c.h.b16 %v5856
    %v7014 = vunpack.c.l.b16 %v5857
    %v7015 = vunpack.c.h.b16 %v5857
    %v7016 = vunpack.c.l.b16 %v5858
    %v7017 = vunpack.c.l.b16 %v5859
    %v7018 = vunpack.c.h.b16 %v5859
    %v7019 = vunpack.c.l.b16 %v5860
    %v7020 = vunpack.c.h.b16 %v5860
    %v7021 = vunpack.c.l.b16 %v5861
    %v7022 = vunpack.c.h.b16 %v5861
    %v7023 = vunpack.c.l.b16 %v5862
    %v7024 = vunpack.c.l.b16 %v5863
    %v7025 = vunpack.c.h.b16 %v5863
    %v7026 = vunpack.c.l.b16 %v5864
    %v7027 = vunpack.c.h.b16 %v5864
    %v7028 = vunpack.c.l.b16 %v5865
    %v7029 = vunpack.c.h.b16 %v5865
    %v7030 = vunpack.c.l.b16 %v5866
    %v7031 = vunpack.c.l.b16 %v5867
    %v7032 = vunpack.c.h.b16 %v5867
    %v7033 = vunpack.c.l.b16 %v5868
    %v7034 = vunpack.c.h.b16 %v5868
    %v7035 = vunpack.c.l.b16 %v5869
    %v7036 = vunpack.c.h.b16 %v5869
    %v7037 = vunpack.c.l.b16 %v5870
    %v7038 = vunpack.c.l.b16 %v5871
    %v7039 = vunpack.c.h.b16 %v5871
    %v7040 = vunpack.c.l.b16 %v5872
    %v7041 = vunpack.c.h.b16 %v5872
    %v7042 = vunpack.c.l.b16 %v5873
    %v7043 = vunpack.c.h.b16 %v5873
    %v7044 = vunpack.c.l.b16 %v5874
    %v7045 = vunpack.c.l.b16 %v5875
    %v7046 = vunpack.c.h.b16 %v5875
    %v7047 = vunpack.c.l.b16 %v5876
    %v7048 = vunpack.c.h.b16 %v5876
    %v7049 = vunpack.c.l.b16 %v5877
    %v7050 = vunpack.c.h.b16 %v5877
    %v7051 = vunpack.c.l.b16 %v5878
    %v7052 = vunpack.c.l.b16 %v5879
    %v7053 = vunpack.c.h.b16 %v5879
    %v7054 = vunpack.c.l.b16 %v5880
    %v7055 = vunpack.c.h.b16 %v5880
    %v7056 = vunpack.c.l.b16 %v5881
    %v7057 = vunpack.c.h.b16 %v5881
    %v7058 = vunpack.c.l.b16 %v5882
    %v7059 = vunpack.c.l.b16 %v5883
    %v7060 = vunpack.c.h.b16 %v5883
    %v7061 = vunpack.c.l.b16 %v5884
    %v7062 = vunpack.c.h.b16 %v5884
    %v7063 = vunpack.c.l.b16 %v5885
    %v7064 = vunpack.c.h.b16 %v5885
    %v7065 = vunpack.c.l.b16 %v5886
    %v7066 = vunpack.c.l.b16 %v5887
    %v7067 = vunpack.c.h.b16 %v5887
    %v7068 = vunpack.c.l.b16 %v5888
    %v7069 = vunpack.c.h.b16 %v5888
    %v7070 = vunpack.c.l.b16 %v5889
    %v7071 = vunpack.c.h.b16 %v5889
    %v7072 = vunpack.c.l.b16 %v5890
    %v7073 = vunpack.c.l.b16 %v5891
    %v7074 = vunpack.c.h.b16 %v5891
    %v7075 = vunpack.c.l.b16 %v5892
    %v7076 = vunpack.c.h.b16 %v5892
    %v7077 = vunpack.c.l.b16 %v5893
    %v7078 = vunpack.c.h.b16 %v5893
    %v7079 = vunpack.c.l.b16 %v5894
    %v7080 = vunpack.c.l.b16 %v5895
    %v7081 = vunpack.c.h.b16 %v5895
    %v7082 = vunpack.c.l.b16 %v5896
    %v7083 = vunpack.c.h.b16 %v5896
    %v7084 = vunpack.c.l.b16 %v5897
    %v7085 = vunpack.c.h.b16 %v5897
    %v7086 = vunpack.c.l.b16 %v5898
    %v7087 = vunpack.c.l.b16 %v5899
    %v7088 = vunpack.c.h.b16 %v5899
    %v7089 = vunpack.c.l.b16 %v5900
    %v7090 = vunpack.c.h.b16 %v5900
    %v7091 = vunpack.c.l.b16 %v5901
    %v7092 = vunpack.c.h.b16 %v5901
    %v7093 = vunpack.c.l.b16 %v5902
    %v7094 = vunpack.c.l.b16 %v5903
    %v7095 = vunpack.c.h.b16 %v5903
    %v7096 = vunpack.c.l.b16 %v5904
    %v7097 = vunpack.c.h.b16 %v5904
    %v7098 = vunpack.c.l.b16 %v5905
    %v7099 = vunpack.c.h.b16 %v5905
    %v7100 = vunpack.c.l.b16 %v5906
    %v7101 = vunpack.c.l.b16 %v5907
    %v7102 = vunpack.c.h.b16 %v5907
    %v7103 = vunpack.c.l.b16 %v5908
    %v7104 = vunpack.c.h.b16 %v5908
    %v7105 = vunpack.c.l.b16 %v5909
    %v7106 = vunpack.c.h.b16 %v5909
    %v7107 = vunpack.c.l.b16 %v5910
    %v7108 = vunpack.c.l.b16 %v5911
    %v7109 = vunpack.c.h.b16 %v5911
    %v7110 = vunpack.c.l.b16 %v5912
    %v7111 = vunpack.c.h.b16 %v5912
    %v7112 = vunpack.c.l.b16 %v5913
    %v7113 = vunpack.c.h.b16 %v5913
    %v7114 = vunpack.c.l.b16 %v5914
    %v7115 = vunpack.c.l.b16 %v5915
    %v7116 = vunpack.c.h.b16 %v5915
    %v7117 = vunpack.c.l.b16 %v5916
    %v7118 = vunpack.c.h.b16 %v5916
    %v7119 = vunpack.c.l.b16 %v5917
    %v7120 = vunpack.c.h.b16 %v5917
    %v7121 = vunpack.c.l.b16 %v5918
    %v7122 = vunpack.c.l.b16 %v5919
    %v7123 = vunpack.c.h.b16 %v5919
    %v7124 = vunpack.c.l.b16 %v5920
    %v7125 = vunpack.c.h.b16 %v5920
    %v7126 = vunpack.c.l.b16 %v5921
    %v7127 = vunpack.c.h.b16 %v5921
    %v7128 = vunpack.c.l.b16 %v5922
    %v7129 = vunpack.c.l.b16 %v5923
    %v7130 = vunpack.c.h.b16 %v5923
    %v7131 = vunpack.c.l.b16 %v5924
    %v7132 = vunpack.c.h.b16 %v5924
    %v7133 = vunpack.c.l.b16 %v5925
    %v7134 = vunpack.c.h.b16 %v5925
    %v7135 = vunpack.c.l.b16 %v5926
    %v7136 = vunpack.c.l.b16 %v5927
    %v7137 = vunpack.c.h.b16 %v5927
    %v7138 = vunpack.c.l.b16 %v5928
    %v7139 = vunpack.c.h.b16 %v5928
    %v7140 = vunpack.c.l.b16 %v5929
    %v7141 = vunpack.c.h.b16 %v5929
    %v7142 = vunpack.c.l.b16 %v5930
    %v7143 = vunpack.c.l.b16 %v5931
    %v7144 = vunpack.c.h.b16 %v5931
    %v7145 = vunpack.c.l.b16 %v5932
    %v7146 = vunpack.c.h.b16 %v5932
    %v7147 = vunpack.c.l.b16 %v5933
    %v7148 = vunpack.c.h.b16 %v5933
    %v7149 = vunpack.c.l.b16 %v5934
    %v7150 = vunpack.c.l.b16 %v5935
    %v7151 = vunpack.c.h.b16 %v5935
    %v7152 = vunpack.c.l.b16 %v5936
    %v7153 = vunpack.c.h.b16 %v5936
    %v7154 = vunpack.c.l.b16 %v5937
    %v7155 = vunpack.c.h.b16 %v5937
    %v7156 = vunpack.c.l.b16 %v5938
    %v7157 = vunpack.c.l.b16 %v5939
    %v7158 = vunpack.c.h.b16 %v5939
    %v7159 = vunpack.c.l.b16 %v5940
    %v7160 = vunpack.c.h.b16 %v5940
    %v7161 = vunpack.c.l.b16 %v5941
    %v7162 = vunpack.c.h.b16 %v5941
    %v7163 = vunpack.c.l.b16 %v5942
    %v7164 = vunpack.c.l.b16 %v5943
    %v7165 = vunpack.c.h.b16 %v5943
    %v7166 = vunpack.c.l.b16 %v5944
    %v7167 = vunpack.c.h.b16 %v5944
    %v7168 = vunpack.c.l.b16 %v5945
    %v7169 = vunpack.c.h.b16 %v5945
    %v7170 = vunpack.c.l.b16 %v5946
    %v7171 = vunpack.c.l.b16 %v5947
    %v7172 = vunpack.c.h.b16 %v5947
    %v7173 = vunpack.c.l.b16 %v5948
    %v7174 = vunpack.c.h.b16 %v5948
    %v7175 = vunpack.c.l.b16 %v5949
    %v7176 = vunpack.c.h.b16 %v5949
    %v7177 = vunpack.c.l.b16 %v5950
    %v7178 = vunpack.c.l.b16 %v5951
    %v7179 = vunpack.c.h.b16 %v5951
    %v7180 = vunpack.c.l.b16 %v5952
    %v7181 = vunpack.c.h.b16 %v5952
    %v7182 = vunpack.c.l.b16 %v5953
    %v7183 = vunpack.c.h.b16 %v5953
    %v7184 = vunpack.c.l.b16 %v5954
    %v7185 = vunpack.c.l.b16 %v5955
    %v7186 = vunpack.c.h.b16 %v5955
    %v7187 = vunpack.c.l.b16 %v5956
    %v7188 = vunpack.c.h.b16 %v5956
    %v7189 = vunpack.c.l.b16 %v5957
    %v7190 = vunpack.c.h.b16 %v5957
    %v7191 = vunpack.c.l.b16 %v5958
    %v7192 = vunpack.c.l.b16 %v5959
    %v7193 = vunpack.c.h.b16 %v5959
    %v7194 = vunpack.c.l.b16 %v5960
    %v7195 = vunpack.c.h.b16 %v5960
    %v7196 = vunpack.c.l.b16 %v5961
    %v7197 = vunpack.c.h.b16 %v5961
    %v7198 = vunpack.c.l.b16 %v5962
    %v7199 = vunpack.c.l.b16 %v5963
    %v7200 = vunpack.c.h.b16 %v5963
    %v7201 = vunpack.c.l.b16 %v5964
    %v7202 = vunpack.c.h.b16 %v5964
    %v7203 = vunpack.c.l.b16 %v5965
    %v7204 = vunpack.c.h.b16 %v5965
    %v7205 = vunpack.c.l.b16 %v5966
    %v7206 = vunpack.c.l.b16 %v5967
    %v7207 = vunpack.c.h.b16 %v5967
    %v7208 = vunpack.c.l.b16 %v5968
    %v7209 = vunpack.c.h.b16 %v5968
    %v7210 = vunpack.c.l.b16 %v5969
    %v7211 = vunpack.c.h.b16 %v5969
    %v7212 = vunpack.c.l.b16 %v5970
    %v7213 = vunpack.c.l.b16 %v5971
    %v7214 = vunpack.c.h.b16 %v5971
    %v7215 = vunpack.c.l.b16 %v5972
    %v7216 = vunpack.c.h.b16 %v5972
    %v7217 = vunpack.c.l.b16 %v5973
    %v7218 = vunpack.c.h.b16 %v5973
    %v7219 = vunpack.c.l.b16 %v5974
    %v7220 = vunpack.c.l.b16 %v5975
    %v7221 = vunpack.c.h.b16 %v5975
    %v7222 = vunpack.c.l.b16 %v5976
    %v7223 = vunpack.c.h.b16 %v5976
    %v7224 = vunpack.c.l.b16 %v5977
    %v7225 = vunpack.c.h.b16 %v5977
    %v7226 = vunpack.c.l.b16 %v5978
    %v7227 = vpack.c.b16 %v6450, %v6443
    %v7228 = vpack.c.b16 %v6451, %v6444
    %v7229 = vpack.c.b16 %v6452, %v6445
    %v7230 = vpack.c.b16 %v6453, %v6446
    %v7231 = vpack.c.b16 %v6454, %v6447
    %v7232 = vpack.c.b16 %v6455, %v6448
    %v7233 = vpack.c.b16 %v6456, %v6449
    %v7234 = vpack.c.b16 %v6464, %v6457
    %v7235 = vpack.c.b16 %v6465, %v6458
    %v7236 = vpack.c.b16 %v6466, %v6459
    %v7237 = vpack.c.b16 %v6467, %v6460
    %v7238 = vpack.c.b16 %v6468, %v6461
    %v7239 = vpack.c.b16 %v6469, %v6462
    %v7240 = vpack.c.b16 %v6470, %v6463
    %v7241 = vpack.c.b16 %v6478, %v6471
    %v7242 = vpack.c.b16 %v6479, %v6472
    %v7243 = vpack.c.b16 %v6480, %v6473
    %v7244 = vpack.c.b16 %v6481, %v6474
    %v7245 = vpack.c.b16 %v6482, %v6475
    %v7246 = vpack.c.b16 %v6483, %v6476
    %v7247 = vpack.c.b16 %v6484, %v6477
    %v7248 = vpack.c.b16 %v6492, %v6485
    %v7249 = vpack.c.b16 %v6493, %v6486
    %v7250 = vpack.c.b16 %v6494, %v6487
    %v7251 = vpack.c.b16 %v6495, %v6488
    %v7252 = vpack.c.b16 %v6496, %v6489
    %v7253 = vpack.c.b16 %v6497, %v6490
    %v7254 = vpack.c.b16 %v6498, %v6491
    %v7255 = vpack.c.b16 %v6506, %v6499
    %v7256 = vpack.c.b16 %v6507, %v6500
    %v7257 = vpack.c.b16 %v6508, %v6501
    %v7258 = vpack.c.b16 %v6509, %v6502
    %v7259 = vpack.c.b16 %v6510, %v6503
    %v7260 = vpack.c.b16 %v6511, %v6504
    %v7261 = vpack.c.b16 %v6512, %v6505
    %v7262 = vpack.c.b16 %v6520, %v6513
    %v7263 = vpack.c.b16 %v6521, %v6514
    %v7264 = vpack.c.b16 %v6522, %v6515
    %v7265 = vpack.c.b16 %v6523, %v6516
    %v7266 = vpack.c.b16 %v6524, %v6517
    %v7267 = vpack.c.b16 %v6525, %v6518
    %v7268 = vpack.c.b16 %v6526, %v6519
    %v7269 = vpack.c.b16 %v6534, %v6527
    %v7270 = vpack.c.b16 %v6535, %v6528
    %v7271 = vpack.c.b16 %v6536, %v6529
    %v7272 = vpack.c.b16 %v6537, %v6530
    %v7273 = vpack.c.b16 %v6538, %v6531
    %v7274 = vpack.c.b16 %v6539, %v6532
    %v7275 = vpack.c.b16 %v6540, %v6533
    %v7276 = vpack.c.b16 %v6548, %v6541
    %v7277 = vpack.c.b16 %v6549, %v6542
    %v7278 = vpack.c.b16 %v6550, %v6543
    %v7279 = vpack.c.b16 %v6551, %v6544
    %v7280 = vpack.c.b16 %v6552, %v6545
    %v7281 = vpack.c.b16 %v6553, %v6546
    %v7282 = vpack.c.b16 %v6554, %v6547
    %v7283 = vpack.c.b16 %v6562, %v6555
    %v7284 = vpack.c.b16 %v6563, %v6556
    %v7285 = vpack.c.b16 %v6564, %v6557
    %v7286 = vpack.c.b16 %v6565, %v6558
    %v7287 = vpack.c.b16 %v6566, %v6559
    %v7288 = vpack.c.b16 %v6567, %v6560
    %v7289 = vpack.c.b16 %v6568, %v6561
    %v7290 = vpack.c.b16 %v6576, %v6569
    %v7291 = vpack.c.b16 %v6577, %v6570
    %v7292 = vpack.c.b16 %v6578, %v6571
    %v7293 = vpack.c.b16 %v6579, %v6572
    %v7294 = vpack.c.b16 %v6580, %v6573
    %v7295 = vpack.c.b16 %v6581, %v6574
    %v7296 = vpack.c.b16 %v6582, %v6575
    %v7297 = vpack.c.b16 %v6590, %v6583
    %v7298 = vpack.c.b16 %v6591, %v6584
    %v7299 = vpack.c.b16 %v6592, %v6585
    %v7300 = vpack.c.b16 %v6593, %v6586
    %v7301 = vpack.c.b16 %v6594, %v6587
    %v7302 = vpack.c.b16 %v6595, %v6588
    %v7303 = vpack.c.b16 %v6596, %v6589
    %v7304 = vpack.c.b16 %v6604, %v6597
    %v7305 = vpack.c.b16 %v6605, %v6598
    %v7306 = vpack.c.b16 %v6606, %v6599
    %v7307 = vpack.c.b16 %v6607, %v6600
    %v7308 = vpack.c.b16 %v6608, %v6601
    %v7309 = vpack.c.b16 %v6609, %v6602
    %v7310 = vpack.c.b16 %v6610, %v6603
    %v7311 = vpack.c.b16 %v6618, %v6611
    %v7312 = vpack.c.b16 %v6619, %v6612
    %v7313 = vpack.c.b16 %v6620, %v6613
    %v7314 = vpack.c.b16 %v6621, %v6614
    %v7315 = vpack.c.b16 %v6622, %v6615
    %v7316 = vpack.c.b16 %v6623, %v6616
    %v7317 = vpack.c.b16 %v6624, %v6617
    %v7318 = vpack.c.b16 %v6632, %v6625
    %v7319 = vpack.c.b16 %v6633, %v6626
    %v7320 = vpack.c.b16 %v6634, %v6627
    %v7321 = vpack.c.b16 %v6635, %v6628
    %v7322 = vpack.c.b16 %v6636, %v6629
    %v7323 = vpack.c.b16 %v6637, %v6630
    %v7324 = vpack.c.b16 %v6638, %v6631
    %v7325 = vpack.c.b16 %v6646, %v6639
    %v7326 = vpack.c.b16 %v6647, %v6640
    %v7327 = vpack.c.b16 %v6648, %v6641
    %v7328 = vpack.c.b16 %v6649, %v6642
    %v7329 = vpack.c.b16 %v6650, %v6643
    %v7330 = vpack.c.b16 %v6651, %v6644
    %v7331 = vpack.c.b16 %v6652, %v6645
    %v7332 = vpack.c.b16 %v6660, %v6653
    %v7333 = vpack.c.b16 %v6661, %v6654
    %v7334 = vpack.c.b16 %v6662, %v6655
    %v7335 = vpack.c.b16 %v6663, %v6656
    %v7336 = vpack.c.b16 %v6664, %v6657
    %v7337 = vpack.c.b16 %v6665, %v6658
    %v7338 = vpack.c.b16 %v6666, %v6659
    %v7339 = vpack.c.b16 %v6674, %v6667
    %v7340 = vpack.c.b16 %v6675, %v6668
    %v7341 = vpack.c.b16 %v6676, %v6669
    %v7342 = vpack.c.b16 %v6677, %v6670
    %v7343 = vpack.c.b16 %v6678, %v6671
    %v7344 = vpack.c.b16 %v6679, %v6672
    %v7345 = vpack.c.b16 %v6680, %v6673
    %v7346 = vpack.c.b16 %v6688, %v6681
    %v7347 = vpack.c.b16 %v6689, %v6682
    %v7348 = vpack.c.b16 %v6690, %v6683
    %v7349 = vpack.c.b16 %v6691, %v6684
    %v7350 = vpack.c.b16 %v6692, %v6685
    %v7351 = vpack.c.b16 %v6693, %v6686
    %v7352 = vpack.c.b16 %v6694, %v6687
    %v7353 = vpack.c.b16 %v6702, %v6695
    %v7354 = vpack.c.b16 %v6703, %v6696
    %v7355 = vpack.c.b16 %v6704, %v6697
    %v7356 = vpack.c.b16 %v6705, %v6698
    %v7357 = vpack.c.b16 %v6706, %v6699
    %v7358 = vpack.c.b16 %v6707, %v6700
    %v7359 = vpack.c.b16 %v6708, %v6701
    %v7360 = vpack.c.b16 %v6716, %v6709
    %v7361 = vpack.c.b16 %v6717, %v6710
    %v7362 = vpack.c.b16 %v6718, %v6711
    %v7363 = vpack.c.b16 %v6719, %v6712
    %v7364 = vpack.c.b16 %v6720, %v6713
    %v7365 = vpack.c.b16 %v6721, %v6714
    %v7366 = vpack.c.b16 %v6722, %v6715
    %v7367 = vpack.c.b16 %v6730, %v6723
    %v7368 = vpack.c.b16 %v6731, %v6724
    %v7369 = vpack.c.b16 %v6732, %v6725
    %v7370 = vpack.c.b16 %v6733, %v6726
    %v7371 = vpack.c.b16 %v6734, %v6727
    %v7372 = vpack.c.b16 %v6735, %v6728
    %v7373 = vpack.c.b16 %v6736, %v6729
    %v7374 = vpack.c.b16 %v6744, %v6737
    %v7375 = vpack.c.b16 %v6745, %v6738
    %v7376 = vpack.c.b16 %v6746, %v6739
    %v7377 = vpack.c.b16 %v6747, %v6740
    %v7378 = vpack.c.b16 %v6748, %v6741
    %v7379 = vpack.c.b16 %v6749, %v6742
    %v7380 = vpack.c.b16 %v6750, %v6743
    %v7381 = vpack.c.b16 %v6758, %v6751
    %v7382 = vpack.c.b16 %v6759, %v6752
    %v7383 = vpack.c.b16 %v6760, %v6753
    %v7384 = vpack.c.b16 %v6761, %v6754
    %v7385 = vpack.c.b16 %v6762, %v6755
    %v7386 = vpack.c.b16 %v6763, %v6756
    %v7387 = vpack.c.b16 %v6764, %v6757
    %v7388 = vpack.c.b16 %v6772, %v6765
    %v7389 = vpack.c.b16 %v6773, %v6766
    %v7390 = vpack.c.b16 %v6774, %v6767
    %v7391 = vpack.c.b16 %v6775, %v6768
    %v7392 = vpack.c.b16 %v6776, %v6769
    %v7393 = vpack.c.b16 %v6777, %v6770
    %v7394 = vpack.c.b16 %v6778, %v6771
    %v7395 = vpack.c.b16 %v6786, %v6779
    %v7396 = vpack.c.b16 %v6787, %v6780
    %v7397 = vpack.c.b16 %v6788, %v6781
    %v7398 = vpack.c.b16 %v6789, %v6782
    %v7399 = vpack.c.b16 %v6790, %v6783
    %v7400 = vpack.c.b16 %v6791, %v6784
    %v7401 = vpack.c.b16 %v6792, %v6785
    %v7402 = vpack.c.b16 %v6800, %v6793
    %v7403 = vpack.c.b16 %v6801, %v6794
    %v7404 = vpack.c.b16 %v6802, %v6795
    %v7405 = vpack.c.b16 %v6803, %v6796
    %v7406 = vpack.c.b16 %v6804, %v6797
    %v7407 = vpack.c.b16 %v6805, %v6798
    %v7408 = vpack.c.b16 %v6806, %v6799
    %v7409 = vpack.c.b16 %v6814, %v6807
    %v7410 = vpack.c.b16 %v6815, %v6808
    %v7411 = vpack.c.b16 %v6816, %v6809
    %v7412 = vpack.c.b16 %v6817, %v6810
    %v7413 = vpack.c.b16 %v6818, %v6811
    %v7414 = vpack.c.b16 %v6819, %v6812
    %v7415 = vpack.c.b16 %v6820, %v6813
    %v7416 = vpack.c.b16 %v6828, %v6821
    %v7417 = vpack.c.b16 %v6829, %v6822
    %v7418 = vpack.c.b16 %v6830, %v6823
    %v7419 = vpack.c.b16 %v6831, %v6824
    %v7420 = vpack.c.b16 %v6832, %v6825
    %v7421 = vpack.c.b16 %v6833, %v6826
    %v7422 = vpack.c.b16 %v6834, %v6827
    %v7423 = vpack.c.b16 %v6842, %v6835
    %v7424 = vpack.c.b16 %v6843, %v6836
    %v7425 = vpack.c.b16 %v6844, %v6837
    %v7426 = vpack.c.b16 %v6845, %v6838
    %v7427 = vpack.c.b16 %v6846, %v6839
    %v7428 = vpack.c.b16 %v6847, %v6840
    %v7429 = vpack.c.b16 %v6848, %v6841
    %v7430 = vpack.c.b16 %v6856, %v6849
    %v7431 = vpack.c.b16 %v6857, %v6850
    %v7432 = vpack.c.b16 %v6858, %v6851
    %v7433 = vpack.c.b16 %v6859, %v6852
    %v7434 = vpack.c.b16 %v6860, %v6853
    %v7435 = vpack.c.b16 %v6861, %v6854
    %v7436 = vpack.c.b16 %v6862, %v6855
    %v7437 = vpack.c.b16 %v6870, %v6863
    %v7438 = vpack.c.b16 %v6871, %v6864
    %v7439 = vpack.c.b16 %v6872, %v6865
    %v7440 = vpack.c.b16 %v6873, %v6866
    %v7441 = vpack.c.b16 %v6874, %v6867
    %v7442 = vpack.c.b16 %v6875, %v6868
    %v7443 = vpack.c.b16 %v6876, %v6869
    %v7444 = vpack.c.b16 %v6884, %v6877
    %v7445 = vpack.c.b16 %v6885, %v6878
    %v7446 = vpack.c.b16 %v6886, %v6879
    %v7447 = vpack.c.b16 %v6887, %v6880
    %v7448 = vpack.c.b16 %v6888, %v6881
    %v7449 = vpack.c.b16 %v6889, %v6882
    %v7450 = vpack.c.b16 %v6890, %v6883
    %v7451 = vpack.c.b16 %v6898, %v6891
    %v7452 = vpack.c.b16 %v6899, %v6892
    %v7453 = vpack.c.b16 %v6900, %v6893
    %v7454 = vpack.c.b16 %v6901, %v6894
    %v7455 = vpack.c.b16 %v6902, %v6895
    %v7456 = vpack.c.b16 %v6903, %v6896
    %v7457 = vpack.c.b16 %v6904, %v6897
    %v7458 = vpack.c.b16 %v6912, %v6905
    %v7459 = vpack.c.b16 %v6913, %v6906
    %v7460 = vpack.c.b16 %v6914, %v6907
    %v7461 = vpack.c.b16 %v6915, %v6908
    %v7462 = vpack.c.b16 %v6916, %v6909
    %v7463 = vpack.c.b16 %v6917, %v6910
    %v7464 = vpack.c.b16 %v6918, %v6911
    %v7465 = vpack.c.b16 %v6926, %v6919
    %v7466 = vpack.c.b16 %v6927, %v6920
    %v7467 = vpack.c.b16 %v6928, %v6921
    %v7468 = vpack.c.b16 %v6929, %v6922
    %v7469 = vpack.c.b16 %v6930, %v6923
    %v7470 = vpack.c.b16 %v6931, %v6924
    %v7471 = vpack.c.b16 %v6932, %v6925
    %v7472 = vpack.c.b16 %v6940, %v6933
    %v7473 = vpack.c.b16 %v6941, %v6934
    %v7474 = vpack.c.b16 %v6942, %v6935
    %v7475 = vpack.c.b16 %v6943, %v6936
    %v7476 = vpack.c.b16 %v6944, %v6937
    %v7477 = vpack.c.b16 %v6945, %v6938
    %v7478 = vpack.c.b16 %v6946, %v6939
    %v7479 = vpack.c.b16 %v6954, %v6947
    %v7480 = vpack.c.b16 %v6955, %v6948
    %v7481 = vpack.c.b16 %v6956, %v6949
    %v7482 = vpack.c.b16 %v6957, %v6950
    %v7483 = vpack.c.b16 %v6958, %v6951
    %v7484 = vpack.c.b16 %v6959, %v6952
    %v7485 = vpack.c.b16 %v6960, %v6953
    %v7486 = vpack.c.b16 %v6968, %v6961
    %v7487 = vpack.c.b16 %v6969, %v6962
    %v7488 = vpack.c.b16 %v6970, %v6963
    %v7489 = vpack.c.b16 %v6971, %v6964
    %v7490 = vpack.c.b16 %v6972, %v6965
    %v7491 = vpack.c.b16 %v6973, %v6966
    %v7492 = vpack.c.b16 %v6974, %v6967
    %v7493 = vpack.c.b16 %v6982, %v6975
    %v7494 = vpack.c.b16 %v6983, %v6976
    %v7495 = vpack.c.b16 %v6984, %v6977
    %v7496 = vpack.c.b16 %v6985, %v6978
    %v7497 = vpack.c.b16 %v6986, %v6979
    %v7498 = vpack.c.b16 %v6987, %v6980
    %v7499 = vpack.c.b16 %v6988, %v6981
    %v7500 = vpack.c.b16 %v6996, %v6989
    %v7501 = vpack.c.b16 %v6997, %v6990
    %v7502 = vpack.c.b16 %v6998, %v6991
    %v7503 = vpack.c.b16 %v6999, %v6992
    %v7504 = vpack.c.b16 %v7000, %v6993
    %v7505 = vpack.c.b16 %v7001, %v6994
    %v7506 = vpack.c.b16 %v7002, %v6995
    %v7507 = vpack.c.b16 %v7010, %v7003
    %v7508 = vpack.c.b16 %v7011, %v7004
    %v7509 = vpack.c.b16 %v7012, %v7005
    %v7510 = vpack.c.b16 %v7013, %v7006
    %v7511 = vpack.c.b16 %v7014, %v7007
    %v7512 = vpack.c.b16 %v7015, %v7008
    %v7513 = vpack.c.b16 %v7016, %v7009
    %v7514 = vpack.c.b16 %v7024, %v7017
    %v7515 = vpack.c.b16 %v7025, %v7018
    %v7516 = vpack.c.b16 %v7026, %v7019
    %v7517 = vpack.c.b16 %v7027, %v7020
    %v7518 = vpack.c.b16 %v7028, %v7021
    %v7519 = vpack.c.b16 %v7029, %v7022
    %v7520 = vpack.c.b16 %v7030, %v7023
    %v7521 = vpack.c.b16 %v7038, %v7031
    %v7522 = vpack.c.b16 %v7039, %v7032
    %v7523 = vpack.c.b16 %v7040, %v7033
    %v7524 = vpack.c.b16 %v7041, %v7034
    %v7525 = vpack.c.b16 %v7042, %v7035
    %v7526 = vpack.c.b16 %v7043, %v7036
    %v7527 = vpack.c.b16 %v7044, %v7037
    %v7528 = vpack.c.b16 %v7052, %v7045
    %v7529 = vpack.c.b16 %v7053, %v7046
    %v7530 = vpack.c.b16 %v7054, %v7047
    %v7531 = vpack.c.b16 %v7055, %v7048
    %v7532 = vpack.c.b16 %v7056, %v7049
    %v7533 = vpack.c.b16 %v7057, %v7050
    %v7534 = vpack.c.b16 %v7058, %v7051
    %v7535 = vpack.c.b16 %v7066, %v7059
    %v7536 = vpack.c.b16 %v7067, %v7060
    %v7537 = vpack.c.b16 %v7068, %v7061
    %v7538 = vpack.c.b16 %v7069, %v7062
    %v7539 = vpack.c.b16 %v7070, %v7063
    %v7540 = vpack.c.b16 %v7071, %v7064
    %v7541 = vpack.c.b16 %v7072, %v7065
    %v7542 = vpack.c.b16 %v7080, %v7073
    %v7543 = vpack.c.b16 %v7081, %v7074
    %v7544 = vpack.c.b16 %v7082, %v7075
    %v7545 = vpack.c.b16 %v7083, %v7076
    %v7546 = vpack.c.b16 %v7084, %v7077
    %v7547 = vpack.c.b16 %v7085, %v7078
    %v7548 = vpack.c.b16 %v7086, %v7079
    %v7549 = vpack.c.b16 %v7094, %v7087
    %v7550 = vpack.c.b16 %v7095, %v7088
    %v7551 = vpack.c.b16 %v7096, %v7089
    %v7552 = vpack.c.b16 %v7097, %v7090
    %v7553 = vpack.c.b16 %v7098, %v7091
    %v7554 = vpack.c.b16 %v7099, %v7092
    %v7555 = vpack.c.b16 %v7100, %v7093
    %v7556 = vpack.c.b16 %v7108, %v7101
    %v7557 = vpack.c.b16 %v7109, %v7102
    %v7558 = vpack.c.b16 %v7110, %v7103
    %v7559 = vpack.c.b16 %v7111, %v7104
    %v7560 = vpack.c.b16 %v7112, %v7105
    %v7561 = vpack.c.b16 %v7113, %v7106
    %v7562 = vpack.c.b16 %v7114, %v7107
    %v7563 = vpack.c.b16 %v7122, %v7115
    %v7564 = vpack.c.b16 %v7123, %v7116
    %v7565 = vpack.c.b16 %v7124, %v7117
    %v7566 = vpack.c.b16 %v7125, %v7118
    %v7567 = vpack.c.b16 %v7126, %v7119
    %v7568 = vpack.c.b16 %v7127, %v7120
    %v7569 = vpack.c.b16 %v7128, %v7121
    %v7570 = vpack.c.b16 %v7136, %v7129
    %v7571 = vpack.c.b16 %v7137, %v7130
    %v7572 = vpack.c.b16 %v7138, %v7131
    %v7573 = vpack.c.b16 %v7139, %v7132
    %v7574 = vpack.c.b16 %v7140, %v7133
    %v7575 = vpack.c.b16 %v7141, %v7134
    %v7576 = vpack.c.b16 %v7142, %v7135
    %v7577 = vpack.c.b16 %v7150, %v7143
    %v7578 = vpack.c.b16 %v7151, %v7144
    %v7579 = vpack.c.b16 %v7152, %v7145
    %v7580 = vpack.c.b16 %v7153, %v7146
    %v7581 = vpack.c.b16 %v7154, %v7147
    %v7582 = vpack.c.b16 %v7155, %v7148
    %v7583 = vpack.c.b16 %v7156, %v7149
    %v7584 = vpack.c.b16 %v7164, %v7157
    %v7585 = vpack.c.b16 %v7165, %v7158
    %v7586 = vpack.c.b16 %v7166, %v7159
    %v7587 = vpack.c.b16 %v7167, %v7160
    %v7588 = vpack.c.b16 %v7168, %v7161
    %v7589 = vpack.c.b16 %v7169, %v7162
    %v7590 = vpack.c.b16 %v7170, %v7163
    %v7591 = vpack.c.b16 %v7178, %v7171
    %v7592 = vpack.c.b16 %v7179, %v7172
    %v7593 = vpack.c.b16 %v7180, %v7173
    %v7594 = vpack.c.b16 %v7181, %v7174
    %v7595 = vpack.c.b16 %v7182, %v7175
    %v7596 = vpack.c.b16 %v7183, %v7176
    %v7597 = vpack.c.b16 %v7184, %v7177
    %v7598 = vpack.c.b16 %v7192, %v7185
    %v7599 = vpack.c.b16 %v7193, %v7186
    %v7600 = vpack.c.b16 %v7194, %v7187
    %v7601 = vpack.c.b16 %v7195, %v7188
    %v7602 = vpack.c.b16 %v7196, %v7189
    %v7603 = vpack.c.b16 %v7197, %v7190
    %v7604 = vpack.c.b16 %v7198, %v7191
    %v7605 = vpack.c.b16 %v7206, %v7199
    %v7606 = vpack.c.b16 %v7207, %v7200
    %v7607 = vpack.c.b16 %v7208, %v7201
    %v7608 = vpack.c.b16 %v7209, %v7202
    %v7609 = vpack.c.b16 %v7210, %v7203
    %v7610 = vpack.c.b16 %v7211, %v7204
    %v7611 = vpack.c.b16 %v7212, %v7205
    %v7612 = vpack.c.b16 %v7220, %v7213
    %v7613 = vpack.c.b16 %v7221, %v7214
    %v7614 = vpack.c.b16 %v7222, %v7215
    %v7615 = vpack.c.b16 %v7223, %v7216
    %v7616 = vpack.c.b16 %v7224, %v7217
    %v7617 = vpack.c.b16 %v7225, %v7218
    %v7618 = vpack.c.b16 %v7226, %v7219
    %8011 = vmatpush.bf16.msra.mxu0 %v7276
    %8012 = vmatpush.bf16.msra.mxu0 %v7269
    %8013 = vmatpush.bf16.msra.mxu0 %v7262
    %8014 = vmatpush.bf16.msra.mxu0 %v7255
    %8015 = vmatpush.bf16.msra.mxu0 %v7248
    %8016 = vmatpush.bf16.msra.mxu0 %v7241
    %8017 = vmatpush.bf16.msra.mxu0 %v7234
    %8018 = vmatpush.bf16.msra.mxu0 %v7227
    %8019 = vmatmul.bf16.gmra.mxu0 %v5475
    %v8020 = vpop.f32.mrf.mxu0
    %v8021 = vadd.f32 %v5981, %v8020
    %v8022 = vpop.f32.mrf.mxu0
    %v8023 = vadd.f32 %v5981, %v8022
    %8024 = vmatmul.bf16.gmra.mxu0 %v5482
    %v8025 = vpop.f32.mrf.mxu0
    %v8026 = vadd.f32 %v5981, %v8025
    %v8027 = vpop.f32.mrf.mxu0
    %v8028 = vadd.f32 %v5981, %v8027
    %8029 = vmatmul.bf16.gmra.mxu0 %v5489
    %v8030 = vpop.f32.mrf.mxu0
    %v8031 = vadd.f32 %v5981, %v8030
    %v8032 = vpop.f32.mrf.mxu0
    %v8033 = vadd.f32 %v5981, %v8032
    %8034 = vmatmul.bf16.gmra.mxu0 %v5496
    %v8035 = vpop.f32.mrf.mxu0
    %v8036 = vadd.f32 %v5981, %v8035
    %v8037 = vpop.f32.mrf.mxu0
    %v8038 = vadd.f32 %v5981, %v8037
    %8039 = vmatmul.bf16.gmra.mxu0 %v5503
    %v8040 = vpop.f32.mrf.mxu0
    %v8041 = vadd.f32 %v5981, %v8040
    %v8042 = vpop.f32.mrf.mxu0
    %v8043 = vadd.f32 %v5981, %v8042
    %8044 = vmatmul.bf16.gmra.mxu0 %v5510
    %v8045 = vpop.f32.mrf.mxu0
    %v8046 = vadd.f32 %v5981, %v8045
    %v8047 = vpop.f32.mrf.mxu0
    %v8048 = vadd.f32 %v5981, %v8047
    %8049 = vmatmul.bf16.gmra.mxu0 %v5517
    %v8050 = vpop.f32.mrf.mxu0
    %v8051 = vadd.f32 %v5981, %v8050
    %v8052 = vpop.f32.mrf.mxu0
    %v8053 = vadd.f32 %v5981, %v8052
    %8054 = vmatmul.bf16.gmra.mxu0 %v5524
    %v8055 = vpop.f32.mrf.mxu0
    %v8056 = vadd.f32 %v5981, %v8055
    %v8057 = vpop.f32.mrf.mxu0
    %v8058 = vadd.f32 %v5981, %v8057
    %8059 = vdwg.mxu0
    %8060 = vmatpush.bf16.msra.mxu0 %v7332
    %8061 = vmatpush.bf16.msra.mxu0 %v7325
    %8062 = vmatpush.bf16.msra.mxu0 %v7318
    %8063 = vmatpush.bf16.msra.mxu0 %v7311
    %8064 = vmatpush.bf16.msra.mxu0 %v7304
    %8065 = vmatpush.bf16.msra.mxu0 %v7297
    %8066 = vmatpush.bf16.msra.mxu0 %v7290
    %8067 = vmatpush.bf16.msra.mxu0 %v7283
    %8068 = vmatmul.bf16.gmra.mxu0 %v5476
    %v8069 = vpop.f32.mrf.mxu0
    %v8070 = vadd.f32 %v8021, %v8069
    %v8071 = vpop.f32.mrf.mxu0
    %v8072 = vadd.f32 %v8023, %v8071
    %8073 = vmatmul.bf16.gmra.mxu0 %v5483
    %v8074 = vpop.f32.mrf.mxu0
    %v8075 = vadd.f32 %v8026, %v8074
    %v8076 = vpop.f32.mrf.mxu0
    %v8077 = vadd.f32 %v8028, %v8076
    %8078 = vmatmul.bf16.gmra.mxu0 %v5490
    %v8079 = vpop.f32.mrf.mxu0
    %v8080 = vadd.f32 %v8031, %v8079
    %v8081 = vpop.f32.mrf.mxu0
    %v8082 = vadd.f32 %v8033, %v8081
    %8083 = vmatmul.bf16.gmra.mxu0 %v5497
    %v8084 = vpop.f32.mrf.mxu0
    %v8085 = vadd.f32 %v8036, %v8084
    %v8086 = vpop.f32.mrf.mxu0
    %v8087 = vadd.f32 %v8038, %v8086
    %8088 = vmatmul.bf16.gmra.mxu0 %v5504
    %v8089 = vpop.f32.mrf.mxu0
    %v8090 = vadd.f32 %v8041, %v8089
    %v8091 = vpop.f32.mrf.mxu0
    %v8092 = vadd.f32 %v8043, %v8091
    %8093 = vmatmul.bf16.gmra.mxu0 %v5511
    %v8094 = vpop.f32.mrf.mxu0
    %v8095 = vadd.f32 %v8046, %v8094
    %v8096 = vpop.f32.mrf.mxu0
    %v8097 = vadd.f32 %v8048, %v8096
    %8098 = vmatmul.bf16.gmra.mxu0 %v5518
    %v8099 = vpop.f32.mrf.mxu0
    %v8100 = vadd.f32 %v8051, %v8099
    %v8101 = vpop.f32.mrf.mxu0
    %v8102 = vadd.f32 %v8053, %v8101
    %8103 = vmatmul.bf16.gmra.mxu0 %v5525
    %v8104 = vpop.f32.mrf.mxu0
    %v8105 = vadd.f32 %v8056, %v8104
    %v8106 = vpop.f32.mrf.mxu0
    %v8107 = vadd.f32 %v8058, %v8106
    %8108 = vdwg.mxu0
    %8109 = vmatpush.bf16.msra.mxu0 %v7388
    %8110 = vmatpush.bf16.msra.mxu0 %v7381
    %8111 = vmatpush.bf16.msra.mxu0 %v7374
    %8112 = vmatpush.bf16.msra.mxu0 %v7367
    %8113 = vmatpush.bf16.msra.mxu0 %v7360
    %8114 = vmatpush.bf16.msra.mxu0 %v7353
    %8115 = vmatpush.bf16.msra.mxu0 %v7346
    %8116 = vmatpush.bf16.msra.mxu0 %v7339
    %8117 = vmatmul.bf16.gmra.mxu0 %v5477
    %v8118 = vpop.f32.mrf.mxu0
    %v8119 = vadd.f32 %v8070, %v8118
    %v8120 = vpop.f32.mrf.mxu0
    %v8121 = vadd.f32 %v8072, %v8120
    %8122 = vmatmul.bf16.gmra.mxu0 %v5484
    %v8123 = vpop.f32.mrf.mxu0
    %v8124 = vadd.f32 %v8075, %v8123
    %v8125 = vpop.f32.mrf.mxu0
    %v8126 = vadd.f32 %v8077, %v8125
    %8127 = vmatmul.bf16.gmra.mxu0 %v5491
    %v8128 = vpop.f32.mrf.mxu0
    %v8129 = vadd.f32 %v8080, %v8128
    %v8130 = vpop.f32.mrf.mxu0
    %v8131 = vadd.f32 %v8082, %v8130
    %8132 = vmatmul.bf16.gmra.mxu0 %v5498
    %v8133 = vpop.f32.mrf.mxu0
    %v8134 = vadd.f32 %v8085, %v8133
    %v8135 = vpop.f32.mrf.mxu0
    %v8136 = vadd.f32 %v8087, %v8135
    %8137 = vmatmul.bf16.gmra.mxu0 %v5505
    %v8138 = vpop.f32.mrf.mxu0
    %v8139 = vadd.f32 %v8090, %v8138
    %v8140 = vpop.f32.mrf.mxu0
    %v8141 = vadd.f32 %v8092, %v8140
    %8142 = vmatmul.bf16.gmra.mxu0 %v5512
    %v8143 = vpop.f32.mrf.mxu0
    %v8144 = vadd.f32 %v8095, %v8143
    %v8145 = vpop.f32.mrf.mxu0
    %v8146 = vadd.f32 %v8097, %v8145
    %8147 = vmatmul.bf16.gmra.mxu0 %v5519
    %v8148 = vpop.f32.mrf.mxu0
    %v8149 = vadd.f32 %v8100, %v8148
    %v8150 = vpop.f32.mrf.mxu0
    %v8151 = vadd.f32 %v8102, %v8150
    %8152 = vmatmul.bf16.gmra.mxu0 %v5526
    %v8153 = vpop.f32.mrf.mxu0
    %v8154 = vadd.f32 %v8105, %v8153
    %v8155 = vpop.f32.mrf.mxu0
    %v8156 = vadd.f32 %v8107, %v8155
    %8157 = vdwg.mxu0
    %8158 = vmatpush.bf16.msra.mxu0 %v7444
    %8159 = vmatpush.bf16.msra.mxu0 %v7437
    %8160 = vmatpush.bf16.msra.mxu0 %v7430
    %8161 = vmatpush.bf16.msra.mxu0 %v7423
    %8162 = vmatpush.bf16.msra.mxu0 %v7416
    %8163 = vmatpush.bf16.msra.mxu0 %v7409
    %8164 = vmatpush.bf16.msra.mxu0 %v7402
    %8165 = vmatpush.bf16.msra.mxu0 %v7395
    %8166 = vmatmul.bf16.gmra.mxu0 %v5478
    %v8167 = vpop.f32.mrf.mxu0
    %v8168 = vadd.f32 %v8119, %v8167
    %v8169 = vpop.f32.mrf.mxu0
    %v8170 = vadd.f32 %v8121, %v8169
    %8171 = vmatmul.bf16.gmra.mxu0 %v5485
    %v8172 = vpop.f32.mrf.mxu0
    %v8173 = vadd.f32 %v8124, %v8172
    %v8174 = vpop.f32.mrf.mxu0
    %v8175 = vadd.f32 %v8126, %v8174
    %8176 = vmatmul.bf16.gmra.mxu0 %v5492
    %v8177 = vpop.f32.mrf.mxu0
    %v8178 = vadd.f32 %v8129, %v8177
    %v8179 = vpop.f32.mrf.mxu0
    %v8180 = vadd.f32 %v8131, %v8179
    %8181 = vmatmul.bf16.gmra.mxu0 %v5499
    %v8182 = vpop.f32.mrf.mxu0
    %v8183 = vadd.f32 %v8134, %v8182
    %v8184 = vpop.f32.mrf.mxu0
    %v8185 = vadd.f32 %v8136, %v8184
    %8186 = vmatmul.bf16.gmra.mxu0 %v5506
    %v8187 = vpop.f32.mrf.mxu0
    %v8188 = vadd.f32 %v8139, %v8187
    %v8189 = vpop.f32.mrf.mxu0
    %v8190 = vadd.f32 %v8141, %v8189
    %8191 = vmatmul.bf16.gmra.mxu0 %v5513
    %v8192 = vpop.f32.mrf.mxu0
    %v8193 = vadd.f32 %v8144, %v8192
    %v8194 = vpop.f32.mrf.mxu0
    %v8195 = vadd.f32 %v8146, %v8194
    %8196 = vmatmul.bf16.gmra.mxu0 %v5520
    %v8197 = vpop.f32.mrf.mxu0
    %v8198 = vadd.f32 %v8149, %v8197
    %v8199 = vpop.f32.mrf.mxu0
    %v8200 = vadd.f32 %v8151, %v8199
    %8201 = vmatmul.bf16.gmra.mxu0 %v5527
    %v8202 = vpop.f32.mrf.mxu0
    %v8203 = vadd.f32 %v8154, %v8202
    %v8204 = vpop.f32.mrf.mxu0
    %v8205 = vadd.f32 %v8156, %v8204
    %8206 = vdwg.mxu0
    %8207 = vmatpush.bf16.msra.mxu0 %v7500
    %8208 = vmatpush.bf16.msra.mxu0 %v7493
    %8209 = vmatpush.bf16.msra.mxu0 %v7486
    %8210 = vmatpush.bf16.msra.mxu0 %v7479
    %8211 = vmatpush.bf16.msra.mxu0 %v7472
    %8212 = vmatpush.bf16.msra.mxu0 %v7465
    %8213 = vmatpush.bf16.msra.mxu0 %v7458
    %8214 = vmatpush.bf16.msra.mxu0 %v7451
    %8215 = vmatmul.bf16.gmra.mxu0 %v5479
    %v8216 = vpop.f32.mrf.mxu0
    %v8217 = vadd.f32 %v8168, %v8216
    %v8218 = vpop.f32.mrf.mxu0
    %v8219 = vadd.f32 %v8170, %v8218
    %8220 = vmatmul.bf16.gmra.mxu0 %v5486
    %v8221 = vpop.f32.mrf.mxu0
    %v8222 = vadd.f32 %v8173, %v8221
    %v8223 = vpop.f32.mrf.mxu0
    %v8224 = vadd.f32 %v8175, %v8223
    %8225 = vmatmul.bf16.gmra.mxu0 %v5493
    %v8226 = vpop.f32.mrf.mxu0
    %v8227 = vadd.f32 %v8178, %v8226
    %v8228 = vpop.f32.mrf.mxu0
    %v8229 = vadd.f32 %v8180, %v8228
    %8230 = vmatmul.bf16.gmra.mxu0 %v5500
    %v8231 = vpop.f32.mrf.mxu0
    %v8232 = vadd.f32 %v8183, %v8231
    %v8233 = vpop.f32.mrf.mxu0
    %v8234 = vadd.f32 %v8185, %v8233
    %8235 = vmatmul.bf16.gmra.mxu0 %v5507
    %v8236 = vpop.f32.mrf.mxu0
    %v8237 = vadd.f32 %v8188, %v8236
    %v8238 = vpop.f32.mrf.mxu0
    %v8239 = vadd.f32 %v8190, %v8238
    %8240 = vmatmul.bf16.gmra.mxu0 %v5514
    %v8241 = vpop.f32.mrf.mxu0
    %v8242 = vadd.f32 %v8193, %v8241
    %v8243 = vpop.f32.mrf.mxu0
    %v8244 = vadd.f32 %v8195, %v8243
    %8245 = vmatmul.bf16.gmra.mxu0 %v5521
    %v8246 = vpop.f32.mrf.mxu0
    %v8247 = vadd.f32 %v8198, %v8246
    %v8248 = vpop.f32.mrf.mxu0
    %v8249 = vadd.f32 %v8200, %v8248
    %8250 = vmatmul.bf16.gmra.mxu0 %v5528
    %v8251 = vpop.f32.mrf.mxu0
    %v8252 = vadd.f32 %v8203, %v8251
    %v8253 = vpop.f32.mrf.mxu0
    %v8254 = vadd.f32 %v8205, %v8253
    %8255 = vdwg.mxu0
    %8256 = vmatpush.bf16.msra.mxu0 %v7556
    %8257 = vmatpush.bf16.msra.mxu0 %v7549
    %8258 = vmatpush.bf16.msra.mxu0 %v7542
    %8259 = vmatpush.bf16.msra.mxu0 %v7535
    %8260 = vmatpush.bf16.msra.mxu0 %v7528
    %8261 = vmatpush.bf16.msra.mxu0 %v7521
    %8262 = vmatpush.bf16.msra.mxu0 %v7514
    %8263 = vmatpush.bf16.msra.mxu0 %v7507
    %8264 = vmatmul.bf16.gmra.mxu0 %v5480
    %v8265 = vpop.f32.mrf.mxu0
    %v8266 = vadd.f32 %v8217, %v8265
    %v8267 = vpop.f32.mrf.mxu0
    %v8268 = vadd.f32 %v8219, %v8267
    %8269 = vmatmul.bf16.gmra.mxu0 %v5487
    %v8270 = vpop.f32.mrf.mxu0
    %v8271 = vadd.f32 %v8222, %v8270
    %v8272 = vpop.f32.mrf.mxu0
    %v8273 = vadd.f32 %v8224, %v8272
    %8274 = vmatmul.bf16.gmra.mxu0 %v5494
    %v8275 = vpop.f32.mrf.mxu0
    %v8276 = vadd.f32 %v8227, %v8275
    %v8277 = vpop.f32.mrf.mxu0
    %v8278 = vadd.f32 %v8229, %v8277
    %8279 = vmatmul.bf16.gmra.mxu0 %v5501
    %v8280 = vpop.f32.mrf.mxu0
    %v8281 = vadd.f32 %v8232, %v8280
    %v8282 = vpop.f32.mrf.mxu0
    %v8283 = vadd.f32 %v8234, %v8282
    %8284 = vmatmul.bf16.gmra.mxu0 %v5508
    %v8285 = vpop.f32.mrf.mxu0
    %v8286 = vadd.f32 %v8237, %v8285
    %v8287 = vpop.f32.mrf.mxu0
    %v8288 = vadd.f32 %v8239, %v8287
    %8289 = vmatmul.bf16.gmra.mxu0 %v5515
    %v8290 = vpop.f32.mrf.mxu0
    %v8291 = vadd.f32 %v8242, %v8290
    %v8292 = vpop.f32.mrf.mxu0
    %v8293 = vadd.f32 %v8244, %v8292
    %8294 = vmatmul.bf16.gmra.mxu0 %v5522
    %v8295 = vpop.f32.mrf.mxu0
    %v8296 = vadd.f32 %v8247, %v8295
    %v8297 = vpop.f32.mrf.mxu0
    %v8298 = vadd.f32 %v8249, %v8297
    %8299 = vmatmul.bf16.gmra.mxu0 %v5529
    %v8300 = vpop.f32.mrf.mxu0
    %v8301 = vadd.f32 %v8252, %v8300
    %v8302 = vpop.f32.mrf.mxu0
    %v8303 = vadd.f32 %v8254, %v8302
    %8304 = vdwg.mxu0
    %8305 = vmatpush.bf16.msra.mxu0 %v7612
    %8306 = vmatpush.bf16.msra.mxu0 %v7605
    %8307 = vmatpush.bf16.msra.mxu0 %v7598
    %8308 = vmatpush.bf16.msra.mxu0 %v7591
    %8309 = vmatpush.bf16.msra.mxu0 %v7584
    %8310 = vmatpush.bf16.msra.mxu0 %v7577
    %8311 = vmatpush.bf16.msra.mxu0 %v7570
    %8312 = vmatpush.bf16.msra.mxu0 %v7563
    %8313 = vmatmul.bf16.gmra.mxu0 %v5481
    %v8314 = vpop.f32.mrf.mxu0
    %v8315 = vadd.f32 %v8266, %v8314
    %v8316 = vpop.f32.mrf.mxu0
    %v8317 = vadd.f32 %v8268, %v8316
    %8318 = vmatmul.bf16.gmra.mxu0 %v5488
    %v8319 = vpop.f32.mrf.mxu0
    %v8320 = vadd.f32 %v8271, %v8319
    %v8321 = vpop.f32.mrf.mxu0
    %v8322 = vadd.f32 %v8273, %v8321
    %8323 = vmatmul.bf16.gmra.mxu0 %v5495
    %v8324 = vpop.f32.mrf.mxu0
    %v8325 = vadd.f32 %v8276, %v8324
    %v8326 = vpop.f32.mrf.mxu0
    %v8327 = vadd.f32 %v8278, %v8326
    %8328 = vmatmul.bf16.gmra.mxu0 %v5502
    %v8329 = vpop.f32.mrf.mxu0
    %v8330 = vadd.f32 %v8281, %v8329
    %v8331 = vpop.f32.mrf.mxu0
    %v8332 = vadd.f32 %v8283, %v8331
    %8333 = vmatmul.bf16.gmra.mxu0 %v5509
    %v8334 = vpop.f32.mrf.mxu0
    %v8335 = vadd.f32 %v8286, %v8334
    %v8336 = vpop.f32.mrf.mxu0
    %v8337 = vadd.f32 %v8288, %v8336
    %8338 = vmatmul.bf16.gmra.mxu0 %v5516
    %v8339 = vpop.f32.mrf.mxu0
    %v8340 = vadd.f32 %v8291, %v8339
    %v8341 = vpop.f32.mrf.mxu0
    %v8342 = vadd.f32 %v8293, %v8341
    %8343 = vmatmul.bf16.gmra.mxu0 %v5523
    %v8344 = vpop.f32.mrf.mxu0
    %v8345 = vadd.f32 %v8296, %v8344
    %v8346 = vpop.f32.mrf.mxu0
    %v8347 = vadd.f32 %v8298, %v8346
    %8348 = vmatmul.bf16.gmra.mxu0 %v5530
    %v8349 = vpop.f32.mrf.mxu0
    %v8350 = vadd.f32 %v8301, %v8349
    %v8351 = vpop.f32.mrf.mxu0
    %v8352 = vadd.f32 %v8303, %v8351
    %8353 = vdwg.mxu0
    %8354 = vmatpush.bf16.msra.mxu0 %v7277
    %8355 = vmatpush.bf16.msra.mxu0 %v7270
    %8356 = vmatpush.bf16.msra.mxu0 %v7263
    %8357 = vmatpush.bf16.msra.mxu0 %v7256
    %8358 = vmatpush.bf16.msra.mxu0 %v7249
    %8359 = vmatpush.bf16.msra.mxu0 %v7242
    %8360 = vmatpush.bf16.msra.mxu0 %v7235
    %8361 = vmatpush.bf16.msra.mxu0 %v7228
    %8362 = vmatmul.bf16.gmra.mxu0 %v5475
    %v8363 = vpop.f32.mrf.mxu0
    %v8364 = vadd.f32 %v5982, %v8363
    %v8365 = vpop.f32.mrf.mxu0
    %v8366 = vadd.f32 %v5982, %v8365
    %8367 = vmatmul.bf16.gmra.mxu0 %v5482
    %v8368 = vpop.f32.mrf.mxu0
    %v8369 = vadd.f32 %v5982, %v8368
    %v8370 = vpop.f32.mrf.mxu0
    %v8371 = vadd.f32 %v5982, %v8370
    %8372 = vmatmul.bf16.gmra.mxu0 %v5489
    %v8373 = vpop.f32.mrf.mxu0
    %v8374 = vadd.f32 %v5982, %v8373
    %v8375 = vpop.f32.mrf.mxu0
    %v8376 = vadd.f32 %v5982, %v8375
    %8377 = vmatmul.bf16.gmra.mxu0 %v5496
    %v8378 = vpop.f32.mrf.mxu0
    %v8379 = vadd.f32 %v5982, %v8378
    %v8380 = vpop.f32.mrf.mxu0
    %v8381 = vadd.f32 %v5982, %v8380
    %8382 = vmatmul.bf16.gmra.mxu0 %v5503
    %v8383 = vpop.f32.mrf.mxu0
    %v8384 = vadd.f32 %v5982, %v8383
    %v8385 = vpop.f32.mrf.mxu0
    %v8386 = vadd.f32 %v5982, %v8385
    %8387 = vmatmul.bf16.gmra.mxu0 %v5510
    %v8388 = vpop.f32.mrf.mxu0
    %v8389 = vadd.f32 %v5982, %v8388
    %v8390 = vpop.f32.mrf.mxu0
    %v8391 = vadd.f32 %v5982, %v8390
    %8392 = vmatmul.bf16.gmra.mxu0 %v5517
    %v8393 = vpop.f32.mrf.mxu0
    %v8394 = vadd.f32 %v5982, %v8393
    %v8395 = vpop.f32.mrf.mxu0
    %v8396 = vadd.f32 %v5982, %v8395
    %8397 = vmatmul.bf16.gmra.mxu0 %v5524
    %v8398 = vpop.f32.mrf.mxu0
    %v8399 = vadd.f32 %v5982, %v8398
    %v8400 = vpop.f32.mrf.mxu0
    %v8401 = vadd.f32 %v5982, %v8400
    %8402 = vdwg.mxu0
    %8403 = vmatpush.bf16.msra.mxu0 %v7333
    %8404 = vmatpush.bf16.msra.mxu0 %v7326
    %8405 = vmatpush.bf16.msra.mxu0 %v7319
    %8406 = vmatpush.bf16.msra.mxu0 %v7312
    %8407 = vmatpush.bf16.msra.mxu0 %v7305
    %8408 = vmatpush.bf16.msra.mxu0 %v7298
    %8409 = vmatpush.bf16.msra.mxu0 %v7291
    %8410 = vmatpush.bf16.msra.mxu0 %v7284
    %8411 = vmatmul.bf16.gmra.mxu0 %v5476
    %v8412 = vpop.f32.mrf.mxu0
    %v8413 = vadd.f32 %v8364, %v8412
    %v8414 = vpop.f32.mrf.mxu0
    %v8415 = vadd.f32 %v8366, %v8414
    %8416 = vmatmul.bf16.gmra.mxu0 %v5483
    %v8417 = vpop.f32.mrf.mxu0
    %v8418 = vadd.f32 %v8369, %v8417
    %v8419 = vpop.f32.mrf.mxu0
    %v8420 = vadd.f32 %v8371, %v8419
    %8421 = vmatmul.bf16.gmra.mxu0 %v5490
    %v8422 = vpop.f32.mrf.mxu0
    %v8423 = vadd.f32 %v8374, %v8422
    %v8424 = vpop.f32.mrf.mxu0
    %v8425 = vadd.f32 %v8376, %v8424
    %8426 = vmatmul.bf16.gmra.mxu0 %v5497
    %v8427 = vpop.f32.mrf.mxu0
    %v8428 = vadd.f32 %v8379, %v8427
    %v8429 = vpop.f32.mrf.mxu0
    %v8430 = vadd.f32 %v8381, %v8429
    %8431 = vmatmul.bf16.gmra.mxu0 %v5504
    %v8432 = vpop.f32.mrf.mxu0
    %v8433 = vadd.f32 %v8384, %v8432
    %v8434 = vpop.f32.mrf.mxu0
    %v8435 = vadd.f32 %v8386, %v8434
    %8436 = vmatmul.bf16.gmra.mxu0 %v5511
    %v8437 = vpop.f32.mrf.mxu0
    %v8438 = vadd.f32 %v8389, %v8437
    %v8439 = vpop.f32.mrf.mxu0
    %v8440 = vadd.f32 %v8391, %v8439
    %8441 = vmatmul.bf16.gmra.mxu0 %v5518
    %v8442 = vpop.f32.mrf.mxu0
    %v8443 = vadd.f32 %v8394, %v8442
    %v8444 = vpop.f32.mrf.mxu0
    %v8445 = vadd.f32 %v8396, %v8444
    %8446 = vmatmul.bf16.gmra.mxu0 %v5525
    %v8447 = vpop.f32.mrf.mxu0
    %v8448 = vadd.f32 %v8399, %v8447
    %v8449 = vpop.f32.mrf.mxu0
    %v8450 = vadd.f32 %v8401, %v8449
    %8451 = vdwg.mxu0
    %8452 = vmatpush.bf16.msra.mxu0 %v7389
    %8453 = vmatpush.bf16.msra.mxu0 %v7382
    %8454 = vmatpush.bf16.msra.mxu0 %v7375
    %8455 = vmatpush.bf16.msra.mxu0 %v7368
    %8456 = vmatpush.bf16.msra.mxu0 %v7361
    %8457 = vmatpush.bf16.msra.mxu0 %v7354
    %8458 = vmatpush.bf16.msra.mxu0 %v7347
    %8459 = vmatpush.bf16.msra.mxu0 %v7340
    %8460 = vmatmul.bf16.gmra.mxu0 %v5477
    %v8461 = vpop.f32.mrf.mxu0
    %v8462 = vadd.f32 %v8413, %v8461
    %v8463 = vpop.f32.mrf.mxu0
    %v8464 = vadd.f32 %v8415, %v8463
    %8465 = vmatmul.bf16.gmra.mxu0 %v5484
    %v8466 = vpop.f32.mrf.mxu0
    %v8467 = vadd.f32 %v8418, %v8466
    %v8468 = vpop.f32.mrf.mxu0
    %v8469 = vadd.f32 %v8420, %v8468
    %8470 = vmatmul.bf16.gmra.mxu0 %v5491
    %v8471 = vpop.f32.mrf.mxu0
    %v8472 = vadd.f32 %v8423, %v8471
    %v8473 = vpop.f32.mrf.mxu0
    %v8474 = vadd.f32 %v8425, %v8473
    %8475 = vmatmul.bf16.gmra.mxu0 %v5498
    %v8476 = vpop.f32.mrf.mxu0
    %v8477 = vadd.f32 %v8428, %v8476
    %v8478 = vpop.f32.mrf.mxu0
    %v8479 = vadd.f32 %v8430, %v8478
    %8480 = vmatmul.bf16.gmra.mxu0 %v5505
    %v8481 = vpop.f32.mrf.mxu0
    %v8482 = vadd.f32 %v8433, %v8481
    %v8483 = vpop.f32.mrf.mxu0
    %v8484 = vadd.f32 %v8435, %v8483
    %8485 = vmatmul.bf16.gmra.mxu0 %v5512
    %v8486 = vpop.f32.mrf.mxu0
    %v8487 = vadd.f32 %v8438, %v8486
    %v8488 = vpop.f32.mrf.mxu0
    %v8489 = vadd.f32 %v8440, %v8488
    %8490 = vmatmul.bf16.gmra.mxu0 %v5519
    %v8491 = vpop.f32.mrf.mxu0
    %v8492 = vadd.f32 %v8443, %v8491
    %v8493 = vpop.f32.mrf.mxu0
    %v8494 = vadd.f32 %v8445, %v8493
    %8495 = vmatmul.bf16.gmra.mxu0 %v5526
    %v8496 = vpop.f32.mrf.mxu0
    %v8497 = vadd.f32 %v8448, %v8496
    %v8498 = vpop.f32.mrf.mxu0
    %v8499 = vadd.f32 %v8450, %v8498
    %8500 = vdwg.mxu0
    %8501 = vmatpush.bf16.msra.mxu0 %v7445
    %8502 = vmatpush.bf16.msra.mxu0 %v7438
    %8503 = vmatpush.bf16.msra.mxu0 %v7431
    %8504 = vmatpush.bf16.msra.mxu0 %v7424
    %8505 = vmatpush.bf16.msra.mxu0 %v7417
    %8506 = vmatpush.bf16.msra.mxu0 %v7410
    %8507 = vmatpush.bf16.msra.mxu0 %v7403
    %8508 = vmatpush.bf16.msra.mxu0 %v7396
    %8509 = vmatmul.bf16.gmra.mxu0 %v5478
    %v8510 = vpop.f32.mrf.mxu0
    %v8511 = vadd.f32 %v8462, %v8510
    %v8512 = vpop.f32.mrf.mxu0
    %v8513 = vadd.f32 %v8464, %v8512
    %8514 = vmatmul.bf16.gmra.mxu0 %v5485
    %v8515 = vpop.f32.mrf.mxu0
    %v8516 = vadd.f32 %v8467, %v8515
    %v8517 = vpop.f32.mrf.mxu0
    %v8518 = vadd.f32 %v8469, %v8517
    %8519 = vmatmul.bf16.gmra.mxu0 %v5492
    %v8520 = vpop.f32.mrf.mxu0
    %v8521 = vadd.f32 %v8472, %v8520
    %v8522 = vpop.f32.mrf.mxu0
    %v8523 = vadd.f32 %v8474, %v8522
    %8524 = vmatmul.bf16.gmra.mxu0 %v5499
    %v8525 = vpop.f32.mrf.mxu0
    %v8526 = vadd.f32 %v8477, %v8525
    %v8527 = vpop.f32.mrf.mxu0
    %v8528 = vadd.f32 %v8479, %v8527
    %8529 = vmatmul.bf16.gmra.mxu0 %v5506
    %v8530 = vpop.f32.mrf.mxu0
    %v8531 = vadd.f32 %v8482, %v8530
    %v8532 = vpop.f32.mrf.mxu0
    %v8533 = vadd.f32 %v8484, %v8532
    %8534 = vmatmul.bf16.gmra.mxu0 %v5513
    %v8535 = vpop.f32.mrf.mxu0
    %v8536 = vadd.f32 %v8487, %v8535
    %v8537 = vpop.f32.mrf.mxu0
    %v8538 = vadd.f32 %v8489, %v8537
    %8539 = vmatmul.bf16.gmra.mxu0 %v5520
    %v8540 = vpop.f32.mrf.mxu0
    %v8541 = vadd.f32 %v8492, %v8540
    %v8542 = vpop.f32.mrf.mxu0
    %v8543 = vadd.f32 %v8494, %v8542
    %8544 = vmatmul.bf16.gmra.mxu0 %v5527
    %v8545 = vpop.f32.mrf.mxu0
    %v8546 = vadd.f32 %v8497, %v8545
    %v8547 = vpop.f32.mrf.mxu0
    %v8548 = vadd.f32 %v8499, %v8547
    %8549 = vdwg.mxu0
    %8550 = vmatpush.bf16.msra.mxu0 %v7501
    %8551 = vmatpush.bf16.msra.mxu0 %v7494
    %8552 = vmatpush.bf16.msra.mxu0 %v7487
    %8553 = vmatpush.bf16.msra.mxu0 %v7480
    %8554 = vmatpush.bf16.msra.mxu0 %v7473
    %8555 = vmatpush.bf16.msra.mxu0 %v7466
    %8556 = vmatpush.bf16.msra.mxu0 %v7459
    %8557 = vmatpush.bf16.msra.mxu0 %v7452
    %8558 = vmatmul.bf16.gmra.mxu0 %v5479
    %v8559 = vpop.f32.mrf.mxu0
    %v8560 = vadd.f32 %v8511, %v8559
    %v8561 = vpop.f32.mrf.mxu0
    %v8562 = vadd.f32 %v8513, %v8561
    %8563 = vmatmul.bf16.gmra.mxu0 %v5486
    %v8564 = vpop.f32.mrf.mxu0
    %v8565 = vadd.f32 %v8516, %v8564
    %v8566 = vpop.f32.mrf.mxu0
    %v8567 = vadd.f32 %v8518, %v8566
    %8568 = vmatmul.bf16.gmra.mxu0 %v5493
    %v8569 = vpop.f32.mrf.mxu0
    %v8570 = vadd.f32 %v8521, %v8569
    %v8571 = vpop.f32.mrf.mxu0
    %v8572 = vadd.f32 %v8523, %v8571
    %8573 = vmatmul.bf16.gmra.mxu0 %v5500
    %v8574 = vpop.f32.mrf.mxu0
    %v8575 = vadd.f32 %v8526, %v8574
    %v8576 = vpop.f32.mrf.mxu0
    %v8577 = vadd.f32 %v8528, %v8576
    %8578 = vmatmul.bf16.gmra.mxu0 %v5507
    %v8579 = vpop.f32.mrf.mxu0
    %v8580 = vadd.f32 %v8531, %v8579
    %v8581 = vpop.f32.mrf.mxu0
    %v8582 = vadd.f32 %v8533, %v8581
    %8583 = vmatmul.bf16.gmra.mxu0 %v5514
    %v8584 = vpop.f32.mrf.mxu0
    %v8585 = vadd.f32 %v8536, %v8584
    %v8586 = vpop.f32.mrf.mxu0
    %v8587 = vadd.f32 %v8538, %v8586
    %8588 = vmatmul.bf16.gmra.mxu0 %v5521
    %v8589 = vpop.f32.mrf.mxu0
    %v8590 = vadd.f32 %v8541, %v8589
    %v8591 = vpop.f32.mrf.mxu0
    %v8592 = vadd.f32 %v8543, %v8591
    %8593 = vmatmul.bf16.gmra.mxu0 %v5528
    %v8594 = vpop.f32.mrf.mxu0
    %v8595 = vadd.f32 %v8546, %v8594
    %v8596 = vpop.f32.mrf.mxu0
    %v8597 = vadd.f32 %v8548, %v8596
    %8598 = vdwg.mxu0
    %8599 = vmatpush.bf16.msra.mxu0 %v7557
    %8600 = vmatpush.bf16.msra.mxu0 %v7550
    %8601 = vmatpush.bf16.msra.mxu0 %v7543
    %8602 = vmatpush.bf16.msra.mxu0 %v7536
    %8603 = vmatpush.bf16.msra.mxu0 %v7529
    %8604 = vmatpush.bf16.msra.mxu0 %v7522
    %8605 = vmatpush.bf16.msra.mxu0 %v7515
    %8606 = vmatpush.bf16.msra.mxu0 %v7508
    %8607 = vmatmul.bf16.gmra.mxu0 %v5480
    %v8608 = vpop.f32.mrf.mxu0
    %v8609 = vadd.f32 %v8560, %v8608
    %v8610 = vpop.f32.mrf.mxu0
    %v8611 = vadd.f32 %v8562, %v8610
    %8612 = vmatmul.bf16.gmra.mxu0 %v5487
    %v8613 = vpop.f32.mrf.mxu0
    %v8614 = vadd.f32 %v8565, %v8613
    %v8615 = vpop.f32.mrf.mxu0
    %v8616 = vadd.f32 %v8567, %v8615
    %8617 = vmatmul.bf16.gmra.mxu0 %v5494
    %v8618 = vpop.f32.mrf.mxu0
    %v8619 = vadd.f32 %v8570, %v8618
    %v8620 = vpop.f32.mrf.mxu0
    %v8621 = vadd.f32 %v8572, %v8620
    %8622 = vmatmul.bf16.gmra.mxu0 %v5501
    %v8623 = vpop.f32.mrf.mxu0
    %v8624 = vadd.f32 %v8575, %v8623
    %v8625 = vpop.f32.mrf.mxu0
    %v8626 = vadd.f32 %v8577, %v8625
    %8627 = vmatmul.bf16.gmra.mxu0 %v5508
    %v8628 = vpop.f32.mrf.mxu0
    %v8629 = vadd.f32 %v8580, %v8628
    %v8630 = vpop.f32.mrf.mxu0
    %v8631 = vadd.f32 %v8582, %v8630
    %8632 = vmatmul.bf16.gmra.mxu0 %v5515
    %v8633 = vpop.f32.mrf.mxu0
    %v8634 = vadd.f32 %v8585, %v8633
    %v8635 = vpop.f32.mrf.mxu0
    %v8636 = vadd.f32 %v8587, %v8635
    %8637 = vmatmul.bf16.gmra.mxu0 %v5522
    %v8638 = vpop.f32.mrf.mxu0
    %v8639 = vadd.f32 %v8590, %v8638
    %v8640 = vpop.f32.mrf.mxu0
    %v8641 = vadd.f32 %v8592, %v8640
    %8642 = vmatmul.bf16.gmra.mxu0 %v5529
    %v8643 = vpop.f32.mrf.mxu0
    %v8644 = vadd.f32 %v8595, %v8643
    %v8645 = vpop.f32.mrf.mxu0
    %v8646 = vadd.f32 %v8597, %v8645
    %8647 = vdwg.mxu0
    %8648 = vmatpush.bf16.msra.mxu0 %v7613
    %8649 = vmatpush.bf16.msra.mxu0 %v7606
    %8650 = vmatpush.bf16.msra.mxu0 %v7599
    %8651 = vmatpush.bf16.msra.mxu0 %v7592
    %8652 = vmatpush.bf16.msra.mxu0 %v7585
    %8653 = vmatpush.bf16.msra.mxu0 %v7578
    %8654 = vmatpush.bf16.msra.mxu0 %v7571
    %8655 = vmatpush.bf16.msra.mxu0 %v7564
    %8656 = vmatmul.bf16.gmra.mxu0 %v5481
    %v8657 = vpop.f32.mrf.mxu0
    %v8658 = vadd.f32 %v8609, %v8657
    %v8659 = vpop.f32.mrf.mxu0
    %v8660 = vadd.f32 %v8611, %v8659
    %8661 = vmatmul.bf16.gmra.mxu0 %v5488
    %v8662 = vpop.f32.mrf.mxu0
    %v8663 = vadd.f32 %v8614, %v8662
    %v8664 = vpop.f32.mrf.mxu0
    %v8665 = vadd.f32 %v8616, %v8664
    %8666 = vmatmul.bf16.gmra.mxu0 %v5495
    %v8667 = vpop.f32.mrf.mxu0
    %v8668 = vadd.f32 %v8619, %v8667
    %v8669 = vpop.f32.mrf.mxu0
    %v8670 = vadd.f32 %v8621, %v8669
    %8671 = vmatmul.bf16.gmra.mxu0 %v5502
    %v8672 = vpop.f32.mrf.mxu0
    %v8673 = vadd.f32 %v8624, %v8672
    %v8674 = vpop.f32.mrf.mxu0
    %v8675 = vadd.f32 %v8626, %v8674
    %8676 = vmatmul.bf16.gmra.mxu0 %v5509
    %v8677 = vpop.f32.mrf.mxu0
    %v8678 = vadd.f32 %v8629, %v8677
    %v8679 = vpop.f32.mrf.mxu0
    %v8680 = vadd.f32 %v8631, %v8679
    %8681 = vmatmul.bf16.gmra.mxu0 %v5516
    %v8682 = vpop.f32.mrf.mxu0
    %v8683 = vadd.f32 %v8634, %v8682
    %v8684 = vpop.f32.mrf.mxu0
    %v8685 = vadd.f32 %v8636, %v8684
    %8686 = vmatmul.bf16.gmra.mxu0 %v5523
    %v8687 = vpop.f32.mrf.mxu0
    %v8688 = vadd.f32 %v8639, %v8687
    %v8689 = vpop.f32.mrf.mxu0
    %v8690 = vadd.f32 %v8641, %v8689
    %8691 = vmatmul.bf16.gmra.mxu0 %v5530
    %v8692 = vpop.f32.mrf.mxu0
    %v8693 = vadd.f32 %v8644, %v8692
    %v8694 = vpop.f32.mrf.mxu0
    %v8695 = vadd.f32 %v8646, %v8694
    %8696 = vdwg.mxu0
    %8697 = vmatpush.bf16.msra.mxu0 %v7278
    %8698 = vmatpush.bf16.msra.mxu0 %v7271
    %8699 = vmatpush.bf16.msra.mxu0 %v7264
    %8700 = vmatpush.bf16.msra.mxu0 %v7257
    %8701 = vmatpush.bf16.msra.mxu0 %v7250
    %8702 = vmatpush.bf16.msra.mxu0 %v7243
    %8703 = vmatpush.bf16.msra.mxu0 %v7236
    %8704 = vmatpush.bf16.msra.mxu0 %v7229
    %8705 = vmatmul.bf16.gmra.mxu0 %v5475
    %v8706 = vpop.f32.mrf.mxu0
    %v8707 = vadd.f32 %v5983, %v8706
    %v8708 = vpop.f32.mrf.mxu0
    %v8709 = vadd.f32 %v5983, %v8708
    %8710 = vmatmul.bf16.gmra.mxu0 %v5482
    %v8711 = vpop.f32.mrf.mxu0
    %v8712 = vadd.f32 %v5983, %v8711
    %v8713 = vpop.f32.mrf.mxu0
    %v8714 = vadd.f32 %v5983, %v8713
    %8715 = vmatmul.bf16.gmra.mxu0 %v5489
    %v8716 = vpop.f32.mrf.mxu0
    %v8717 = vadd.f32 %v5983, %v8716
    %v8718 = vpop.f32.mrf.mxu0
    %v8719 = vadd.f32 %v5983, %v8718
    %8720 = vmatmul.bf16.gmra.mxu0 %v5496
    %v8721 = vpop.f32.mrf.mxu0
    %v8722 = vadd.f32 %v5983, %v8721
    %v8723 = vpop.f32.mrf.mxu0
    %v8724 = vadd.f32 %v5983, %v8723
    %8725 = vmatmul.bf16.gmra.mxu0 %v5503
    %v8726 = vpop.f32.mrf.mxu0
    %v8727 = vadd.f32 %v5983, %v8726
    %v8728 = vpop.f32.mrf.mxu0
    %v8729 = vadd.f32 %v5983, %v8728
    %8730 = vmatmul.bf16.gmra.mxu0 %v5510
    %v8731 = vpop.f32.mrf.mxu0
    %v8732 = vadd.f32 %v5983, %v8731
    %v8733 = vpop.f32.mrf.mxu0
    %v8734 = vadd.f32 %v5983, %v8733
    %8735 = vmatmul.bf16.gmra.mxu0 %v5517
    %v8736 = vpop.f32.mrf.mxu0
    %v8737 = vadd.f32 %v5983, %v8736
    %v8738 = vpop.f32.mrf.mxu0
    %v8739 = vadd.f32 %v5983, %v8738
    %8740 = vmatmul.bf16.gmra.mxu0 %v5524
    %v8741 = vpop.f32.mrf.mxu0
    %v8742 = vadd.f32 %v5983, %v8741
    %v8743 = vpop.f32.mrf.mxu0
    %v8744 = vadd.f32 %v5983, %v8743
    %8745 = vdwg.mxu0
    %8746 = vmatpush.bf16.msra.mxu0 %v7334
    %8747 = vmatpush.bf16.msra.mxu0 %v7327
    %8748 = vmatpush.bf16.msra.mxu0 %v7320
    %8749 = vmatpush.bf16.msra.mxu0 %v7313
    %8750 = vmatpush.bf16.msra.mxu0 %v7306
    %8751 = vmatpush.bf16.msra.mxu0 %v7299
    %8752 = vmatpush.bf16.msra.mxu0 %v7292
    %8753 = vmatpush.bf16.msra.mxu0 %v7285
    %8754 = vmatmul.bf16.gmra.mxu0 %v5476
    %v8755 = vpop.f32.mrf.mxu0
    %v8756 = vadd.f32 %v8707, %v8755
    %v8757 = vpop.f32.mrf.mxu0
    %v8758 = vadd.f32 %v8709, %v8757
    %8759 = vmatmul.bf16.gmra.mxu0 %v5483
    %v8760 = vpop.f32.mrf.mxu0
    %v8761 = vadd.f32 %v8712, %v8760
    %v8762 = vpop.f32.mrf.mxu0
    %v8763 = vadd.f32 %v8714, %v8762
    %8764 = vmatmul.bf16.gmra.mxu0 %v5490
    %v8765 = vpop.f32.mrf.mxu0
    %v8766 = vadd.f32 %v8717, %v8765
    %v8767 = vpop.f32.mrf.mxu0
    %v8768 = vadd.f32 %v8719, %v8767
    %8769 = vmatmul.bf16.gmra.mxu0 %v5497
    %v8770 = vpop.f32.mrf.mxu0
    %v8771 = vadd.f32 %v8722, %v8770
    %v8772 = vpop.f32.mrf.mxu0
    %v8773 = vadd.f32 %v8724, %v8772
    %8774 = vmatmul.bf16.gmra.mxu0 %v5504
    %v8775 = vpop.f32.mrf.mxu0
    %v8776 = vadd.f32 %v8727, %v8775
    %v8777 = vpop.f32.mrf.mxu0
    %v8778 = vadd.f32 %v8729, %v8777
    %8779 = vmatmul.bf16.gmra.mxu0 %v5511
    %v8780 = vpop.f32.mrf.mxu0
    %v8781 = vadd.f32 %v8732, %v8780
    %v8782 = vpop.f32.mrf.mxu0
    %v8783 = vadd.f32 %v8734, %v8782
    %8784 = vmatmul.bf16.gmra.mxu0 %v5518
    %v8785 = vpop.f32.mrf.mxu0
    %v8786 = vadd.f32 %v8737, %v8785
    %v8787 = vpop.f32.mrf.mxu0
    %v8788 = vadd.f32 %v8739, %v8787
    %8789 = vmatmul.bf16.gmra.mxu0 %v5525
    %v8790 = vpop.f32.mrf.mxu0
    %v8791 = vadd.f32 %v8742, %v8790
    %v8792 = vpop.f32.mrf.mxu0
    %v8793 = vadd.f32 %v8744, %v8792
    %8794 = vdwg.mxu0
    %8795 = vmatpush.bf16.msra.mxu0 %v7390
    %8796 = vmatpush.bf16.msra.mxu0 %v7383
    %8797 = vmatpush.bf16.msra.mxu0 %v7376
    %8798 = vmatpush.bf16.msra.mxu0 %v7369
    %8799 = vmatpush.bf16.msra.mxu0 %v7362
    %8800 = vmatpush.bf16.msra.mxu0 %v7355
    %8801 = vmatpush.bf16.msra.mxu0 %v7348
    %8802 = vmatpush.bf16.msra.mxu0 %v7341
    %8803 = vmatmul.bf16.gmra.mxu0 %v5477
    %v8804 = vpop.f32.mrf.mxu0
    %v8805 = vadd.f32 %v8756, %v8804
    %v8806 = vpop.f32.mrf.mxu0
    %v8807 = vadd.f32 %v8758, %v8806
    %8808 = vmatmul.bf16.gmra.mxu0 %v5484
    %v8809 = vpop.f32.mrf.mxu0
    %v8810 = vadd.f32 %v8761, %v8809
    %v8811 = vpop.f32.mrf.mxu0
    %v8812 = vadd.f32 %v8763, %v8811
    %8813 = vmatmul.bf16.gmra.mxu0 %v5491
    %v8814 = vpop.f32.mrf.mxu0
    %v8815 = vadd.f32 %v8766, %v8814
    %v8816 = vpop.f32.mrf.mxu0
    %v8817 = vadd.f32 %v8768, %v8816
    %8818 = vmatmul.bf16.gmra.mxu0 %v5498
    %v8819 = vpop.f32.mrf.mxu0
    %v8820 = vadd.f32 %v8771, %v8819
    %v8821 = vpop.f32.mrf.mxu0
    %v8822 = vadd.f32 %v8773, %v8821
    %8823 = vmatmul.bf16.gmra.mxu0 %v5505
    %v8824 = vpop.f32.mrf.mxu0
    %v8825 = vadd.f32 %v8776, %v8824
    %v8826 = vpop.f32.mrf.mxu0
    %v8827 = vadd.f32 %v8778, %v8826
    %8828 = vmatmul.bf16.gmra.mxu0 %v5512
    %v8829 = vpop.f32.mrf.mxu0
    %v8830 = vadd.f32 %v8781, %v8829
    %v8831 = vpop.f32.mrf.mxu0
    %v8832 = vadd.f32 %v8783, %v8831
    %8833 = vmatmul.bf16.gmra.mxu0 %v5519
    %v8834 = vpop.f32.mrf.mxu0
    %v8835 = vadd.f32 %v8786, %v8834
    %v8836 = vpop.f32.mrf.mxu0
    %v8837 = vadd.f32 %v8788, %v8836
    %8838 = vmatmul.bf16.gmra.mxu0 %v5526
    %v8839 = vpop.f32.mrf.mxu0
    %v8840 = vadd.f32 %v8791, %v8839
    %v8841 = vpop.f32.mrf.mxu0
    %v8842 = vadd.f32 %v8793, %v8841
    %8843 = vdwg.mxu0
    %8844 = vmatpush.bf16.msra.mxu0 %v7446
    %8845 = vmatpush.bf16.msra.mxu0 %v7439
    %8846 = vmatpush.bf16.msra.mxu0 %v7432
    %8847 = vmatpush.bf16.msra.mxu0 %v7425
    %8848 = vmatpush.bf16.msra.mxu0 %v7418
    %8849 = vmatpush.bf16.msra.mxu0 %v7411
    %8850 = vmatpush.bf16.msra.mxu0 %v7404
    %8851 = vmatpush.bf16.msra.mxu0 %v7397
    %8852 = vmatmul.bf16.gmra.mxu0 %v5478
    %v8853 = vpop.f32.mrf.mxu0
    %v8854 = vadd.f32 %v8805, %v8853
    %v8855 = vpop.f32.mrf.mxu0
    %v8856 = vadd.f32 %v8807, %v8855
    %8857 = vmatmul.bf16.gmra.mxu0 %v5485
    %v8858 = vpop.f32.mrf.mxu0
    %v8859 = vadd.f32 %v8810, %v8858
    %v8860 = vpop.f32.mrf.mxu0
    %v8861 = vadd.f32 %v8812, %v8860
    %8862 = vmatmul.bf16.gmra.mxu0 %v5492
    %v8863 = vpop.f32.mrf.mxu0
    %v8864 = vadd.f32 %v8815, %v8863
    %v8865 = vpop.f32.mrf.mxu0
    %v8866 = vadd.f32 %v8817, %v8865
    %8867 = vmatmul.bf16.gmra.mxu0 %v5499
    %v8868 = vpop.f32.mrf.mxu0
    %v8869 = vadd.f32 %v8820, %v8868
    %v8870 = vpop.f32.mrf.mxu0
    %v8871 = vadd.f32 %v8822, %v8870
    %8872 = vmatmul.bf16.gmra.mxu0 %v5506
    %v8873 = vpop.f32.mrf.mxu0
    %v8874 = vadd.f32 %v8825, %v8873
    %v8875 = vpop.f32.mrf.mxu0
    %v8876 = vadd.f32 %v8827, %v8875
    %8877 = vmatmul.bf16.gmra.mxu0 %v5513
    %v8878 = vpop.f32.mrf.mxu0
    %v8879 = vadd.f32 %v8830, %v8878
    %v8880 = vpop.f32.mrf.mxu0
    %v8881 = vadd.f32 %v8832, %v8880
    %8882 = vmatmul.bf16.gmra.mxu0 %v5520
    %v8883 = vpop.f32.mrf.mxu0
    %v8884 = vadd.f32 %v8835, %v8883
    %v8885 = vpop.f32.mrf.mxu0
    %v8886 = vadd.f32 %v8837, %v8885
    %8887 = vmatmul.bf16.gmra.mxu0 %v5527
    %v8888 = vpop.f32.mrf.mxu0
    %v8889 = vadd.f32 %v8840, %v8888
    %v8890 = vpop.f32.mrf.mxu0
    %v8891 = vadd.f32 %v8842, %v8890
    %8892 = vdwg.mxu0
    %8893 = vmatpush.bf16.msra.mxu0 %v7502
    %8894 = vmatpush.bf16.msra.mxu0 %v7495
    %8895 = vmatpush.bf16.msra.mxu0 %v7488
    %8896 = vmatpush.bf16.msra.mxu0 %v7481
    %8897 = vmatpush.bf16.msra.mxu0 %v7474
    %8898 = vmatpush.bf16.msra.mxu0 %v7467
    %8899 = vmatpush.bf16.msra.mxu0 %v7460
    %8900 = vmatpush.bf16.msra.mxu0 %v7453
    %8901 = vmatmul.bf16.gmra.mxu0 %v5479
    %v8902 = vpop.f32.mrf.mxu0
    %v8903 = vadd.f32 %v8854, %v8902
    %v8904 = vpop.f32.mrf.mxu0
    %v8905 = vadd.f32 %v8856, %v8904
    %8906 = vmatmul.bf16.gmra.mxu0 %v5486
    %v8907 = vpop.f32.mrf.mxu0
    %v8908 = vadd.f32 %v8859, %v8907
    %v8909 = vpop.f32.mrf.mxu0
    %v8910 = vadd.f32 %v8861, %v8909
    %8911 = vmatmul.bf16.gmra.mxu0 %v5493
    %v8912 = vpop.f32.mrf.mxu0
    %v8913 = vadd.f32 %v8864, %v8912
    %v8914 = vpop.f32.mrf.mxu0
    %v8915 = vadd.f32 %v8866, %v8914
    %8916 = vmatmul.bf16.gmra.mxu0 %v5500
    %v8917 = vpop.f32.mrf.mxu0
    %v8918 = vadd.f32 %v8869, %v8917
    %v8919 = vpop.f32.mrf.mxu0
    %v8920 = vadd.f32 %v8871, %v8919
    %8921 = vmatmul.bf16.gmra.mxu0 %v5507
    %v8922 = vpop.f32.mrf.mxu0
    %v8923 = vadd.f32 %v8874, %v8922
    %v8924 = vpop.f32.mrf.mxu0
    %v8925 = vadd.f32 %v8876, %v8924
    %8926 = vmatmul.bf16.gmra.mxu0 %v5514
    %v8927 = vpop.f32.mrf.mxu0
    %v8928 = vadd.f32 %v8879, %v8927
    %v8929 = vpop.f32.mrf.mxu0
    %v8930 = vadd.f32 %v8881, %v8929
    %8931 = vmatmul.bf16.gmra.mxu0 %v5521
    %v8932 = vpop.f32.mrf.mxu0
    %v8933 = vadd.f32 %v8884, %v8932
    %v8934 = vpop.f32.mrf.mxu0
    %v8935 = vadd.f32 %v8886, %v8934
    %8936 = vmatmul.bf16.gmra.mxu0 %v5528
    %v8937 = vpop.f32.mrf.mxu0
    %v8938 = vadd.f32 %v8889, %v8937
    %v8939 = vpop.f32.mrf.mxu0
    %v8940 = vadd.f32 %v8891, %v8939
    %8941 = vdwg.mxu0
    %8942 = vmatpush.bf16.msra.mxu0 %v7558
    %8943 = vmatpush.bf16.msra.mxu0 %v7551
    %8944 = vmatpush.bf16.msra.mxu0 %v7544
    %8945 = vmatpush.bf16.msra.mxu0 %v7537
    %8946 = vmatpush.bf16.msra.mxu0 %v7530
    %8947 = vmatpush.bf16.msra.mxu0 %v7523
    %8948 = vmatpush.bf16.msra.mxu0 %v7516
    %8949 = vmatpush.bf16.msra.mxu0 %v7509
    %8950 = vmatmul.bf16.gmra.mxu0 %v5480
    %v8951 = vpop.f32.mrf.mxu0
    %v8952 = vadd.f32 %v8903, %v8951
    %v8953 = vpop.f32.mrf.mxu0
    %v8954 = vadd.f32 %v8905, %v8953
    %8955 = vmatmul.bf16.gmra.mxu0 %v5487
    %v8956 = vpop.f32.mrf.mxu0
    %v8957 = vadd.f32 %v8908, %v8956
    %v8958 = vpop.f32.mrf.mxu0
    %v8959 = vadd.f32 %v8910, %v8958
    %8960 = vmatmul.bf16.gmra.mxu0 %v5494
    %v8961 = vpop.f32.mrf.mxu0
    %v8962 = vadd.f32 %v8913, %v8961
    %v8963 = vpop.f32.mrf.mxu0
    %v8964 = vadd.f32 %v8915, %v8963
    %8965 = vmatmul.bf16.gmra.mxu0 %v5501
    %v8966 = vpop.f32.mrf.mxu0
    %v8967 = vadd.f32 %v8918, %v8966
    %v8968 = vpop.f32.mrf.mxu0
    %v8969 = vadd.f32 %v8920, %v8968
    %8970 = vmatmul.bf16.gmra.mxu0 %v5508
    %v8971 = vpop.f32.mrf.mxu0
    %v8972 = vadd.f32 %v8923, %v8971
    %v8973 = vpop.f32.mrf.mxu0
    %v8974 = vadd.f32 %v8925, %v8973
    %8975 = vmatmul.bf16.gmra.mxu0 %v5515
    %v8976 = vpop.f32.mrf.mxu0
    %v8977 = vadd.f32 %v8928, %v8976
    %v8978 = vpop.f32.mrf.mxu0
    %v8979 = vadd.f32 %v8930, %v8978
    %8980 = vmatmul.bf16.gmra.mxu0 %v5522
    %v8981 = vpop.f32.mrf.mxu0
    %v8982 = vadd.f32 %v8933, %v8981
    %v8983 = vpop.f32.mrf.mxu0
    %v8984 = vadd.f32 %v8935, %v8983
    %8985 = vmatmul.bf16.gmra.mxu0 %v5529
    %v8986 = vpop.f32.mrf.mxu0
    %v8987 = vadd.f32 %v8938, %v8986
    %v8988 = vpop.f32.mrf.mxu0
    %v8989 = vadd.f32 %v8940, %v8988
    %8990 = vdwg.mxu0
    %8991 = vmatpush.bf16.msra.mxu0 %v7614
    %8992 = vmatpush.bf16.msra.mxu0 %v7607
    %8993 = vmatpush.bf16.msra.mxu0 %v7600
    %8994 = vmatpush.bf16.msra.mxu0 %v7593
    %8995 = vmatpush.bf16.msra.mxu0 %v7586
    %8996 = vmatpush.bf16.msra.mxu0 %v7579
    %8997 = vmatpush.bf16.msra.mxu0 %v7572
    %8998 = vmatpush.bf16.msra.mxu0 %v7565
    %8999 = vmatmul.bf16.gmra.mxu0 %v5481
    %v9000 = vpop.f32.mrf.mxu0
    %v9001 = vadd.f32 %v8952, %v9000
    %v9002 = vpop.f32.mrf.mxu0
    %v9003 = vadd.f32 %v8954, %v9002
    %9004 = vmatmul.bf16.gmra.mxu0 %v5488
    %v9005 = vpop.f32.mrf.mxu0
    %v9006 = vadd.f32 %v8957, %v9005
    %v9007 = vpop.f32.mrf.mxu0
    %v9008 = vadd.f32 %v8959, %v9007
    %9009 = vmatmul.bf16.gmra.mxu0 %v5495
    %v9010 = vpop.f32.mrf.mxu0
    %v9011 = vadd.f32 %v8962, %v9010
    %v9012 = vpop.f32.mrf.mxu0
    %v9013 = vadd.f32 %v8964, %v9012
    %9014 = vmatmul.bf16.gmra.mxu0 %v5502
    %v9015 = vpop.f32.mrf.mxu0
    %v9016 = vadd.f32 %v8967, %v9015
    %v9017 = vpop.f32.mrf.mxu0
    %v9018 = vadd.f32 %v8969, %v9017
    %9019 = vmatmul.bf16.gmra.mxu0 %v5509
    %v9020 = vpop.f32.mrf.mxu0
    %v9021 = vadd.f32 %v8972, %v9020
    %v9022 = vpop.f32.mrf.mxu0
    %v9023 = vadd.f32 %v8974, %v9022
    %9024 = vmatmul.bf16.gmra.mxu0 %v5516
    %v9025 = vpop.f32.mrf.mxu0
    %v9026 = vadd.f32 %v8977, %v9025
    %v9027 = vpop.f32.mrf.mxu0
    %v9028 = vadd.f32 %v8979, %v9027
    %9029 = vmatmul.bf16.gmra.mxu0 %v5523
    %v9030 = vpop.f32.mrf.mxu0
    %v9031 = vadd.f32 %v8982, %v9030
    %v9032 = vpop.f32.mrf.mxu0
    %v9033 = vadd.f32 %v8984, %v9032
    %9034 = vmatmul.bf16.gmra.mxu0 %v5530
    %v9035 = vpop.f32.mrf.mxu0
    %v9036 = vadd.f32 %v8987, %v9035
    %v9037 = vpop.f32.mrf.mxu0
    %v9038 = vadd.f32 %v8989, %v9037
    %9039 = vdwg.mxu0
    %9040 = vmatpush.bf16.msra.mxu0 %v7279
    %9041 = vmatpush.bf16.msra.mxu0 %v7272
    %9042 = vmatpush.bf16.msra.mxu0 %v7265
    %9043 = vmatpush.bf16.msra.mxu0 %v7258
    %9044 = vmatpush.bf16.msra.mxu0 %v7251
    %9045 = vmatpush.bf16.msra.mxu0 %v7244
    %9046 = vmatpush.bf16.msra.mxu0 %v7237
    %9047 = vmatpush.bf16.msra.mxu0 %v7230
    %9048 = vmatmul.bf16.gmra.mxu0 %v5475
    %v9049 = vpop.f32.mrf.mxu0
    %v9050 = vadd.f32 %v5984, %v9049
    %v9051 = vpop.f32.mrf.mxu0
    %v9052 = vadd.f32 %v5984, %v9051
    %9053 = vmatmul.bf16.gmra.mxu0 %v5482
    %v9054 = vpop.f32.mrf.mxu0
    %v9055 = vadd.f32 %v5984, %v9054
    %v9056 = vpop.f32.mrf.mxu0
    %v9057 = vadd.f32 %v5984, %v9056
    %9058 = vmatmul.bf16.gmra.mxu0 %v5489
    %v9059 = vpop.f32.mrf.mxu0
    %v9060 = vadd.f32 %v5984, %v9059
    %v9061 = vpop.f32.mrf.mxu0
    %v9062 = vadd.f32 %v5984, %v9061
    %9063 = vmatmul.bf16.gmra.mxu0 %v5496
    %v9064 = vpop.f32.mrf.mxu0
    %v9065 = vadd.f32 %v5984, %v9064
    %v9066 = vpop.f32.mrf.mxu0
    %v9067 = vadd.f32 %v5984, %v9066
    %9068 = vmatmul.bf16.gmra.mxu0 %v5503
    %v9069 = vpop.f32.mrf.mxu0
    %v9070 = vadd.f32 %v5984, %v9069
    %v9071 = vpop.f32.mrf.mxu0
    %v9072 = vadd.f32 %v5984, %v9071
    %9073 = vmatmul.bf16.gmra.mxu0 %v5510
    %v9074 = vpop.f32.mrf.mxu0
    %v9075 = vadd.f32 %v5984, %v9074
    %v9076 = vpop.f32.mrf.mxu0
    %v9077 = vadd.f32 %v5984, %v9076
    %9078 = vmatmul.bf16.gmra.mxu0 %v5517
    %v9079 = vpop.f32.mrf.mxu0
    %v9080 = vadd.f32 %v5984, %v9079
    %v9081 = vpop.f32.mrf.mxu0
    %v9082 = vadd.f32 %v5984, %v9081
    %9083 = vmatmul.bf16.gmra.mxu0 %v5524
    %v9084 = vpop.f32.mrf.mxu0
    %v9085 = vadd.f32 %v5984, %v9084
    %v9086 = vpop.f32.mrf.mxu0
    %v9087 = vadd.f32 %v5984, %v9086
    %9088 = vdwg.mxu0
    %9089 = vmatpush.bf16.msra.mxu0 %v7335
    %9090 = vmatpush.bf16.msra.mxu0 %v7328
    %9091 = vmatpush.bf16.msra.mxu0 %v7321
    %9092 = vmatpush.bf16.msra.mxu0 %v7314
    %9093 = vmatpush.bf16.msra.mxu0 %v7307
    %9094 = vmatpush.bf16.msra.mxu0 %v7300
    %9095 = vmatpush.bf16.msra.mxu0 %v7293
    %9096 = vmatpush.bf16.msra.mxu0 %v7286
    %9097 = vmatmul.bf16.gmra.mxu0 %v5476
    %v9098 = vpop.f32.mrf.mxu0
    %v9099 = vadd.f32 %v9050, %v9098
    %v9100 = vpop.f32.mrf.mxu0
    %v9101 = vadd.f32 %v9052, %v9100
    %9102 = vmatmul.bf16.gmra.mxu0 %v5483
    %v9103 = vpop.f32.mrf.mxu0
    %v9104 = vadd.f32 %v9055, %v9103
    %v9105 = vpop.f32.mrf.mxu0
    %v9106 = vadd.f32 %v9057, %v9105
    %9107 = vmatmul.bf16.gmra.mxu0 %v5490
    %v9108 = vpop.f32.mrf.mxu0
    %v9109 = vadd.f32 %v9060, %v9108
    %v9110 = vpop.f32.mrf.mxu0
    %v9111 = vadd.f32 %v9062, %v9110
    %9112 = vmatmul.bf16.gmra.mxu0 %v5497
    %v9113 = vpop.f32.mrf.mxu0
    %v9114 = vadd.f32 %v9065, %v9113
    %v9115 = vpop.f32.mrf.mxu0
    %v9116 = vadd.f32 %v9067, %v9115
    %9117 = vmatmul.bf16.gmra.mxu0 %v5504
    %v9118 = vpop.f32.mrf.mxu0
    %v9119 = vadd.f32 %v9070, %v9118
    %v9120 = vpop.f32.mrf.mxu0
    %v9121 = vadd.f32 %v9072, %v9120
    %9122 = vmatmul.bf16.gmra.mxu0 %v5511
    %v9123 = vpop.f32.mrf.mxu0
    %v9124 = vadd.f32 %v9075, %v9123
    %v9125 = vpop.f32.mrf.mxu0
    %v9126 = vadd.f32 %v9077, %v9125
    %9127 = vmatmul.bf16.gmra.mxu0 %v5518
    %v9128 = vpop.f32.mrf.mxu0
    %v9129 = vadd.f32 %v9080, %v9128
    %v9130 = vpop.f32.mrf.mxu0
    %v9131 = vadd.f32 %v9082, %v9130
    %9132 = vmatmul.bf16.gmra.mxu0 %v5525
    %v9133 = vpop.f32.mrf.mxu0
    %v9134 = vadd.f32 %v9085, %v9133
    %v9135 = vpop.f32.mrf.mxu0
    %v9136 = vadd.f32 %v9087, %v9135
    %9137 = vdwg.mxu0
    %9138 = vmatpush.bf16.msra.mxu0 %v7391
    %9139 = vmatpush.bf16.msra.mxu0 %v7384
    %9140 = vmatpush.bf16.msra.mxu0 %v7377
    %9141 = vmatpush.bf16.msra.mxu0 %v7370
    %9142 = vmatpush.bf16.msra.mxu0 %v7363
    %9143 = vmatpush.bf16.msra.mxu0 %v7356
    %9144 = vmatpush.bf16.msra.mxu0 %v7349
    %9145 = vmatpush.bf16.msra.mxu0 %v7342
    %9146 = vmatmul.bf16.gmra.mxu0 %v5477
    %v9147 = vpop.f32.mrf.mxu0
    %v9148 = vadd.f32 %v9099, %v9147
    %v9149 = vpop.f32.mrf.mxu0
    %v9150 = vadd.f32 %v9101, %v9149
    %9151 = vmatmul.bf16.gmra.mxu0 %v5484
    %v9152 = vpop.f32.mrf.mxu0
    %v9153 = vadd.f32 %v9104, %v9152
    %v9154 = vpop.f32.mrf.mxu0
    %v9155 = vadd.f32 %v9106, %v9154
    %9156 = vmatmul.bf16.gmra.mxu0 %v5491
    %v9157 = vpop.f32.mrf.mxu0
    %v9158 = vadd.f32 %v9109, %v9157
    %v9159 = vpop.f32.mrf.mxu0
    %v9160 = vadd.f32 %v9111, %v9159
    %9161 = vmatmul.bf16.gmra.mxu0 %v5498
    %v9162 = vpop.f32.mrf.mxu0
    %v9163 = vadd.f32 %v9114, %v9162
    %v9164 = vpop.f32.mrf.mxu0
    %v9165 = vadd.f32 %v9116, %v9164
    %9166 = vmatmul.bf16.gmra.mxu0 %v5505
    %v9167 = vpop.f32.mrf.mxu0
    %v9168 = vadd.f32 %v9119, %v9167
    %v9169 = vpop.f32.mrf.mxu0
    %v9170 = vadd.f32 %v9121, %v9169
    %9171 = vmatmul.bf16.gmra.mxu0 %v5512
    %v9172 = vpop.f32.mrf.mxu0
    %v9173 = vadd.f32 %v9124, %v9172
    %v9174 = vpop.f32.mrf.mxu0
    %v9175 = vadd.f32 %v9126, %v9174
    %9176 = vmatmul.bf16.gmra.mxu0 %v5519
    %v9177 = vpop.f32.mrf.mxu0
    %v9178 = vadd.f32 %v9129, %v9177
    %v9179 = vpop.f32.mrf.mxu0
    %v9180 = vadd.f32 %v9131, %v9179
    %9181 = vmatmul.bf16.gmra.mxu0 %v5526
    %v9182 = vpop.f32.mrf.mxu0
    %v9183 = vadd.f32 %v9134, %v9182
    %v9184 = vpop.f32.mrf.mxu0
    %v9185 = vadd.f32 %v9136, %v9184
    %9186 = vdwg.mxu0
    %9187 = vmatpush.bf16.msra.mxu0 %v7447
    %9188 = vmatpush.bf16.msra.mxu0 %v7440
    %9189 = vmatpush.bf16.msra.mxu0 %v7433
    %9190 = vmatpush.bf16.msra.mxu0 %v7426
    %9191 = vmatpush.bf16.msra.mxu0 %v7419
    %9192 = vmatpush.bf16.msra.mxu0 %v7412
    %9193 = vmatpush.bf16.msra.mxu0 %v7405
    %9194 = vmatpush.bf16.msra.mxu0 %v7398
    %9195 = vmatmul.bf16.gmra.mxu0 %v5478
    %v9196 = vpop.f32.mrf.mxu0
    %v9197 = vadd.f32 %v9148, %v9196
    %v9198 = vpop.f32.mrf.mxu0
    %v9199 = vadd.f32 %v9150, %v9198
    %9200 = vmatmul.bf16.gmra.mxu0 %v5485
    %v9201 = vpop.f32.mrf.mxu0
    %v9202 = vadd.f32 %v9153, %v9201
    %v9203 = vpop.f32.mrf.mxu0
    %v9204 = vadd.f32 %v9155, %v9203
    %9205 = vmatmul.bf16.gmra.mxu0 %v5492
    %v9206 = vpop.f32.mrf.mxu0
    %v9207 = vadd.f32 %v9158, %v9206
    %v9208 = vpop.f32.mrf.mxu0
    %v9209 = vadd.f32 %v9160, %v9208
    %9210 = vmatmul.bf16.gmra.mxu0 %v5499
    %v9211 = vpop.f32.mrf.mxu0
    %v9212 = vadd.f32 %v9163, %v9211
    %v9213 = vpop.f32.mrf.mxu0
    %v9214 = vadd.f32 %v9165, %v9213
    %9215 = vmatmul.bf16.gmra.mxu0 %v5506
    %v9216 = vpop.f32.mrf.mxu0
    %v9217 = vadd.f32 %v9168, %v9216
    %v9218 = vpop.f32.mrf.mxu0
    %v9219 = vadd.f32 %v9170, %v9218
    %9220 = vmatmul.bf16.gmra.mxu0 %v5513
    %v9221 = vpop.f32.mrf.mxu0
    %v9222 = vadd.f32 %v9173, %v9221
    %v9223 = vpop.f32.mrf.mxu0
    %v9224 = vadd.f32 %v9175, %v9223
    %9225 = vmatmul.bf16.gmra.mxu0 %v5520
    %v9226 = vpop.f32.mrf.mxu0
    %v9227 = vadd.f32 %v9178, %v9226
    %v9228 = vpop.f32.mrf.mxu0
    %v9229 = vadd.f32 %v9180, %v9228
    %9230 = vmatmul.bf16.gmra.mxu0 %v5527
    %v9231 = vpop.f32.mrf.mxu0
    %v9232 = vadd.f32 %v9183, %v9231
    %v9233 = vpop.f32.mrf.mxu0
    %v9234 = vadd.f32 %v9185, %v9233
    %9235 = vdwg.mxu0
    %9236 = vmatpush.bf16.msra.mxu0 %v7503
    %9237 = vmatpush.bf16.msra.mxu0 %v7496
    %9238 = vmatpush.bf16.msra.mxu0 %v7489
    %9239 = vmatpush.bf16.msra.mxu0 %v7482
    %9240 = vmatpush.bf16.msra.mxu0 %v7475
    %9241 = vmatpush.bf16.msra.mxu0 %v7468
    %9242 = vmatpush.bf16.msra.mxu0 %v7461
    %9243 = vmatpush.bf16.msra.mxu0 %v7454
    %9244 = vmatmul.bf16.gmra.mxu0 %v5479
    %v9245 = vpop.f32.mrf.mxu0
    %v9246 = vadd.f32 %v9197, %v9245
    %v9247 = vpop.f32.mrf.mxu0
    %v9248 = vadd.f32 %v9199, %v9247
    %9249 = vmatmul.bf16.gmra.mxu0 %v5486
    %v9250 = vpop.f32.mrf.mxu0
    %v9251 = vadd.f32 %v9202, %v9250
    %v9252 = vpop.f32.mrf.mxu0
    %v9253 = vadd.f32 %v9204, %v9252
    %9254 = vmatmul.bf16.gmra.mxu0 %v5493
    %v9255 = vpop.f32.mrf.mxu0
    %v9256 = vadd.f32 %v9207, %v9255
    %v9257 = vpop.f32.mrf.mxu0
    %v9258 = vadd.f32 %v9209, %v9257
    %9259 = vmatmul.bf16.gmra.mxu0 %v5500
    %v9260 = vpop.f32.mrf.mxu0
    %v9261 = vadd.f32 %v9212, %v9260
    %v9262 = vpop.f32.mrf.mxu0
    %v9263 = vadd.f32 %v9214, %v9262
    %9264 = vmatmul.bf16.gmra.mxu0 %v5507
    %v9265 = vpop.f32.mrf.mxu0
    %v9266 = vadd.f32 %v9217, %v9265
    %v9267 = vpop.f32.mrf.mxu0
    %v9268 = vadd.f32 %v9219, %v9267
    %9269 = vmatmul.bf16.gmra.mxu0 %v5514
    %v9270 = vpop.f32.mrf.mxu0
    %v9271 = vadd.f32 %v9222, %v9270
    %v9272 = vpop.f32.mrf.mxu0
    %v9273 = vadd.f32 %v9224, %v9272
    %9274 = vmatmul.bf16.gmra.mxu0 %v5521
    %v9275 = vpop.f32.mrf.mxu0
    %v9276 = vadd.f32 %v9227, %v9275
    %v9277 = vpop.f32.mrf.mxu0
    %v9278 = vadd.f32 %v9229, %v9277
    %9279 = vmatmul.bf16.gmra.mxu0 %v5528
    %v9280 = vpop.f32.mrf.mxu0
    %v9281 = vadd.f32 %v9232, %v9280
    %v9282 = vpop.f32.mrf.mxu0
    %v9283 = vadd.f32 %v9234, %v9282
    %9284 = vdwg.mxu0
    %9285 = vmatpush.bf16.msra.mxu0 %v7559
    %9286 = vmatpush.bf16.msra.mxu0 %v7552
    %9287 = vmatpush.bf16.msra.mxu0 %v7545
    %9288 = vmatpush.bf16.msra.mxu0 %v7538
    %9289 = vmatpush.bf16.msra.mxu0 %v7531
    %9290 = vmatpush.bf16.msra.mxu0 %v7524
    %9291 = vmatpush.bf16.msra.mxu0 %v7517
    %9292 = vmatpush.bf16.msra.mxu0 %v7510
    %9293 = vmatmul.bf16.gmra.mxu0 %v5480
    %v9294 = vpop.f32.mrf.mxu0
    %v9295 = vadd.f32 %v9246, %v9294
    %v9296 = vpop.f32.mrf.mxu0
    %v9297 = vadd.f32 %v9248, %v9296
    %9298 = vmatmul.bf16.gmra.mxu0 %v5487
    %v9299 = vpop.f32.mrf.mxu0
    %v9300 = vadd.f32 %v9251, %v9299
    %v9301 = vpop.f32.mrf.mxu0
    %v9302 = vadd.f32 %v9253, %v9301
    %9303 = vmatmul.bf16.gmra.mxu0 %v5494
    %v9304 = vpop.f32.mrf.mxu0
    %v9305 = vadd.f32 %v9256, %v9304
    %v9306 = vpop.f32.mrf.mxu0
    %v9307 = vadd.f32 %v9258, %v9306
    %9308 = vmatmul.bf16.gmra.mxu0 %v5501
    %v9309 = vpop.f32.mrf.mxu0
    %v9310 = vadd.f32 %v9261, %v9309
    %v9311 = vpop.f32.mrf.mxu0
    %v9312 = vadd.f32 %v9263, %v9311
    %9313 = vmatmul.bf16.gmra.mxu0 %v5508
    %v9314 = vpop.f32.mrf.mxu0
    %v9315 = vadd.f32 %v9266, %v9314
    %v9316 = vpop.f32.mrf.mxu0
    %v9317 = vadd.f32 %v9268, %v9316
    %9318 = vmatmul.bf16.gmra.mxu0 %v5515
    %v9319 = vpop.f32.mrf.mxu0
    %v9320 = vadd.f32 %v9271, %v9319
    %v9321 = vpop.f32.mrf.mxu0
    %v9322 = vadd.f32 %v9273, %v9321
    %9323 = vmatmul.bf16.gmra.mxu0 %v5522
    %v9324 = vpop.f32.mrf.mxu0
    %v9325 = vadd.f32 %v9276, %v9324
    %v9326 = vpop.f32.mrf.mxu0
    %v9327 = vadd.f32 %v9278, %v9326
    %9328 = vmatmul.bf16.gmra.mxu0 %v5529
    %v9329 = vpop.f32.mrf.mxu0
    %v9330 = vadd.f32 %v9281, %v9329
    %v9331 = vpop.f32.mrf.mxu0
    %v9332 = vadd.f32 %v9283, %v9331
    %9333 = vdwg.mxu0
    %9334 = vmatpush.bf16.msra.mxu0 %v7615
    %9335 = vmatpush.bf16.msra.mxu0 %v7608
    %9336 = vmatpush.bf16.msra.mxu0 %v7601
    %9337 = vmatpush.bf16.msra.mxu0 %v7594
    %9338 = vmatpush.bf16.msra.mxu0 %v7587
    %9339 = vmatpush.bf16.msra.mxu0 %v7580
    %9340 = vmatpush.bf16.msra.mxu0 %v7573
    %9341 = vmatpush.bf16.msra.mxu0 %v7566
    %9342 = vmatmul.bf16.gmra.mxu0 %v5481
    %v9343 = vpop.f32.mrf.mxu0
    %v9344 = vadd.f32 %v9295, %v9343
    %v9345 = vpop.f32.mrf.mxu0
    %v9346 = vadd.f32 %v9297, %v9345
    %9347 = vmatmul.bf16.gmra.mxu0 %v5488
    %v9348 = vpop.f32.mrf.mxu0
    %v9349 = vadd.f32 %v9300, %v9348
    %v9350 = vpop.f32.mrf.mxu0
    %v9351 = vadd.f32 %v9302, %v9350
    %9352 = vmatmul.bf16.gmra.mxu0 %v5495
    %v9353 = vpop.f32.mrf.mxu0
    %v9354 = vadd.f32 %v9305, %v9353
    %v9355 = vpop.f32.mrf.mxu0
    %v9356 = vadd.f32 %v9307, %v9355
    %9357 = vmatmul.bf16.gmra.mxu0 %v5502
    %v9358 = vpop.f32.mrf.mxu0
    %v9359 = vadd.f32 %v9310, %v9358
    %v9360 = vpop.f32.mrf.mxu0
    %v9361 = vadd.f32 %v9312, %v9360
    %9362 = vmatmul.bf16.gmra.mxu0 %v5509
    %v9363 = vpop.f32.mrf.mxu0
    %v9364 = vadd.f32 %v9315, %v9363
    %v9365 = vpop.f32.mrf.mxu0
    %v9366 = vadd.f32 %v9317, %v9365
    %9367 = vmatmul.bf16.gmra.mxu0 %v5516
    %v9368 = vpop.f32.mrf.mxu0
    %v9369 = vadd.f32 %v9320, %v9368
    %v9370 = vpop.f32.mrf.mxu0
    %v9371 = vadd.f32 %v9322, %v9370
    %9372 = vmatmul.bf16.gmra.mxu0 %v5523
    %v9373 = vpop.f32.mrf.mxu0
    %v9374 = vadd.f32 %v9325, %v9373
    %v9375 = vpop.f32.mrf.mxu0
    %v9376 = vadd.f32 %v9327, %v9375
    %9377 = vmatmul.bf16.gmra.mxu0 %v5530
    %v9378 = vpop.f32.mrf.mxu0
    %v9379 = vadd.f32 %v9330, %v9378
    %v9380 = vpop.f32.mrf.mxu0
    %v9381 = vadd.f32 %v9332, %v9380
    %9382 = vdwg.mxu0
    %9383 = vmatpush.bf16.msra.mxu0 %v7280
    %9384 = vmatpush.bf16.msra.mxu0 %v7273
    %9385 = vmatpush.bf16.msra.mxu0 %v7266
    %9386 = vmatpush.bf16.msra.mxu0 %v7259
    %9387 = vmatpush.bf16.msra.mxu0 %v7252
    %9388 = vmatpush.bf16.msra.mxu0 %v7245
    %9389 = vmatpush.bf16.msra.mxu0 %v7238
    %9390 = vmatpush.bf16.msra.mxu0 %v7231
    %9391 = vmatmul.bf16.gmra.mxu0 %v5475
    %v9392 = vpop.f32.mrf.mxu0
    %v9393 = vadd.f32 %v5985, %v9392
    %v9394 = vpop.f32.mrf.mxu0
    %v9395 = vadd.f32 %v5985, %v9394
    %9396 = vmatmul.bf16.gmra.mxu0 %v5482
    %v9397 = vpop.f32.mrf.mxu0
    %v9398 = vadd.f32 %v5985, %v9397
    %v9399 = vpop.f32.mrf.mxu0
    %v9400 = vadd.f32 %v5985, %v9399
    %9401 = vmatmul.bf16.gmra.mxu0 %v5489
    %v9402 = vpop.f32.mrf.mxu0
    %v9403 = vadd.f32 %v5985, %v9402
    %v9404 = vpop.f32.mrf.mxu0
    %v9405 = vadd.f32 %v5985, %v9404
    %9406 = vmatmul.bf16.gmra.mxu0 %v5496
    %v9407 = vpop.f32.mrf.mxu0
    %v9408 = vadd.f32 %v5985, %v9407
    %v9409 = vpop.f32.mrf.mxu0
    %v9410 = vadd.f32 %v5985, %v9409
    %9411 = vmatmul.bf16.gmra.mxu0 %v5503
    %v9412 = vpop.f32.mrf.mxu0
    %v9413 = vadd.f32 %v5985, %v9412
    %v9414 = vpop.f32.mrf.mxu0
    %v9415 = vadd.f32 %v5985, %v9414
    %9416 = vmatmul.bf16.gmra.mxu0 %v5510
    %v9417 = vpop.f32.mrf.mxu0
    %v9418 = vadd.f32 %v5985, %v9417
    %v9419 = vpop.f32.mrf.mxu0
    %v9420 = vadd.f32 %v5985, %v9419
    %9421 = vmatmul.bf16.gmra.mxu0 %v5517
    %v9422 = vpop.f32.mrf.mxu0
    %v9423 = vadd.f32 %v5985, %v9422
    %v9424 = vpop.f32.mrf.mxu0
    %v9425 = vadd.f32 %v5985, %v9424
    %9426 = vmatmul.bf16.gmra.mxu0 %v5524
    %v9427 = vpop.f32.mrf.mxu0
    %v9428 = vadd.f32 %v5985, %v9427
    %v9429 = vpop.f32.mrf.mxu0
    %v9430 = vadd.f32 %v5985, %v9429
    %9431 = vdwg.mxu0
    %9432 = vmatpush.bf16.msra.mxu0 %v7336
    %9433 = vmatpush.bf16.msra.mxu0 %v7329
    %9434 = vmatpush.bf16.msra.mxu0 %v7322
    %9435 = vmatpush.bf16.msra.mxu0 %v7315
    %9436 = vmatpush.bf16.msra.mxu0 %v7308
    %9437 = vmatpush.bf16.msra.mxu0 %v7301
    %9438 = vmatpush.bf16.msra.mxu0 %v7294
    %9439 = vmatpush.bf16.msra.mxu0 %v7287
    %9440 = vmatmul.bf16.gmra.mxu0 %v5476
    %v9441 = vpop.f32.mrf.mxu0
    %v9442 = vadd.f32 %v9393, %v9441
    %v9443 = vpop.f32.mrf.mxu0
    %v9444 = vadd.f32 %v9395, %v9443
    %9445 = vmatmul.bf16.gmra.mxu0 %v5483
    %v9446 = vpop.f32.mrf.mxu0
    %v9447 = vadd.f32 %v9398, %v9446
    %v9448 = vpop.f32.mrf.mxu0
    %v9449 = vadd.f32 %v9400, %v9448
    %9450 = vmatmul.bf16.gmra.mxu0 %v5490
    %v9451 = vpop.f32.mrf.mxu0
    %v9452 = vadd.f32 %v9403, %v9451
    %v9453 = vpop.f32.mrf.mxu0
    %v9454 = vadd.f32 %v9405, %v9453
    %9455 = vmatmul.bf16.gmra.mxu0 %v5497
    %v9456 = vpop.f32.mrf.mxu0
    %v9457 = vadd.f32 %v9408, %v9456
    %v9458 = vpop.f32.mrf.mxu0
    %v9459 = vadd.f32 %v9410, %v9458
    %9460 = vmatmul.bf16.gmra.mxu0 %v5504
    %v9461 = vpop.f32.mrf.mxu0
    %v9462 = vadd.f32 %v9413, %v9461
    %v9463 = vpop.f32.mrf.mxu0
    %v9464 = vadd.f32 %v9415, %v9463
    %9465 = vmatmul.bf16.gmra.mxu0 %v5511
    %v9466 = vpop.f32.mrf.mxu0
    %v9467 = vadd.f32 %v9418, %v9466
    %v9468 = vpop.f32.mrf.mxu0
    %v9469 = vadd.f32 %v9420, %v9468
    %9470 = vmatmul.bf16.gmra.mxu0 %v5518
    %v9471 = vpop.f32.mrf.mxu0
    %v9472 = vadd.f32 %v9423, %v9471
    %v9473 = vpop.f32.mrf.mxu0
    %v9474 = vadd.f32 %v9425, %v9473
    %9475 = vmatmul.bf16.gmra.mxu0 %v5525
    %v9476 = vpop.f32.mrf.mxu0
    %v9477 = vadd.f32 %v9428, %v9476
    %v9478 = vpop.f32.mrf.mxu0
    %v9479 = vadd.f32 %v9430, %v9478
    %9480 = vdwg.mxu0
    %9481 = vmatpush.bf16.msra.mxu0 %v7392
    %9482 = vmatpush.bf16.msra.mxu0 %v7385
    %9483 = vmatpush.bf16.msra.mxu0 %v7378
    %9484 = vmatpush.bf16.msra.mxu0 %v7371
    %9485 = vmatpush.bf16.msra.mxu0 %v7364
    %9486 = vmatpush.bf16.msra.mxu0 %v7357
    %9487 = vmatpush.bf16.msra.mxu0 %v7350
    %9488 = vmatpush.bf16.msra.mxu0 %v7343
    %9489 = vmatmul.bf16.gmra.mxu0 %v5477
    %v9490 = vpop.f32.mrf.mxu0
    %v9491 = vadd.f32 %v9442, %v9490
    %v9492 = vpop.f32.mrf.mxu0
    %v9493 = vadd.f32 %v9444, %v9492
    %9494 = vmatmul.bf16.gmra.mxu0 %v5484
    %v9495 = vpop.f32.mrf.mxu0
    %v9496 = vadd.f32 %v9447, %v9495
    %v9497 = vpop.f32.mrf.mxu0
    %v9498 = vadd.f32 %v9449, %v9497
    %9499 = vmatmul.bf16.gmra.mxu0 %v5491
    %v9500 = vpop.f32.mrf.mxu0
    %v9501 = vadd.f32 %v9452, %v9500
    %v9502 = vpop.f32.mrf.mxu0
    %v9503 = vadd.f32 %v9454, %v9502
    %9504 = vmatmul.bf16.gmra.mxu0 %v5498
    %v9505 = vpop.f32.mrf.mxu0
    %v9506 = vadd.f32 %v9457, %v9505
    %v9507 = vpop.f32.mrf.mxu0
    %v9508 = vadd.f32 %v9459, %v9507
    %9509 = vmatmul.bf16.gmra.mxu0 %v5505
    %v9510 = vpop.f32.mrf.mxu0
    %v9511 = vadd.f32 %v9462, %v9510
    %v9512 = vpop.f32.mrf.mxu0
    %v9513 = vadd.f32 %v9464, %v9512
    %9514 = vmatmul.bf16.gmra.mxu0 %v5512
    %v9515 = vpop.f32.mrf.mxu0
    %v9516 = vadd.f32 %v9467, %v9515
    %v9517 = vpop.f32.mrf.mxu0
    %v9518 = vadd.f32 %v9469, %v9517
    %9519 = vmatmul.bf16.gmra.mxu0 %v5519
    %v9520 = vpop.f32.mrf.mxu0
    %v9521 = vadd.f32 %v9472, %v9520
    %v9522 = vpop.f32.mrf.mxu0
    %v9523 = vadd.f32 %v9474, %v9522
    %9524 = vmatmul.bf16.gmra.mxu0 %v5526
    %v9525 = vpop.f32.mrf.mxu0
    %v9526 = vadd.f32 %v9477, %v9525
    %v9527 = vpop.f32.mrf.mxu0
    %v9528 = vadd.f32 %v9479, %v9527
    %9529 = vdwg.mxu0
    %9530 = vmatpush.bf16.msra.mxu0 %v7448
    %9531 = vmatpush.bf16.msra.mxu0 %v7441
    %9532 = vmatpush.bf16.msra.mxu0 %v7434
    %9533 = vmatpush.bf16.msra.mxu0 %v7427
    %9534 = vmatpush.bf16.msra.mxu0 %v7420
    %9535 = vmatpush.bf16.msra.mxu0 %v7413
    %9536 = vmatpush.bf16.msra.mxu0 %v7406
    %9537 = vmatpush.bf16.msra.mxu0 %v7399
    %9538 = vmatmul.bf16.gmra.mxu0 %v5478
    %v9539 = vpop.f32.mrf.mxu0
    %v9540 = vadd.f32 %v9491, %v9539
    %v9541 = vpop.f32.mrf.mxu0
    %v9542 = vadd.f32 %v9493, %v9541
    %9543 = vmatmul.bf16.gmra.mxu0 %v5485
    %v9544 = vpop.f32.mrf.mxu0
    %v9545 = vadd.f32 %v9496, %v9544
    %v9546 = vpop.f32.mrf.mxu0
    %v9547 = vadd.f32 %v9498, %v9546
    %9548 = vmatmul.bf16.gmra.mxu0 %v5492
    %v9549 = vpop.f32.mrf.mxu0
    %v9550 = vadd.f32 %v9501, %v9549
    %v9551 = vpop.f32.mrf.mxu0
    %v9552 = vadd.f32 %v9503, %v9551
    %9553 = vmatmul.bf16.gmra.mxu0 %v5499
    %v9554 = vpop.f32.mrf.mxu0
    %v9555 = vadd.f32 %v9506, %v9554
    %v9556 = vpop.f32.mrf.mxu0
    %v9557 = vadd.f32 %v9508, %v9556
    %9558 = vmatmul.bf16.gmra.mxu0 %v5506
    %v9559 = vpop.f32.mrf.mxu0
    %v9560 = vadd.f32 %v9511, %v9559
    %v9561 = vpop.f32.mrf.mxu0
    %v9562 = vadd.f32 %v9513, %v9561
    %9563 = vmatmul.bf16.gmra.mxu0 %v5513
    %v9564 = vpop.f32.mrf.mxu0
    %v9565 = vadd.f32 %v9516, %v9564
    %v9566 = vpop.f32.mrf.mxu0
    %v9567 = vadd.f32 %v9518, %v9566
    %9568 = vmatmul.bf16.gmra.mxu0 %v5520
    %v9569 = vpop.f32.mrf.mxu0
    %v9570 = vadd.f32 %v9521, %v9569
    %v9571 = vpop.f32.mrf.mxu0
    %v9572 = vadd.f32 %v9523, %v9571
    %9573 = vmatmul.bf16.gmra.mxu0 %v5527
    %v9574 = vpop.f32.mrf.mxu0
    %v9575 = vadd.f32 %v9526, %v9574
    %v9576 = vpop.f32.mrf.mxu0
    %v9577 = vadd.f32 %v9528, %v9576
    %9578 = vdwg.mxu0
    %9579 = vmatpush.bf16.msra.mxu0 %v7504
    %9580 = vmatpush.bf16.msra.mxu0 %v7497
    %9581 = vmatpush.bf16.msra.mxu0 %v7490
    %9582 = vmatpush.bf16.msra.mxu0 %v7483
    %9583 = vmatpush.bf16.msra.mxu0 %v7476
    %9584 = vmatpush.bf16.msra.mxu0 %v7469
    %9585 = vmatpush.bf16.msra.mxu0 %v7462
    %9586 = vmatpush.bf16.msra.mxu0 %v7455
    %9587 = vmatmul.bf16.gmra.mxu0 %v5479
    %v9588 = vpop.f32.mrf.mxu0
    %v9589 = vadd.f32 %v9540, %v9588
    %v9590 = vpop.f32.mrf.mxu0
    %v9591 = vadd.f32 %v9542, %v9590
    %9592 = vmatmul.bf16.gmra.mxu0 %v5486
    %v9593 = vpop.f32.mrf.mxu0
    %v9594 = vadd.f32 %v9545, %v9593
    %v9595 = vpop.f32.mrf.mxu0
    %v9596 = vadd.f32 %v9547, %v9595
    %9597 = vmatmul.bf16.gmra.mxu0 %v5493
    %v9598 = vpop.f32.mrf.mxu0
    %v9599 = vadd.f32 %v9550, %v9598
    %v9600 = vpop.f32.mrf.mxu0
    %v9601 = vadd.f32 %v9552, %v9600
    %9602 = vmatmul.bf16.gmra.mxu0 %v5500
    %v9603 = vpop.f32.mrf.mxu0
    %v9604 = vadd.f32 %v9555, %v9603
    %v9605 = vpop.f32.mrf.mxu0
    %v9606 = vadd.f32 %v9557, %v9605
    %9607 = vmatmul.bf16.gmra.mxu0 %v5507
    %v9608 = vpop.f32.mrf.mxu0
    %v9609 = vadd.f32 %v9560, %v9608
    %v9610 = vpop.f32.mrf.mxu0
    %v9611 = vadd.f32 %v9562, %v9610
    %9612 = vmatmul.bf16.gmra.mxu0 %v5514
    %v9613 = vpop.f32.mrf.mxu0
    %v9614 = vadd.f32 %v9565, %v9613
    %v9615 = vpop.f32.mrf.mxu0
    %v9616 = vadd.f32 %v9567, %v9615
    %9617 = vmatmul.bf16.gmra.mxu0 %v5521
    %v9618 = vpop.f32.mrf.mxu0
    %v9619 = vadd.f32 %v9570, %v9618
    %v9620 = vpop.f32.mrf.mxu0
    %v9621 = vadd.f32 %v9572, %v9620
    %9622 = vmatmul.bf16.gmra.mxu0 %v5528
    %v9623 = vpop.f32.mrf.mxu0
    %v9624 = vadd.f32 %v9575, %v9623
    %v9625 = vpop.f32.mrf.mxu0
    %v9626 = vadd.f32 %v9577, %v9625
    %9627 = vdwg.mxu0
    %9628 = vmatpush.bf16.msra.mxu0 %v7560
    %9629 = vmatpush.bf16.msra.mxu0 %v7553
    %9630 = vmatpush.bf16.msra.mxu0 %v7546
    %9631 = vmatpush.bf16.msra.mxu0 %v7539
    %9632 = vmatpush.bf16.msra.mxu0 %v7532
    %9633 = vmatpush.bf16.msra.mxu0 %v7525
    %9634 = vmatpush.bf16.msra.mxu0 %v7518
    %9635 = vmatpush.bf16.msra.mxu0 %v7511
    %9636 = vmatmul.bf16.gmra.mxu0 %v5480
    %v9637 = vpop.f32.mrf.mxu0
    %v9638 = vadd.f32 %v9589, %v9637
    %v9639 = vpop.f32.mrf.mxu0
    %v9640 = vadd.f32 %v9591, %v9639
    %9641 = vmatmul.bf16.gmra.mxu0 %v5487
    %v9642 = vpop.f32.mrf.mxu0
    %v9643 = vadd.f32 %v9594, %v9642
    %v9644 = vpop.f32.mrf.mxu0
    %v9645 = vadd.f32 %v9596, %v9644
    %9646 = vmatmul.bf16.gmra.mxu0 %v5494
    %v9647 = vpop.f32.mrf.mxu0
    %v9648 = vadd.f32 %v9599, %v9647
    %v9649 = vpop.f32.mrf.mxu0
    %v9650 = vadd.f32 %v9601, %v9649
    %9651 = vmatmul.bf16.gmra.mxu0 %v5501
    %v9652 = vpop.f32.mrf.mxu0
    %v9653 = vadd.f32 %v9604, %v9652
    %v9654 = vpop.f32.mrf.mxu0
    %v9655 = vadd.f32 %v9606, %v9654
    %9656 = vmatmul.bf16.gmra.mxu0 %v5508
    %v9657 = vpop.f32.mrf.mxu0
    %v9658 = vadd.f32 %v9609, %v9657
    %v9659 = vpop.f32.mrf.mxu0
    %v9660 = vadd.f32 %v9611, %v9659
    %9661 = vmatmul.bf16.gmra.mxu0 %v5515
    %v9662 = vpop.f32.mrf.mxu0
    %v9663 = vadd.f32 %v9614, %v9662
    %v9664 = vpop.f32.mrf.mxu0
    %v9665 = vadd.f32 %v9616, %v9664
    %9666 = vmatmul.bf16.gmra.mxu0 %v5522
    %v9667 = vpop.f32.mrf.mxu0
    %v9668 = vadd.f32 %v9619, %v9667
    %v9669 = vpop.f32.mrf.mxu0
    %v9670 = vadd.f32 %v9621, %v9669
    %9671 = vmatmul.bf16.gmra.mxu0 %v5529
    %v9672 = vpop.f32.mrf.mxu0
    %v9673 = vadd.f32 %v9624, %v9672
    %v9674 = vpop.f32.mrf.mxu0
    %v9675 = vadd.f32 %v9626, %v9674
    %9676 = vdwg.mxu0
    %9677 = vmatpush.bf16.msra.mxu0 %v7616
    %9678 = vmatpush.bf16.msra.mxu0 %v7609
    %9679 = vmatpush.bf16.msra.mxu0 %v7602
    %9680 = vmatpush.bf16.msra.mxu0 %v7595
    %9681 = vmatpush.bf16.msra.mxu0 %v7588
    %9682 = vmatpush.bf16.msra.mxu0 %v7581
    %9683 = vmatpush.bf16.msra.mxu0 %v7574
    %9684 = vmatpush.bf16.msra.mxu0 %v7567
    %9685 = vmatmul.bf16.gmra.mxu0 %v5481
    %v9686 = vpop.f32.mrf.mxu0
    %v9687 = vadd.f32 %v9638, %v9686
    %v9688 = vpop.f32.mrf.mxu0
    %v9689 = vadd.f32 %v9640, %v9688
    %9690 = vmatmul.bf16.gmra.mxu0 %v5488
    %v9691 = vpop.f32.mrf.mxu0
    %v9692 = vadd.f32 %v9643, %v9691
    %v9693 = vpop.f32.mrf.mxu0
    %v9694 = vadd.f32 %v9645, %v9693
    %9695 = vmatmul.bf16.gmra.mxu0 %v5495
    %v9696 = vpop.f32.mrf.mxu0
    %v9697 = vadd.f32 %v9648, %v9696
    %v9698 = vpop.f32.mrf.mxu0
    %v9699 = vadd.f32 %v9650, %v9698
    %9700 = vmatmul.bf16.gmra.mxu0 %v5502
    %v9701 = vpop.f32.mrf.mxu0
    %v9702 = vadd.f32 %v9653, %v9701
    %v9703 = vpop.f32.mrf.mxu0
    %v9704 = vadd.f32 %v9655, %v9703
    %9705 = vmatmul.bf16.gmra.mxu0 %v5509
    %v9706 = vpop.f32.mrf.mxu0
    %v9707 = vadd.f32 %v9658, %v9706
    %v9708 = vpop.f32.mrf.mxu0
    %v9709 = vadd.f32 %v9660, %v9708
    %9710 = vmatmul.bf16.gmra.mxu0 %v5516
    %v9711 = vpop.f32.mrf.mxu0
    %v9712 = vadd.f32 %v9663, %v9711
    %v9713 = vpop.f32.mrf.mxu0
    %v9714 = vadd.f32 %v9665, %v9713
    %9715 = vmatmul.bf16.gmra.mxu0 %v5523
    %v9716 = vpop.f32.mrf.mxu0
    %v9717 = vadd.f32 %v9668, %v9716
    %v9718 = vpop.f32.mrf.mxu0
    %v9719 = vadd.f32 %v9670, %v9718
    %9720 = vmatmul.bf16.gmra.mxu0 %v5530
    %v9721 = vpop.f32.mrf.mxu0
    %v9722 = vadd.f32 %v9673, %v9721
    %v9723 = vpop.f32.mrf.mxu0
    %v9724 = vadd.f32 %v9675, %v9723
    %9725 = vdwg.mxu0
    %9726 = vmatpush.bf16.msra.mxu0 %v7281
    %9727 = vmatpush.bf16.msra.mxu0 %v7274
    %9728 = vmatpush.bf16.msra.mxu0 %v7267
    %9729 = vmatpush.bf16.msra.mxu0 %v7260
    %9730 = vmatpush.bf16.msra.mxu0 %v7253
    %9731 = vmatpush.bf16.msra.mxu0 %v7246
    %9732 = vmatpush.bf16.msra.mxu0 %v7239
    %9733 = vmatpush.bf16.msra.mxu0 %v7232
    %9734 = vmatmul.bf16.gmra.mxu0 %v5475
    %v9735 = vpop.f32.mrf.mxu0
    %v9736 = vadd.f32 %v5986, %v9735
    %v9737 = vpop.f32.mrf.mxu0
    %v9738 = vadd.f32 %v5986, %v9737
    %9739 = vmatmul.bf16.gmra.mxu0 %v5482
    %v9740 = vpop.f32.mrf.mxu0
    %v9741 = vadd.f32 %v5986, %v9740
    %v9742 = vpop.f32.mrf.mxu0
    %v9743 = vadd.f32 %v5986, %v9742
    %9744 = vmatmul.bf16.gmra.mxu0 %v5489
    %v9745 = vpop.f32.mrf.mxu0
    %v9746 = vadd.f32 %v5986, %v9745
    %v9747 = vpop.f32.mrf.mxu0
    %v9748 = vadd.f32 %v5986, %v9747
    %9749 = vmatmul.bf16.gmra.mxu0 %v5496
    %v9750 = vpop.f32.mrf.mxu0
    %v9751 = vadd.f32 %v5986, %v9750
    %v9752 = vpop.f32.mrf.mxu0
    %v9753 = vadd.f32 %v5986, %v9752
    %9754 = vmatmul.bf16.gmra.mxu0 %v5503
    %v9755 = vpop.f32.mrf.mxu0
    %v9756 = vadd.f32 %v5986, %v9755
    %v9757 = vpop.f32.mrf.mxu0
    %v9758 = vadd.f32 %v5986, %v9757
    %9759 = vmatmul.bf16.gmra.mxu0 %v5510
    %v9760 = vpop.f32.mrf.mxu0
    %v9761 = vadd.f32 %v5986, %v9760
    %v9762 = vpop.f32.mrf.mxu0
    %v9763 = vadd.f32 %v5986, %v9762
    %9764 = vmatmul.bf16.gmra.mxu0 %v5517
    %v9765 = vpop.f32.mrf.mxu0
    %v9766 = vadd.f32 %v5986, %v9765
    %v9767 = vpop.f32.mrf.mxu0
    %v9768 = vadd.f32 %v5986, %v9767
    %9769 = vmatmul.bf16.gmra.mxu0 %v5524
    %v9770 = vpop.f32.mrf.mxu0
    %v9771 = vadd.f32 %v5986, %v9770
    %v9772 = vpop.f32.mrf.mxu0
    %v9773 = vadd.f32 %v5986, %v9772
    %9774 = vdwg.mxu0
    %9775 = vmatpush.bf16.msra.mxu0 %v7337
    %9776 = vmatpush.bf16.msra.mxu0 %v7330
    %9777 = vmatpush.bf16.msra.mxu0 %v7323
    %9778 = vmatpush.bf16.msra.mxu0 %v7316
    %9779 = vmatpush.bf16.msra.mxu0 %v7309
    %9780 = vmatpush.bf16.msra.mxu0 %v7302
    %9781 = vmatpush.bf16.msra.mxu0 %v7295
    %9782 = vmatpush.bf16.msra.mxu0 %v7288
    %9783 = vmatmul.bf16.gmra.mxu0 %v5476
    %v9784 = vpop.f32.mrf.mxu0
    %v9785 = vadd.f32 %v9736, %v9784
    %v9786 = vpop.f32.mrf.mxu0
    %v9787 = vadd.f32 %v9738, %v9786
    %9788 = vmatmul.bf16.gmra.mxu0 %v5483
    %v9789 = vpop.f32.mrf.mxu0
    %v9790 = vadd.f32 %v9741, %v9789
    %v9791 = vpop.f32.mrf.mxu0
    %v9792 = vadd.f32 %v9743, %v9791
    %9793 = vmatmul.bf16.gmra.mxu0 %v5490
    %v9794 = vpop.f32.mrf.mxu0
    %v9795 = vadd.f32 %v9746, %v9794
    %v9796 = vpop.f32.mrf.mxu0
    %v9797 = vadd.f32 %v9748, %v9796
    %9798 = vmatmul.bf16.gmra.mxu0 %v5497
    %v9799 = vpop.f32.mrf.mxu0
    %v9800 = vadd.f32 %v9751, %v9799
    %v9801 = vpop.f32.mrf.mxu0
    %v9802 = vadd.f32 %v9753, %v9801
    %9803 = vmatmul.bf16.gmra.mxu0 %v5504
    %v9804 = vpop.f32.mrf.mxu0
    %v9805 = vadd.f32 %v9756, %v9804
    %v9806 = vpop.f32.mrf.mxu0
    %v9807 = vadd.f32 %v9758, %v9806
    %9808 = vmatmul.bf16.gmra.mxu0 %v5511
    %v9809 = vpop.f32.mrf.mxu0
    %v9810 = vadd.f32 %v9761, %v9809
    %v9811 = vpop.f32.mrf.mxu0
    %v9812 = vadd.f32 %v9763, %v9811
    %9813 = vmatmul.bf16.gmra.mxu0 %v5518
    %v9814 = vpop.f32.mrf.mxu0
    %v9815 = vadd.f32 %v9766, %v9814
    %v9816 = vpop.f32.mrf.mxu0
    %v9817 = vadd.f32 %v9768, %v9816
    %9818 = vmatmul.bf16.gmra.mxu0 %v5525
    %v9819 = vpop.f32.mrf.mxu0
    %v9820 = vadd.f32 %v9771, %v9819
    %v9821 = vpop.f32.mrf.mxu0
    %v9822 = vadd.f32 %v9773, %v9821
    %9823 = vdwg.mxu0
    %9824 = vmatpush.bf16.msra.mxu0 %v7393
    %9825 = vmatpush.bf16.msra.mxu0 %v7386
    %9826 = vmatpush.bf16.msra.mxu0 %v7379
    %9827 = vmatpush.bf16.msra.mxu0 %v7372
    %9828 = vmatpush.bf16.msra.mxu0 %v7365
    %9829 = vmatpush.bf16.msra.mxu0 %v7358
    %9830 = vmatpush.bf16.msra.mxu0 %v7351
    %9831 = vmatpush.bf16.msra.mxu0 %v7344
    %9832 = vmatmul.bf16.gmra.mxu0 %v5477
    %v9833 = vpop.f32.mrf.mxu0
    %v9834 = vadd.f32 %v9785, %v9833
    %v9835 = vpop.f32.mrf.mxu0
    %v9836 = vadd.f32 %v9787, %v9835
    %9837 = vmatmul.bf16.gmra.mxu0 %v5484
    %v9838 = vpop.f32.mrf.mxu0
    %v9839 = vadd.f32 %v9790, %v9838
    %v9840 = vpop.f32.mrf.mxu0
    %v9841 = vadd.f32 %v9792, %v9840
    %9842 = vmatmul.bf16.gmra.mxu0 %v5491
    %v9843 = vpop.f32.mrf.mxu0
    %v9844 = vadd.f32 %v9795, %v9843
    %v9845 = vpop.f32.mrf.mxu0
    %v9846 = vadd.f32 %v9797, %v9845
    %9847 = vmatmul.bf16.gmra.mxu0 %v5498
    %v9848 = vpop.f32.mrf.mxu0
    %v9849 = vadd.f32 %v9800, %v9848
    %v9850 = vpop.f32.mrf.mxu0
    %v9851 = vadd.f32 %v9802, %v9850
    %9852 = vmatmul.bf16.gmra.mxu0 %v5505
    %v9853 = vpop.f32.mrf.mxu0
    %v9854 = vadd.f32 %v9805, %v9853
    %v9855 = vpop.f32.mrf.mxu0
    %v9856 = vadd.f32 %v9807, %v9855
    %9857 = vmatmul.bf16.gmra.mxu0 %v5512
    %v9858 = vpop.f32.mrf.mxu0
    %v9859 = vadd.f32 %v9810, %v9858
    %v9860 = vpop.f32.mrf.mxu0
    %v9861 = vadd.f32 %v9812, %v9860
    %9862 = vmatmul.bf16.gmra.mxu0 %v5519
    %v9863 = vpop.f32.mrf.mxu0
    %v9864 = vadd.f32 %v9815, %v9863
    %v9865 = vpop.f32.mrf.mxu0
    %v9866 = vadd.f32 %v9817, %v9865
    %9867 = vmatmul.bf16.gmra.mxu0 %v5526
    %v9868 = vpop.f32.mrf.mxu0
    %v9869 = vadd.f32 %v9820, %v9868
    %v9870 = vpop.f32.mrf.mxu0
    %v9871 = vadd.f32 %v9822, %v9870
    %9872 = vdwg.mxu0
    %9873 = vmatpush.bf16.msra.mxu0 %v7449
    %9874 = vmatpush.bf16.msra.mxu0 %v7442
    %9875 = vmatpush.bf16.msra.mxu0 %v7435
    %9876 = vmatpush.bf16.msra.mxu0 %v7428
    %9877 = vmatpush.bf16.msra.mxu0 %v7421
    %9878 = vmatpush.bf16.msra.mxu0 %v7414
    %9879 = vmatpush.bf16.msra.mxu0 %v7407
    %9880 = vmatpush.bf16.msra.mxu0 %v7400
    %9881 = vmatmul.bf16.gmra.mxu0 %v5478
    %v9882 = vpop.f32.mrf.mxu0
    %v9883 = vadd.f32 %v9834, %v9882
    %v9884 = vpop.f32.mrf.mxu0
    %v9885 = vadd.f32 %v9836, %v9884
    %9886 = vmatmul.bf16.gmra.mxu0 %v5485
    %v9887 = vpop.f32.mrf.mxu0
    %v9888 = vadd.f32 %v9839, %v9887
    %v9889 = vpop.f32.mrf.mxu0
    %v9890 = vadd.f32 %v9841, %v9889
    %9891 = vmatmul.bf16.gmra.mxu0 %v5492
    %v9892 = vpop.f32.mrf.mxu0
    %v9893 = vadd.f32 %v9844, %v9892
    %v9894 = vpop.f32.mrf.mxu0
    %v9895 = vadd.f32 %v9846, %v9894
    %9896 = vmatmul.bf16.gmra.mxu0 %v5499
    %v9897 = vpop.f32.mrf.mxu0
    %v9898 = vadd.f32 %v9849, %v9897
    %v9899 = vpop.f32.mrf.mxu0
    %v9900 = vadd.f32 %v9851, %v9899
    %9901 = vmatmul.bf16.gmra.mxu0 %v5506
    %v9902 = vpop.f32.mrf.mxu0
    %v9903 = vadd.f32 %v9854, %v9902
    %v9904 = vpop.f32.mrf.mxu0
    %v9905 = vadd.f32 %v9856, %v9904
    %9906 = vmatmul.bf16.gmra.mxu0 %v5513
    %v9907 = vpop.f32.mrf.mxu0
    %v9908 = vadd.f32 %v9859, %v9907
    %v9909 = vpop.f32.mrf.mxu0
    %v9910 = vadd.f32 %v9861, %v9909
    %9911 = vmatmul.bf16.gmra.mxu0 %v5520
    %v9912 = vpop.f32.mrf.mxu0
    %v9913 = vadd.f32 %v9864, %v9912
    %v9914 = vpop.f32.mrf.mxu0
    %v9915 = vadd.f32 %v9866, %v9914
    %9916 = vmatmul.bf16.gmra.mxu0 %v5527
    %v9917 = vpop.f32.mrf.mxu0
    %v9918 = vadd.f32 %v9869, %v9917
    %v9919 = vpop.f32.mrf.mxu0
    %v9920 = vadd.f32 %v9871, %v9919
    %9921 = vdwg.mxu0
    %9922 = vmatpush.bf16.msra.mxu0 %v7505
    %9923 = vmatpush.bf16.msra.mxu0 %v7498
    %9924 = vmatpush.bf16.msra.mxu0 %v7491
    %9925 = vmatpush.bf16.msra.mxu0 %v7484
    %9926 = vmatpush.bf16.msra.mxu0 %v7477
    %9927 = vmatpush.bf16.msra.mxu0 %v7470
    %9928 = vmatpush.bf16.msra.mxu0 %v7463
    %9929 = vmatpush.bf16.msra.mxu0 %v7456
    %9930 = vmatmul.bf16.gmra.mxu0 %v5479
    %v9931 = vpop.f32.mrf.mxu0
    %v9932 = vadd.f32 %v9883, %v9931
    %v9933 = vpop.f32.mrf.mxu0
    %v9934 = vadd.f32 %v9885, %v9933
    %9935 = vmatmul.bf16.gmra.mxu0 %v5486
    %v9936 = vpop.f32.mrf.mxu0
    %v9937 = vadd.f32 %v9888, %v9936
    %v9938 = vpop.f32.mrf.mxu0
    %v9939 = vadd.f32 %v9890, %v9938
    %9940 = vmatmul.bf16.gmra.mxu0 %v5493
    %v9941 = vpop.f32.mrf.mxu0
    %v9942 = vadd.f32 %v9893, %v9941
    %v9943 = vpop.f32.mrf.mxu0
    %v9944 = vadd.f32 %v9895, %v9943
    %9945 = vmatmul.bf16.gmra.mxu0 %v5500
    %v9946 = vpop.f32.mrf.mxu0
    %v9947 = vadd.f32 %v9898, %v9946
    %v9948 = vpop.f32.mrf.mxu0
    %v9949 = vadd.f32 %v9900, %v9948
    %9950 = vmatmul.bf16.gmra.mxu0 %v5507
    %v9951 = vpop.f32.mrf.mxu0
    %v9952 = vadd.f32 %v9903, %v9951
    %v9953 = vpop.f32.mrf.mxu0
    %v9954 = vadd.f32 %v9905, %v9953
    %9955 = vmatmul.bf16.gmra.mxu0 %v5514
    %v9956 = vpop.f32.mrf.mxu0
    %v9957 = vadd.f32 %v9908, %v9956
    %v9958 = vpop.f32.mrf.mxu0
    %v9959 = vadd.f32 %v9910, %v9958
    %9960 = vmatmul.bf16.gmra.mxu0 %v5521
    %v9961 = vpop.f32.mrf.mxu0
    %v9962 = vadd.f32 %v9913, %v9961
    %v9963 = vpop.f32.mrf.mxu0
    %v9964 = vadd.f32 %v9915, %v9963
    %9965 = vmatmul.bf16.gmra.mxu0 %v5528
    %v9966 = vpop.f32.mrf.mxu0
    %v9967 = vadd.f32 %v9918, %v9966
    %v9968 = vpop.f32.mrf.mxu0
    %v9969 = vadd.f32 %v9920, %v9968
    %9970 = vdwg.mxu0
    %9971 = vmatpush.bf16.msra.mxu0 %v7561
    %9972 = vmatpush.bf16.msra.mxu0 %v7554
    %9973 = vmatpush.bf16.msra.mxu0 %v7547
    %9974 = vmatpush.bf16.msra.mxu0 %v7540
    %9975 = vmatpush.bf16.msra.mxu0 %v7533
    %9976 = vmatpush.bf16.msra.mxu0 %v7526
    %9977 = vmatpush.bf16.msra.mxu0 %v7519
    %9978 = vmatpush.bf16.msra.mxu0 %v7512
    %9979 = vmatmul.bf16.gmra.mxu0 %v5480
    %v9980 = vpop.f32.mrf.mxu0
    %v9981 = vadd.f32 %v9932, %v9980
    %v9982 = vpop.f32.mrf.mxu0
    %v9983 = vadd.f32 %v9934, %v9982
    %9984 = vmatmul.bf16.gmra.mxu0 %v5487
    %v9985 = vpop.f32.mrf.mxu0
    %v9986 = vadd.f32 %v9937, %v9985
    %v9987 = vpop.f32.mrf.mxu0
    %v9988 = vadd.f32 %v9939, %v9987
    %9989 = vmatmul.bf16.gmra.mxu0 %v5494
    %v9990 = vpop.f32.mrf.mxu0
    %v9991 = vadd.f32 %v9942, %v9990
    %v9992 = vpop.f32.mrf.mxu0
    %v9993 = vadd.f32 %v9944, %v9992
    %9994 = vmatmul.bf16.gmra.mxu0 %v5501
    %v9995 = vpop.f32.mrf.mxu0
    %v9996 = vadd.f32 %v9947, %v9995
    %v9997 = vpop.f32.mrf.mxu0
    %v9998 = vadd.f32 %v9949, %v9997
    %9999 = vmatmul.bf16.gmra.mxu0 %v5508
    %v10000 = vpop.f32.mrf.mxu0
    %v10001 = vadd.f32 %v9952, %v10000
    %v10002 = vpop.f32.mrf.mxu0
    %v10003 = vadd.f32 %v9954, %v10002
    %10004 = vmatmul.bf16.gmra.mxu0 %v5515
    %v10005 = vpop.f32.mrf.mxu0
    %v10006 = vadd.f32 %v9957, %v10005
    %v10007 = vpop.f32.mrf.mxu0
    %v10008 = vadd.f32 %v9959, %v10007
    %10009 = vmatmul.bf16.gmra.mxu0 %v5522
    %v10010 = vpop.f32.mrf.mxu0
    %v10011 = vadd.f32 %v9962, %v10010
    %v10012 = vpop.f32.mrf.mxu0
    %v10013 = vadd.f32 %v9964, %v10012
    %10014 = vmatmul.bf16.gmra.mxu0 %v5529
    %v10015 = vpop.f32.mrf.mxu0
    %v10016 = vadd.f32 %v9967, %v10015
    %v10017 = vpop.f32.mrf.mxu0
    %v10018 = vadd.f32 %v9969, %v10017
    %10019 = vdwg.mxu0
    %10020 = vmatpush.bf16.msra.mxu0 %v7617
    %10021 = vmatpush.bf16.msra.mxu0 %v7610
    %10022 = vmatpush.bf16.msra.mxu0 %v7603
    %10023 = vmatpush.bf16.msra.mxu0 %v7596
    %10024 = vmatpush.bf16.msra.mxu0 %v7589
    %10025 = vmatpush.bf16.msra.mxu0 %v7582
    %10026 = vmatpush.bf16.msra.mxu0 %v7575
    %10027 = vmatpush.bf16.msra.mxu0 %v7568
    %10028 = vmatmul.bf16.gmra.mxu0 %v5481
    %v10029 = vpop.f32.mrf.mxu0
    %v10030 = vadd.f32 %v9981, %v10029
    %v10031 = vpop.f32.mrf.mxu0
    %v10032 = vadd.f32 %v9983, %v10031
    %10033 = vmatmul.bf16.gmra.mxu0 %v5488
    %v10034 = vpop.f32.mrf.mxu0
    %v10035 = vadd.f32 %v9986, %v10034
    %v10036 = vpop.f32.mrf.mxu0
    %v10037 = vadd.f32 %v9988, %v10036
    %10038 = vmatmul.bf16.gmra.mxu0 %v5495
    %v10039 = vpop.f32.mrf.mxu0
    %v10040 = vadd.f32 %v9991, %v10039
    %v10041 = vpop.f32.mrf.mxu0
    %v10042 = vadd.f32 %v9993, %v10041
    %10043 = vmatmul.bf16.gmra.mxu0 %v5502
    %v10044 = vpop.f32.mrf.mxu0
    %v10045 = vadd.f32 %v9996, %v10044
    %v10046 = vpop.f32.mrf.mxu0
    %v10047 = vadd.f32 %v9998, %v10046
    %10048 = vmatmul.bf16.gmra.mxu0 %v5509
    %v10049 = vpop.f32.mrf.mxu0
    %v10050 = vadd.f32 %v10001, %v10049
    %v10051 = vpop.f32.mrf.mxu0
    %v10052 = vadd.f32 %v10003, %v10051
    %10053 = vmatmul.bf16.gmra.mxu0 %v5516
    %v10054 = vpop.f32.mrf.mxu0
    %v10055 = vadd.f32 %v10006, %v10054
    %v10056 = vpop.f32.mrf.mxu0
    %v10057 = vadd.f32 %v10008, %v10056
    %10058 = vmatmul.bf16.gmra.mxu0 %v5523
    %v10059 = vpop.f32.mrf.mxu0
    %v10060 = vadd.f32 %v10011, %v10059
    %v10061 = vpop.f32.mrf.mxu0
    %v10062 = vadd.f32 %v10013, %v10061
    %10063 = vmatmul.bf16.gmra.mxu0 %v5530
    %v10064 = vpop.f32.mrf.mxu0
    %v10065 = vadd.f32 %v10016, %v10064
    %v10066 = vpop.f32.mrf.mxu0
    %v10067 = vadd.f32 %v10018, %v10066
    %10068 = vdwg.mxu0
    %10069 = vmatpush.bf16.msra.mxu0 %v7282
    %10070 = vmatpush.bf16.msra.mxu0 %v7275
    %10071 = vmatpush.bf16.msra.mxu0 %v7268
    %10072 = vmatpush.bf16.msra.mxu0 %v7261
    %10073 = vmatpush.bf16.msra.mxu0 %v7254
    %10074 = vmatpush.bf16.msra.mxu0 %v7247
    %10075 = vmatpush.bf16.msra.mxu0 %v7240
    %10076 = vmatpush.bf16.msra.mxu0 %v7233
    %10077 = vmatmul.bf16.gmra.mxu0 %v5475
    %v10078 = vpop.f32.mrf.mxu0
    %v10079 = vadd.f32 %v5987, %v10078
    %v10080 = vpop.f32.mrf.mxu0
    %v10081 = vadd.f32 %v5987, %v10080
    %10082 = vmatmul.bf16.gmra.mxu0 %v5482
    %v10083 = vpop.f32.mrf.mxu0
    %v10084 = vadd.f32 %v5987, %v10083
    %v10085 = vpop.f32.mrf.mxu0
    %v10086 = vadd.f32 %v5987, %v10085
    %10087 = vmatmul.bf16.gmra.mxu0 %v5489
    %v10088 = vpop.f32.mrf.mxu0
    %v10089 = vadd.f32 %v5987, %v10088
    %v10090 = vpop.f32.mrf.mxu0
    %v10091 = vadd.f32 %v5987, %v10090
    %10092 = vmatmul.bf16.gmra.mxu0 %v5496
    %v10093 = vpop.f32.mrf.mxu0
    %v10094 = vadd.f32 %v5987, %v10093
    %v10095 = vpop.f32.mrf.mxu0
    %v10096 = vadd.f32 %v5987, %v10095
    %10097 = vmatmul.bf16.gmra.mxu0 %v5503
    %v10098 = vpop.f32.mrf.mxu0
    %v10099 = vadd.f32 %v5987, %v10098
    %v10100 = vpop.f32.mrf.mxu0
    %v10101 = vadd.f32 %v5987, %v10100
    %10102 = vmatmul.bf16.gmra.mxu0 %v5510
    %v10103 = vpop.f32.mrf.mxu0
    %v10104 = vadd.f32 %v5987, %v10103
    %v10105 = vpop.f32.mrf.mxu0
    %v10106 = vadd.f32 %v5987, %v10105
    %10107 = vmatmul.bf16.gmra.mxu0 %v5517
    %v10108 = vpop.f32.mrf.mxu0
    %v10109 = vadd.f32 %v5987, %v10108
    %v10110 = vpop.f32.mrf.mxu0
    %v10111 = vadd.f32 %v5987, %v10110
    %10112 = vmatmul.bf16.gmra.mxu0 %v5524
    %v10113 = vpop.f32.mrf.mxu0
    %v10114 = vadd.f32 %v5987, %v10113
    %v10115 = vpop.f32.mrf.mxu0
    %v10116 = vadd.f32 %v5987, %v10115
    %10117 = vdwg.mxu0
    %10118 = vmatpush.bf16.msra.mxu0 %v7338
    %10119 = vmatpush.bf16.msra.mxu0 %v7331
    %10120 = vmatpush.bf16.msra.mxu0 %v7324
    %10121 = vmatpush.bf16.msra.mxu0 %v7317
    %10122 = vmatpush.bf16.msra.mxu0 %v7310
    %10123 = vmatpush.bf16.msra.mxu0 %v7303
    %10124 = vmatpush.bf16.msra.mxu0 %v7296
    %10125 = vmatpush.bf16.msra.mxu0 %v7289
    %10126 = vmatmul.bf16.gmra.mxu0 %v5476
    %v10127 = vpop.f32.mrf.mxu0
    %v10128 = vadd.f32 %v10079, %v10127
    %v10129 = vpop.f32.mrf.mxu0
    %v10130 = vadd.f32 %v10081, %v10129
    %10131 = vmatmul.bf16.gmra.mxu0 %v5483
    %v10132 = vpop.f32.mrf.mxu0
    %v10133 = vadd.f32 %v10084, %v10132
    %v10134 = vpop.f32.mrf.mxu0
    %v10135 = vadd.f32 %v10086, %v10134
    %10136 = vmatmul.bf16.gmra.mxu0 %v5490
    %v10137 = vpop.f32.mrf.mxu0
    %v10138 = vadd.f32 %v10089, %v10137
    %v10139 = vpop.f32.mrf.mxu0
    %v10140 = vadd.f32 %v10091, %v10139
    %10141 = vmatmul.bf16.gmra.mxu0 %v5497
    %v10142 = vpop.f32.mrf.mxu0
    %v10143 = vadd.f32 %v10094, %v10142
    %v10144 = vpop.f32.mrf.mxu0
    %v10145 = vadd.f32 %v10096, %v10144
    %10146 = vmatmul.bf16.gmra.mxu0 %v5504
    %v10147 = vpop.f32.mrf.mxu0
    %v10148 = vadd.f32 %v10099, %v10147
    %v10149 = vpop.f32.mrf.mxu0
    %v10150 = vadd.f32 %v10101, %v10149
    %10151 = vmatmul.bf16.gmra.mxu0 %v5511
    %v10152 = vpop.f32.mrf.mxu0
    %v10153 = vadd.f32 %v10104, %v10152
    %v10154 = vpop.f32.mrf.mxu0
    %v10155 = vadd.f32 %v10106, %v10154
    %10156 = vmatmul.bf16.gmra.mxu0 %v5518
    %v10157 = vpop.f32.mrf.mxu0
    %v10158 = vadd.f32 %v10109, %v10157
    %v10159 = vpop.f32.mrf.mxu0
    %v10160 = vadd.f32 %v10111, %v10159
    %10161 = vmatmul.bf16.gmra.mxu0 %v5525
    %v10162 = vpop.f32.mrf.mxu0
    %v10163 = vadd.f32 %v10114, %v10162
    %v10164 = vpop.f32.mrf.mxu0
    %v10165 = vadd.f32 %v10116, %v10164
    %10166 = vdwg.mxu0
    %10167 = vmatpush.bf16.msra.mxu0 %v7394
    %10168 = vmatpush.bf16.msra.mxu0 %v7387
    %10169 = vmatpush.bf16.msra.mxu0 %v7380
    %10170 = vmatpush.bf16.msra.mxu0 %v7373
    %10171 = vmatpush.bf16.msra.mxu0 %v7366
    %10172 = vmatpush.bf16.msra.mxu0 %v7359
    %10173 = vmatpush.bf16.msra.mxu0 %v7352
    %10174 = vmatpush.bf16.msra.mxu0 %v7345
    %10175 = vmatmul.bf16.gmra.mxu0 %v5477
    %v10176 = vpop.f32.mrf.mxu0
    %v10177 = vadd.f32 %v10128, %v10176
    %v10178 = vpop.f32.mrf.mxu0
    %v10179 = vadd.f32 %v10130, %v10178
    %10180 = vmatmul.bf16.gmra.mxu0 %v5484
    %v10181 = vpop.f32.mrf.mxu0
    %v10182 = vadd.f32 %v10133, %v10181
    %v10183 = vpop.f32.mrf.mxu0
    %v10184 = vadd.f32 %v10135, %v10183
    %10185 = vmatmul.bf16.gmra.mxu0 %v5491
    %v10186 = vpop.f32.mrf.mxu0
    %v10187 = vadd.f32 %v10138, %v10186
    %v10188 = vpop.f32.mrf.mxu0
    %v10189 = vadd.f32 %v10140, %v10188
    %10190 = vmatmul.bf16.gmra.mxu0 %v5498
    %v10191 = vpop.f32.mrf.mxu0
    %v10192 = vadd.f32 %v10143, %v10191
    %v10193 = vpop.f32.mrf.mxu0
    %v10194 = vadd.f32 %v10145, %v10193
    %10195 = vmatmul.bf16.gmra.mxu0 %v5505
    %v10196 = vpop.f32.mrf.mxu0
    %v10197 = vadd.f32 %v10148, %v10196
    %v10198 = vpop.f32.mrf.mxu0
    %v10199 = vadd.f32 %v10150, %v10198
    %10200 = vmatmul.bf16.gmra.mxu0 %v5512
    %v10201 = vpop.f32.mrf.mxu0
    %v10202 = vadd.f32 %v10153, %v10201
    %v10203 = vpop.f32.mrf.mxu0
    %v10204 = vadd.f32 %v10155, %v10203
    %10205 = vmatmul.bf16.gmra.mxu0 %v5519
    %v10206 = vpop.f32.mrf.mxu0
    %v10207 = vadd.f32 %v10158, %v10206
    %v10208 = vpop.f32.mrf.mxu0
    %v10209 = vadd.f32 %v10160, %v10208
    %10210 = vmatmul.bf16.gmra.mxu0 %v5526
    %v10211 = vpop.f32.mrf.mxu0
    %v10212 = vadd.f32 %v10163, %v10211
    %v10213 = vpop.f32.mrf.mxu0
    %v10214 = vadd.f32 %v10165, %v10213
    %10215 = vdwg.mxu0
    %10216 = vmatpush.bf16.msra.mxu0 %v7450
    %10217 = vmatpush.bf16.msra.mxu0 %v7443
    %10218 = vmatpush.bf16.msra.mxu0 %v7436
    %10219 = vmatpush.bf16.msra.mxu0 %v7429
    %10220 = vmatpush.bf16.msra.mxu0 %v7422
    %10221 = vmatpush.bf16.msra.mxu0 %v7415
    %10222 = vmatpush.bf16.msra.mxu0 %v7408
    %10223 = vmatpush.bf16.msra.mxu0 %v7401
    %10224 = vmatmul.bf16.gmra.mxu0 %v5478
    %v10225 = vpop.f32.mrf.mxu0
    %v10226 = vadd.f32 %v10177, %v10225
    %v10227 = vpop.f32.mrf.mxu0
    %v10228 = vadd.f32 %v10179, %v10227
    %10229 = vmatmul.bf16.gmra.mxu0 %v5485
    %v10230 = vpop.f32.mrf.mxu0
    %v10231 = vadd.f32 %v10182, %v10230
    %v10232 = vpop.f32.mrf.mxu0
    %v10233 = vadd.f32 %v10184, %v10232
    %10234 = vmatmul.bf16.gmra.mxu0 %v5492
    %v10235 = vpop.f32.mrf.mxu0
    %v10236 = vadd.f32 %v10187, %v10235
    %v10237 = vpop.f32.mrf.mxu0
    %v10238 = vadd.f32 %v10189, %v10237
    %10239 = vmatmul.bf16.gmra.mxu0 %v5499
    %v10240 = vpop.f32.mrf.mxu0
    %v10241 = vadd.f32 %v10192, %v10240
    %v10242 = vpop.f32.mrf.mxu0
    %v10243 = vadd.f32 %v10194, %v10242
    %10244 = vmatmul.bf16.gmra.mxu0 %v5506
    %v10245 = vpop.f32.mrf.mxu0
    %v10246 = vadd.f32 %v10197, %v10245
    %v10247 = vpop.f32.mrf.mxu0
    %v10248 = vadd.f32 %v10199, %v10247
    %10249 = vmatmul.bf16.gmra.mxu0 %v5513
    %v10250 = vpop.f32.mrf.mxu0
    %v10251 = vadd.f32 %v10202, %v10250
    %v10252 = vpop.f32.mrf.mxu0
    %v10253 = vadd.f32 %v10204, %v10252
    %10254 = vmatmul.bf16.gmra.mxu0 %v5520
    %v10255 = vpop.f32.mrf.mxu0
    %v10256 = vadd.f32 %v10207, %v10255
    %v10257 = vpop.f32.mrf.mxu0
    %v10258 = vadd.f32 %v10209, %v10257
    %10259 = vmatmul.bf16.gmra.mxu0 %v5527
    %v10260 = vpop.f32.mrf.mxu0
    %v10261 = vadd.f32 %v10212, %v10260
    %v10262 = vpop.f32.mrf.mxu0
    %v10263 = vadd.f32 %v10214, %v10262
    %10264 = vdwg.mxu0
    %10265 = vmatpush.bf16.msra.mxu0 %v7506
    %10266 = vmatpush.bf16.msra.mxu0 %v7499
    %10267 = vmatpush.bf16.msra.mxu0 %v7492
    %10268 = vmatpush.bf16.msra.mxu0 %v7485
    %10269 = vmatpush.bf16.msra.mxu0 %v7478
    %10270 = vmatpush.bf16.msra.mxu0 %v7471
    %10271 = vmatpush.bf16.msra.mxu0 %v7464
    %10272 = vmatpush.bf16.msra.mxu0 %v7457
    %10273 = vmatmul.bf16.gmra.mxu0 %v5479
    %v10274 = vpop.f32.mrf.mxu0
    %v10275 = vadd.f32 %v10226, %v10274
    %v10276 = vpop.f32.mrf.mxu0
    %v10277 = vadd.f32 %v10228, %v10276
    %10278 = vmatmul.bf16.gmra.mxu0 %v5486
    %v10279 = vpop.f32.mrf.mxu0
    %v10280 = vadd.f32 %v10231, %v10279
    %v10281 = vpop.f32.mrf.mxu0
    %v10282 = vadd.f32 %v10233, %v10281
    %10283 = vmatmul.bf16.gmra.mxu0 %v5493
    %v10284 = vpop.f32.mrf.mxu0
    %v10285 = vadd.f32 %v10236, %v10284
    %v10286 = vpop.f32.mrf.mxu0
    %v10287 = vadd.f32 %v10238, %v10286
    %10288 = vmatmul.bf16.gmra.mxu0 %v5500
    %v10289 = vpop.f32.mrf.mxu0
    %v10290 = vadd.f32 %v10241, %v10289
    %v10291 = vpop.f32.mrf.mxu0
    %v10292 = vadd.f32 %v10243, %v10291
    %10293 = vmatmul.bf16.gmra.mxu0 %v5507
    %v10294 = vpop.f32.mrf.mxu0
    %v10295 = vadd.f32 %v10246, %v10294
    %v10296 = vpop.f32.mrf.mxu0
    %v10297 = vadd.f32 %v10248, %v10296
    %10298 = vmatmul.bf16.gmra.mxu0 %v5514
    %v10299 = vpop.f32.mrf.mxu0
    %v10300 = vadd.f32 %v10251, %v10299
    %v10301 = vpop.f32.mrf.mxu0
    %v10302 = vadd.f32 %v10253, %v10301
    %10303 = vmatmul.bf16.gmra.mxu0 %v5521
    %v10304 = vpop.f32.mrf.mxu0
    %v10305 = vadd.f32 %v10256, %v10304
    %v10306 = vpop.f32.mrf.mxu0
    %v10307 = vadd.f32 %v10258, %v10306
    %10308 = vmatmul.bf16.gmra.mxu0 %v5528
    %v10309 = vpop.f32.mrf.mxu0
    %v10310 = vadd.f32 %v10261, %v10309
    %v10311 = vpop.f32.mrf.mxu0
    %v10312 = vadd.f32 %v10263, %v10311
    %10313 = vdwg.mxu0
    %10314 = vmatpush.bf16.msra.mxu0 %v7562
    %10315 = vmatpush.bf16.msra.mxu0 %v7555
    %10316 = vmatpush.bf16.msra.mxu0 %v7548
    %10317 = vmatpush.bf16.msra.mxu0 %v7541
    %10318 = vmatpush.bf16.msra.mxu0 %v7534
    %10319 = vmatpush.bf16.msra.mxu0 %v7527
    %10320 = vmatpush.bf16.msra.mxu0 %v7520
    %10321 = vmatpush.bf16.msra.mxu0 %v7513
    %10322 = vmatmul.bf16.gmra.mxu0 %v5480
    %v10323 = vpop.f32.mrf.mxu0
    %v10324 = vadd.f32 %v10275, %v10323
    %v10325 = vpop.f32.mrf.mxu0
    %v10326 = vadd.f32 %v10277, %v10325
    %10327 = vmatmul.bf16.gmra.mxu0 %v5487
    %v10328 = vpop.f32.mrf.mxu0
    %v10329 = vadd.f32 %v10280, %v10328
    %v10330 = vpop.f32.mrf.mxu0
    %v10331 = vadd.f32 %v10282, %v10330
    %10332 = vmatmul.bf16.gmra.mxu0 %v5494
    %v10333 = vpop.f32.mrf.mxu0
    %v10334 = vadd.f32 %v10285, %v10333
    %v10335 = vpop.f32.mrf.mxu0
    %v10336 = vadd.f32 %v10287, %v10335
    %10337 = vmatmul.bf16.gmra.mxu0 %v5501
    %v10338 = vpop.f32.mrf.mxu0
    %v10339 = vadd.f32 %v10290, %v10338
    %v10340 = vpop.f32.mrf.mxu0
    %v10341 = vadd.f32 %v10292, %v10340
    %10342 = vmatmul.bf16.gmra.mxu0 %v5508
    %v10343 = vpop.f32.mrf.mxu0
    %v10344 = vadd.f32 %v10295, %v10343
    %v10345 = vpop.f32.mrf.mxu0
    %v10346 = vadd.f32 %v10297, %v10345
    %10347 = vmatmul.bf16.gmra.mxu0 %v5515
    %v10348 = vpop.f32.mrf.mxu0
    %v10349 = vadd.f32 %v10300, %v10348
    %v10350 = vpop.f32.mrf.mxu0
    %v10351 = vadd.f32 %v10302, %v10350
    %10352 = vmatmul.bf16.gmra.mxu0 %v5522
    %v10353 = vpop.f32.mrf.mxu0
    %v10354 = vadd.f32 %v10305, %v10353
    %v10355 = vpop.f32.mrf.mxu0
    %v10356 = vadd.f32 %v10307, %v10355
    %10357 = vmatmul.bf16.gmra.mxu0 %v5529
    %v10358 = vpop.f32.mrf.mxu0
    %v10359 = vadd.f32 %v10310, %v10358
    %v10360 = vpop.f32.mrf.mxu0
    %v10361 = vadd.f32 %v10312, %v10360
    %10362 = vdwg.mxu0
    %10363 = vmatpush.bf16.msra.mxu0 %v7618
    %10364 = vmatpush.bf16.msra.mxu0 %v7611
    %10365 = vmatpush.bf16.msra.mxu0 %v7604
    %10366 = vmatpush.bf16.msra.mxu0 %v7597
    %10367 = vmatpush.bf16.msra.mxu0 %v7590
    %10368 = vmatpush.bf16.msra.mxu0 %v7583
    %10369 = vmatpush.bf16.msra.mxu0 %v7576
    %10370 = vmatpush.bf16.msra.mxu0 %v7569
    %10371 = vmatmul.bf16.gmra.mxu0 %v5481
    %v10372 = vpop.f32.mrf.mxu0
    %v10373 = vadd.f32 %v10324, %v10372
    %v10374 = vpop.f32.mrf.mxu0
    %v10375 = vadd.f32 %v10326, %v10374
    %10376 = vmatmul.bf16.gmra.mxu0 %v5488
    %v10377 = vpop.f32.mrf.mxu0
    %v10378 = vadd.f32 %v10329, %v10377
    %v10379 = vpop.f32.mrf.mxu0
    %v10380 = vadd.f32 %v10331, %v10379
    %10381 = vmatmul.bf16.gmra.mxu0 %v5495
    %v10382 = vpop.f32.mrf.mxu0
    %v10383 = vadd.f32 %v10334, %v10382
    %v10384 = vpop.f32.mrf.mxu0
    %v10385 = vadd.f32 %v10336, %v10384
    %10386 = vmatmul.bf16.gmra.mxu0 %v5502
    %v10387 = vpop.f32.mrf.mxu0
    %v10388 = vadd.f32 %v10339, %v10387
    %v10389 = vpop.f32.mrf.mxu0
    %v10390 = vadd.f32 %v10341, %v10389
    %10391 = vmatmul.bf16.gmra.mxu0 %v5509
    %v10392 = vpop.f32.mrf.mxu0
    %v10393 = vadd.f32 %v10344, %v10392
    %v10394 = vpop.f32.mrf.mxu0
    %v10395 = vadd.f32 %v10346, %v10394
    %10396 = vmatmul.bf16.gmra.mxu0 %v5516
    %v10397 = vpop.f32.mrf.mxu0
    %v10398 = vadd.f32 %v10349, %v10397
    %v10399 = vpop.f32.mrf.mxu0
    %v10400 = vadd.f32 %v10351, %v10399
    %10401 = vmatmul.bf16.gmra.mxu0 %v5523
    %v10402 = vpop.f32.mrf.mxu0
    %v10403 = vadd.f32 %v10354, %v10402
    %v10404 = vpop.f32.mrf.mxu0
    %v10405 = vadd.f32 %v10356, %v10404
    %10406 = vmatmul.bf16.gmra.mxu0 %v5530
    %v10407 = vpop.f32.mrf.mxu0
    %v10408 = vadd.f32 %v10359, %v10407
    %v10409 = vpop.f32.mrf.mxu0
    %v10410 = vadd.f32 %v10361, %v10409
    %10411 = vdwg.mxu0
    %v10412 = vmax.f32 %v8315, 0.0
    %v10413 = vmax.f32 %v8658, 0.0
    %v10414 = vmax.f32 %v9001, 0.0
    %v10415 = vmax.f32 %v9344, 0.0
    %v10416 = vmax.f32 %v9687, 0.0
    %v10417 = vmax.f32 %v10030, 0.0
    %v10418 = vmax.f32 %v10373, 0.0
    %v10419 = vmax.f32 %v8317, 0.0
    %v10420 = vmax.f32 %v8660, 0.0
    %v10421 = vmax.f32 %v9003, 0.0
    %v10422 = vmax.f32 %v9346, 0.0
    %v10423 = vmax.f32 %v9689, 0.0
    %v10424 = vmax.f32 %v10032, 0.0
    %v10425 = vmax.f32 %v10375, 0.0
    %v10426 = vmax.f32 %v8320, 0.0
    %v10427 = vmax.f32 %v8663, 0.0
    %v10428 = vmax.f32 %v9006, 0.0
    %v10429 = vmax.f32 %v9349, 0.0
    %v10430 = vmax.f32 %v9692, 0.0
    %v10431 = vmax.f32 %v10035, 0.0
    %v10432 = vmax.f32 %v10378, 0.0
    %v10433 = vmax.f32 %v8322, 0.0
    %v10434 = vmax.f32 %v8665, 0.0
    %v10435 = vmax.f32 %v9008, 0.0
    %v10436 = vmax.f32 %v9351, 0.0
    %v10437 = vmax.f32 %v9694, 0.0
    %v10438 = vmax.f32 %v10037, 0.0
    %v10439 = vmax.f32 %v10380, 0.0
    %v10440 = vmax.f32 %v8325, 0.0
    %v10441 = vmax.f32 %v8668, 0.0
    %v10442 = vmax.f32 %v9011, 0.0
    %v10443 = vmax.f32 %v9354, 0.0
    %v10444 = vmax.f32 %v9697, 0.0
    %v10445 = vmax.f32 %v10040, 0.0
    %v10446 = vmax.f32 %v10383, 0.0
    %v10447 = vmax.f32 %v8327, 0.0
    %v10448 = vmax.f32 %v8670, 0.0
    %v10449 = vmax.f32 %v9013, 0.0
    %v10450 = vmax.f32 %v9356, 0.0
    %v10451 = vmax.f32 %v9699, 0.0
    %v10452 = vmax.f32 %v10042, 0.0
    %v10453 = vmax.f32 %v10385, 0.0
    %v10454 = vmax.f32 %v8330, 0.0
    %v10455 = vmax.f32 %v8673, 0.0
    %v10456 = vmax.f32 %v9016, 0.0
    %v10457 = vmax.f32 %v9359, 0.0
    %v10458 = vmax.f32 %v9702, 0.0
    %v10459 = vmax.f32 %v10045, 0.0
    %v10460 = vmax.f32 %v10388, 0.0
    %v10461 = vmax.f32 %v8332, 0.0
    %v10462 = vmax.f32 %v8675, 0.0
    %v10463 = vmax.f32 %v9018, 0.0
    %v10464 = vmax.f32 %v9361, 0.0
    %v10465 = vmax.f32 %v9704, 0.0
    %v10466 = vmax.f32 %v10047, 0.0
    %v10467 = vmax.f32 %v10390, 0.0
    %v10468 = vmax.f32 %v8335, 0.0
    %v10469 = vmax.f32 %v8678, 0.0
    %v10470 = vmax.f32 %v9021, 0.0
    %v10471 = vmax.f32 %v9364, 0.0
    %v10472 = vmax.f32 %v9707, 0.0
    %v10473 = vmax.f32 %v10050, 0.0
    %v10474 = vmax.f32 %v10393, 0.0
    %v10475 = vmax.f32 %v8337, 0.0
    %v10476 = vmax.f32 %v8680, 0.0
    %v10477 = vmax.f32 %v9023, 0.0
    %v10478 = vmax.f32 %v9366, 0.0
    %v10479 = vmax.f32 %v9709, 0.0
    %v10480 = vmax.f32 %v10052, 0.0
    %v10481 = vmax.f32 %v10395, 0.0
    %v10482 = vmax.f32 %v8340, 0.0
    %v10483 = vmax.f32 %v8683, 0.0
    %v10484 = vmax.f32 %v9026, 0.0
    %v10485 = vmax.f32 %v9369, 0.0
    %v10486 = vmax.f32 %v9712, 0.0
    %v10487 = vmax.f32 %v10055, 0.0
    %v10488 = vmax.f32 %v10398, 0.0
    %v10489 = vmax.f32 %v8342, 0.0
    %v10490 = vmax.f32 %v8685, 0.0
    %v10491 = vmax.f32 %v9028, 0.0
    %v10492 = vmax.f32 %v9371, 0.0
    %v10493 = vmax.f32 %v9714, 0.0
    %v10494 = vmax.f32 %v10057, 0.0
    %v10495 = vmax.f32 %v10400, 0.0
    %v10496 = vmax.f32 %v8345, 0.0
    %v10497 = vmax.f32 %v8688, 0.0
    %v10498 = vmax.f32 %v9031, 0.0
    %v10499 = vmax.f32 %v9374, 0.0
    %v10500 = vmax.f32 %v9717, 0.0
    %v10501 = vmax.f32 %v10060, 0.0
    %v10502 = vmax.f32 %v10403, 0.0
    %v10503 = vmax.f32 %v8347, 0.0
    %v10504 = vmax.f32 %v8690, 0.0
    %v10505 = vmax.f32 %v9033, 0.0
    %v10506 = vmax.f32 %v9376, 0.0
    %v10507 = vmax.f32 %v9719, 0.0
    %v10508 = vmax.f32 %v10062, 0.0
    %v10509 = vmax.f32 %v10405, 0.0
    %v10510 = vmax.f32 %v8350, 0.0
    %v10511 = vmax.f32 %v8693, 0.0
    %v10512 = vmax.f32 %v9036, 0.0
    %v10513 = vmax.f32 %v9379, 0.0
    %v10514 = vmax.f32 %v9722, 0.0
    %v10515 = vmax.f32 %v10065, 0.0
    %v10516 = vmax.f32 %v10408, 0.0
    %v10517 = vmax.f32 %v8352, 0.0
    %v10518 = vmax.f32 %v8695, 0.0
    %v10519 = vmax.f32 %v9038, 0.0
    %v10520 = vmax.f32 %v9381, 0.0
    %v10521 = vmax.f32 %v9724, 0.0
    %v10522 = vmax.f32 %v10067, 0.0
    %v10523 = vmax.f32 %v10410, 0.0
    %v10524 = vpack.c.bf16 %v10419, %v10412
    %v10525 = vpack.c.bf16 %v10420, %v10413
    %v10526 = vpack.c.bf16 %v10421, %v10414
    %v10527 = vpack.c.bf16 %v10422, %v10415
    %v10528 = vpack.c.bf16 %v10423, %v10416
    %v10529 = vpack.c.bf16 %v10424, %v10417
    %v10530 = vpack.c.bf16 %v10425, %v10418
    %v10531 = vpack.c.bf16 %v10433, %v10426
    %v10532 = vpack.c.bf16 %v10434, %v10427
    %v10533 = vpack.c.bf16 %v10435, %v10428
    %v10534 = vpack.c.bf16 %v10436, %v10429
    %v10535 = vpack.c.bf16 %v10437, %v10430
    %v10536 = vpack.c.bf16 %v10438, %v10431
    %v10537 = vpack.c.bf16 %v10439, %v10432
    %v10538 = vpack.c.bf16 %v10447, %v10440
    %v10539 = vpack.c.bf16 %v10448, %v10441
    %v10540 = vpack.c.bf16 %v10449, %v10442
    %v10541 = vpack.c.bf16 %v10450, %v10443
    %v10542 = vpack.c.bf16 %v10451, %v10444
    %v10543 = vpack.c.bf16 %v10452, %v10445
    %v10544 = vpack.c.bf16 %v10453, %v10446
    %v10545 = vpack.c.bf16 %v10461, %v10454
    %v10546 = vpack.c.bf16 %v10462, %v10455
    %v10547 = vpack.c.bf16 %v10463, %v10456
    %v10548 = vpack.c.bf16 %v10464, %v10457
    %v10549 = vpack.c.bf16 %v10465, %v10458
    %v10550 = vpack.c.bf16 %v10466, %v10459
    %v10551 = vpack.c.bf16 %v10467, %v10460
    %v10552 = vpack.c.bf16 %v10475, %v10468
    %v10553 = vpack.c.bf16 %v10476, %v10469
    %v10554 = vpack.c.bf16 %v10477, %v10470
    %v10555 = vpack.c.bf16 %v10478, %v10471
    %v10556 = vpack.c.bf16 %v10479, %v10472
    %v10557 = vpack.c.bf16 %v10480, %v10473
    %v10558 = vpack.c.bf16 %v10481, %v10474
    %v10559 = vpack.c.bf16 %v10489, %v10482
    %v10560 = vpack.c.bf16 %v10490, %v10483
    %v10561 = vpack.c.bf16 %v10491, %v10484
    %v10562 = vpack.c.bf16 %v10492, %v10485
    %v10563 = vpack.c.bf16 %v10493, %v10486
    %v10564 = vpack.c.bf16 %v10494, %v10487
    %v10565 = vpack.c.bf16 %v10495, %v10488
    %v10566 = vpack.c.bf16 %v10503, %v10496
    %v10567 = vpack.c.bf16 %v10504, %v10497
    %v10568 = vpack.c.bf16 %v10505, %v10498
    %v10569 = vpack.c.bf16 %v10506, %v10499
    %v10570 = vpack.c.bf16 %v10507, %v10500
    %v10571 = vpack.c.bf16 %v10508, %v10501
    %v10572 = vpack.c.bf16 %v10509, %v10502
    %v10573 = vpack.c.bf16 %v10517, %v10510
    %v10574 = vpack.c.bf16 %v10518, %v10511
    %v10575 = vpack.c.bf16 %v10519, %v10512
    %v10576 = vpack.c.bf16 %v10520, %v10513
    %v10577 = vpack.c.bf16 %v10521, %v10514
    %v10578 = vpack.c.bf16 %v10522, %v10515
    %v10579 = vpack.c.bf16 %v10523, %v10516
    %v10580 = vld [vmem:[#allocation11] sm:$0xf]
    %v10581 = vld [vmem:[#allocation11 + $0x4] sm:$0xf]
    %v10582 = vld [vmem:[#allocation11 + $0x8] sm:$0xf]
    %v10583 = vld [vmem:[#allocation11 + $0xc] sm:$0xf]
    %v10584 = vld [vmem:[#allocation11 + $0x10] sm:$0xf]
    %v10585 = vld [vmem:[#allocation11 + $0x14] sm:$0xf]
    %v10586 = vld [vmem:[#allocation11 + $0x18] sm:$0xf]
    %v10587 = vld [vmem:[#allocation11 + $0x1c] sm:$0xf]
    %v10588 = vld [vmem:[#allocation11 + $0x20] sm:$0xf]
    %v10589 = vld [vmem:[#allocation11 + $0x24] sm:$0xf]
    %v10590 = vld [vmem:[#allocation11 + $0x28] sm:$0xf]
    %v10591 = vld [vmem:[#allocation11 + $0x2c] sm:$0xf]
    %v10592 = vld [vmem:[#allocation11 + $0x30] sm:$0xf]
    %v10593 = vld [vmem:[#allocation11 + $0x34] sm:$0xf]
    %v10594 = vld [vmem:[#allocation11 + $0x38] sm:$0xf]
    %v10595 = vld [vmem:[#allocation11 + $0x3c] sm:$0xf]
    %v10596 = vld [vmem:[#allocation11 + $0x40] sm:$0xf]
    %v10597 = vld [vmem:[#allocation11 + $0x44] sm:$0xf]
    %v10598 = vld [vmem:[#allocation11 + $0x48] sm:$0xf]
    %v10599 = vld [vmem:[#allocation11 + $0x4c] sm:$0xf]
    %v10600 = vld [vmem:[#allocation11 + $0x50] sm:$0xf]
    %v10601 = vld [vmem:[#allocation11 + $0x54] sm:$0xf]
    %v10602 = vld [vmem:[#allocation11 + $0x58] sm:$0xf]
    %v10603 = vld [vmem:[#allocation11 + $0x5c] sm:$0xf]
    %v10604 = vld [vmem:[#allocation11 + $0x60] sm:$0xf]
    %v10605 = vld [vmem:[#allocation11 + $0x64] sm:$0xf]
    %v10606 = vld [vmem:[#allocation11 + $0x68] sm:$0xf]
    %v10607 = vld [vmem:[#allocation11 + $0x6c] sm:$0xf]
    %v10608 = vld [vmem:[#allocation11 + $0x70] sm:$0xf]
    %v10609 = vld [vmem:[#allocation11 + $0x74] sm:$0xf]
    %v10610 = vld [vmem:[#allocation11 + $0x78] sm:$0xf]
    %v10611 = vld [vmem:[#allocation11 + $0x7c] sm:$0xf]
    %v10612 = vld [vmem:[#allocation11 + $0x80] sm:$0xf]
    %v10613 = vld [vmem:[#allocation11 + $0x84] sm:$0xf]
    %v10614 = vld [vmem:[#allocation11 + $0x88] sm:$0xf]
    %v10615 = vld [vmem:[#allocation11 + $0x8c] sm:$0xf]
    %v10616 = vld [vmem:[#allocation11 + $0x90] sm:$0xf]
    %v10617 = vld [vmem:[#allocation11 + $0x94] sm:$0xf]
    %v10618 = vld [vmem:[#allocation11 + $0x98] sm:$0xf]
    %v10619 = vld [vmem:[#allocation11 + $0x9c] sm:$0xf]
    %v10620 = vld [vmem:[#allocation11 + $0xa0] sm:$0xf]
    %v10621 = vld [vmem:[#allocation11 + $0xa4] sm:$0xf]
    %v10622 = vld [vmem:[#allocation11 + $0xa8] sm:$0xf]
    %v10623 = vld [vmem:[#allocation11 + $0xac] sm:$0xf]
    %v10624 = vld [vmem:[#allocation11 + $0xb0] sm:$0xf]
    %v10625 = vld [vmem:[#allocation11 + $0xb4] sm:$0xf]
    %v10626 = vld [vmem:[#allocation11 + $0xb8] sm:$0xf]
    %v10627 = vld [vmem:[#allocation11 + $0xbc] sm:$0xf]
    %v10628 = vld [vmem:[#allocation11 + $0xc0] sm:$0xf]
    %v10629 = vld [vmem:[#allocation11 + $0xc4] sm:$0xf]
    %v10630 = vld [vmem:[#allocation11 + $0xc8] sm:$0xf]
    %v10631 = vld [vmem:[#allocation11 + $0xcc] sm:$0xf]
    %v10632 = vld [vmem:[#allocation11 + $0xd0] sm:$0xf]
    %v10633 = vld [vmem:[#allocation11 + $0xd4] sm:$0xf]
    %v10634 = vld [vmem:[#allocation11 + $0xd8] sm:$0xf]
    %v10635 = vld [vmem:[#allocation11 + $0xdc] sm:$0xf]
    %v10636 = vld [vmem:[#allocation11 + $0xe0] sm:$0xf]
    %v10637 = vld [vmem:[#allocation11 + $0xe4] sm:$0xf]
    %v10638 = vld [vmem:[#allocation11 + $0xe8] sm:$0xf]
    %v10639 = vld [vmem:[#allocation11 + $0xec] sm:$0xf]
    %v10640 = vld [vmem:[#allocation11 + $0xf0] sm:$0xf]
    %v10641 = vld [vmem:[#allocation11 + $0xf4] sm:$0xf]
    %v10642 = vld [vmem:[#allocation11 + $0xf8] sm:$0xf]
    %v10643 = vld [vmem:[#allocation11 + $0xfc] sm:$0xf]
    %v10644 = vld [vmem:[#allocation11 + $0x100] sm:$0xf]
    %v10645 = vld [vmem:[#allocation11 + $0x104] sm:$0xf]
    %v10646 = vld [vmem:[#allocation11 + $0x108] sm:$0xf]
    %v10647 = vld [vmem:[#allocation11 + $0x10c] sm:$0xf]
    %v10648 = vld [vmem:[#allocation11 + $0x110] sm:$0xf]
    %v10649 = vld [vmem:[#allocation11 + $0x114] sm:$0xf]
    %v10650 = vld [vmem:[#allocation11 + $0x118] sm:$0xf]
    %v10651 = vld [vmem:[#allocation11 + $0x11c] sm:$0xf]
    %v10652 = vld [vmem:[#allocation11 + $0x120] sm:$0xf]
    %v10653 = vld [vmem:[#allocation11 + $0x124] sm:$0xf]
    %v10654 = vld [vmem:[#allocation11 + $0x128] sm:$0xf]
    %v10655 = vld [vmem:[#allocation11 + $0x12c] sm:$0xf]
    %v10656 = vld [vmem:[#allocation11 + $0x130] sm:$0xf]
    %v10657 = vld [vmem:[#allocation11 + $0x134] sm:$0xf]
    %v10658 = vld [vmem:[#allocation11 + $0x138] sm:$0xf]
    %v10659 = vld [vmem:[#allocation11 + $0x13c] sm:$0xf]
    %v10660 = vld [vmem:[#allocation11 + $0x140] sm:$0xf]
    %v10661 = vld [vmem:[#allocation11 + $0x144] sm:$0xf]
    %v10662 = vld [vmem:[#allocation11 + $0x148] sm:$0xf]
    %v10663 = vld [vmem:[#allocation11 + $0x14c] sm:$0xf]
    %v10664 = vld [vmem:[#allocation11 + $0x150] sm:$0xf]
    %v10665 = vld [vmem:[#allocation11 + $0x154] sm:$0xf]
    %v10666 = vld [vmem:[#allocation11 + $0x158] sm:$0xf]
    %v10667 = vld [vmem:[#allocation11 + $0x15c] sm:$0xf]
    %v10668 = vld [vmem:[#allocation11 + $0x160] sm:$0xf]
    %v10669 = vld [vmem:[#allocation11 + $0x164] sm:$0xf]
    %v10670 = vld [vmem:[#allocation11 + $0x168] sm:$0xf]
    %v10671 = vld [vmem:[#allocation11 + $0x16c] sm:$0xf]
    %v10672 = vld [vmem:[#allocation11 + $0x170] sm:$0xf]
    %v10673 = vld [vmem:[#allocation11 + $0x174] sm:$0xf]
    %v10674 = vld [vmem:[#allocation11 + $0x178] sm:$0xf]
    %v10675 = vld [vmem:[#allocation11 + $0x17c] sm:$0xf]
    %v10676 = vld [vmem:[#allocation11 + $0x180] sm:$0xf]
    %v10677 = vld [vmem:[#allocation11 + $0x184] sm:$0xf]
    %v10678 = vld [vmem:[#allocation11 + $0x188] sm:$0xf]
    %v10679 = vld [vmem:[#allocation11 + $0x18c] sm:$0xf]
    %v10680 = vld [vmem:[#allocation11 + $0x190] sm:$0xf]
    %v10681 = vld [vmem:[#allocation11 + $0x194] sm:$0xf]
    %v10682 = vld [vmem:[#allocation11 + $0x198] sm:$0xf]
    %v10683 = vld [vmem:[#allocation11 + $0x19c] sm:$0xf]
    %v10684 = vld [vmem:[#allocation11 + $0x1a0] sm:$0xf]
    %v10685 = vld [vmem:[#allocation11 + $0x1a4] sm:$0xf]
    %v10686 = vld [vmem:[#allocation11 + $0x1a8] sm:$0xf]
    %v10687 = vld [vmem:[#allocation11 + $0x1ac] sm:$0xf]
    %v10688 = vld [vmem:[#allocation11 + $0x1b0] sm:$0xf]
    %v10689 = vld [vmem:[#allocation11 + $0x1b4] sm:$0xf]
    %v10690 = vld [vmem:[#allocation11 + $0x1b8] sm:$0xf]
    %v10691 = vld [vmem:[#allocation11 + $0x1bc] sm:$0xf]
    %v10692 = vld [vmem:[#allocation13] sm:$0x1]
    %v10694 = vperm.slane %v10692, 0
    %v10808 = vunpack.c.l.b16 %v10580
    %v10809 = vunpack.c.l.b16 %v10581
    %v10810 = vunpack.c.l.b16 %v10582
    %v10811 = vunpack.c.l.b16 %v10583
    %v10812 = vunpack.c.l.b16 %v10584
    %v10813 = vunpack.c.l.b16 %v10585
    %v10814 = vunpack.c.l.b16 %v10586
    %v10815 = vunpack.c.l.b16 %v10587
    %v10816 = vunpack.c.l.b16 %v10588
    %v10817 = vunpack.c.l.b16 %v10589
    %v10818 = vunpack.c.l.b16 %v10590
    %v10819 = vunpack.c.l.b16 %v10591
    %v10820 = vunpack.c.l.b16 %v10592
    %v10821 = vunpack.c.l.b16 %v10593
    %v10822 = vunpack.c.l.b16 %v10594
    %v10823 = vunpack.c.l.b16 %v10595
    %v10824 = vunpack.c.l.b16 %v10596
    %v10825 = vunpack.c.l.b16 %v10597
    %v10826 = vunpack.c.l.b16 %v10598
    %v10827 = vunpack.c.l.b16 %v10599
    %v10828 = vunpack.c.l.b16 %v10600
    %v10829 = vunpack.c.l.b16 %v10601
    %v10830 = vunpack.c.l.b16 %v10602
    %v10831 = vunpack.c.l.b16 %v10603
    %v10832 = vunpack.c.l.b16 %v10604
    %v10833 = vunpack.c.l.b16 %v10605
    %v10834 = vunpack.c.l.b16 %v10606
    %v10835 = vunpack.c.l.b16 %v10607
    %v10836 = vunpack.c.l.b16 %v10608
    %v10837 = vunpack.c.l.b16 %v10609
    %v10838 = vunpack.c.l.b16 %v10610
    %v10839 = vunpack.c.l.b16 %v10611
    %v10840 = vunpack.c.l.b16 %v10612
    %v10841 = vunpack.c.l.b16 %v10613
    %v10842 = vunpack.c.l.b16 %v10614
    %v10843 = vunpack.c.l.b16 %v10615
    %v10844 = vunpack.c.l.b16 %v10616
    %v10845 = vunpack.c.l.b16 %v10617
    %v10846 = vunpack.c.l.b16 %v10618
    %v10847 = vunpack.c.l.b16 %v10619
    %v10848 = vunpack.c.l.b16 %v10620
    %v10849 = vunpack.c.l.b16 %v10621
    %v10850 = vunpack.c.l.b16 %v10622
    %v10851 = vunpack.c.l.b16 %v10623
    %v10852 = vunpack.c.l.b16 %v10624
    %v10853 = vunpack.c.l.b16 %v10625
    %v10854 = vunpack.c.l.b16 %v10626
    %v10855 = vunpack.c.l.b16 %v10627
    %v10856 = vunpack.c.l.b16 %v10628
    %v10857 = vunpack.c.l.b16 %v10629
    %v10858 = vunpack.c.l.b16 %v10630
    %v10859 = vunpack.c.l.b16 %v10631
    %v10860 = vunpack.c.l.b16 %v10632
    %v10861 = vunpack.c.l.b16 %v10633
    %v10862 = vunpack.c.l.b16 %v10634
    %v10863 = vunpack.c.l.b16 %v10635
    %v10864 = vunpack.c.l.b16 %v10636
    %v10865 = vunpack.c.l.b16 %v10637
    %v10866 = vunpack.c.l.b16 %v10638
    %v10867 = vunpack.c.l.b16 %v10639
    %v10868 = vunpack.c.l.b16 %v10640
    %v10869 = vunpack.c.l.b16 %v10641
    %v10870 = vunpack.c.l.b16 %v10642
    %v10871 = vunpack.c.l.b16 %v10643
    %v10872 = vunpack.c.l.b16 %v10644
    %v10873 = vunpack.c.l.b16 %v10645
    %v10874 = vunpack.c.l.b16 %v10646
    %v10875 = vunpack.c.l.b16 %v10647
    %v10876 = vunpack.c.l.b16 %v10648
    %v10877 = vunpack.c.l.b16 %v10649
    %v10878 = vunpack.c.l.b16 %v10650
    %v10879 = vunpack.c.l.b16 %v10651
    %v10880 = vunpack.c.l.b16 %v10652
    %v10881 = vunpack.c.l.b16 %v10653
    %v10882 = vunpack.c.l.b16 %v10654
    %v10883 = vunpack.c.l.b16 %v10655
    %v10884 = vunpack.c.l.b16 %v10656
    %v10885 = vunpack.c.l.b16 %v10657
    %v10886 = vunpack.c.l.b16 %v10658
    %v10887 = vunpack.c.l.b16 %v10659
    %v10888 = vunpack.c.l.b16 %v10660
    %v10889 = vunpack.c.l.b16 %v10661
    %v10890 = vunpack.c.l.b16 %v10662
    %v10891 = vunpack.c.l.b16 %v10663
    %v10892 = vunpack.c.l.b16 %v10664
    %v10893 = vunpack.c.l.b16 %v10665
    %v10894 = vunpack.c.l.b16 %v10666
    %v10895 = vunpack.c.l.b16 %v10667
    %v10896 = vunpack.c.l.b16 %v10668
    %v10897 = vunpack.c.l.b16 %v10669
    %v10898 = vunpack.c.l.b16 %v10670
    %v10899 = vunpack.c.l.b16 %v10671
    %v10900 = vunpack.c.l.b16 %v10672
    %v10901 = vunpack.c.l.b16 %v10673
    %v10902 = vunpack.c.l.b16 %v10674
    %v10903 = vunpack.c.l.b16 %v10675
    %v10904 = vunpack.c.l.b16 %v10676
    %v10905 = vunpack.c.l.b16 %v10677
    %v10906 = vunpack.c.l.b16 %v10678
    %v10907 = vunpack.c.l.b16 %v10679
    %v10908 = vunpack.c.l.b16 %v10680
    %v10909 = vunpack.c.l.b16 %v10681
    %v10910 = vunpack.c.l.b16 %v10682
    %v10911 = vunpack.c.l.b16 %v10683
    %v10912 = vunpack.c.l.b16 %v10684
    %v10913 = vunpack.c.l.b16 %v10685
    %v10914 = vunpack.c.l.b16 %v10686
    %v10915 = vunpack.c.l.b16 %v10687
    %v10916 = vunpack.c.l.b16 %v10688
    %v10917 = vunpack.c.l.b16 %v10689
    %v10918 = vunpack.c.l.b16 %v10690
    %v10919 = vunpack.c.l.b16 %v10691
    %v10920 = vpack.c.b16 %v10809, %v10808
    %v10921 = vpack.c.b16 %v10811, %v10810
    %v10922 = vpack.c.b16 %v10813, %v10812
    %v10923 = vpack.c.b16 %v10815, %v10814
    %v10924 = vpack.c.b16 %v10817, %v10816
    %v10925 = vpack.c.b16 %v10819, %v10818
    %v10926 = vpack.c.b16 %v10821, %v10820
    %v10927 = vpack.c.b16 %v10823, %v10822
    %v10928 = vpack.c.b16 %v10825, %v10824
    %v10929 = vpack.c.b16 %v10827, %v10826
    %v10930 = vpack.c.b16 %v10829, %v10828
    %v10931 = vpack.c.b16 %v10831, %v10830
    %v10932 = vpack.c.b16 %v10833, %v10832
    %v10933 = vpack.c.b16 %v10835, %v10834
    %v10934 = vpack.c.b16 %v10837, %v10836
    %v10935 = vpack.c.b16 %v10839, %v10838
    %v10936 = vpack.c.b16 %v10841, %v10840
    %v10937 = vpack.c.b16 %v10843, %v10842
    %v10938 = vpack.c.b16 %v10845, %v10844
    %v10939 = vpack.c.b16 %v10847, %v10846
    %v10940 = vpack.c.b16 %v10849, %v10848
    %v10941 = vpack.c.b16 %v10851, %v10850
    %v10942 = vpack.c.b16 %v10853, %v10852
    %v10943 = vpack.c.b16 %v10855, %v10854
    %v10944 = vpack.c.b16 %v10857, %v10856
    %v10945 = vpack.c.b16 %v10859, %v10858
    %v10946 = vpack.c.b16 %v10861, %v10860
    %v10947 = vpack.c.b16 %v10863, %v10862
    %v10948 = vpack.c.b16 %v10865, %v10864
    %v10949 = vpack.c.b16 %v10867, %v10866
    %v10950 = vpack.c.b16 %v10869, %v10868
    %v10951 = vpack.c.b16 %v10871, %v10870
    %v10952 = vpack.c.b16 %v10873, %v10872
    %v10953 = vpack.c.b16 %v10875, %v10874
    %v10954 = vpack.c.b16 %v10877, %v10876
    %v10955 = vpack.c.b16 %v10879, %v10878
    %v10956 = vpack.c.b16 %v10881, %v10880
    %v10957 = vpack.c.b16 %v10883, %v10882
    %v10958 = vpack.c.b16 %v10885, %v10884
    %v10959 = vpack.c.b16 %v10887, %v10886
    %v10960 = vpack.c.b16 %v10889, %v10888
    %v10961 = vpack.c.b16 %v10891, %v10890
    %v10962 = vpack.c.b16 %v10893, %v10892
    %v10963 = vpack.c.b16 %v10895, %v10894
    %v10964 = vpack.c.b16 %v10897, %v10896
    %v10965 = vpack.c.b16 %v10899, %v10898
    %v10966 = vpack.c.b16 %v10901, %v10900
    %v10967 = vpack.c.b16 %v10903, %v10902
    %v10968 = vpack.c.b16 %v10905, %v10904
    %v10969 = vpack.c.b16 %v10907, %v10906
    %v10970 = vpack.c.b16 %v10909, %v10908
    %v10971 = vpack.c.b16 %v10911, %v10910
    %v10972 = vpack.c.b16 %v10913, %v10912
    %v10973 = vpack.c.b16 %v10915, %v10914
    %v10974 = vpack.c.b16 %v10917, %v10916
    %v10975 = vpack.c.b16 %v10919, %v10918
    %11032 = vmatpush.bf16.msra.mxu0 %v10927
    %11033 = vmatpush.bf16.msra.mxu0 %v10926
    %11034 = vmatpush.bf16.msra.mxu0 %v10925
    %11035 = vmatpush.bf16.msra.mxu0 %v10924
    %11036 = vmatpush.bf16.msra.mxu0 %v10923
    %11037 = vmatpush.bf16.msra.mxu0 %v10922
    %11038 = vmatpush.bf16.msra.mxu0 %v10921
    %11039 = vmatpush.bf16.msra.mxu0 %v10920
    %11040 = vmatmul.bf16.gmra.mxu0 %v10524
    %v11041 = vpop.f32.mrf.mxu0
    %v11042 = vadd.f32 %v10694, %v11041
    %v11043 = vpop.f32.mrf.mxu0
    %v11044 = vadd.f32 %v10694, %v11043
    %11045 = vmatmul.bf16.gmra.mxu0 %v10531
    %v11046 = vpop.f32.mrf.mxu0
    %v11047 = vadd.f32 %v10694, %v11046
    %v11048 = vpop.f32.mrf.mxu0
    %v11049 = vadd.f32 %v10694, %v11048
    %11050 = vmatmul.bf16.gmra.mxu0 %v10538
    %v11051 = vpop.f32.mrf.mxu0
    %v11052 = vadd.f32 %v10694, %v11051
    %v11053 = vpop.f32.mrf.mxu0
    %v11054 = vadd.f32 %v10694, %v11053
    %11055 = vmatmul.bf16.gmra.mxu0 %v10545
    %v11056 = vpop.f32.mrf.mxu0
    %v11057 = vadd.f32 %v10694, %v11056
    %v11058 = vpop.f32.mrf.mxu0
    %v11059 = vadd.f32 %v10694, %v11058
    %11060 = vmatmul.bf16.gmra.mxu0 %v10552
    %v11061 = vpop.f32.mrf.mxu0
    %v11062 = vadd.f32 %v10694, %v11061
    %v11063 = vpop.f32.mrf.mxu0
    %v11064 = vadd.f32 %v10694, %v11063
    %11065 = vmatmul.bf16.gmra.mxu0 %v10559
    %v11066 = vpop.f32.mrf.mxu0
    %v11067 = vadd.f32 %v10694, %v11066
    %v11068 = vpop.f32.mrf.mxu0
    %v11069 = vadd.f32 %v10694, %v11068
    %11070 = vmatmul.bf16.gmra.mxu0 %v10566
    %v11071 = vpop.f32.mrf.mxu0
    %v11072 = vadd.f32 %v10694, %v11071
    %v11073 = vpop.f32.mrf.mxu0
    %v11074 = vadd.f32 %v10694, %v11073
    %11075 = vmatmul.bf16.gmra.mxu0 %v10573
    %v11076 = vpop.f32.mrf.mxu0
    %v11077 = vadd.f32 %v10694, %v11076
    %v11078 = vpop.f32.mrf.mxu0
    %v11079 = vadd.f32 %v10694, %v11078
    %11080 = vdwg.mxu0
    %11081 = vmatpush.bf16.msra.mxu0 %v10935
    %11082 = vmatpush.bf16.msra.mxu0 %v10934
    %11083 = vmatpush.bf16.msra.mxu0 %v10933
    %11084 = vmatpush.bf16.msra.mxu0 %v10932
    %11085 = vmatpush.bf16.msra.mxu0 %v10931
    %11086 = vmatpush.bf16.msra.mxu0 %v10930
    %11087 = vmatpush.bf16.msra.mxu0 %v10929
    %11088 = vmatpush.bf16.msra.mxu0 %v10928
    %11089 = vmatmul.bf16.gmra.mxu0 %v10525
    %v11090 = vpop.f32.mrf.mxu0
    %v11091 = vadd.f32 %v11042, %v11090
    %v11092 = vpop.f32.mrf.mxu0
    %v11093 = vadd.f32 %v11044, %v11092
    %11094 = vmatmul.bf16.gmra.mxu0 %v10532
    %v11095 = vpop.f32.mrf.mxu0
    %v11096 = vadd.f32 %v11047, %v11095
    %v11097 = vpop.f32.mrf.mxu0
    %v11098 = vadd.f32 %v11049, %v11097
    %11099 = vmatmul.bf16.gmra.mxu0 %v10539
    %v11100 = vpop.f32.mrf.mxu0
    %v11101 = vadd.f32 %v11052, %v11100
    %v11102 = vpop.f32.mrf.mxu0
    %v11103 = vadd.f32 %v11054, %v11102
    %11104 = vmatmul.bf16.gmra.mxu0 %v10546
    %v11105 = vpop.f32.mrf.mxu0
    %v11106 = vadd.f32 %v11057, %v11105
    %v11107 = vpop.f32.mrf.mxu0
    %v11108 = vadd.f32 %v11059, %v11107
    %11109 = vmatmul.bf16.gmra.mxu0 %v10553
    %v11110 = vpop.f32.mrf.mxu0
    %v11111 = vadd.f32 %v11062, %v11110
    %v11112 = vpop.f32.mrf.mxu0
    %v11113 = vadd.f32 %v11064, %v11112
    %11114 = vmatmul.bf16.gmra.mxu0 %v10560
    %v11115 = vpop.f32.mrf.mxu0
    %v11116 = vadd.f32 %v11067, %v11115
    %v11117 = vpop.f32.mrf.mxu0
    %v11118 = vadd.f32 %v11069, %v11117
    %11119 = vmatmul.bf16.gmra.mxu0 %v10567
    %v11120 = vpop.f32.mrf.mxu0
    %v11121 = vadd.f32 %v11072, %v11120
    %v11122 = vpop.f32.mrf.mxu0
    %v11123 = vadd.f32 %v11074, %v11122
    %11124 = vmatmul.bf16.gmra.mxu0 %v10574
    %v11125 = vpop.f32.mrf.mxu0
    %v11126 = vadd.f32 %v11077, %v11125
    %v11127 = vpop.f32.mrf.mxu0
    %v11128 = vadd.f32 %v11079, %v11127
    %11129 = vdwg.mxu0
    %11130 = vmatpush.bf16.msra.mxu0 %v10943
    %11131 = vmatpush.bf16.msra.mxu0 %v10942
    %11132 = vmatpush.bf16.msra.mxu0 %v10941
    %11133 = vmatpush.bf16.msra.mxu0 %v10940
    %11134 = vmatpush.bf16.msra.mxu0 %v10939
    %11135 = vmatpush.bf16.msra.mxu0 %v10938
    %11136 = vmatpush.bf16.msra.mxu0 %v10937
    %11137 = vmatpush.bf16.msra.mxu0 %v10936
    %11138 = vmatmul.bf16.gmra.mxu0 %v10526
    %v11139 = vpop.f32.mrf.mxu0
    %v11140 = vadd.f32 %v11091, %v11139
    %v11141 = vpop.f32.mrf.mxu0
    %v11142 = vadd.f32 %v11093, %v11141
    %11143 = vmatmul.bf16.gmra.mxu0 %v10533
    %v11144 = vpop.f32.mrf.mxu0
    %v11145 = vadd.f32 %v11096, %v11144
    %v11146 = vpop.f32.mrf.mxu0
    %v11147 = vadd.f32 %v11098, %v11146
    %11148 = vmatmul.bf16.gmra.mxu0 %v10540
    %v11149 = vpop.f32.mrf.mxu0
    %v11150 = vadd.f32 %v11101, %v11149
    %v11151 = vpop.f32.mrf.mxu0
    %v11152 = vadd.f32 %v11103, %v11151
    %11153 = vmatmul.bf16.gmra.mxu0 %v10547
    %v11154 = vpop.f32.mrf.mxu0
    %v11155 = vadd.f32 %v11106, %v11154
    %v11156 = vpop.f32.mrf.mxu0
    %v11157 = vadd.f32 %v11108, %v11156
    %11158 = vmatmul.bf16.gmra.mxu0 %v10554
    %v11159 = vpop.f32.mrf.mxu0
    %v11160 = vadd.f32 %v11111, %v11159
    %v11161 = vpop.f32.mrf.mxu0
    %v11162 = vadd.f32 %v11113, %v11161
    %11163 = vmatmul.bf16.gmra.mxu0 %v10561
    %v11164 = vpop.f32.mrf.mxu0
    %v11165 = vadd.f32 %v11116, %v11164
    %v11166 = vpop.f32.mrf.mxu0
    %v11167 = vadd.f32 %v11118, %v11166
    %11168 = vmatmul.bf16.gmra.mxu0 %v10568
    %v11169 = vpop.f32.mrf.mxu0
    %v11170 = vadd.f32 %v11121, %v11169
    %v11171 = vpop.f32.mrf.mxu0
    %v11172 = vadd.f32 %v11123, %v11171
    %11173 = vmatmul.bf16.gmra.mxu0 %v10575
    %v11174 = vpop.f32.mrf.mxu0
    %v11175 = vadd.f32 %v11126, %v11174
    %v11176 = vpop.f32.mrf.mxu0
    %v11177 = vadd.f32 %v11128, %v11176
    %11178 = vdwg.mxu0
    %11179 = vmatpush.bf16.msra.mxu0 %v10951
    %11180 = vmatpush.bf16.msra.mxu0 %v10950
    %11181 = vmatpush.bf16.msra.mxu0 %v10949
    %11182 = vmatpush.bf16.msra.mxu0 %v10948
    %11183 = vmatpush.bf16.msra.mxu0 %v10947
    %11184 = vmatpush.bf16.msra.mxu0 %v10946
    %11185 = vmatpush.bf16.msra.mxu0 %v10945
    %11186 = vmatpush.bf16.msra.mxu0 %v10944
    %11187 = vmatmul.bf16.gmra.mxu0 %v10527
    %v11188 = vpop.f32.mrf.mxu0
    %v11189 = vadd.f32 %v11140, %v11188
    %v11190 = vpop.f32.mrf.mxu0
    %v11191 = vadd.f32 %v11142, %v11190
    %11192 = vmatmul.bf16.gmra.mxu0 %v10534
    %v11193 = vpop.f32.mrf.mxu0
    %v11194 = vadd.f32 %v11145, %v11193
    %v11195 = vpop.f32.mrf.mxu0
    %v11196 = vadd.f32 %v11147, %v11195
    %11197 = vmatmul.bf16.gmra.mxu0 %v10541
    %v11198 = vpop.f32.mrf.mxu0
    %v11199 = vadd.f32 %v11150, %v11198
    %v11200 = vpop.f32.mrf.mxu0
    %v11201 = vadd.f32 %v11152, %v11200
    %11202 = vmatmul.bf16.gmra.mxu0 %v10548
    %v11203 = vpop.f32.mrf.mxu0
    %v11204 = vadd.f32 %v11155, %v11203
    %v11205 = vpop.f32.mrf.mxu0
    %v11206 = vadd.f32 %v11157, %v11205
    %11207 = vmatmul.bf16.gmra.mxu0 %v10555
    %v11208 = vpop.f32.mrf.mxu0
    %v11209 = vadd.f32 %v11160, %v11208
    %v11210 = vpop.f32.mrf.mxu0
    %v11211 = vadd.f32 %v11162, %v11210
    %11212 = vmatmul.bf16.gmra.mxu0 %v10562
    %v11213 = vpop.f32.mrf.mxu0
    %v11214 = vadd.f32 %v11165, %v11213
    %v11215 = vpop.f32.mrf.mxu0
    %v11216 = vadd.f32 %v11167, %v11215
    %11217 = vmatmul.bf16.gmra.mxu0 %v10569
    %v11218 = vpop.f32.mrf.mxu0
    %v11219 = vadd.f32 %v11170, %v11218
    %v11220 = vpop.f32.mrf.mxu0
    %v11221 = vadd.f32 %v11172, %v11220
    %11222 = vmatmul.bf16.gmra.mxu0 %v10576
    %v11223 = vpop.f32.mrf.mxu0
    %v11224 = vadd.f32 %v11175, %v11223
    %v11225 = vpop.f32.mrf.mxu0
    %v11226 = vadd.f32 %v11177, %v11225
    %11227 = vdwg.mxu0
    %11228 = vmatpush.bf16.msra.mxu0 %v10959
    %11229 = vmatpush.bf16.msra.mxu0 %v10958
    %11230 = vmatpush.bf16.msra.mxu0 %v10957
    %11231 = vmatpush.bf16.msra.mxu0 %v10956
    %11232 = vmatpush.bf16.msra.mxu0 %v10955
    %11233 = vmatpush.bf16.msra.mxu0 %v10954
    %11234 = vmatpush.bf16.msra.mxu0 %v10953
    %11235 = vmatpush.bf16.msra.mxu0 %v10952
    %11236 = vmatmul.bf16.gmra.mxu0 %v10528
    %v11237 = vpop.f32.mrf.mxu0
    %v11238 = vadd.f32 %v11189, %v11237
    %v11239 = vpop.f32.mrf.mxu0
    %v11240 = vadd.f32 %v11191, %v11239
    %11241 = vmatmul.bf16.gmra.mxu0 %v10535
    %v11242 = vpop.f32.mrf.mxu0
    %v11243 = vadd.f32 %v11194, %v11242
    %v11244 = vpop.f32.mrf.mxu0
    %v11245 = vadd.f32 %v11196, %v11244
    %11246 = vmatmul.bf16.gmra.mxu0 %v10542
    %v11247 = vpop.f32.mrf.mxu0
    %v11248 = vadd.f32 %v11199, %v11247
    %v11249 = vpop.f32.mrf.mxu0
    %v11250 = vadd.f32 %v11201, %v11249
    %11251 = vmatmul.bf16.gmra.mxu0 %v10549
    %v11252 = vpop.f32.mrf.mxu0
    %v11253 = vadd.f32 %v11204, %v11252
    %v11254 = vpop.f32.mrf.mxu0
    %v11255 = vadd.f32 %v11206, %v11254
    %11256 = vmatmul.bf16.gmra.mxu0 %v10556
    %v11257 = vpop.f32.mrf.mxu0
    %v11258 = vadd.f32 %v11209, %v11257
    %v11259 = vpop.f32.mrf.mxu0
    %v11260 = vadd.f32 %v11211, %v11259
    %11261 = vmatmul.bf16.gmra.mxu0 %v10563
    %v11262 = vpop.f32.mrf.mxu0
    %v11263 = vadd.f32 %v11214, %v11262
    %v11264 = vpop.f32.mrf.mxu0
    %v11265 = vadd.f32 %v11216, %v11264
    %11266 = vmatmul.bf16.gmra.mxu0 %v10570
    %v11267 = vpop.f32.mrf.mxu0
    %v11268 = vadd.f32 %v11219, %v11267
    %v11269 = vpop.f32.mrf.mxu0
    %v11270 = vadd.f32 %v11221, %v11269
    %11271 = vmatmul.bf16.gmra.mxu0 %v10577
    %v11272 = vpop.f32.mrf.mxu0
    %v11273 = vadd.f32 %v11224, %v11272
    %v11274 = vpop.f32.mrf.mxu0
    %v11275 = vadd.f32 %v11226, %v11274
    %11276 = vdwg.mxu0
    %11277 = vmatpush.bf16.msra.mxu0 %v10967
    %11278 = vmatpush.bf16.msra.mxu0 %v10966
    %11279 = vmatpush.bf16.msra.mxu0 %v10965
    %11280 = vmatpush.bf16.msra.mxu0 %v10964
    %11281 = vmatpush.bf16.msra.mxu0 %v10963
    %11282 = vmatpush.bf16.msra.mxu0 %v10962
    %11283 = vmatpush.bf16.msra.mxu0 %v10961
    %11284 = vmatpush.bf16.msra.mxu0 %v10960
    %11285 = vmatmul.bf16.gmra.mxu0 %v10529
    %v11286 = vpop.f32.mrf.mxu0
    %v11287 = vadd.f32 %v11238, %v11286
    %v11288 = vpop.f32.mrf.mxu0
    %v11289 = vadd.f32 %v11240, %v11288
    %11290 = vmatmul.bf16.gmra.mxu0 %v10536
    %v11291 = vpop.f32.mrf.mxu0
    %v11292 = vadd.f32 %v11243, %v11291
    %v11293 = vpop.f32.mrf.mxu0
    %v11294 = vadd.f32 %v11245, %v11293
    %11295 = vmatmul.bf16.gmra.mxu0 %v10543
    %v11296 = vpop.f32.mrf.mxu0
    %v11297 = vadd.f32 %v11248, %v11296
    %v11298 = vpop.f32.mrf.mxu0
    %v11299 = vadd.f32 %v11250, %v11298
    %11300 = vmatmul.bf16.gmra.mxu0 %v10550
    %v11301 = vpop.f32.mrf.mxu0
    %v11302 = vadd.f32 %v11253, %v11301
    %v11303 = vpop.f32.mrf.mxu0
    %v11304 = vadd.f32 %v11255, %v11303
    %11305 = vmatmul.bf16.gmra.mxu0 %v10557
    %v11306 = vpop.f32.mrf.mxu0
    %v11307 = vadd.f32 %v11258, %v11306
    %v11308 = vpop.f32.mrf.mxu0
    %v11309 = vadd.f32 %v11260, %v11308
    %11310 = vmatmul.bf16.gmra.mxu0 %v10564
    %v11311 = vpop.f32.mrf.mxu0
    %v11312 = vadd.f32 %v11263, %v11311
    %v11313 = vpop.f32.mrf.mxu0
    %v11314 = vadd.f32 %v11265, %v11313
    %11315 = vmatmul.bf16.gmra.mxu0 %v10571
    %v11316 = vpop.f32.mrf.mxu0
    %v11317 = vadd.f32 %v11268, %v11316
    %v11318 = vpop.f32.mrf.mxu0
    %v11319 = vadd.f32 %v11270, %v11318
    %11320 = vmatmul.bf16.gmra.mxu0 %v10578
    %v11321 = vpop.f32.mrf.mxu0
    %v11322 = vadd.f32 %v11273, %v11321
    %v11323 = vpop.f32.mrf.mxu0
    %v11324 = vadd.f32 %v11275, %v11323
    %11325 = vdwg.mxu0
    %11326 = vmatpush.bf16.msra.mxu0 %v10975
    %11327 = vmatpush.bf16.msra.mxu0 %v10974
    %11328 = vmatpush.bf16.msra.mxu0 %v10973
    %11329 = vmatpush.bf16.msra.mxu0 %v10972
    %11330 = vmatpush.bf16.msra.mxu0 %v10971
    %11331 = vmatpush.bf16.msra.mxu0 %v10970
    %11332 = vmatpush.bf16.msra.mxu0 %v10969
    %11333 = vmatpush.bf16.msra.mxu0 %v10968
    %11334 = vmatmul.bf16.gmra.mxu0 %v10530
    %v11335 = vpop.f32.mrf.mxu0
    %v11336 = vadd.f32 %v11287, %v11335
    %v11337 = vpop.f32.mrf.mxu0
    %v11338 = vadd.f32 %v11289, %v11337
    %11339 = vmatmul.bf16.gmra.mxu0 %v10537
    %v11340 = vpop.f32.mrf.mxu0
    %v11341 = vadd.f32 %v11292, %v11340
    %v11342 = vpop.f32.mrf.mxu0
    %v11343 = vadd.f32 %v11294, %v11342
    %11344 = vmatmul.bf16.gmra.mxu0 %v10544
    %v11345 = vpop.f32.mrf.mxu0
    %v11346 = vadd.f32 %v11297, %v11345
    %v11347 = vpop.f32.mrf.mxu0
    %v11348 = vadd.f32 %v11299, %v11347
    %11349 = vmatmul.bf16.gmra.mxu0 %v10551
    %v11350 = vpop.f32.mrf.mxu0
    %v11351 = vadd.f32 %v11302, %v11350
    %v11352 = vpop.f32.mrf.mxu0
    %v11353 = vadd.f32 %v11304, %v11352
    %11354 = vmatmul.bf16.gmra.mxu0 %v10558
    %v11355 = vpop.f32.mrf.mxu0
    %v11356 = vadd.f32 %v11307, %v11355
    %v11357 = vpop.f32.mrf.mxu0
    %v11358 = vadd.f32 %v11309, %v11357
    %11359 = vmatmul.bf16.gmra.mxu0 %v10565
    %v11360 = vpop.f32.mrf.mxu0
    %v11361 = vadd.f32 %v11312, %v11360
    %v11362 = vpop.f32.mrf.mxu0
    %v11363 = vadd.f32 %v11314, %v11362
    %11364 = vmatmul.bf16.gmra.mxu0 %v10572
    %v11365 = vpop.f32.mrf.mxu0
    %v11366 = vadd.f32 %v11317, %v11365
    %v11367 = vpop.f32.mrf.mxu0
    %v11368 = vadd.f32 %v11319, %v11367
    %11369 = vmatmul.bf16.gmra.mxu0 %v10579
    %v11370 = vpop.f32.mrf.mxu0
    %v11371 = vadd.f32 %v11322, %v11370
    %v11372 = vpop.f32.mrf.mxu0
    %v11373 = vadd.f32 %v11324, %v11372
    %11374 = vdwg.mxu0
    %11375 = vst [vmem:[#allocation14] sm:$0xff] %v11336
    %11376 = vst [vmem:[#allocation14 + $0x8] sm:$0xff] %v11338
    %11377 = vst [vmem:[#allocation14 + $0x10] sm:$0xff] %v11341
    %11378 = vst [vmem:[#allocation14 + $0x18] sm:$0xff] %v11343
    %11379 = vst [vmem:[#allocation14 + $0x20] sm:$0xff] %v11346
    %11380 = vst [vmem:[#allocation14 + $0x28] sm:$0xff] %v11348
    %11381 = vst [vmem:[#allocation14 + $0x30] sm:$0xff] %v11351
    %11382 = vst [vmem:[#allocation14 + $0x38] sm:$0xff] %v11353
    %11383 = vst [vmem:[#allocation14 + $0x40] sm:$0xff] %v11356
    %11384 = vst [vmem:[#allocation14 + $0x48] sm:$0xff] %v11358
    %11385 = vst [vmem:[#allocation14 + $0x50] sm:$0xff] %v11361
    %11386 = vst [vmem:[#allocation14 + $0x58] sm:$0xff] %v11363
    %11387 = vst [vmem:[#allocation14 + $0x60] sm:$0xff] %v11366
    %11388 = vst [vmem:[#allocation14 + $0x68] sm:$0xff] %v11368
    %11389 = vst [vmem:[#allocation14 + $0x70] sm:$0xff] %v11371
    %11390 = vst [vmem:[#allocation14 + $0x78] sm:$0xff] %v11373
    // Predicated region
    $region58: #{tpu_custom_call.1} parent=1 // pred_check
      _
    $region59: #{tpu_custom_call.1} parent=1 // pred_check_branch
      %11392 = sbr.rel (0) target = $region61
    $region60: #{tpu_custom_call.1} parent=1 // pred_region
      %11394 = vsyncadd [#allocation4], 0
      %s11395 = sshll.u32 [#allocation14], 4
      %s11396 = int_to_ptr.vmem [resolvable:$true] %s11395
      %s11397 = sshll.u32 %s7, 4
      %s11398 = int_to_ptr.hbm [resolvable:$true] %s11397
      %11403 = dma.vmem_to_hbm [thread:$0]  %s11396, 2048, %s11398, [#allocation4], 128, 128, 8
    $region61: #{tpu_custom_call.1} parent=1 // pred_fallthru
      _
    // Predicated region
    $region62: #{tpu_custom_call.1} parent=1 // pred_check
      _
    $region63: #{tpu_custom_call.1} parent=1 // pred_check_branch
      %11405 = sbr.rel (0) target = $region65
    $region64: #{tpu_custom_call.1} parent=1 // pred_region
      %11407 = dma.done [#allocation4], 2048
    $region65: #{tpu_custom_call.1} parent=1 // pred_fallthru
      _
    %11408 = vsyncpa [#allocation3], 1
    %11409 = vsyncpa [#allocation6], 1
    %11410 = vsyncpa [#allocation9], 1
    %11411 = vsyncpa [#allocation12], 1
    %11412 = vsyncpa [#allocation4], 1

</llo_original>
